<compile_context>
chip_gen: v5e
topology: v5e:2x2
jax: 0.10.0
libtpu: 0.0.40
codegen_flags: <defaults>
</compile_context>

<pallas_src>
import functools

import numpy as np
import jax
import jax.numpy as jnp
from jax.experimental import pallas as pl
from jax.experimental.pallas import tpu as pltpu


POOL_HW = 4                      # adaptive_avg_pool2d target is 4x4
N_PIX = POOL_HW * POOL_HW        # 16
CONV_OUT = 128                   # 1x1 conv output channels
FC1_IN = CONV_OUT * N_PIX        # 2048
FC1_OUT = 1024
LANE = 128
BN_EPS = 1e-3


# -----------------------------------------------------------------------------
# Fused per-sample kernel:
#   conv1x1 (BN-scale folded) -> bf16 adaptive-avg-pool -> +shift -> ReLU
#   -> flatten (strip copies) -> fc1 (one K=2048 matmul) -> ReLU -> fc2
# -----------------------------------------------------------------------------
def _inception_aux_kernel(x_ref, pool_ref, convw_ref, shift_ref,
                          fc1w_ref, fc2w_ref, out_ref, a_ref, feat_ref):
    """
    Per grid step (one sample n):
      x_ref     : (1, H*W, C)    bf16  NHWC rows of sample n, row index = h*W + w
      pool_ref  : (16, H*W)      bf16  adaptive pool matrix (batch-independent, resident)
      convw_ref : (C, 128)       bf16  1x1 conv weight^T with BN scale folded in (resident)
      shift_ref : (1, 128)       f32   folded BN shift = beta - mean * scale (resident)
      fc1w_ref  : (2048, 1024)   bf16  fc1 weight, flatten permutation folded in (resident)
      fc2w_ref  : (1024, ncpad)  bf16  fc2 weight^T, zero-padded lanes (resident)
      out_ref   : (1, 1, ncpad)  f32   padded logits for sample n
      a_ref     : (16, 128)      f32   scratch: pooled conv+BN+ReLU activation
      feat_ref  : (1, 2048)      f32   scratch: flattened feature row
    """
    # 1x1 conv at full spatial resolution (BN scale is pre-folded into the weight).
    y = jnp.dot(x_ref[0], convw_ref[...],
                preferred_element_type=jnp.float32)              # (H*W, 128) f32

    # Adaptive average pool as a single-pass bf16 MXU matmul (pool & conv commute).
    z = jnp.dot(pool_ref[...], y.astype(jnp.bfloat16),
                preferred_element_type=jnp.float32)              # (16, 128) f32

    # Folded BatchNorm (eval running stats) shift + ReLU.
    a_ref[...] = jnp.maximum(z + shift_ref[...], 0.0)            # (16, 128) f32

    # Flatten (16, 128) -> (1, 2048) via 16 lane-aligned VMEM strip copies.
    # Torch's channel-major flatten permutation is already folded into fc1w at
    # init, so pixel strip p simply lands at lanes [p*128, (p+1)*128).
    for p in range(N_PIX):                                       # static unroll
        feat_ref[:, pl.ds(p * CONV_OUT, CONV_OUT)] = a_ref[p:p + 1, :]

    # fc1 as ONE K=2048 streamed MXU matmul (replaces the old 16-step dot loop).
    feat = feat_ref[...].astype(jnp.bfloat16)                    # (1, 2048)
    h1 = jnp.dot(feat, fc1w_ref[...],
                 preferred_element_type=jnp.float32)             # (1, 1024) f32
    h1 = jnp.maximum(h1, 0.0).astype(jnp.bfloat16)
    # TODO(synk): Dropout(0.7) is eval-mode identity here.

    # fc2 into a lane-dense padded slab (unmasked stores).
    out_ref[0] = jnp.dot(h1, fc2w_ref[...],
                         preferred_element_type=jnp.float32)     # (1, ncpad)


# -----------------------------------------------------------------------------
# Adaptive average pool (exact PyTorch overlapping-bin semantics) as a matrix
# -----------------------------------------------------------------------------
def _adaptive_pool_weights(size, out_size):
    m = np.zeros((out_size, size), np.float32)
    for i in range(out_size):
        start = (i * size) // out_size
        end = -((-(i + 1) * size) // out_size)       # ceil((i+1)*size/out_size)
        m[i, start:end] = 1.0 / (end - start)
    return m


def make_pool_matrix(H, W):
    """(16, H*W) bf16 matrix; row index p = i*4 + j, column index = h*W + w."""
    ph = _adaptive_pool_weights(H, POOL_HW)                       # (4, H)
    pw = _adaptive_pool_weights(W, POOL_HW)                       # (4, W)
    poolw = np.einsum("ih,jw->ijhw", ph, pw).reshape(N_PIX, H * W)
    return jnp.asarray(poolw, dtype=jnp.bfloat16)


# -----------------------------------------------------------------------------
# Parameters: raw (torch-layout) weights + kernel-ready pre-arranged weights
# -----------------------------------------------------------------------------
def init_params(key, in_channels, num_classes):
    k1, k2, k3 = jax.random.split(key, 3)
    raw = {
        # Conv2d(C, 128, k=1, bias=False): (128, C, 1, 1) -> (128, C)
        "conv_w": 0.05 * jax.random.normal(k1, (CONV_OUT, in_channels), jnp.float32),
        "bn_gamma": jnp.ones((CONV_OUT,), jnp.float32),
        "bn_beta": jnp.zeros((CONV_OUT,), jnp.float32),
        "bn_mean": jnp.zeros((CONV_OUT,), jnp.float32),
        "bn_var": jnp.ones((CONV_OUT,), jnp.float32),
        # Linear(2048, 1024, bias=False)
        "fc1_w": 0.02 * jax.random.normal(k2, (FC1_OUT, FC1_IN), jnp.float32),
        # Linear(1024, num_classes, bias=False)
        "fc2_w": 0.02 * jax.random.normal(k3, (num_classes, FC1_OUT), jnp.float32),
    }

    # ---- one-time offline pre-arrangement for the kernel ----
    inv_std = 1.0 / jnp.sqrt(raw["bn_var"] + BN_EPS)
    scale = raw["bn_gamma"] * inv_std                                   # (128,)
    shift = (raw["bn_beta"] - raw["bn_mean"] * scale).reshape(1, CONV_OUT)

    # BN scale folded into the (C, 128) transposed conv weight.
    conv_w_t = (raw["conv_w"].T * scale[None, :]).astype(jnp.bfloat16)

    # fc1 flattened to (2048, 1024) with torch's channel-major flatten folded in:
    # kernel feature index p*128 + c  <->  torch feature index c*16 + p.
    fc1_w_flat = (raw["fc1_w"].reshape(FC1_OUT, CONV_OUT, N_PIX)        # (k, c, p)
                  .transpose(2, 1, 0)                                   # (p, c, k)
                  .reshape(FC1_IN, FC1_OUT)
                  .astype(jnp.bfloat16))

    # fc2 weight pre-transposed and zero-padded to a lane-dense output width.
    nc_pad = max(LANE, ((num_classes + LANE - 1) // LANE) * LANE)
    fc2_w_t = jnp.zeros((FC1_OUT, nc_pad), jnp.float32).at[:, :num_classes].set(raw["fc2_w"].T)
    fc2_w_t = fc2_w_t.astype(jnp.bfloat16)

    # TODO(synk): brevitas weight quantization (int8 on v5e/v6e, fp8 on v7x with
    # per-output-channel scales) would halve these weight bytes; kept bf16 here.
    kernel_params = {"conv_w_t": conv_w_t, "shift": shift,
                     "fc1_w_flat": fc1_w_flat, "fc2_w_t": fc2_w_t}
    return kernel_params, raw


# -----------------------------------------------------------------------------
# Forward
# -----------------------------------------------------------------------------
@functools.partial(jax.jit, static_argnames=("num_classes",))
def inception_aux_forward(x, params, *, num_classes):
    """x: (N, C, H, W) float32 (PyTorch NCHW layout)."""
    N, C, H, W = x.shape
    HW = H * W
    nc_pad = params["fc2_w_t"].shape[1]

    # Only full-resolution layout op: NCHW -> (N, H*W, C); bf16 cast fuses into it.
    x_rows = x.transpose(0, 2, 3, 1).reshape(N, HW, C).astype(jnp.bfloat16)

    pool_mat = make_pool_matrix(H, W)                             # (16, H*W) bf16

    out_padded = pl.pallas_call(
        _inception_aux_kernel,
        out_shape=jax.ShapeDtypeStruct((N, 1, nc_pad), jnp.float32),
        grid=(N,),
        in_specs=[
            # per-sample activation block
            pl.BlockSpec((1, HW, C), lambda n: (n, 0, 0)),
            # batch-independent pool matrix + weights: constant index_map -> resident
            pl.BlockSpec((N_PIX, HW), lambda n: (0, 0)),
            pl.BlockSpec((C, CONV_OUT), lambda n: (0, 0)),
            pl.BlockSpec((1, CONV_OUT), lambda n: (0, 0)),
            pl.BlockSpec((FC1_IN, FC1_OUT), lambda n: (0, 0)),
            pl.BlockSpec((FC1_OUT, nc_pad), lambda n: (0, 0)),
        ],
        out_specs=pl.BlockSpec((1, 1, nc_pad), lambda n: (n, 0, 0)),
        scratch_shapes=[
            pltpu.VMEM((N_PIX, CONV_OUT), jnp.float32),   # pooled activation
            pltpu.VMEM((1, FC1_IN), jnp.float32),         # flattened feature row
        ],
        compiler_params=pltpu.CompilerParams(
            dimension_semantics=("parallel",),            # split batch across TCs (v7x)
            vmem_limit_bytes=32 * 1024 * 1024),
    )(x_rows, pool_mat, params["conv_w_t"], params["shift"],
      params["fc1_w_flat"], params["fc2_w_t"])

    return out_padded.reshape(N, nc_pad)[:, :num_classes]


# -----------------------------------------------------------------------------
# Pure-JAX reference (torch op order: pool -> conv -> BN -> ReLU -> flatten -> fcs)
# -----------------------------------------------------------------------------
def reference_forward(x, raw):
    N, C, H, W = x.shape
    ph = jnp.asarray(_adaptive_pool_weights(H, POOL_HW))
    pw = jnp.asarray(_adaptive_pool_weights(W, POOL_HW))
    pooled = jnp.einsum("ih,jw,nchw->ncij", ph, pw, x)
    z = jnp.einsum("oc,ncij->noij", raw["conv_w"], pooled)
    inv_std = 1.0 / jnp.sqrt(raw["bn_var"] + BN_EPS)
    scale = (raw["bn_gamma"] * inv_std)[None, :, None, None]
    shift = (raw["bn_beta"] - raw["bn_mean"] * raw["bn_gamma"] * inv_std)[None, :, None, None]
    a = jnp.maximum(z * scale + shift, 0.0)
    feat = a.reshape(N, -1)                                       # channel-major flatten
    h1 = jnp.maximum(feat @ raw["fc1_w"].T, 0.0)
    return h1 @ raw["fc2_w"].T


if __name__ == "__main__":
    key = jax.random.PRNGKey(0)
    k_x, k_p = jax.random.split(key)

    # Small, module-consistent shapes: 14x14 exercises GoogLeNet's true
    # overlapping-bin adaptive pool (aux heads see 14x14 feature maps).
    batch, in_channels, spatial, num_classes = 2, 16, 14, 10
    x = jax.random.normal(k_x, (batch, in_channels, spatial, spatial), jnp.float32)

    params, raw = init_params(k_p, in_channels, num_classes)

    out = inception_aux_forward(x, params, num_classes=num_classes)
    out = jax.block_until_ready(out)

    assert out.shape == (batch, num_classes), out.shape
    assert bool(jnp.all(jnp.isfinite(out)))

    ref = reference_forward(x, raw)
    assert bool(jnp.allclose(out, ref, rtol=1e-1, atol=1e-2)), (
        "max abs diff", float(jnp.max(jnp.abs(out - ref))))

    print("KERNEL_OK")
</pallas_src>

<mosaic_0001>
module attributes {stable_mosaic.version = 11 : i64} {
  func.func @_inception_aux_kernel(%arg0: i32, %arg1: memref<1x196x16xbf16, #tpu.memory_space<vmem>>, %arg2: memref<16x196xbf16, #tpu.memory_space<vmem>>, %arg3: memref<16x128xbf16, #tpu.memory_space<vmem>>, %arg4: memref<1x128xf32, #tpu.memory_space<vmem>>, %arg5: memref<2048x1024xbf16, #tpu.memory_space<vmem>>, %arg6: memref<1024x128xbf16, #tpu.memory_space<vmem>>, %arg7: memref<1x1x128xf32, #tpu.memory_space<vmem>>, %arg8: memref<16x128xf32, #tpu.memory_space<vmem>>, %arg9: memref<1x2048xf32, #tpu.memory_space<vmem>>) attributes {dimension_semantics = [#tpu.dimension_semantics<parallel>], iteration_bounds = array<i64: 2>, scalar_prefetch = 0 : i64, scratch_operands = 2 : i64, tpu.core_type = #tpu.core_type<tc>, window_params = [{transform_indices = @transform_0, window_bounds = array<i64: 1, 196, 16>}, {pipeline_mode = #tpu.pipeline_mode<synchronous>, transform_indices = @transform_1, window_bounds = array<i64: 16, 196>}, {pipeline_mode = #tpu.pipeline_mode<synchronous>, transform_indices = @transform_2, window_bounds = array<i64: 16, 128>}, {pipeline_mode = #tpu.pipeline_mode<synchronous>, transform_indices = @transform_3, window_bounds = array<i64: 1, 128>}, {pipeline_mode = #tpu.pipeline_mode<synchronous>, transform_indices = @transform_4, window_bounds = array<i64: 2048, 1024>}, {pipeline_mode = #tpu.pipeline_mode<synchronous>, transform_indices = @transform_5, window_bounds = array<i64: 1024, 128>}, {transform_indices = @transform_6, window_bounds = array<i64: 1, 1, 128>}]} {
    %c0 = arith.constant 0 : index
    %c0_0 = arith.constant 0 : index
    %c0_1 = arith.constant 0 : index
    %0 = vector.load %arg1[%c0, %c0_0, %c0_1] : memref<1x196x16xbf16, #tpu.memory_space<vmem>>, vector<1x196x16xbf16>
    %1 = vector.shape_cast %0 : vector<1x196x16xbf16> to vector<196x16xbf16>
    %c0_2 = arith.constant 0 : index
    %c0_3 = arith.constant 0 : index
    %2 = vector.load %arg3[%c0_2, %c0_3] : memref<16x128xbf16, #tpu.memory_space<vmem>>, vector<16x128xbf16>
    %cst = arith.constant dense<0.000000e+00> : vector<196x128xf32>
    %3 = tpu.matmul %1, %2, %cst {dimension_numbers = #tpu.dot_dimension_numbers<[1], [0], [0], [1], [0, 0, 1, 1], [], []>} : vector<196x16xbf16>, vector<16x128xbf16>, vector<196x128xf32> -> vector<196x128xf32>
    %c0_4 = arith.constant 0 : index
    %c0_5 = arith.constant 0 : index
    %4 = vector.load %arg2[%c0_4, %c0_5] : memref<16x196xbf16, #tpu.memory_space<vmem>>, vector<16x196xbf16>
    %5 = arith.truncf %3 : vector<196x128xf32> to vector<196x128xbf16>
    %cst_6 = arith.constant dense<0.000000e+00> : vector<16x128xf32>
    %6 = tpu.matmul %4, %5, %cst_6 {dimension_numbers = #tpu.dot_dimension_numbers<[1], [0], [0], [1], [0, 0, 1, 1], [], []>} : vector<16x196xbf16>, vector<196x128xbf16>, vector<16x128xf32> -> vector<16x128xf32>
    %c0_7 = arith.constant 0 : index
    %c0_8 = arith.constant 0 : index
    %7 = vector.load %arg4[%c0_7, %c0_8] : memref<1x128xf32, #tpu.memory_space<vmem>>, vector<1x128xf32>
    %8 = vector.broadcast %7 : vector<1x128xf32> to vector<16x128xf32>
    %9 = arith.addf %6, %8 : vector<16x128xf32>
    %cst_9 = arith.constant 0.000000e+00 : f32
    %10 = vector.broadcast %cst_9 : f32 to vector<16x128xf32>
    %11 = arith.maximumf %9, %10 : vector<16x128xf32>
    %c0_10 = arith.constant 0 : index
    %c0_11 = arith.constant 0 : index
    %12 = vector.load %arg8[%c0_10, %c0_11] : memref<16x128xf32, #tpu.memory_space<vmem>>, vector<16x128xf32>
    tpu.vector_store %arg8[%c0_10, %c0_11], %11 {strides = array<i32>} : memref<16x128xf32, #tpu.memory_space<vmem>>, vector<16x128xf32>,
    %c0_12 = arith.constant 0 : index
    %c0_13 = arith.constant 0 : index
    %13 = vector.load %arg8[%c0_12, %c0_13] : memref<16x128xf32, #tpu.memory_space<vmem>>, vector<1x128xf32>
    %c0_14 = arith.constant 0 : index
    %c0_15 = arith.constant 0 : index
    %14 = vector.load %arg9[%c0_14, %c0_15] : memref<1x2048xf32, #tpu.memory_space<vmem>>, vector<1x128xf32>
    tpu.vector_store %arg9[%c0_14, %c0_15], %13 {strides = array<i32>} : memref<1x2048xf32, #tpu.memory_space<vmem>>, vector<1x128xf32>,
    %c1 = arith.constant 1 : index
    %c0_16 = arith.constant 0 : index
    %15 = vector.load %arg8[%c1, %c0_16] : memref<16x128xf32, #tpu.memory_space<vmem>>, vector<1x128xf32>
    %c0_17 = arith.constant 0 : index
    %c128 = arith.constant 128 : index
    %16 = vector.load %arg9[%c0_17, %c128] : memref<1x2048xf32, #tpu.memory_space<vmem>>, vector<1x128xf32>
    tpu.vector_store %arg9[%c0_17, %c128], %15 {strides = array<i32>} : memref<1x2048xf32, #tpu.memory_space<vmem>>, vector<1x128xf32>,
    %c2 = arith.constant 2 : index
    %c0_18 = arith.constant 0 : index
    %17 = vector.load %arg8[%c2, %c0_18] : memref<16x128xf32, #tpu.memory_space<vmem>>, vector<1x128xf32>
    %c0_19 = arith.constant 0 : index
    %c256 = arith.constant 256 : index
    %18 = vector.load %arg9[%c0_19, %c256] : memref<1x2048xf32, #tpu.memory_space<vmem>>, vector<1x128xf32>
    tpu.vector_store %arg9[%c0_19, %c256], %17 {strides = array<i32>} : memref<1x2048xf32, #tpu.memory_space<vmem>>, vector<1x128xf32>,
    %c3 = arith.constant 3 : index
    %c0_20 = arith.constant 0 : index
    %19 = vector.load %arg8[%c3, %c0_20] : memref<16x128xf32, #tpu.memory_space<vmem>>, vector<1x128xf32>
    %c0_21 = arith.constant 0 : index
    %c384 = arith.constant 384 : index
    %20 = vector.load %arg9[%c0_21, %c384] : memref<1x2048xf32, #tpu.memory_space<vmem>>, vector<1x128xf32>
    tpu.vector_store %arg9[%c0_21, %c384], %19 {strides = array<i32>} : memref<1x2048xf32, #tpu.memory_space<vmem>>, vector<1x128xf32>,
    %c4 = arith.constant 4 : index
    %c0_22 = arith.constant 0 : index
    %21 = vector.load %arg8[%c4, %c0_22] : memref<16x128xf32, #tpu.memory_space<vmem>>, vector<1x128xf32>
    %c0_23 = arith.constant 0 : index
    %c512 = arith.constant 512 : index
    %22 = vector.load %arg9[%c0_23, %c512] : memref<1x2048xf32, #tpu.memory_space<vmem>>, vector<1x128xf32>
    tpu.vector_store %arg9[%c0_23, %c512], %21 {strides = array<i32>} : memref<1x2048xf32, #tpu.memory_space<vmem>>, vector<1x128xf32>,
    %c5 = arith.constant 5 : index
    %c0_24 = arith.constant 0 : index
    %23 = vector.load %arg8[%c5, %c0_24] : memref<16x128xf32, #tpu.memory_space<vmem>>, vector<1x128xf32>
    %c0_25 = arith.constant 0 : index
    %c640 = arith.constant 640 : index
    %24 = vector.load %arg9[%c0_25, %c640] : memref<1x2048xf32, #tpu.memory_space<vmem>>, vector<1x128xf32>
    tpu.vector_store %arg9[%c0_25, %c640], %23 {strides = array<i32>} : memref<1x2048xf32, #tpu.memory_space<vmem>>, vector<1x128xf32>,
    %c6 = arith.constant 6 : index
    %c0_26 = arith.constant 0 : index
    %25 = vector.load %arg8[%c6, %c0_26] : memref<16x128xf32, #tpu.memory_space<vmem>>, vector<1x128xf32>
    %c0_27 = arith.constant 0 : index
    %c768 = arith.constant 768 : index
    %26 = vector.load %arg9[%c0_27, %c768] : memref<1x2048xf32, #tpu.memory_space<vmem>>, vector<1x128xf32>
    tpu.vector_store %arg9[%c0_27, %c768], %25 {strides = array<i32>} : memref<1x2048xf32, #tpu.memory_space<vmem>>, vector<1x128xf32>,
    %c7 = arith.constant 7 : index
    %c0_28 = arith.constant 0 : index
    %27 = vector.load %arg8[%c7, %c0_28] : memref<16x128xf32, #tpu.memory_space<vmem>>, vector<1x128xf32>
    %c0_29 = arith.constant 0 : index
    %c896 = arith.constant 896 : index
    %28 = vector.load %arg9[%c0_29, %c896] : memref<1x2048xf32, #tpu.memory_space<vmem>>, vector<1x128xf32>
    tpu.vector_store %arg9[%c0_29, %c896], %27 {strides = array<i32>} : memref<1x2048xf32, #tpu.memory_space<vmem>>, vector<1x128xf32>,
    %c8 = arith.constant 8 : index
    %c0_30 = arith.constant 0 : index
    %29 = vector.load %arg8[%c8, %c0_30] : memref<16x128xf32, #tpu.memory_space<vmem>>, vector<1x128xf32>
    %c0_31 = arith.constant 0 : index
    %c1024 = arith.constant 1024 : index
    %30 = vector.load %arg9[%c0_31, %c1024] : memref<1x2048xf32, #tpu.memory_space<vmem>>, vector<1x128xf32>
    tpu.vector_store %arg9[%c0_31, %c1024], %29 {strides = array<i32>} : memref<1x2048xf32, #tpu.memory_space<vmem>>, vector<1x128xf32>,
    %c9 = arith.constant 9 : index
    %c0_32 = arith.constant 0 : index
    %31 = vector.load %arg8[%c9, %c0_32] : memref<16x128xf32, #tpu.memory_space<vmem>>, vector<1x128xf32>
    %c0_33 = arith.constant 0 : index
    %c1152 = arith.constant 1152 : index
    %32 = vector.load %arg9[%c0_33, %c1152] : memref<1x2048xf32, #tpu.memory_space<vmem>>, vector<1x128xf32>
    tpu.vector_store %arg9[%c0_33, %c1152], %31 {strides = array<i32>} : memref<1x2048xf32, #tpu.memory_space<vmem>>, vector<1x128xf32>,
    %c10 = arith.constant 10 : index
    %c0_34 = arith.constant 0 : index
    %33 = vector.load %arg8[%c10, %c0_34] : memref<16x128xf32, #tpu.memory_space<vmem>>, vector<1x128xf32>
    %c0_35 = arith.constant 0 : index
    %c1280 = arith.constant 1280 : index
    %34 = vector.load %arg9[%c0_35, %c1280] : memref<1x2048xf32, #tpu.memory_space<vmem>>, vector<1x128xf32>
    tpu.vector_store %arg9[%c0_35, %c1280], %33 {strides = array<i32>} : memref<1x2048xf32, #tpu.memory_space<vmem>>, vector<1x128xf32>,
    %c11 = arith.constant 11 : index
    %c0_36 = arith.constant 0 : index
    %35 = vector.load %arg8[%c11, %c0_36] : memref<16x128xf32, #tpu.memory_space<vmem>>, vector<1x128xf32>
    %c0_37 = arith.constant 0 : index
    %c1408 = arith.constant 1408 : index
    %36 = vector.load %arg9[%c0_37, %c1408] : memref<1x2048xf32, #tpu.memory_space<vmem>>, vector<1x128xf32>
    tpu.vector_store %arg9[%c0_37, %c1408], %35 {strides = array<i32>} : memref<1x2048xf32, #tpu.memory_space<vmem>>, vector<1x128xf32>,
    %c12 = arith.constant 12 : index
    %c0_38 = arith.constant 0 : index
    %37 = vector.load %arg8[%c12, %c0_38] : memref<16x128xf32, #tpu.memory_space<vmem>>, vector<1x128xf32>
    %c0_39 = arith.constant 0 : index
    %c1536 = arith.constant 1536 : index
    %38 = vector.load %arg9[%c0_39, %c1536] : memref<1x2048xf32, #tpu.memory_space<vmem>>, vector<1x128xf32>
    tpu.vector_store %arg9[%c0_39, %c1536], %37 {strides = array<i32>} : memref<1x2048xf32, #tpu.memory_space<vmem>>, vector<1x128xf32>,
    %c13 = arith.constant 13 : index
    %c0_40 = arith.constant 0 : index
    %39 = vector.load %arg8[%c13, %c0_40] : memref<16x128xf32, #tpu.memory_space<vmem>>, vector<1x128xf32>
    %c0_41 = arith.constant 0 : index
    %c1664 = arith.constant 1664 : index
    %40 = vector.load %arg9[%c0_41, %c1664] : memref<1x2048xf32, #tpu.memory_space<vmem>>, vector<1x128xf32>
    tpu.vector_store %arg9[%c0_41, %c1664], %39 {strides = array<i32>} : memref<1x2048xf32, #tpu.memory_space<vmem>>, vector<1x128xf32>,
    %c14 = arith.constant 14 : index
    %c0_42 = arith.constant 0 : index
    %41 = vector.load %arg8[%c14, %c0_42] : memref<16x128xf32, #tpu.memory_space<vmem>>, vector<1x128xf32>
    %c0_43 = arith.constant 0 : index
    %c1792 = arith.constant 1792 : index
    %42 = vector.load %arg9[%c0_43, %c1792] : memref<1x2048xf32, #tpu.memory_space<vmem>>, vector<1x128xf32>
    tpu.vector_store %arg9[%c0_43, %c1792], %41 {strides = array<i32>} : memref<1x2048xf32, #tpu.memory_space<vmem>>, vector<1x128xf32>,
    %c15 = arith.constant 15 : index
    %c0_44 = arith.constant 0 : index
    %43 = vector.load %arg8[%c15, %c0_44] : memref<16x128xf32, #tpu.memory_space<vmem>>, vector<1x128xf32>
    %c0_45 = arith.constant 0 : index
    %c1920 = arith.constant 1920 : index
    %44 = vector.load %arg9[%c0_45, %c1920] : memref<1x2048xf32, #tpu.memory_space<vmem>>, vector<1x128xf32>
    tpu.vector_store %arg9[%c0_45, %c1920], %43 {strides = array<i32>} : memref<1x2048xf32, #tpu.memory_space<vmem>>, vector<1x128xf32>,
    %c0_46 = arith.constant 0 : index
    %c0_47 = arith.constant 0 : index
    %45 = vector.load %arg9[%c0_46, %c0_47] : memref<1x2048xf32, #tpu.memory_space<vmem>>, vector<1x2048xf32>
    %46 = arith.truncf %45 : vector<1x2048xf32> to vector<1x2048xbf16>
    %c0_48 = arith.constant 0 : index
    %c0_49 = arith.constant 0 : index
    %47 = vector.load %arg5[%c0_48, %c0_49] : memref<2048x1024xbf16, #tpu.memory_space<vmem>>, vector<2048x1024xbf16>
    %cst_50 = arith.constant dense<0.000000e+00> : vector<1x1024xf32>
    %48 = tpu.matmul %46, %47, %cst_50 {dimension_numbers = #tpu.dot_dimension_numbers<[1], [0], [0], [1], [0, 0, 1, 1], [], []>} : vector<1x2048xbf16>, vector<2048x1024xbf16>, vector<1x1024xf32> -> vector<1x1024xf32>
    %cst_51 = arith.constant 0.000000e+00 : f32
    %49 = vector.broadcast %cst_51 : f32 to vector<1x1024xf32>
    %50 = arith.maximumf %48, %49 : vector<1x1024xf32>
    %51 = arith.truncf %50 : vector<1x1024xf32> to vector<1x1024xbf16>
    %c0_52 = arith.constant 0 : index
    %c0_53 = arith.constant 0 : index
    %52 = vector.load %arg6[%c0_52, %c0_53] : memref<1024x128xbf16, #tpu.memory_space<vmem>>, vector<1024x128xbf16>
    %cst_54 = arith.constant dense<0.000000e+00> : vector<1x128xf32>
    %53 = tpu.matmul %51, %52, %cst_54 {dimension_numbers = #tpu.dot_dimension_numbers<[1], [0], [0], [1], [0, 0, 1, 1], [], []>} : vector<1x1024xbf16>, vector<1024x128xbf16>, vector<1x128xf32> -> vector<1x128xf32>
    %c0_55 = arith.constant 0 : index
    %c0_56 = arith.constant 0 : index
    %c0_57 = arith.constant 0 : index
    %54 = vector.load %arg7[%c0_55, %c0_56, %c0_57] : memref<1x1x128xf32, #tpu.memory_space<vmem>>, vector<1x1x128xf32>
    %55 = vector.shape_cast %54 : vector<1x1x128xf32> to vector<1x128xf32>
    %56 = vector.shape_cast %53 : vector<1x128xf32> to vector<1x1x128xf32>
    tpu.vector_store %arg7[%c0_55, %c0_56, %c0_57], %56 {strides = array<i32>} : memref<1x1x128xf32, #tpu.memory_space<vmem>>, vector<1x1x128xf32>,
    return
  }
  func.func @transform_0(%arg0: i32) -> (i32, i32, i32) {
    %c0_i32 = arith.constant 0 : i32
    %c0_i32_0 = arith.constant 0 : i32
    %c0_i32_1 = arith.constant 0 : i32
    return %arg0, %c0_i32, %c0_i32_0 : i32, i32, i32
  }
  func.func @transform_1(%arg0: i32) -> (i32, i32) {
    %c0_i32 = arith.constant 0 : i32
    %c0_i32_0 = arith.constant 0 : i32
    %c0_i32_1 = arith.constant 0 : i32
    return %c0_i32, %c0_i32_0 : i32, i32
  }
  func.func @transform_2(%arg0: i32) -> (i32, i32) {
    %c0_i32 = arith.constant 0 : i32
    %c0_i32_0 = arith.constant 0 : i32
    %c0_i32_1 = arith.constant 0 : i32
    return %c0_i32, %c0_i32_0 : i32, i32
  }
  func.func @transform_3(%arg0: i32) -> (i32, i32) {
    %c0_i32 = arith.constant 0 : i32
    %c0_i32_0 = arith.constant 0 : i32
    %c0_i32_1 = arith.constant 0 : i32
    return %c0_i32, %c0_i32_0 : i32, i32
  }
  func.func @transform_4(%arg0: i32) -> (i32, i32) {
    %c0_i32 = arith.constant 0 : i32
    %c0_i32_0 = arith.constant 0 : i32
    %c0_i32_1 = arith.constant 0 : i32
    return %c0_i32, %c0_i32_0 : i32, i32
  }
  func.func @transform_5(%arg0: i32) -> (i32, i32) {
    %c0_i32 = arith.constant 0 : i32
    %c0_i32_0 = arith.constant 0 : i32
    %c0_i32_1 = arith.constant 0 : i32
    return %c0_i32, %c0_i32_0 : i32, i32
  }
  func.func @transform_6(%arg0: i32) -> (i32, i32, i32) {
    %c0_i32 = arith.constant 0 : i32
    %c0_i32_0 = arith.constant 0 : i32
    %c0_i32_1 = arith.constant 0 : i32
    return %arg0, %c0_i32, %c0_i32_0 : i32, i32, i32
  }
}

</mosaic_0001>

<llo_original>
// kernel: inception_aux_forward.1
$region0: #{inception_aux_forward.1}
  #allocation0 [shape = 'u32[]', space=smem, size = 0x4, offset = 0x4, fixed_abs, tag = 'smem constant byte address 0x4 - core index']
  #allocation1 [shape = 'u32[72,128]{1,0:T(1,128)}', space=vmem, size = 0x9000, scoped, tag = 'internal scratch']
  #allocation2 [shape = 'f32[16,128]{1,0:T(8,128)}', space=vmem, size = 0x2000, scoped, tag = 'scratch operand']
  #allocation3 [shape = 'f32[1,2048]{1,0:T(1,128)}', space=vmem, size = 0x2000, scoped, tag = 'scratch operand']
  %s0 = inlined_call_operand.vmem [shape: bf16[2,196,16], index: 0, kind: input, shape index: {}]
  %s1 = inlined_call_operand.hbm [shape: bf16[16,196], index: 1, kind: input, shape index: {}]
  %s2 = inlined_call_operand.hbm [shape: bf16[16,128], index: 2, kind: input, shape index: {}]
  %s3 = inlined_call_operand.hbm [shape: f32[1,128], index: 3, kind: input, shape index: {}]
  %s4 = inlined_call_operand.hbm [shape: bf16[2048,1024], index: 4, kind: input, shape index: {}]
  %s5 = inlined_call_operand.hbm [shape: bf16[1024,128], index: 5, kind: input, shape index: {}]
  %s6 = inlined_call_operand.hbm [shape: f32[2,1,128], index: 6, kind: output, shape index: {}]
  %s7 = sld [smem:[#allocation0]]
  $region77: #{inception_aux_forward.1} parent=0
    _
  %s9 = ssub.s32 1, %s7
  %s10 = scalar_select 0, %s9, %s7
  $region1: #{inception_aux_forward.1} parent=0
    #allocation4 [shape = 'u8[8192]{0}', space=vmem, size = 0x2000, scoped, tag = 'input window, operand 1, single buffered']
    #allocation5 [shape = 's32[2]{0}', space=sflag, size = 0x8, scoped, tag = 'scoped memory for inception_aux_forward.1']
    #allocation6 [shape = 's32[2]{0}', space=sflag, size = 0x8, scoped, tag = 'scoped memory for inception_aux_forward.1']
    #allocation7 [shape = 'u8[4096]{0}', space=vmem, size = 0x1000, scoped, tag = 'input window, operand 2, single buffered']
    #allocation8 [shape = 's32[1]{0}', space=sflag, size = 0x4, scoped, tag = 'scoped memory for inception_aux_forward.1']
    #allocation9 [shape = 'u8[512]{0}', space=vmem, size = 0x400, scoped, tag = 'input window, operand 3, single buffered']
    #allocation10 [shape = 'u8[4194304]{0}', space=vmem, size = 0x400000, scoped, tag = 'input window, operand 4, single buffered']
    #allocation11 [shape = 's32[1]{0}', space=sflag, size = 0x4, scoped, tag = 'scoped memory for inception_aux_forward.1']
    #allocation12 [shape = 'u8[262144]{0}', space=vmem, size = 0x40000, scoped, tag = 'input window, operand 5, single buffered']
    #allocation13 [shape = 'u8[1024]{0}', space=vmem, size = 0x400, scoped, tag = 'output window, operand 0']
    %11 = vsyncpa [#allocation5], 0
    %12 = vsyncpa [#allocation8], 0
    %13 = vsyncpa [#allocation11], 0
    %14 = vsyncpa [#allocation6], 0
    %s15 = scalar_lea.sflag [#allocation6], 1
    %16 = vsyncpa %s15, 0
    loop: start=0, step=1, limit=4
    $region2: #{inception_aux_forward.1} parent=1 // loop_pre_header
      _
    $region3: #{inception_aux_forward.1} parent=1 // loop_header
      %s18 = sphi 0, %s22
      %p19 = scmp.ge.s32.totalorder %s18, 4
      %s28 = sphi 0, %s30
      %s31 = sphi 0, %s28
      %s32 = sphi 0, %s31
      %s48 = sphi 0, %s32
      %s52 = sphi 0, %s52
      %s54 = sphi 0, %s52
      %s55 = sphi 0, %s54
      %s69 = sphi 0, %s55
      %s73 = sphi 0, %s73
      %s75 = sphi 0, %s73
      %s76 = sphi 0, %s75
      %s90 = sphi 0, %s76
      %s94 = sphi 0, %s94
      %s96 = sphi 0, %s94
      %s97 = sphi 0, %s96
      %s111 = sphi 0, %s97
      %s115 = sphi 0, %s115
      %s117 = sphi 0, %s115
      %s118 = sphi 0, %s117
      %s132 = sphi 0, %s118
      %s136 = sphi 0, %s136
      %s138 = sphi 0, %s136
      %s139 = sphi 0, %s138
      %s153 = sphi 0, %s139
      %s159 = sphi 0, %s161
      %s162 = sphi 0, %s159
      %s163 = sphi 0, %s162
      %s179 = sphi 0, %s163
    $region4: #{inception_aux_forward.1} parent=1 // loop_header_branch
      %21 = sbr.rel (%p19) target = $region8
    $region5: #{inception_aux_forward.1} parent=1 // loop_body
      %s23 = ssub.s32 %s18, 1
      %s24 = ssub.s32 %s18, 2
      %s25 = sadd.s32 %s18, 1
      %s26 = ssub.s32 %s18, %s25
      %p27 = scmp.eq.s32.totalorder %s26, 0
      %s29 = sadd.s32 %s28, 1
      %s30 = scalar_select %p27, %s28, %s29
      %p33 = pneg %p27
      %p34 = scmp.eq.s32.totalorder %s18, 1
      %p35 = por %p33, %p34
      %p36 = scmp.ne.s32.totalorder %s28, %s31
      %p37 = scmp.eq.s32.totalorder %s18, 0
      %p38 = por %p36, %p37
      %p39 = scmp.ne.s32.totalorder %s28, %s31
      %p40 = scmp.eq.s32.totalorder %s23, 1
      %p41 = por %p39, %p40
      %p42 = scmp.ne.s32.totalorder %s31, %s32
      %p43 = scmp.eq.s32.totalorder %s23, 0
      %p44 = por %p42, %p43
      %p45 = scmp.ne.s32.totalorder %s31, %s32
      %p46 = scmp.eq.s32.totalorder %s24, 1
      %p47 = por %p45, %p46
      %p49 = scmp.ne.s32.totalorder %s32, %s48
      %p50 = scmp.eq.s32.totalorder %s24, 0
      %p51 = por %p49, %p50
      %s53 = sadd.s32 %s52, 1
      %p56 = scmp.eq.s32.totalorder %s18, 1
      %p57 = scmp.ne.s32.totalorder %s52, %s54
      %p58 = scmp.eq.s32.totalorder %s18, 0
      %p59 = por %p57, %p58
      %p60 = scmp.ne.s32.totalorder %s52, %s54
      %p61 = scmp.eq.s32.totalorder %s23, 1
      %p62 = por %p60, %p61
      %p63 = scmp.ne.s32.totalorder %s54, %s55
      %p64 = scmp.eq.s32.totalorder %s23, 0
      %p65 = por %p63, %p64
      %p66 = scmp.ne.s32.totalorder %s54, %s55
      %p67 = scmp.eq.s32.totalorder %s24, 1
      %p68 = por %p66, %p67
      %p70 = scmp.ne.s32.totalorder %s55, %s69
      %p71 = scmp.eq.s32.totalorder %s24, 0
      %p72 = por %p70, %p71
      %s74 = sadd.s32 %s73, 1
      %p77 = scmp.eq.s32.totalorder %s18, 1
      %p78 = scmp.ne.s32.totalorder %s73, %s75
      %p79 = scmp.eq.s32.totalorder %s18, 0
      %p80 = por %p78, %p79
      %p81 = scmp.ne.s32.totalorder %s73, %s75
      %p82 = scmp.eq.s32.totalorder %s23, 1
      %p83 = por %p81, %p82
      %p84 = scmp.ne.s32.totalorder %s75, %s76
      %p85 = scmp.eq.s32.totalorder %s23, 0
      %p86 = por %p84, %p85
      %p87 = scmp.ne.s32.totalorder %s75, %s76
      %p88 = scmp.eq.s32.totalorder %s24, 1
      %p89 = por %p87, %p88
      %p91 = scmp.ne.s32.totalorder %s76, %s90
      %p92 = scmp.eq.s32.totalorder %s24, 0
      %p93 = por %p91, %p92
      %s95 = sadd.s32 %s94, 1
      %p98 = scmp.eq.s32.totalorder %s18, 1
      %p99 = scmp.ne.s32.totalorder %s94, %s96
      %p100 = scmp.eq.s32.totalorder %s18, 0
      %p101 = por %p99, %p100
      %p102 = scmp.ne.s32.totalorder %s94, %s96
      %p103 = scmp.eq.s32.totalorder %s23, 1
      %p104 = por %p102, %p103
      %p105 = scmp.ne.s32.totalorder %s96, %s97
      %p106 = scmp.eq.s32.totalorder %s23, 0
      %p107 = por %p105, %p106
      %p108 = scmp.ne.s32.totalorder %s96, %s97
      %p109 = scmp.eq.s32.totalorder %s24, 1
      %p110 = por %p108, %p109
      %p112 = scmp.ne.s32.totalorder %s97, %s111
      %p113 = scmp.eq.s32.totalorder %s24, 0
      %p114 = por %p112, %p113
      %s116 = sadd.s32 %s115, 1
      %p119 = scmp.eq.s32.totalorder %s18, 1
      %p120 = scmp.ne.s32.totalorder %s115, %s117
      %p121 = scmp.eq.s32.totalorder %s18, 0
      %p122 = por %p120, %p121
      %p123 = scmp.ne.s32.totalorder %s115, %s117
      %p124 = scmp.eq.s32.totalorder %s23, 1
      %p125 = por %p123, %p124
      %p126 = scmp.ne.s32.totalorder %s117, %s118
      %p127 = scmp.eq.s32.totalorder %s23, 0
      %p128 = por %p126, %p127
      %p129 = scmp.ne.s32.totalorder %s117, %s118
      %p130 = scmp.eq.s32.totalorder %s24, 1
      %p131 = por %p129, %p130
      %p133 = scmp.ne.s32.totalorder %s118, %s132
      %p134 = scmp.eq.s32.totalorder %s24, 0
      %p135 = por %p133, %p134
      %s137 = sadd.s32 %s136, 1
      %p140 = scmp.eq.s32.totalorder %s18, 1
      %p141 = scmp.ne.s32.totalorder %s136, %s138
      %p142 = scmp.eq.s32.totalorder %s18, 0
      %p143 = por %p141, %p142
      %p144 = scmp.ne.s32.totalorder %s136, %s138
      %p145 = scmp.eq.s32.totalorder %s23, 1
      %p146 = por %p144, %p145
      %p147 = scmp.ne.s32.totalorder %s138, %s139
      %p148 = scmp.eq.s32.totalorder %s23, 0
      %p149 = por %p147, %p148
      %p150 = scmp.ne.s32.totalorder %s138, %s139
      %p151 = scmp.eq.s32.totalorder %s24, 1
      %p152 = por %p150, %p151
      %p154 = scmp.ne.s32.totalorder %s139, %s153
      %p155 = scmp.eq.s32.totalorder %s24, 0
      %p156 = por %p154, %p155
      %s157 = ssub.s32 %s18, %s25
      %p158 = scmp.eq.s32.totalorder %s157, 0
      %s160 = sadd.s32 %s159, 1
      %s161 = scalar_select %p158, %s159, %s160
      %p164 = pneg %p158
      %p165 = scmp.eq.s32.totalorder %s18, 1
      %p166 = por %p164, %p165
      %p167 = scmp.ne.s32.totalorder %s159, %s162
      %p168 = scmp.eq.s32.totalorder %s18, 0
      %p169 = por %p167, %p168
      %p170 = scmp.ne.s32.totalorder %s159, %s162
      %p171 = scmp.eq.s32.totalorder %s23, 1
      %p172 = por %p170, %p171
      %p173 = scmp.ne.s32.totalorder %s162, %s163
      %p174 = scmp.eq.s32.totalorder %s23, 0
      %p175 = por %p173, %p174
      %p176 = scmp.ne.s32.totalorder %s162, %s163
      %p177 = scmp.eq.s32.totalorder %s24, 1
      %p178 = por %p176, %p177
      %p180 = scmp.ne.s32.totalorder %s163, %s179
      %p181 = scmp.eq.s32.totalorder %s24, 0
      %p182 = por %p180, %p181
      %p183 = scmp.le.s32.totalorder 1, %s18
      %p184 = scmp.lt.s32.totalorder %s18, 3
      %p185 = pnand %p183, %p184
      %p186 = pneg %p185
      // Predicated region
      $region9: #{inception_aux_forward.1} parent=5 // pred_check
        _
      $region10: #{inception_aux_forward.1} parent=5 // pred_check_branch
        %188 = sbr.rel (%p185) target = $region12
      $region11: #{inception_aux_forward.1} parent=5 // pred_region
        %s189 = ssub.s32 %s18, 1
        // Predicated region
        $region13: #{inception_aux_forward.1} parent=11 // pred_check
          %p190 = pneg %p65
        $region14: #{inception_aux_forward.1} parent=11 // pred_check_branch
          %192 = sbr.rel (%p190) target = $region16
        $region15: #{inception_aux_forward.1} parent=11 // pred_region
          %194 = vsyncadd [#allocation5], 0
          %s195 = sshll.u32 %s1, 4
          %s196 = int_to_ptr.hbm [resolvable:$true] %s195
          %s197 = sshll.u32 [#allocation4], 4
          %s198 = int_to_ptr.vmem [resolvable:$true] %s197
          %203 = dma.hbm_to_vmem [thread:$0]  %s196, 256, %s198, [#allocation5], 128, 128, 8
        $region16: #{inception_aux_forward.1} parent=11 // pred_fallthru
          _
        // Predicated region
        $region17: #{inception_aux_forward.1} parent=11 // pred_check
          %p204 = pneg %p86
        $region18: #{inception_aux_forward.1} parent=11 // pred_check_branch
          %206 = sbr.rel (%p204) target = $region20
        $region19: #{inception_aux_forward.1} parent=11 // pred_region
          %208 = vsyncadd [#allocation8], 0
          %s209 = sshll.u32 %s2, 4
          %s210 = int_to_ptr.hbm [resolvable:$true] %s209
          %s211 = sshll.u32 [#allocation7], 4
          %s212 = int_to_ptr.vmem [resolvable:$true] %s211
          %217 = dma.hbm_to_vmem [thread:$0]  %s210, 128, %s212, [#allocation8], 64, 64, 4
        $region20: #{inception_aux_forward.1} parent=11 // pred_fallthru
          _
        // Predicated region
        $region21: #{inception_aux_forward.1} parent=11 // pred_check
          %p218 = pneg %p107
        $region22: #{inception_aux_forward.1} parent=11 // pred_check_branch
          %220 = sbr.rel (%p218) target = $region24
        $region23: #{inception_aux_forward.1} parent=11 // pred_region
          %222 = vsyncadd [#allocation8], 0
          %s224 = sshll.u32 %s3, 4
          %s225 = int_to_ptr.hbm [resolvable:$true] %s224
          %s226 = sshll.u32 [#allocation9], 4
          %s227 = int_to_ptr.vmem [resolvable:$true] %s226
          %229 = dma.hbm_to_vmem [thread:$0]  %s225, 16, %s227, [#allocation8]
        $region24: #{inception_aux_forward.1} parent=11 // pred_fallthru
          _
        // Predicated region
        $region25: #{inception_aux_forward.1} parent=11 // pred_check
          %p230 = pneg %p128
        $region26: #{inception_aux_forward.1} parent=11 // pred_check_branch
          %232 = sbr.rel (%p230) target = $region28
        $region27: #{inception_aux_forward.1} parent=11 // pred_region
          %234 = vsyncadd [#allocation11], 0
          %s235 = sshll.u32 %s4, 4
          %s236 = int_to_ptr.hbm [resolvable:$true] %s235
          %s237 = sshll.u32 [#allocation10], 4
          %s238 = int_to_ptr.vmem [resolvable:$true] %s237
          %243 = dma.hbm_to_vmem [thread:$0]  %s236, 131072, %s238, [#allocation11], 512, 512, 32
        $region28: #{inception_aux_forward.1} parent=11 // pred_fallthru
          _
        // Predicated region
        $region29: #{inception_aux_forward.1} parent=11 // pred_check
          %p244 = pneg %p149
        $region30: #{inception_aux_forward.1} parent=11 // pred_check_branch
          %246 = sbr.rel (%p244) target = $region32
        $region31: #{inception_aux_forward.1} parent=11 // pred_region
          %248 = vsyncadd [#allocation11], 0
          %s249 = sshll.u32 %s5, 4
          %s250 = int_to_ptr.hbm [resolvable:$true] %s249
          %s251 = sshll.u32 [#allocation12], 4
          %s252 = int_to_ptr.vmem [resolvable:$true] %s251
          %257 = dma.hbm_to_vmem [thread:$0]  %s250, 8192, %s252, [#allocation11], 64, 64, 4
        $region32: #{inception_aux_forward.1} parent=11 // pred_fallthru
          _
      $region12: #{inception_aux_forward.1} parent=5 // pred_fallthru
        _
      %p258 = scmp.lt.s32.totalorder %s18, 2
      // Predicated region
      $region33: #{inception_aux_forward.1} parent=5 // pred_check
        %p259 = pneg %p258
      $region34: #{inception_aux_forward.1} parent=5 // pred_check_branch
        %261 = sbr.rel (%p259) target = $region36
      $region35: #{inception_aux_forward.1} parent=5 // pred_region
        // Predicated region
        $region37: #{inception_aux_forward.1} parent=35 // pred_check
          %p262 = pneg %p38
        $region38: #{inception_aux_forward.1} parent=35 // pred_check_branch
          %264 = sbr.rel (%p262) target = $region40
        $region39: #{inception_aux_forward.1} parent=35 // pred_region
          %p265 = scmp.lt.s32.totalorder %s18, 1
          %s266 = scalar_select %p265, %s18, 1
          %s267 = smul.addr %s266, 25
          %s268 = smul.addr %s267, 4
          %s269 = scalar_lea.vmem %s0, %s268
        $region40: #{inception_aux_forward.1} parent=35 // pred_fallthru
          _
      $region36: #{inception_aux_forward.1} parent=5 // pred_fallthru
        _
      %p270 = scmp.le.s32.totalorder 1, %s18
      %p271 = scmp.lt.s32.totalorder %s18, 3
      %p272 = pnand %p270, %p271
      %p273 = pneg %p272
      // Predicated region
      $region41: #{inception_aux_forward.1} parent=5 // pred_check
        _
      $region42: #{inception_aux_forward.1} parent=5 // pred_check_branch
        %275 = sbr.rel (%p272) target = $region44
      $region43: #{inception_aux_forward.1} parent=5 // pred_region
        %s276 = ssub.s32 %s18, 1
        // Predicated region
        $region45: #{inception_aux_forward.1} parent=43 // pred_check
          %p277 = pneg %p65
        $region46: #{inception_aux_forward.1} parent=43 // pred_check_branch
          %279 = sbr.rel (%p277) target = $region48
        $region47: #{inception_aux_forward.1} parent=43 // pred_region
          %281 = dma.done [#allocation5], 256
        $region48: #{inception_aux_forward.1} parent=43 // pred_fallthru
          _
        // Predicated region
        $region49: #{inception_aux_forward.1} parent=43 // pred_check
          %p282 = pneg %p86
        $region50: #{inception_aux_forward.1} parent=43 // pred_check_branch
          %284 = sbr.rel (%p282) target = $region52
        $region51: #{inception_aux_forward.1} parent=43 // pred_region
          %286 = dma.done [#allocation8], 128
        $region52: #{inception_aux_forward.1} parent=43 // pred_fallthru
          _
        // Predicated region
        $region53: #{inception_aux_forward.1} parent=43 // pred_check
          %p287 = pneg %p107
        $region54: #{inception_aux_forward.1} parent=43 // pred_check_branch
          %289 = sbr.rel (%p287) target = $region56
        $region55: #{inception_aux_forward.1} parent=43 // pred_region
          %291 = dma.done [#allocation8], 16
        $region56: #{inception_aux_forward.1} parent=43 // pred_fallthru
          _
        // Predicated region
        $region57: #{inception_aux_forward.1} parent=43 // pred_check
          %p292 = pneg %p128
        $region58: #{inception_aux_forward.1} parent=43 // pred_check_branch
          %294 = sbr.rel (%p292) target = $region60
        $region59: #{inception_aux_forward.1} parent=43 // pred_region
          %296 = dma.done [#allocation11], 131072
        $region60: #{inception_aux_forward.1} parent=43 // pred_fallthru
          _
        // Predicated region
        $region61: #{inception_aux_forward.1} parent=43 // pred_check
          %p297 = pneg %p149
        $region62: #{inception_aux_forward.1} parent=43 // pred_check_branch
          %299 = sbr.rel (%p297) target = $region64
        $region63: #{inception_aux_forward.1} parent=43 // pred_region
          %301 = dma.done [#allocation11], 8192
        $region64: #{inception_aux_forward.1} parent=43 // pred_fallthru
          _
        %p302 = scmp.lt.s32.totalorder %s23, 1
        %s303 = scalar_select %p302, %s23, 1
        %s304 = smul.addr %s303, 25
        %s305 = smul.addr %s304, 4
        %s306 = scalar_lea.vmem %s0, %s305
        %p307 = pneg %p44
        %p308 = pneg %p41
        %p309 = pneg %p65
        %p310 = pneg %p62
        %p311 = pneg %p86
        %p312 = pneg %p83
        %p313 = pneg %p107
        %p314 = pneg %p104
        %p315 = pneg %p128
        %p316 = pneg %p125
        %p317 = pneg %p149
        %p318 = pneg %p146
        %p319 = pneg %p175
        %p320 = pneg %p172
        %s321 = sand.u32 %s162, 1
        %s322 = scalar_lea.sflag [#allocation6], %s321
        %s323 = sand.u32 %s162, 1
        %s324 = scalar_lea.vmem [#allocation13], %s323
        %p325 = scmp.lt.s32.totalorder %s23, 1
        %s326 = scalar_select %p325, %s23, 1
        %s327 = smul.addr %s326, 25
        %s328 = smul.addr %s327, 4
        %s329 = scalar_lea.vmem %s0, %s328
        %v331 = vld [vmem:[%s329] sm:$0xf]
        %v332 = vld [vmem:[%s329 + $0x4] sm:$0xf]
        %v333 = vld [vmem:[%s329 + $0x8] sm:$0xf]
        %v334 = vld [vmem:[%s329 + $0xc] sm:$0xf]
        %v335 = vld [vmem:[%s329 + $0x10] sm:$0xf]
        %v336 = vld [vmem:[%s329 + $0x14] sm:$0xf]
        %v337 = vld [vmem:[%s329 + $0x18] sm:$0xf]
        %v338 = vld [vmem:[%s329 + $0x1c] sm:$0xf]
        %v339 = vld [vmem:[%s329 + $0x20] sm:$0xf]
        %v340 = vld [vmem:[%s329 + $0x24] sm:$0xf]
        %v341 = vld [vmem:[%s329 + $0x28] sm:$0xf]
        %v342 = vld [vmem:[%s329 + $0x2c] sm:$0xf]
        %v343 = vld [vmem:[%s329 + $0x30] sm:$0xf]
        %v344 = vld [vmem:[%s329 + $0x34] sm:$0xf]
        %v345 = vld [vmem:[%s329 + $0x38] sm:$0xf]
        %v346 = vld [vmem:[%s329 + $0x3c] sm:$0xf]
        %v347 = vld [vmem:[%s329 + $0x40] sm:$0xf]
        %v348 = vld [vmem:[%s329 + $0x44] sm:$0xf]
        %v349 = vld [vmem:[%s329 + $0x48] sm:$0xf]
        %v350 = vld [vmem:[%s329 + $0x4c] sm:$0xf]
        %v351 = vld [vmem:[%s329 + $0x50] sm:$0xf]
        %v352 = vld [vmem:[%s329 + $0x54] sm:$0xf]
        %v353 = vld [vmem:[%s329 + $0x58] sm:$0xf]
        %v354 = vld [vmem:[%s329 + $0x5c] sm:$0xf]
        %v355 = vld [vmem:[%s329 + $0x60] sm:$0x3]
        %v356 = vld [vmem:[#allocation7] sm:$0xf]
        %v357 = vld [vmem:[#allocation7 + $0x4] sm:$0xf]
        %v383 = vunpack.c.l.b16 %v331
        %v384 = vunpack.c.l.b16 %v332
        %v385 = vunpack.c.l.b16 %v333
        %v386 = vunpack.c.l.b16 %v334
        %v387 = vunpack.c.l.b16 %v335
        %v388 = vunpack.c.l.b16 %v336
        %v389 = vunpack.c.l.b16 %v337
        %v390 = vunpack.c.l.b16 %v338
        %v391 = vunpack.c.l.b16 %v339
        %v392 = vunpack.c.l.b16 %v340
        %v393 = vunpack.c.l.b16 %v341
        %v394 = vunpack.c.l.b16 %v342
        %v395 = vunpack.c.l.b16 %v343
        %v396 = vunpack.c.l.b16 %v344
        %v397 = vunpack.c.l.b16 %v345
        %v398 = vunpack.c.l.b16 %v346
        %v399 = vunpack.c.l.b16 %v347
        %v400 = vunpack.c.l.b16 %v348
        %v401 = vunpack.c.l.b16 %v349
        %v402 = vunpack.c.l.b16 %v350
        %v403 = vunpack.c.l.b16 %v351
        %v404 = vunpack.c.l.b16 %v352
        %v405 = vunpack.c.l.b16 %v353
        %v406 = vunpack.c.l.b16 %v354
        %v407 = vunpack.c.l.b16 %v355
        %v408 = vpack.c.b16 %v384, %v383
        %v409 = vpack.c.b16 %v386, %v385
        %v410 = vpack.c.b16 %v388, %v387
        %v411 = vpack.c.b16 %v390, %v389
        %v412 = vpack.c.b16 %v392, %v391
        %v413 = vpack.c.b16 %v394, %v393
        %v414 = vpack.c.b16 %v396, %v395
        %v415 = vpack.c.b16 %v398, %v397
        %v416 = vpack.c.b16 %v400, %v399
        %v417 = vpack.c.b16 %v402, %v401
        %v418 = vpack.c.b16 %v404, %v403
        %v419 = vpack.c.b16 %v406, %v405
        %v420 = vpack.c.b16 %v407, %v407
        %v423 = vunpack.c.l.b16 %v356
        %v424 = vunpack.c.l.b16 %v357
        %v425 = vpack.c.b16 %v424, %v423
        %vm427 = vcmask 130048
        %v429 = vsel %vm427, %v408, 0
        %v432 = vsel %vm427, %v409, 0
        %v435 = vsel %vm427, %v410, 0
        %v438 = vsel %vm427, %v411, 0
        %v441 = vsel %vm427, %v412, 0
        %v444 = vsel %vm427, %v413, 0
        %v447 = vsel %vm427, %v414, 0
        %v450 = vsel %vm427, %v415, 0
        %v453 = vsel %vm427, %v416, 0
        %v456 = vsel %vm427, %v417, 0
        %v459 = vsel %vm427, %v418, 0
        %v462 = vsel %vm427, %v419, 0
        %v465 = vsel %vm427, %v420, 0
        %467 = vmatpush.bf16.msra.mxu0 0
        %468 = vmatpush.bf16.msra.mxu0 0
        %469 = vmatpush.bf16.msra.mxu0 0
        %470 = vmatpush.bf16.msra.mxu0 0
        %471 = vmatpush.bf16.msra.mxu0 0
        %472 = vmatpush.bf16.msra.mxu0 0
        %473 = vmatpush.bf16.msra.mxu0 0
        %474 = vmatpush.bf16.msra.mxu0 %v425
        %475 = vmatmul.bf16.gmra.mxu0 %v429
        %v476 = vpop.f32.mrf.mxu0
        %v477 = vadd.f32 0.0, %v476
        %v478 = vpop.f32.mrf.mxu0
        %v479 = vadd.f32 0.0, %v478
        %480 = vmatmul.bf16.gmra.mxu0 %v432
        %v481 = vpop.f32.mrf.mxu0
        %v482 = vadd.f32 0.0, %v481
        %v483 = vpop.f32.mrf.mxu0
        %v484 = vadd.f32 0.0, %v483
        %485 = vmatmul.bf16.gmra.mxu0 %v435
        %v486 = vpop.f32.mrf.mxu0
        %v487 = vadd.f32 0.0, %v486
        %v488 = vpop.f32.mrf.mxu0
        %v489 = vadd.f32 0.0, %v488
        %490 = vmatmul.bf16.gmra.mxu0 %v438
        %v491 = vpop.f32.mrf.mxu0
        %v492 = vadd.f32 0.0, %v491
        %v493 = vpop.f32.mrf.mxu0
        %v494 = vadd.f32 0.0, %v493
        %495 = vmatmul.bf16.gmra.mxu0 %v441
        %v496 = vpop.f32.mrf.mxu0
        %v497 = vadd.f32 0.0, %v496
        %v498 = vpop.f32.mrf.mxu0
        %v499 = vadd.f32 0.0, %v498
        %500 = vmatmul.bf16.gmra.mxu0 %v444
        %v501 = vpop.f32.mrf.mxu0
        %v502 = vadd.f32 0.0, %v501
        %v503 = vpop.f32.mrf.mxu0
        %v504 = vadd.f32 0.0, %v503
        %505 = vmatmul.bf16.gmra.mxu0 %v447
        %v506 = vpop.f32.mrf.mxu0
        %v507 = vadd.f32 0.0, %v506
        %v508 = vpop.f32.mrf.mxu0
        %v509 = vadd.f32 0.0, %v508
        %510 = vmatmul.bf16.gmra.mxu0 %v450
        %v511 = vpop.f32.mrf.mxu0
        %v512 = vadd.f32 0.0, %v511
        %v513 = vpop.f32.mrf.mxu0
        %v514 = vadd.f32 0.0, %v513
        %515 = vmatmul.bf16.gmra.mxu0 %v453
        %v516 = vpop.f32.mrf.mxu0
        %v517 = vadd.f32 0.0, %v516
        %v518 = vpop.f32.mrf.mxu0
        %v519 = vadd.f32 0.0, %v518
        %520 = vmatmul.bf16.gmra.mxu0 %v456
        %v521 = vpop.f32.mrf.mxu0
        %v522 = vadd.f32 0.0, %v521
        %v523 = vpop.f32.mrf.mxu0
        %v524 = vadd.f32 0.0, %v523
        %525 = vmatmul.bf16.gmra.mxu0 %v459
        %v526 = vpop.f32.mrf.mxu0
        %v527 = vadd.f32 0.0, %v526
        %v528 = vpop.f32.mrf.mxu0
        %v529 = vadd.f32 0.0, %v528
        %530 = vmatmul.bf16.gmra.mxu0 %v462
        %v531 = vpop.f32.mrf.mxu0
        %v532 = vadd.f32 0.0, %v531
        %v533 = vpop.f32.mrf.mxu0
        %v534 = vadd.f32 0.0, %v533
        %535 = vmatmul.bf16.gmra.mxu0 %v465
        %v536 = vpop.f32.mrf.mxu0
        %v537 = vadd.f32 0.0, %v536
        %v538 = vpop.f32.mrf.mxu0
        %539 = vdwg.mxu0
        %v540 = vld [vmem:[#allocation4] sm:$0xff]
        %v541 = vld [vmem:[#allocation4 + $0x8] sm:$0xff]
        %v542 = vpack.c.bf16 %v479, %v477
        %v543 = vpack.c.bf16 %v484, %v482
        %v544 = vpack.c.bf16 %v489, %v487
        %v545 = vpack.c.bf16 %v494, %v492
        %v546 = vpack.c.bf16 %v499, %v497
        %v547 = vpack.c.bf16 %v504, %v502
        %v548 = vpack.c.bf16 %v509, %v507
        %v549 = vpack.c.bf16 %v514, %v512
        %v550 = vpack.c.bf16 %v519, %v517
        %v551 = vpack.c.bf16 %v524, %v522
        %v552 = vpack.c.bf16 %v529, %v527
        %v553 = vpack.c.bf16 %v534, %v532
        %v554 = vpack.c.bf16 %v537, %v537
        %v555 = vld [vmem:[#allocation9] sm:$0x1]
        %v557 = vperm.slane %v555, 0
        %v561 = vunpack.c.l.b16 %v540
        %v562 = vunpack.c.h.b16 %v540
        %v563 = vunpack.c.l.b16 %v541
        %v564 = vunpack.c.h.b16 %v541
        %v565 = vpack.c.b16 %v563, %v561
        %v566 = vpack.c.b16 %v564, %v562
        %vm568 = vcmask 556032
        %v570 = vsel %vm568, %v566, 0
        %vm572 = vcmask 1041408
        %v574 = vsel %vm572, %v554, 0
        %576 = vmatpush.bf16.msra.mxu0 %v549
        %577 = vmatpush.bf16.msra.mxu0 %v548
        %578 = vmatpush.bf16.msra.mxu0 %v547
        %579 = vmatpush.bf16.msra.mxu0 %v546
        %580 = vmatpush.bf16.msra.mxu0 %v545
        %581 = vmatpush.bf16.msra.mxu0 %v544
        %582 = vmatpush.bf16.msra.mxu0 %v543
        %583 = vmatpush.bf16.msra.mxu0 %v542
        %584 = vmatmul.bf16.gmra.mxu0 %v565
        %v585 = vpop.f32.mrf.mxu0
        %v586 = vadd.f32 %v557, %v585
        %v587 = vpop.f32.mrf.mxu0
        %v588 = vadd.f32 %v557, %v587
        %589 = vdwg.mxu0
        %590 = vmatpush.bf16.msra.mxu0 0
        %591 = vmatpush.bf16.msra.mxu0 0
        %592 = vmatpush.bf16.msra.mxu0 0
        %593 = vmatpush.bf16.msra.mxu0 %v574
        %594 = vmatpush.bf16.msra.mxu0 %v553
        %595 = vmatpush.bf16.msra.mxu0 %v552
        %596 = vmatpush.bf16.msra.mxu0 %v551
        %597 = vmatpush.bf16.msra.mxu0 %v550
        %598 = vmatmul.bf16.gmra.mxu0 %v570
        %v599 = vpop.f32.mrf.mxu0
        %v600 = vadd.f32 %v586, %v599
        %v601 = vpop.f32.mrf.mxu0
        %v602 = vadd.f32 %v588, %v601
        %603 = vdwg.mxu0
        %v604 = vmax.f32 %v600, 0.0
        %v605 = vmax.f32 %v602, 0.0
        %606 = vst [vmem:[#allocation2] sm:$0xff] %v604
        %607 = vst [vmem:[#allocation2 + $0x8] sm:$0xff] %v605
        %v608 = vld [vmem:[#allocation2] sm:$0x1]
        %v609 = vlaneseq
        %vm610 = vcmp.ge.s32.totalorder %v609, 0
        %vm611 = vcmp.lt.s32.totalorder %v609, 128
        %vm612 = vmand %vm610, %vm611
        %613 = vst.msk [vmem:[#allocation3] sm:$0x1] %vm612, %v608
        %v614 = vld [vmem:[#allocation2 + $0x1] sm:$0x1]
        %615 = vst.msk [vmem:[#allocation3 + $0x1] sm:$0x1] %vm612, %v614
        %v616 = vld [vmem:[#allocation2 + $0x2] sm:$0x1]
        %617 = vst.msk [vmem:[#allocation3 + $0x2] sm:$0x1] %vm612, %v616
        %v618 = vld [vmem:[#allocation2 + $0x3] sm:$0x1]
        %619 = vst.msk [vmem:[#allocation3 + $0x3] sm:$0x1] %vm612, %v618
        %v620 = vld [vmem:[#allocation2 + $0x4] sm:$0x1]
        %621 = vst.msk [vmem:[#allocation3 + $0x4] sm:$0x1] %vm612, %v620
        %v622 = vld [vmem:[#allocation2 + $0x5] sm:$0x1]
        %623 = vst.msk [vmem:[#allocation3 + $0x5] sm:$0x1] %vm612, %v622
        %v624 = vld [vmem:[#allocation2 + $0x6] sm:$0x1]
        %625 = vst.msk [vmem:[#allocation3 + $0x6] sm:$0x1] %vm612, %v624
        %v626 = vld [vmem:[#allocation2 + $0x7] sm:$0x1]
        %627 = vst.msk [vmem:[#allocation3 + $0x7] sm:$0x1] %vm612, %v626
        %v628 = vld [vmem:[#allocation2 + $0x8] sm:$0x1]
        %629 = vst.msk [vmem:[#allocation3 + $0x8] sm:$0x1] %vm612, %v628
        %v630 = vld [vmem:[#allocation2 + $0x9] sm:$0x1]
        %631 = vst.msk [vmem:[#allocation3 + $0x9] sm:$0x1] %vm612, %v630
        %v632 = vld [vmem:[#allocation2 + $0xa] sm:$0x1]
        %633 = vst.msk [vmem:[#allocation3 + $0xa] sm:$0x1] %vm612, %v632
        %v634 = vld [vmem:[#allocation2 + $0xb] sm:$0x1]
        %635 = vst.msk [vmem:[#allocation3 + $0xb] sm:$0x1] %vm612, %v634
        %v636 = vld [vmem:[#allocation2 + $0xc] sm:$0x1]
        %637 = vst.msk [vmem:[#allocation3 + $0xc] sm:$0x1] %vm612, %v636
        %v638 = vld [vmem:[#allocation2 + $0xd] sm:$0x1]
        %639 = vst.msk [vmem:[#allocation3 + $0xd] sm:$0x1] %vm612, %v638
        %v640 = vld [vmem:[#allocation2 + $0xe] sm:$0x1]
        %641 = vst.msk [vmem:[#allocation3 + $0xe] sm:$0x1] %vm612, %v640
        %v642 = vld [vmem:[#allocation2 + $0xf] sm:$0x1]
        %643 = vst.msk [vmem:[#allocation3 + $0xf] sm:$0x1] %vm612, %v642
        %v644 = vld [vmem:[#allocation3] sm:$0xff]
        %v645 = vld [vmem:[#allocation3 + $0x8] sm:$0xff]
        %v648 = vperm.slane %v644, 0
        %v649 = vperm.slane %v644, 1
        %v650 = vperm.slane %v644, 2
        %v651 = vperm.slane %v644, 3
        %v652 = vperm.slane %v644, 4
        %v653 = vperm.slane %v644, 5
        %v654 = vperm.slane %v644, 6
        %v655 = vperm.slane %v644, 7
        %v656 = vperm.slane %v645, 0
        %v657 = vperm.slane %v645, 1
        %v658 = vperm.slane %v645, 2
        %v659 = vperm.slane %v645, 3
        %v660 = vperm.slane %v645, 4
        %v661 = vperm.slane %v645, 5
        %v662 = vperm.slane %v645, 6
        %v663 = vperm.slane %v645, 7
        %v680 = vpack.c.bf16 %v648, %v648
        %v681 = vpack.c.bf16 %v649, %v649
        %v682 = vpack.c.bf16 %v650, %v650
        %v683 = vpack.c.bf16 %v651, %v651
        %v684 = vpack.c.bf16 %v652, %v652
        %v685 = vpack.c.bf16 %v653, %v653
        %v686 = vpack.c.bf16 %v654, %v654
        %v687 = vpack.c.bf16 %v655, %v655
        %v688 = vpack.c.bf16 %v656, %v656
        %v689 = vpack.c.bf16 %v657, %v657
        %v690 = vpack.c.bf16 %v658, %v658
        %v691 = vpack.c.bf16 %v659, %v659
        %v692 = vpack.c.bf16 %v660, %v660
        %v693 = vpack.c.bf16 %v661, %v661
        %v694 = vpack.c.bf16 %v662, %v662
        %v695 = vpack.c.bf16 %v663, %v663
        %v696 = vld [vmem:[#allocation10] sm:$0xff]
        %v697 = vld [vmem:[#allocation10 + $0x8] sm:$0xff]
        %v698 = vld [vmem:[#allocation10 + $0x10] sm:$0xff]
        %v699 = vld [vmem:[#allocation10 + $0x18] sm:$0xff]
        %v700 = vld [vmem:[#allocation10 + $0x20] sm:$0xff]
        %v701 = vld [vmem:[#allocation10 + $0x28] sm:$0xff]
        %v702 = vld [vmem:[#allocation10 + $0x30] sm:$0xff]
        %v703 = vld [vmem:[#allocation10 + $0x38] sm:$0xff]
        %v704 = vld [vmem:[#allocation10 + $0x40] sm:$0xff]
        %v705 = vld [vmem:[#allocation10 + $0x48] sm:$0xff]
        %v706 = vld [vmem:[#allocation10 + $0x50] sm:$0xff]
        %v707 = vld [vmem:[#allocation10 + $0x58] sm:$0xff]
        %v708 = vld [vmem:[#allocation10 + $0x60] sm:$0xff]
        %v709 = vld [vmem:[#allocation10 + $0x68] sm:$0xff]
        %v710 = vld [vmem:[#allocation10 + $0x70] sm:$0xff]
        %v711 = vld [vmem:[#allocation10 + $0x78] sm:$0xff]
        %v712 = vld [vmem:[#allocation10 + $0x80] sm:$0xff]
        %v713 = vld [vmem:[#allocation10 + $0x88] sm:$0xff]
        %v714 = vld [vmem:[#allocation10 + $0x90] sm:$0xff]
        %v715 = vld [vmem:[#allocation10 + $0x98] sm:$0xff]
        %v716 = vld [vmem:[#allocation10 + $0xa0] sm:$0xff]
        %v717 = vld [vmem:[#allocation10 + $0xa8] sm:$0xff]
        %v718 = vld [vmem:[#allocation10 + $0xb0] sm:$0xff]
        %v719 = vld [vmem:[#allocation10 + $0xb8] sm:$0xff]
        %v720 = vld [vmem:[#allocation10 + $0xc0] sm:$0xff]
        %v721 = vld [vmem:[#allocation10 + $0xc8] sm:$0xff]
        %v722 = vld [vmem:[#allocation10 + $0xd0] sm:$0xff]
        %v723 = vld [vmem:[#allocation10 + $0xd8] sm:$0xff]
        %v724 = vld [vmem:[#allocation10 + $0xe0] sm:$0xff]
        %v725 = vld [vmem:[#allocation10 + $0xe8] sm:$0xff]
        %v726 = vld [vmem:[#allocation10 + $0xf0] sm:$0xff]
        %v727 = vld [vmem:[#allocation10 + $0xf8] sm:$0xff]
        %v728 = vld [vmem:[#allocation10 + $0x100] sm:$0xff]
        %v729 = vld [vmem:[#allocation10 + $0x108] sm:$0xff]
        %v730 = vld [vmem:[#allocation10 + $0x110] sm:$0xff]
        %v731 = vld [vmem:[#allocation10 + $0x118] sm:$0xff]
        %v732 = vld [vmem:[#allocation10 + $0x120] sm:$0xff]
        %v733 = vld [vmem:[#allocation10 + $0x128] sm:$0xff]
        %v734 = vld [vmem:[#allocation10 + $0x130] sm:$0xff]
        %v735 = vld [vmem:[#allocation10 + $0x138] sm:$0xff]
        %v736 = vld [vmem:[#allocation10 + $0x140] sm:$0xff]
        %v737 = vld [vmem:[#allocation10 + $0x148] sm:$0xff]
        %v738 = vld [vmem:[#allocation10 + $0x150] sm:$0xff]
        %v739 = vld [vmem:[#allocation10 + $0x158] sm:$0xff]
        %v740 = vld [vmem:[#allocation10 + $0x160] sm:$0xff]
        %v741 = vld [vmem:[#allocation10 + $0x168] sm:$0xff]
        %v742 = vld [vmem:[#allocation10 + $0x170] sm:$0xff]
        %v743 = vld [vmem:[#allocation10 + $0x178] sm:$0xff]
        %v744 = vld [vmem:[#allocation10 + $0x180] sm:$0xff]
        %v745 = vld [vmem:[#allocation10 + $0x188] sm:$0xff]
        %v746 = vld [vmem:[#allocation10 + $0x190] sm:$0xff]
        %v747 = vld [vmem:[#allocation10 + $0x198] sm:$0xff]
        %v748 = vld [vmem:[#allocation10 + $0x1a0] sm:$0xff]
        %v749 = vld [vmem:[#allocation10 + $0x1a8] sm:$0xff]
        %v750 = vld [vmem:[#allocation10 + $0x1b0] sm:$0xff]
        %v751 = vld [vmem:[#allocation10 + $0x1b8] sm:$0xff]
        %v752 = vld [vmem:[#allocation10 + $0x1c0] sm:$0xff]
        %v753 = vld [vmem:[#allocation10 + $0x1c8] sm:$0xff]
        %v754 = vld [vmem:[#allocation10 + $0x1d0] sm:$0xff]
        %v755 = vld [vmem:[#allocation10 + $0x1d8] sm:$0xff]
        %v756 = vld [vmem:[#allocation10 + $0x1e0] sm:$0xff]
        %v757 = vld [vmem:[#allocation10 + $0x1e8] sm:$0xff]
        %v758 = vld [vmem:[#allocation10 + $0x1f0] sm:$0xff]
        %v759 = vld [vmem:[#allocation10 + $0x1f8] sm:$0xff]
        %v760 = vld [vmem:[#allocation10 + $0x200] sm:$0xff]
        %v761 = vld [vmem:[#allocation10 + $0x208] sm:$0xff]
        %v762 = vld [vmem:[#allocation10 + $0x210] sm:$0xff]
        %v763 = vld [vmem:[#allocation10 + $0x218] sm:$0xff]
        %v764 = vld [vmem:[#allocation10 + $0x220] sm:$0xff]
        %v765 = vld [vmem:[#allocation10 + $0x228] sm:$0xff]
        %v766 = vld [vmem:[#allocation10 + $0x230] sm:$0xff]
        %v767 = vld [vmem:[#allocation10 + $0x238] sm:$0xff]
        %v768 = vld [vmem:[#allocation10 + $0x240] sm:$0xff]
        %v769 = vld [vmem:[#allocation10 + $0x248] sm:$0xff]
        %v770 = vld [vmem:[#allocation10 + $0x250] sm:$0xff]
        %v771 = vld [vmem:[#allocation10 + $0x258] sm:$0xff]
        %v772 = vld [vmem:[#allocation10 + $0x260] sm:$0xff]
        %v773 = vld [vmem:[#allocation10 + $0x268] sm:$0xff]
        %v774 = vld [vmem:[#allocation10 + $0x270] sm:$0xff]
        %v775 = vld [vmem:[#allocation10 + $0x278] sm:$0xff]
        %v776 = vld [vmem:[#allocation10 + $0x280] sm:$0xff]
        %v777 = vld [vmem:[#allocation10 + $0x288] sm:$0xff]
        %v778 = vld [vmem:[#allocation10 + $0x290] sm:$0xff]
        %v779 = vld [vmem:[#allocation10 + $0x298] sm:$0xff]
        %v780 = vld [vmem:[#allocation10 + $0x2a0] sm:$0xff]
        %v781 = vld [vmem:[#allocation10 + $0x2a8] sm:$0xff]
        %v782 = vld [vmem:[#allocation10 + $0x2b0] sm:$0xff]
        %v783 = vld [vmem:[#allocation10 + $0x2b8] sm:$0xff]
        %v784 = vld [vmem:[#allocation10 + $0x2c0] sm:$0xff]
        %v785 = vld [vmem:[#allocation10 + $0x2c8] sm:$0xff]
        %v786 = vld [vmem:[#allocation10 + $0x2d0] sm:$0xff]
        %v787 = vld [vmem:[#allocation10 + $0x2d8] sm:$0xff]
        %v788 = vld [vmem:[#allocation10 + $0x2e0] sm:$0xff]
        %v789 = vld [vmem:[#allocation10 + $0x2e8] sm:$0xff]
        %v790 = vld [vmem:[#allocation10 + $0x2f0] sm:$0xff]
        %v791 = vld [vmem:[#allocation10 + $0x2f8] sm:$0xff]
        %v792 = vld [vmem:[#allocation10 + $0x300] sm:$0xff]
        %v793 = vld [vmem:[#allocation10 + $0x308] sm:$0xff]
        %v794 = vld [vmem:[#allocation10 + $0x310] sm:$0xff]
        %v795 = vld [vmem:[#allocation10 + $0x318] sm:$0xff]
        %v796 = vld [vmem:[#allocation10 + $0x320] sm:$0xff]
        %v797 = vld [vmem:[#allocation10 + $0x328] sm:$0xff]
        %v798 = vld [vmem:[#allocation10 + $0x330] sm:$0xff]
        %v799 = vld [vmem:[#allocation10 + $0x338] sm:$0xff]
        %v800 = vld [vmem:[#allocation10 + $0x340] sm:$0xff]
        %v801 = vld [vmem:[#allocation10 + $0x348] sm:$0xff]
        %v802 = vld [vmem:[#allocation10 + $0x350] sm:$0xff]
        %v803 = vld [vmem:[#allocation10 + $0x358] sm:$0xff]
        %v804 = vld [vmem:[#allocation10 + $0x360] sm:$0xff]
        %v805 = vld [vmem:[#allocation10 + $0x368] sm:$0xff]
        %v806 = vld [vmem:[#allocation10 + $0x370] sm:$0xff]
        %v807 = vld [vmem:[#allocation10 + $0x378] sm:$0xff]
        %v808 = vld [vmem:[#allocation10 + $0x380] sm:$0xff]
        %v809 = vld [vmem:[#allocation10 + $0x388] sm:$0xff]
        %v810 = vld [vmem:[#allocation10 + $0x390] sm:$0xff]
        %v811 = vld [vmem:[#allocation10 + $0x398] sm:$0xff]
        %v812 = vld [vmem:[#allocation10 + $0x3a0] sm:$0xff]
        %v813 = vld [vmem:[#allocation10 + $0x3a8] sm:$0xff]
        %v814 = vld [vmem:[#allocation10 + $0x3b0] sm:$0xff]
        %v815 = vld [vmem:[#allocation10 + $0x3b8] sm:$0xff]
        %v816 = vld [vmem:[#allocation10 + $0x3c0] sm:$0xff]
        %v817 = vld [vmem:[#allocation10 + $0x3c8] sm:$0xff]
        %v818 = vld [vmem:[#allocation10 + $0x3d0] sm:$0xff]
        %v819 = vld [vmem:[#allocation10 + $0x3d8] sm:$0xff]
        %v820 = vld [vmem:[#allocation10 + $0x3e0] sm:$0xff]
        %v821 = vld [vmem:[#allocation10 + $0x3e8] sm:$0xff]
        %v822 = vld [vmem:[#allocation10 + $0x3f0] sm:$0xff]
        %v823 = vld [vmem:[#allocation10 + $0x3f8] sm:$0xff]
        %v824 = vld [vmem:[#allocation10 + $0x400] sm:$0xff]
        %v825 = vld [vmem:[#allocation10 + $0x408] sm:$0xff]
        %v826 = vld [vmem:[#allocation10 + $0x410] sm:$0xff]
        %v827 = vld [vmem:[#allocation10 + $0x418] sm:$0xff]
        %v828 = vld [vmem:[#allocation10 + $0x420] sm:$0xff]
        %v829 = vld [vmem:[#allocation10 + $0x428] sm:$0xff]
        %v830 = vld [vmem:[#allocation10 + $0x430] sm:$0xff]
        %v831 = vld [vmem:[#allocation10 + $0x438] sm:$0xff]
        %v832 = vld [vmem:[#allocation10 + $0x440] sm:$0xff]
        %v833 = vld [vmem:[#allocation10 + $0x448] sm:$0xff]
        %v834 = vld [vmem:[#allocation10 + $0x450] sm:$0xff]
        %v835 = vld [vmem:[#allocation10 + $0x458] sm:$0xff]
        %v836 = vld [vmem:[#allocation10 + $0x460] sm:$0xff]
        %v837 = vld [vmem:[#allocation10 + $0x468] sm:$0xff]
        %v838 = vld [vmem:[#allocation10 + $0x470] sm:$0xff]
        %v839 = vld [vmem:[#allocation10 + $0x478] sm:$0xff]
        %v840 = vld [vmem:[#allocation10 + $0x480] sm:$0xff]
        %v841 = vld [vmem:[#allocation10 + $0x488] sm:$0xff]
        %v842 = vld [vmem:[#allocation10 + $0x490] sm:$0xff]
        %v843 = vld [vmem:[#allocation10 + $0x498] sm:$0xff]
        %v844 = vld [vmem:[#allocation10 + $0x4a0] sm:$0xff]
        %v845 = vld [vmem:[#allocation10 + $0x4a8] sm:$0xff]
        %v846 = vld [vmem:[#allocation10 + $0x4b0] sm:$0xff]
        %v847 = vld [vmem:[#allocation10 + $0x4b8] sm:$0xff]
        %v848 = vld [vmem:[#allocation10 + $0x4c0] sm:$0xff]
        %v849 = vld [vmem:[#allocation10 + $0x4c8] sm:$0xff]
        %v850 = vld [vmem:[#allocation10 + $0x4d0] sm:$0xff]
        %v851 = vld [vmem:[#allocation10 + $0x4d8] sm:$0xff]
        %v852 = vld [vmem:[#allocation10 + $0x4e0] sm:$0xff]
        %v853 = vld [vmem:[#allocation10 + $0x4e8] sm:$0xff]
        %v854 = vld [vmem:[#allocation10 + $0x4f0] sm:$0xff]
        %v855 = vld [vmem:[#allocation10 + $0x4f8] sm:$0xff]
        %v856 = vld [vmem:[#allocation10 + $0x500] sm:$0xff]
        %v857 = vld [vmem:[#allocation10 + $0x508] sm:$0xff]
        %v858 = vld [vmem:[#allocation10 + $0x510] sm:$0xff]
        %v859 = vld [vmem:[#allocation10 + $0x518] sm:$0xff]
        %v860 = vld [vmem:[#allocation10 + $0x520] sm:$0xff]
        %v861 = vld [vmem:[#allocation10 + $0x528] sm:$0xff]
        %v862 = vld [vmem:[#allocation10 + $0x530] sm:$0xff]
        %v863 = vld [vmem:[#allocation10 + $0x538] sm:$0xff]
        %v864 = vld [vmem:[#allocation10 + $0x540] sm:$0xff]
        %v865 = vld [vmem:[#allocation10 + $0x548] sm:$0xff]
        %v866 = vld [vmem:[#allocation10 + $0x550] sm:$0xff]
        %v867 = vld [vmem:[#allocation10 + $0x558] sm:$0xff]
        %v868 = vld [vmem:[#allocation10 + $0x560] sm:$0xff]
        %v869 = vld [vmem:[#allocation10 + $0x568] sm:$0xff]
        %v870 = vld [vmem:[#allocation10 + $0x570] sm:$0xff]
        %v871 = vld [vmem:[#allocation10 + $0x578] sm:$0xff]
        %v872 = vld [vmem:[#allocation10 + $0x580] sm:$0xff]
        %v873 = vld [vmem:[#allocation10 + $0x588] sm:$0xff]
        %v874 = vld [vmem:[#allocation10 + $0x590] sm:$0xff]
        %v875 = vld [vmem:[#allocation10 + $0x598] sm:$0xff]
        %v876 = vld [vmem:[#allocation10 + $0x5a0] sm:$0xff]
        %v877 = vld [vmem:[#allocation10 + $0x5a8] sm:$0xff]
        %v878 = vld [vmem:[#allocation10 + $0x5b0] sm:$0xff]
        %v879 = vld [vmem:[#allocation10 + $0x5b8] sm:$0xff]
        %v880 = vld [vmem:[#allocation10 + $0x5c0] sm:$0xff]
        %v881 = vld [vmem:[#allocation10 + $0x5c8] sm:$0xff]
        %v882 = vld [vmem:[#allocation10 + $0x5d0] sm:$0xff]
        %v883 = vld [vmem:[#allocation10 + $0x5d8] sm:$0xff]
        %v884 = vld [vmem:[#allocation10 + $0x5e0] sm:$0xff]
        %v885 = vld [vmem:[#allocation10 + $0x5e8] sm:$0xff]
        %v886 = vld [vmem:[#allocation10 + $0x5f0] sm:$0xff]
        %v887 = vld [vmem:[#allocation10 + $0x5f8] sm:$0xff]
        %v888 = vld [vmem:[#allocation10 + $0x600] sm:$0xff]
        %v889 = vld [vmem:[#allocation10 + $0x608] sm:$0xff]
        %v890 = vld [vmem:[#allocation10 + $0x610] sm:$0xff]
        %v891 = vld [vmem:[#allocation10 + $0x618] sm:$0xff]
        %v892 = vld [vmem:[#allocation10 + $0x620] sm:$0xff]
        %v893 = vld [vmem:[#allocation10 + $0x628] sm:$0xff]
        %v894 = vld [vmem:[#allocation10 + $0x630] sm:$0xff]
        %v895 = vld [vmem:[#allocation10 + $0x638] sm:$0xff]
        %v896 = vld [vmem:[#allocation10 + $0x640] sm:$0xff]
        %v897 = vld [vmem:[#allocation10 + $0x648] sm:$0xff]
        %v898 = vld [vmem:[#allocation10 + $0x650] sm:$0xff]
        %v899 = vld [vmem:[#allocation10 + $0x658] sm:$0xff]
        %v900 = vld [vmem:[#allocation10 + $0x660] sm:$0xff]
        %v901 = vld [vmem:[#allocation10 + $0x668] sm:$0xff]
        %v902 = vld [vmem:[#allocation10 + $0x670] sm:$0xff]
        %v903 = vld [vmem:[#allocation10 + $0x678] sm:$0xff]
        %v904 = vld [vmem:[#allocation10 + $0x680] sm:$0xff]
        %v905 = vld [vmem:[#allocation10 + $0x688] sm:$0xff]
        %v906 = vld [vmem:[#allocation10 + $0x690] sm:$0xff]
        %v907 = vld [vmem:[#allocation10 + $0x698] sm:$0xff]
        %v908 = vld [vmem:[#allocation10 + $0x6a0] sm:$0xff]
        %v909 = vld [vmem:[#allocation10 + $0x6a8] sm:$0xff]
        %v910 = vld [vmem:[#allocation10 + $0x6b0] sm:$0xff]
        %v911 = vld [vmem:[#allocation10 + $0x6b8] sm:$0xff]
        %v912 = vld [vmem:[#allocation10 + $0x6c0] sm:$0xff]
        %v913 = vld [vmem:[#allocation10 + $0x6c8] sm:$0xff]
        %v914 = vld [vmem:[#allocation10 + $0x6d0] sm:$0xff]
        %v915 = vld [vmem:[#allocation10 + $0x6d8] sm:$0xff]
        %v916 = vld [vmem:[#allocation10 + $0x6e0] sm:$0xff]
        %v917 = vld [vmem:[#allocation10 + $0x6e8] sm:$0xff]
        %v918 = vld [vmem:[#allocation10 + $0x6f0] sm:$0xff]
        %v919 = vld [vmem:[#allocation10 + $0x6f8] sm:$0xff]
        %v920 = vld [vmem:[#allocation10 + $0x700] sm:$0xff]
        %v921 = vld [vmem:[#allocation10 + $0x708] sm:$0xff]
        %v922 = vld [vmem:[#allocation10 + $0x710] sm:$0xff]
        %v923 = vld [vmem:[#allocation10 + $0x718] sm:$0xff]
        %v924 = vld [vmem:[#allocation10 + $0x720] sm:$0xff]
        %v925 = vld [vmem:[#allocation10 + $0x728] sm:$0xff]
        %v926 = vld [vmem:[#allocation10 + $0x730] sm:$0xff]
        %v927 = vld [vmem:[#allocation10 + $0x738] sm:$0xff]
        %v928 = vld [vmem:[#allocation10 + $0x740] sm:$0xff]
        %v929 = vld [vmem:[#allocation10 + $0x748] sm:$0xff]
        %v930 = vld [vmem:[#allocation10 + $0x750] sm:$0xff]
        %v931 = vld [vmem:[#allocation10 + $0x758] sm:$0xff]
        %v932 = vld [vmem:[#allocation10 + $0x760] sm:$0xff]
        %v933 = vld [vmem:[#allocation10 + $0x768] sm:$0xff]
        %v934 = vld [vmem:[#allocation10 + $0x770] sm:$0xff]
        %v935 = vld [vmem:[#allocation10 + $0x778] sm:$0xff]
        %v936 = vld [vmem:[#allocation10 + $0x780] sm:$0xff]
        %v937 = vld [vmem:[#allocation10 + $0x788] sm:$0xff]
        %v938 = vld [vmem:[#allocation10 + $0x790] sm:$0xff]
        %v939 = vld [vmem:[#allocation10 + $0x798] sm:$0xff]
        %v940 = vld [vmem:[#allocation10 + $0x7a0] sm:$0xff]
        %v941 = vld [vmem:[#allocation10 + $0x7a8] sm:$0xff]
        %v942 = vld [vmem:[#allocation10 + $0x7b0] sm:$0xff]
        %v943 = vld [vmem:[#allocation10 + $0x7b8] sm:$0xff]
        %v944 = vld [vmem:[#allocation10 + $0x7c0] sm:$0xff]
        %v945 = vld [vmem:[#allocation10 + $0x7c8] sm:$0xff]
        %v946 = vld [vmem:[#allocation10 + $0x7d0] sm:$0xff]
        %v947 = vld [vmem:[#allocation10 + $0x7d8] sm:$0xff]
        %v948 = vld [vmem:[#allocation10 + $0x7e0] sm:$0xff]
        %v949 = vld [vmem:[#allocation10 + $0x7e8] sm:$0xff]
        %v950 = vld [vmem:[#allocation10 + $0x7f0] sm:$0xff]
        %v951 = vld [vmem:[#allocation10 + $0x7f8] sm:$0xff]
        %v952 = vld [vmem:[#allocation10 + $0x800] sm:$0xff]
        %v953 = vld [vmem:[#allocation10 + $0x808] sm:$0xff]
        %v954 = vld [vmem:[#allocation10 + $0x810] sm:$0xff]
        %v955 = vld [vmem:[#allocation10 + $0x818] sm:$0xff]
        %v956 = vld [vmem:[#allocation10 + $0x820] sm:$0xff]
        %v957 = vld [vmem:[#allocation10 + $0x828] sm:$0xff]
        %v958 = vld [vmem:[#allocation10 + $0x830] sm:$0xff]
        %v959 = vld [vmem:[#allocation10 + $0x838] sm:$0xff]
        %v960 = vld [vmem:[#allocation10 + $0x840] sm:$0xff]
        %v961 = vld [vmem:[#allocation10 + $0x848] sm:$0xff]
        %v962 = vld [vmem:[#allocation10 + $0x850] sm:$0xff]
        %v963 = vld [vmem:[#allocation10 + $0x858] sm:$0xff]
        %v964 = vld [vmem:[#allocation10 + $0x860] sm:$0xff]
        %v965 = vld [vmem:[#allocation10 + $0x868] sm:$0xff]
        %v966 = vld [vmem:[#allocation10 + $0x870] sm:$0xff]
        %v967 = vld [vmem:[#allocation10 + $0x878] sm:$0xff]
        %v968 = vld [vmem:[#allocation10 + $0x880] sm:$0xff]
        %v969 = vld [vmem:[#allocation10 + $0x888] sm:$0xff]
        %v970 = vld [vmem:[#allocation10 + $0x890] sm:$0xff]
        %v971 = vld [vmem:[#allocation10 + $0x898] sm:$0xff]
        %v972 = vld [vmem:[#allocation10 + $0x8a0] sm:$0xff]
        %v973 = vld [vmem:[#allocation10 + $0x8a8] sm:$0xff]
        %v974 = vld [vmem:[#allocation10 + $0x8b0] sm:$0xff]
        %v975 = vld [vmem:[#allocation10 + $0x8b8] sm:$0xff]
        %v976 = vld [vmem:[#allocation10 + $0x8c0] sm:$0xff]
        %v977 = vld [vmem:[#allocation10 + $0x8c8] sm:$0xff]
        %v978 = vld [vmem:[#allocation10 + $0x8d0] sm:$0xff]
        %v979 = vld [vmem:[#allocation10 + $0x8d8] sm:$0xff]
        %v980 = vld [vmem:[#allocation10 + $0x8e0] sm:$0xff]
        %v981 = vld [vmem:[#allocation10 + $0x8e8] sm:$0xff]
        %v982 = vld [vmem:[#allocation10 + $0x8f0] sm:$0xff]
        %v983 = vld [vmem:[#allocation10 + $0x8f8] sm:$0xff]
        %v984 = vld [vmem:[#allocation10 + $0x900] sm:$0xff]
        %v985 = vld [vmem:[#allocation10 + $0x908] sm:$0xff]
        %v986 = vld [vmem:[#allocation10 + $0x910] sm:$0xff]
        %v987 = vld [vmem:[#allocation10 + $0x918] sm:$0xff]
        %v988 = vld [vmem:[#allocation10 + $0x920] sm:$0xff]
        %v989 = vld [vmem:[#allocation10 + $0x928] sm:$0xff]
        %v990 = vld [vmem:[#allocation10 + $0x930] sm:$0xff]
        %v991 = vld [vmem:[#allocation10 + $0x938] sm:$0xff]
        %v992 = vld [vmem:[#allocation10 + $0x940] sm:$0xff]
        %v993 = vld [vmem:[#allocation10 + $0x948] sm:$0xff]
        %v994 = vld [vmem:[#allocation10 + $0x950] sm:$0xff]
        %v995 = vld [vmem:[#allocation10 + $0x958] sm:$0xff]
        %v996 = vld [vmem:[#allocation10 + $0x960] sm:$0xff]
        %v997 = vld [vmem:[#allocation10 + $0x968] sm:$0xff]
        %v998 = vld [vmem:[#allocation10 + $0x970] sm:$0xff]
        %v999 = vld [vmem:[#allocation10 + $0x978] sm:$0xff]
        %v1000 = vld [vmem:[#allocation10 + $0x980] sm:$0xff]
        %v1001 = vld [vmem:[#allocation10 + $0x988] sm:$0xff]
        %v1002 = vld [vmem:[#allocation10 + $0x990] sm:$0xff]
        %v1003 = vld [vmem:[#allocation10 + $0x998] sm:$0xff]
        %v1004 = vld [vmem:[#allocation10 + $0x9a0] sm:$0xff]
        %v1005 = vld [vmem:[#allocation10 + $0x9a8] sm:$0xff]
        %v1006 = vld [vmem:[#allocation10 + $0x9b0] sm:$0xff]
        %v1007 = vld [vmem:[#allocation10 + $0x9b8] sm:$0xff]
        %v1008 = vld [vmem:[#allocation10 + $0x9c0] sm:$0xff]
        %v1009 = vld [vmem:[#allocation10 + $0x9c8] sm:$0xff]
        %v1010 = vld [vmem:[#allocation10 + $0x9d0] sm:$0xff]
        %v1011 = vld [vmem:[#allocation10 + $0x9d8] sm:$0xff]
        %v1012 = vld [vmem:[#allocation10 + $0x9e0] sm:$0xff]
        %v1013 = vld [vmem:[#allocation10 + $0x9e8] sm:$0xff]
        %v1014 = vld [vmem:[#allocation10 + $0x9f0] sm:$0xff]
        %v1015 = vld [vmem:[#allocation10 + $0x9f8] sm:$0xff]
        %v1016 = vld [vmem:[#allocation10 + $0xa00] sm:$0xff]
        %v1017 = vld [vmem:[#allocation10 + $0xa08] sm:$0xff]
        %v1018 = vld [vmem:[#allocation10 + $0xa10] sm:$0xff]
        %v1019 = vld [vmem:[#allocation10 + $0xa18] sm:$0xff]
        %v1020 = vld [vmem:[#allocation10 + $0xa20] sm:$0xff]
        %v1021 = vld [vmem:[#allocation10 + $0xa28] sm:$0xff]
        %v1022 = vld [vmem:[#allocation10 + $0xa30] sm:$0xff]
        %v1023 = vld [vmem:[#allocation10 + $0xa38] sm:$0xff]
        %v1024 = vld [vmem:[#allocation10 + $0xa40] sm:$0xff]
        %v1025 = vld [vmem:[#allocation10 + $0xa48] sm:$0xff]
        %v1026 = vld [vmem:[#allocation10 + $0xa50] sm:$0xff]
        %v1027 = vld [vmem:[#allocation10 + $0xa58] sm:$0xff]
        %v1028 = vld [vmem:[#allocation10 + $0xa60] sm:$0xff]
        %v1029 = vld [vmem:[#allocation10 + $0xa68] sm:$0xff]
        %v1030 = vld [vmem:[#allocation10 + $0xa70] sm:$0xff]
        %v1031 = vld [vmem:[#allocation10 + $0xa78] sm:$0xff]
        %v1032 = vld [vmem:[#allocation10 + $0xa80] sm:$0xff]
        %v1033 = vld [vmem:[#allocation10 + $0xa88] sm:$0xff]
        %v1034 = vld [vmem:[#allocation10 + $0xa90] sm:$0xff]
        %v1035 = vld [vmem:[#allocation10 + $0xa98] sm:$0xff]
        %v1036 = vld [vmem:[#allocation10 + $0xaa0] sm:$0xff]
        %v1037 = vld [vmem:[#allocation10 + $0xaa8] sm:$0xff]
        %v1038 = vld [vmem:[#allocation10 + $0xab0] sm:$0xff]
        %v1039 = vld [vmem:[#allocation10 + $0xab8] sm:$0xff]
        %v1040 = vld [vmem:[#allocation10 + $0xac0] sm:$0xff]
        %v1041 = vld [vmem:[#allocation10 + $0xac8] sm:$0xff]
        %v1042 = vld [vmem:[#allocation10 + $0xad0] sm:$0xff]
        %v1043 = vld [vmem:[#allocation10 + $0xad8] sm:$0xff]
        %v1044 = vld [vmem:[#allocation10 + $0xae0] sm:$0xff]
        %v1045 = vld [vmem:[#allocation10 + $0xae8] sm:$0xff]
        %v1046 = vld [vmem:[#allocation10 + $0xaf0] sm:$0xff]
        %v1047 = vld [vmem:[#allocation10 + $0xaf8] sm:$0xff]
        %v1048 = vld [vmem:[#allocation10 + $0xb00] sm:$0xff]
        %v1049 = vld [vmem:[#allocation10 + $0xb08] sm:$0xff]
        %v1050 = vld [vmem:[#allocation10 + $0xb10] sm:$0xff]
        %v1051 = vld [vmem:[#allocation10 + $0xb18] sm:$0xff]
        %v1052 = vld [vmem:[#allocation10 + $0xb20] sm:$0xff]
        %v1053 = vld [vmem:[#allocation10 + $0xb28] sm:$0xff]
        %v1054 = vld [vmem:[#allocation10 + $0xb30] sm:$0xff]
        %v1055 = vld [vmem:[#allocation10 + $0xb38] sm:$0xff]
        %v1056 = vld [vmem:[#allocation10 + $0xb40] sm:$0xff]
        %v1057 = vld [vmem:[#allocation10 + $0xb48] sm:$0xff]
        %v1058 = vld [vmem:[#allocation10 + $0xb50] sm:$0xff]
        %v1059 = vld [vmem:[#allocation10 + $0xb58] sm:$0xff]
        %v1060 = vld [vmem:[#allocation10 + $0xb60] sm:$0xff]
        %v1061 = vld [vmem:[#allocation10 + $0xb68] sm:$0xff]
        %v1062 = vld [vmem:[#allocation10 + $0xb70] sm:$0xff]
        %v1063 = vld [vmem:[#allocation10 + $0xb78] sm:$0xff]
        %v1064 = vld [vmem:[#allocation10 + $0xb80] sm:$0xff]
        %v1065 = vld [vmem:[#allocation10 + $0xb88] sm:$0xff]
        %v1066 = vld [vmem:[#allocation10 + $0xb90] sm:$0xff]
        %v1067 = vld [vmem:[#allocation10 + $0xb98] sm:$0xff]
        %v1068 = vld [vmem:[#allocation10 + $0xba0] sm:$0xff]
        %v1069 = vld [vmem:[#allocation10 + $0xba8] sm:$0xff]
        %v1070 = vld [vmem:[#allocation10 + $0xbb0] sm:$0xff]
        %v1071 = vld [vmem:[#allocation10 + $0xbb8] sm:$0xff]
        %v1072 = vld [vmem:[#allocation10 + $0xbc0] sm:$0xff]
        %v1073 = vld [vmem:[#allocation10 + $0xbc8] sm:$0xff]
        %v1074 = vld [vmem:[#allocation10 + $0xbd0] sm:$0xff]
        %v1075 = vld [vmem:[#allocation10 + $0xbd8] sm:$0xff]
        %v1076 = vld [vmem:[#allocation10 + $0xbe0] sm:$0xff]
        %v1077 = vld [vmem:[#allocation10 + $0xbe8] sm:$0xff]
        %v1078 = vld [vmem:[#allocation10 + $0xbf0] sm:$0xff]
        %v1079 = vld [vmem:[#allocation10 + $0xbf8] sm:$0xff]
        %v1080 = vld [vmem:[#allocation10 + $0xc00] sm:$0xff]
        %v1081 = vld [vmem:[#allocation10 + $0xc08] sm:$0xff]
        %v1082 = vld [vmem:[#allocation10 + $0xc10] sm:$0xff]
        %v1083 = vld [vmem:[#allocation10 + $0xc18] sm:$0xff]
        %v1084 = vld [vmem:[#allocation10 + $0xc20] sm:$0xff]
        %v1085 = vld [vmem:[#allocation10 + $0xc28] sm:$0xff]
        %v1086 = vld [vmem:[#allocation10 + $0xc30] sm:$0xff]
        %v1087 = vld [vmem:[#allocation10 + $0xc38] sm:$0xff]
        %v1088 = vld [vmem:[#allocation10 + $0xc40] sm:$0xff]
        %v1089 = vld [vmem:[#allocation10 + $0xc48] sm:$0xff]
        %v1090 = vld [vmem:[#allocation10 + $0xc50] sm:$0xff]
        %v1091 = vld [vmem:[#allocation10 + $0xc58] sm:$0xff]
        %v1092 = vld [vmem:[#allocation10 + $0xc60] sm:$0xff]
        %v1093 = vld [vmem:[#allocation10 + $0xc68] sm:$0xff]
        %v1094 = vld [vmem:[#allocation10 + $0xc70] sm:$0xff]
        %v1095 = vld [vmem:[#allocation10 + $0xc78] sm:$0xff]
        %v1096 = vld [vmem:[#allocation10 + $0xc80] sm:$0xff]
        %v1097 = vld [vmem:[#allocation10 + $0xc88] sm:$0xff]
        %v1098 = vld [vmem:[#allocation10 + $0xc90] sm:$0xff]
        %v1099 = vld [vmem:[#allocation10 + $0xc98] sm:$0xff]
        %v1100 = vld [vmem:[#allocation10 + $0xca0] sm:$0xff]
        %v1101 = vld [vmem:[#allocation10 + $0xca8] sm:$0xff]
        %v1102 = vld [vmem:[#allocation10 + $0xcb0] sm:$0xff]
        %v1103 = vld [vmem:[#allocation10 + $0xcb8] sm:$0xff]
        %v1104 = vld [vmem:[#allocation10 + $0xcc0] sm:$0xff]
        %v1105 = vld [vmem:[#allocation10 + $0xcc8] sm:$0xff]
        %v1106 = vld [vmem:[#allocation10 + $0xcd0] sm:$0xff]
        %v1107 = vld [vmem:[#allocation10 + $0xcd8] sm:$0xff]
        %v1108 = vld [vmem:[#allocation10 + $0xce0] sm:$0xff]
        %v1109 = vld [vmem:[#allocation10 + $0xce8] sm:$0xff]
        %v1110 = vld [vmem:[#allocation10 + $0xcf0] sm:$0xff]
        %v1111 = vld [vmem:[#allocation10 + $0xcf8] sm:$0xff]
        %v1112 = vld [vmem:[#allocation10 + $0xd00] sm:$0xff]
        %v1113 = vld [vmem:[#allocation10 + $0xd08] sm:$0xff]
        %v1114 = vld [vmem:[#allocation10 + $0xd10] sm:$0xff]
        %v1115 = vld [vmem:[#allocation10 + $0xd18] sm:$0xff]
        %v1116 = vld [vmem:[#allocation10 + $0xd20] sm:$0xff]
        %v1117 = vld [vmem:[#allocation10 + $0xd28] sm:$0xff]
        %v1118 = vld [vmem:[#allocation10 + $0xd30] sm:$0xff]
        %v1119 = vld [vmem:[#allocation10 + $0xd38] sm:$0xff]
        %v1120 = vld [vmem:[#allocation10 + $0xd40] sm:$0xff]
        %v1121 = vld [vmem:[#allocation10 + $0xd48] sm:$0xff]
        %v1122 = vld [vmem:[#allocation10 + $0xd50] sm:$0xff]
        %v1123 = vld [vmem:[#allocation10 + $0xd58] sm:$0xff]
        %v1124 = vld [vmem:[#allocation10 + $0xd60] sm:$0xff]
        %v1125 = vld [vmem:[#allocation10 + $0xd68] sm:$0xff]
        %v1126 = vld [vmem:[#allocation10 + $0xd70] sm:$0xff]
        %v1127 = vld [vmem:[#allocation10 + $0xd78] sm:$0xff]
        %v1128 = vld [vmem:[#allocation10 + $0xd80] sm:$0xff]
        %v1129 = vld [vmem:[#allocation10 + $0xd88] sm:$0xff]
        %v1130 = vld [vmem:[#allocation10 + $0xd90] sm:$0xff]
        %v1131 = vld [vmem:[#allocation10 + $0xd98] sm:$0xff]
        %v1132 = vld [vmem:[#allocation10 + $0xda0] sm:$0xff]
        %v1133 = vld [vmem:[#allocation10 + $0xda8] sm:$0xff]
        %v1134 = vld [vmem:[#allocation10 + $0xdb0] sm:$0xff]
        %v1135 = vld [vmem:[#allocation10 + $0xdb8] sm:$0xff]
        %v1136 = vld [vmem:[#allocation10 + $0xdc0] sm:$0xff]
        %v1137 = vld [vmem:[#allocation10 + $0xdc8] sm:$0xff]
        %v1138 = vld [vmem:[#allocation10 + $0xdd0] sm:$0xff]
        %v1139 = vld [vmem:[#allocation10 + $0xdd8] sm:$0xff]
        %v1140 = vld [vmem:[#allocation10 + $0xde0] sm:$0xff]
        %v1141 = vld [vmem:[#allocation10 + $0xde8] sm:$0xff]
        %v1142 = vld [vmem:[#allocation10 + $0xdf0] sm:$0xff]
        %v1143 = vld [vmem:[#allocation10 + $0xdf8] sm:$0xff]
        %v1144 = vld [vmem:[#allocation10 + $0xe00] sm:$0xff]
        %v1145 = vld [vmem:[#allocation10 + $0xe08] sm:$0xff]
        %v1146 = vld [vmem:[#allocation10 + $0xe10] sm:$0xff]
        %v1147 = vld [vmem:[#allocation10 + $0xe18] sm:$0xff]
        %v1148 = vld [vmem:[#allocation10 + $0xe20] sm:$0xff]
        %v1149 = vld [vmem:[#allocation10 + $0xe28] sm:$0xff]
        %v1150 = vld [vmem:[#allocation10 + $0xe30] sm:$0xff]
        %v1151 = vld [vmem:[#allocation10 + $0xe38] sm:$0xff]
        %v1152 = vld [vmem:[#allocation10 + $0xe40] sm:$0xff]
        %v1153 = vld [vmem:[#allocation10 + $0xe48] sm:$0xff]
        %v1154 = vld [vmem:[#allocation10 + $0xe50] sm:$0xff]
        %v1155 = vld [vmem:[#allocation10 + $0xe58] sm:$0xff]
        %v1156 = vld [vmem:[#allocation10 + $0xe60] sm:$0xff]
        %v1157 = vld [vmem:[#allocation10 + $0xe68] sm:$0xff]
        %v1158 = vld [vmem:[#allocation10 + $0xe70] sm:$0xff]
        %v1159 = vld [vmem:[#allocation10 + $0xe78] sm:$0xff]
        %v1160 = vld [vmem:[#allocation10 + $0xe80] sm:$0xff]
        %v1161 = vld [vmem:[#allocation10 + $0xe88] sm:$0xff]
        %v1162 = vld [vmem:[#allocation10 + $0xe90] sm:$0xff]
        %v1163 = vld [vmem:[#allocation10 + $0xe98] sm:$0xff]
        %v1164 = vld [vmem:[#allocation10 + $0xea0] sm:$0xff]
        %v1165 = vld [vmem:[#allocation10 + $0xea8] sm:$0xff]
        %v1166 = vld [vmem:[#allocation10 + $0xeb0] sm:$0xff]
        %v1167 = vld [vmem:[#allocation10 + $0xeb8] sm:$0xff]
        %v1168 = vld [vmem:[#allocation10 + $0xec0] sm:$0xff]
        %v1169 = vld [vmem:[#allocation10 + $0xec8] sm:$0xff]
        %v1170 = vld [vmem:[#allocation10 + $0xed0] sm:$0xff]
        %v1171 = vld [vmem:[#allocation10 + $0xed8] sm:$0xff]
        %v1172 = vld [vmem:[#allocation10 + $0xee0] sm:$0xff]
        %v1173 = vld [vmem:[#allocation10 + $0xee8] sm:$0xff]
        %v1174 = vld [vmem:[#allocation10 + $0xef0] sm:$0xff]
        %v1175 = vld [vmem:[#allocation10 + $0xef8] sm:$0xff]
        %v1176 = vld [vmem:[#allocation10 + $0xf00] sm:$0xff]
        %v1177 = vld [vmem:[#allocation10 + $0xf08] sm:$0xff]
        %v1178 = vld [vmem:[#allocation10 + $0xf10] sm:$0xff]
        %v1179 = vld [vmem:[#allocation10 + $0xf18] sm:$0xff]
        %v1180 = vld [vmem:[#allocation10 + $0xf20] sm:$0xff]
        %v1181 = vld [vmem:[#allocation10 + $0xf28] sm:$0xff]
        %v1182 = vld [vmem:[#allocation10 + $0xf30] sm:$0xff]
        %v1183 = vld [vmem:[#allocation10 + $0xf38] sm:$0xff]
        %v1184 = vld [vmem:[#allocation10 + $0xf40] sm:$0xff]
        %v1185 = vld [vmem:[#allocation10 + $0xf48] sm:$0xff]
        %v1186 = vld [vmem:[#allocation10 + $0xf50] sm:$0xff]
        %v1187 = vld [vmem:[#allocation10 + $0xf58] sm:$0xff]
        %v1188 = vld [vmem:[#allocation10 + $0xf60] sm:$0xff]
        %v1189 = vld [vmem:[#allocation10 + $0xf68] sm:$0xff]
        %v1190 = vld [vmem:[#allocation10 + $0xf70] sm:$0xff]
        %v1191 = vld [vmem:[#allocation10 + $0xf78] sm:$0xff]
        %v1192 = vld [vmem:[#allocation10 + $0xf80] sm:$0xff]
        %v1193 = vld [vmem:[#allocation10 + $0xf88] sm:$0xff]
        %v1194 = vld [vmem:[#allocation10 + $0xf90] sm:$0xff]
        %v1195 = vld [vmem:[#allocation10 + $0xf98] sm:$0xff]
        %v1196 = vld [vmem:[#allocation10 + $0xfa0] sm:$0xff]
        %v1197 = vld [vmem:[#allocation10 + $0xfa8] sm:$0xff]
        %v1198 = vld [vmem:[#allocation10 + $0xfb0] sm:$0xff]
        %v1199 = vld [vmem:[#allocation10 + $0xfb8] sm:$0xff]
        %v1200 = vld [vmem:[#allocation10 + $0xfc0] sm:$0xff]
        %v1201 = vld [vmem:[#allocation10 + $0xfc8] sm:$0xff]
        %v1202 = vld [vmem:[#allocation10 + $0xfd0] sm:$0xff]
        %v1203 = vld [vmem:[#allocation10 + $0xfd8] sm:$0xff]
        %v1204 = vld [vmem:[#allocation10 + $0xfe0] sm:$0xff]
        %v1205 = vld [vmem:[#allocation10 + $0xfe8] sm:$0xff]
        %v1206 = vld [vmem:[#allocation10 + $0xff0] sm:$0xff]
        %v1207 = vld [vmem:[#allocation10 + $0xff8] sm:$0xff]
        %v1208 = vld [vmem:[#allocation10 + $0x1000] sm:$0xff]
        %v1209 = vld [vmem:[#allocation10 + $0x1008] sm:$0xff]
        %v1210 = vld [vmem:[#allocation10 + $0x1010] sm:$0xff]
        %v1211 = vld [vmem:[#allocation10 + $0x1018] sm:$0xff]
        %v1212 = vld [vmem:[#allocation10 + $0x1020] sm:$0xff]
        %v1213 = vld [vmem:[#allocation10 + $0x1028] sm:$0xff]
        %v1214 = vld [vmem:[#allocation10 + $0x1030] sm:$0xff]
        %v1215 = vld [vmem:[#allocation10 + $0x1038] sm:$0xff]
        %v1216 = vld [vmem:[#allocation10 + $0x1040] sm:$0xff]
        %v1217 = vld [vmem:[#allocation10 + $0x1048] sm:$0xff]
        %v1218 = vld [vmem:[#allocation10 + $0x1050] sm:$0xff]
        %v1219 = vld [vmem:[#allocation10 + $0x1058] sm:$0xff]
        %v1220 = vld [vmem:[#allocation10 + $0x1060] sm:$0xff]
        %v1221 = vld [vmem:[#allocation10 + $0x1068] sm:$0xff]
        %v1222 = vld [vmem:[#allocation10 + $0x1070] sm:$0xff]
        %v1223 = vld [vmem:[#allocation10 + $0x1078] sm:$0xff]
        %v1224 = vld [vmem:[#allocation10 + $0x1080] sm:$0xff]
        %v1225 = vld [vmem:[#allocation10 + $0x1088] sm:$0xff]
        %v1226 = vld [vmem:[#allocation10 + $0x1090] sm:$0xff]
        %v1227 = vld [vmem:[#allocation10 + $0x1098] sm:$0xff]
        %v1228 = vld [vmem:[#allocation10 + $0x10a0] sm:$0xff]
        %v1229 = vld [vmem:[#allocation10 + $0x10a8] sm:$0xff]
        %v1230 = vld [vmem:[#allocation10 + $0x10b0] sm:$0xff]
        %v1231 = vld [vmem:[#allocation10 + $0x10b8] sm:$0xff]
        %v1232 = vld [vmem:[#allocation10 + $0x10c0] sm:$0xff]
        %v1233 = vld [vmem:[#allocation10 + $0x10c8] sm:$0xff]
        %v1234 = vld [vmem:[#allocation10 + $0x10d0] sm:$0xff]
        %v1235 = vld [vmem:[#allocation10 + $0x10d8] sm:$0xff]
        %v1236 = vld [vmem:[#allocation10 + $0x10e0] sm:$0xff]
        %v1237 = vld [vmem:[#allocation10 + $0x10e8] sm:$0xff]
        %v1238 = vld [vmem:[#allocation10 + $0x10f0] sm:$0xff]
        %v1239 = vld [vmem:[#allocation10 + $0x10f8] sm:$0xff]
        %v1240 = vld [vmem:[#allocation10 + $0x1100] sm:$0xff]
        %v1241 = vld [vmem:[#allocation10 + $0x1108] sm:$0xff]
        %v1242 = vld [vmem:[#allocation10 + $0x1110] sm:$0xff]
        %v1243 = vld [vmem:[#allocation10 + $0x1118] sm:$0xff]
        %v1244 = vld [vmem:[#allocation10 + $0x1120] sm:$0xff]
        %v1245 = vld [vmem:[#allocation10 + $0x1128] sm:$0xff]
        %v1246 = vld [vmem:[#allocation10 + $0x1130] sm:$0xff]
        %v1247 = vld [vmem:[#allocation10 + $0x1138] sm:$0xff]
        %v1248 = vld [vmem:[#allocation10 + $0x1140] sm:$0xff]
        %v1249 = vld [vmem:[#allocation10 + $0x1148] sm:$0xff]
        %v1250 = vld [vmem:[#allocation10 + $0x1150] sm:$0xff]
        %v1251 = vld [vmem:[#allocation10 + $0x1158] sm:$0xff]
        %v1252 = vld [vmem:[#allocation10 + $0x1160] sm:$0xff]
        %v1253 = vld [vmem:[#allocation10 + $0x1168] sm:$0xff]
        %v1254 = vld [vmem:[#allocation10 + $0x1170] sm:$0xff]
        %v1255 = vld [vmem:[#allocation10 + $0x1178] sm:$0xff]
        %v1256 = vld [vmem:[#allocation10 + $0x1180] sm:$0xff]
        %v1257 = vld [vmem:[#allocation10 + $0x1188] sm:$0xff]
        %v1258 = vld [vmem:[#allocation10 + $0x1190] sm:$0xff]
        %v1259 = vld [vmem:[#allocation10 + $0x1198] sm:$0xff]
        %v1260 = vld [vmem:[#allocation10 + $0x11a0] sm:$0xff]
        %v1261 = vld [vmem:[#allocation10 + $0x11a8] sm:$0xff]
        %v1262 = vld [vmem:[#allocation10 + $0x11b0] sm:$0xff]
        %v1263 = vld [vmem:[#allocation10 + $0x11b8] sm:$0xff]
        %v1264 = vld [vmem:[#allocation10 + $0x11c0] sm:$0xff]
        %v1265 = vld [vmem:[#allocation10 + $0x11c8] sm:$0xff]
        %v1266 = vld [vmem:[#allocation10 + $0x11d0] sm:$0xff]
        %v1267 = vld [vmem:[#allocation10 + $0x11d8] sm:$0xff]
        %v1268 = vld [vmem:[#allocation10 + $0x11e0] sm:$0xff]
        %v1269 = vld [vmem:[#allocation10 + $0x11e8] sm:$0xff]
        %v1270 = vld [vmem:[#allocation10 + $0x11f0] sm:$0xff]
        %v1271 = vld [vmem:[#allocation10 + $0x11f8] sm:$0xff]
        %v1272 = vld [vmem:[#allocation10 + $0x1200] sm:$0xff]
        %v1273 = vld [vmem:[#allocation10 + $0x1208] sm:$0xff]
        %v1274 = vld [vmem:[#allocation10 + $0x1210] sm:$0xff]
        %v1275 = vld [vmem:[#allocation10 + $0x1218] sm:$0xff]
        %v1276 = vld [vmem:[#allocation10 + $0x1220] sm:$0xff]
        %v1277 = vld [vmem:[#allocation10 + $0x1228] sm:$0xff]
        %v1278 = vld [vmem:[#allocation10 + $0x1230] sm:$0xff]
        %v1279 = vld [vmem:[#allocation10 + $0x1238] sm:$0xff]
        %v1280 = vld [vmem:[#allocation10 + $0x1240] sm:$0xff]
        %v1281 = vld [vmem:[#allocation10 + $0x1248] sm:$0xff]
        %v1282 = vld [vmem:[#allocation10 + $0x1250] sm:$0xff]
        %v1283 = vld [vmem:[#allocation10 + $0x1258] sm:$0xff]
        %v1284 = vld [vmem:[#allocation10 + $0x1260] sm:$0xff]
        %v1285 = vld [vmem:[#allocation10 + $0x1268] sm:$0xff]
        %v1286 = vld [vmem:[#allocation10 + $0x1270] sm:$0xff]
        %v1287 = vld [vmem:[#allocation10 + $0x1278] sm:$0xff]
        %v1288 = vld [vmem:[#allocation10 + $0x1280] sm:$0xff]
        %v1289 = vld [vmem:[#allocation10 + $0x1288] sm:$0xff]
        %v1290 = vld [vmem:[#allocation10 + $0x1290] sm:$0xff]
        %v1291 = vld [vmem:[#allocation10 + $0x1298] sm:$0xff]
        %v1292 = vld [vmem:[#allocation10 + $0x12a0] sm:$0xff]
        %v1293 = vld [vmem:[#allocation10 + $0x12a8] sm:$0xff]
        %v1294 = vld [vmem:[#allocation10 + $0x12b0] sm:$0xff]
        %v1295 = vld [vmem:[#allocation10 + $0x12b8] sm:$0xff]
        %v1296 = vld [vmem:[#allocation10 + $0x12c0] sm:$0xff]
        %v1297 = vld [vmem:[#allocation10 + $0x12c8] sm:$0xff]
        %v1298 = vld [vmem:[#allocation10 + $0x12d0] sm:$0xff]
        %v1299 = vld [vmem:[#allocation10 + $0x12d8] sm:$0xff]
        %v1300 = vld [vmem:[#allocation10 + $0x12e0] sm:$0xff]
        %v1301 = vld [vmem:[#allocation10 + $0x12e8] sm:$0xff]
        %v1302 = vld [vmem:[#allocation10 + $0x12f0] sm:$0xff]
        %v1303 = vld [vmem:[#allocation10 + $0x12f8] sm:$0xff]
        %v1304 = vld [vmem:[#allocation10 + $0x1300] sm:$0xff]
        %v1305 = vld [vmem:[#allocation10 + $0x1308] sm:$0xff]
        %v1306 = vld [vmem:[#allocation10 + $0x1310] sm:$0xff]
        %v1307 = vld [vmem:[#allocation10 + $0x1318] sm:$0xff]
        %v1308 = vld [vmem:[#allocation10 + $0x1320] sm:$0xff]
        %v1309 = vld [vmem:[#allocation10 + $0x1328] sm:$0xff]
        %v1310 = vld [vmem:[#allocation10 + $0x1330] sm:$0xff]
        %v1311 = vld [vmem:[#allocation10 + $0x1338] sm:$0xff]
        %v1312 = vld [vmem:[#allocation10 + $0x1340] sm:$0xff]
        %v1313 = vld [vmem:[#allocation10 + $0x1348] sm:$0xff]
        %v1314 = vld [vmem:[#allocation10 + $0x1350] sm:$0xff]
        %v1315 = vld [vmem:[#allocation10 + $0x1358] sm:$0xff]
        %v1316 = vld [vmem:[#allocation10 + $0x1360] sm:$0xff]
        %v1317 = vld [vmem:[#allocation10 + $0x1368] sm:$0xff]
        %v1318 = vld [vmem:[#allocation10 + $0x1370] sm:$0xff]
        %v1319 = vld [vmem:[#allocation10 + $0x1378] sm:$0xff]
        %v1320 = vld [vmem:[#allocation10 + $0x1380] sm:$0xff]
        %v1321 = vld [vmem:[#allocation10 + $0x1388] sm:$0xff]
        %v1322 = vld [vmem:[#allocation10 + $0x1390] sm:$0xff]
        %v1323 = vld [vmem:[#allocation10 + $0x1398] sm:$0xff]
        %v1324 = vld [vmem:[#allocation10 + $0x13a0] sm:$0xff]
        %v1325 = vld [vmem:[#allocation10 + $0x13a8] sm:$0xff]
        %v1326 = vld [vmem:[#allocation10 + $0x13b0] sm:$0xff]
        %v1327 = vld [vmem:[#allocation10 + $0x13b8] sm:$0xff]
        %v1328 = vld [vmem:[#allocation10 + $0x13c0] sm:$0xff]
        %v1329 = vld [vmem:[#allocation10 + $0x13c8] sm:$0xff]
        %v1330 = vld [vmem:[#allocation10 + $0x13d0] sm:$0xff]
        %v1331 = vld [vmem:[#allocation10 + $0x13d8] sm:$0xff]
        %v1332 = vld [vmem:[#allocation10 + $0x13e0] sm:$0xff]
        %v1333 = vld [vmem:[#allocation10 + $0x13e8] sm:$0xff]
        %v1334 = vld [vmem:[#allocation10 + $0x13f0] sm:$0xff]
        %v1335 = vld [vmem:[#allocation10 + $0x13f8] sm:$0xff]
        %v1336 = vld [vmem:[#allocation10 + $0x1400] sm:$0xff]
        %v1337 = vld [vmem:[#allocation10 + $0x1408] sm:$0xff]
        %v1338 = vld [vmem:[#allocation10 + $0x1410] sm:$0xff]
        %v1339 = vld [vmem:[#allocation10 + $0x1418] sm:$0xff]
        %v1340 = vld [vmem:[#allocation10 + $0x1420] sm:$0xff]
        %v1341 = vld [vmem:[#allocation10 + $0x1428] sm:$0xff]
        %v1342 = vld [vmem:[#allocation10 + $0x1430] sm:$0xff]
        %v1343 = vld [vmem:[#allocation10 + $0x1438] sm:$0xff]
        %v1344 = vld [vmem:[#allocation10 + $0x1440] sm:$0xff]
        %v1345 = vld [vmem:[#allocation10 + $0x1448] sm:$0xff]
        %v1346 = vld [vmem:[#allocation10 + $0x1450] sm:$0xff]
        %v1347 = vld [vmem:[#allocation10 + $0x1458] sm:$0xff]
        %v1348 = vld [vmem:[#allocation10 + $0x1460] sm:$0xff]
        %v1349 = vld [vmem:[#allocation10 + $0x1468] sm:$0xff]
        %v1350 = vld [vmem:[#allocation10 + $0x1470] sm:$0xff]
        %v1351 = vld [vmem:[#allocation10 + $0x1478] sm:$0xff]
        %v1352 = vld [vmem:[#allocation10 + $0x1480] sm:$0xff]
        %v1353 = vld [vmem:[#allocation10 + $0x1488] sm:$0xff]
        %v1354 = vld [vmem:[#allocation10 + $0x1490] sm:$0xff]
        %v1355 = vld [vmem:[#allocation10 + $0x1498] sm:$0xff]
        %v1356 = vld [vmem:[#allocation10 + $0x14a0] sm:$0xff]
        %v1357 = vld [vmem:[#allocation10 + $0x14a8] sm:$0xff]
        %v1358 = vld [vmem:[#allocation10 + $0x14b0] sm:$0xff]
        %v1359 = vld [vmem:[#allocation10 + $0x14b8] sm:$0xff]
        %v1360 = vld [vmem:[#allocation10 + $0x14c0] sm:$0xff]
        %v1361 = vld [vmem:[#allocation10 + $0x14c8] sm:$0xff]
        %v1362 = vld [vmem:[#allocation10 + $0x14d0] sm:$0xff]
        %v1363 = vld [vmem:[#allocation10 + $0x14d8] sm:$0xff]
        %v1364 = vld [vmem:[#allocation10 + $0x14e0] sm:$0xff]
        %v1365 = vld [vmem:[#allocation10 + $0x14e8] sm:$0xff]
        %v1366 = vld [vmem:[#allocation10 + $0x14f0] sm:$0xff]
        %v1367 = vld [vmem:[#allocation10 + $0x14f8] sm:$0xff]
        %v1368 = vld [vmem:[#allocation10 + $0x1500] sm:$0xff]
        %v1369 = vld [vmem:[#allocation10 + $0x1508] sm:$0xff]
        %v1370 = vld [vmem:[#allocation10 + $0x1510] sm:$0xff]
        %v1371 = vld [vmem:[#allocation10 + $0x1518] sm:$0xff]
        %v1372 = vld [vmem:[#allocation10 + $0x1520] sm:$0xff]
        %v1373 = vld [vmem:[#allocation10 + $0x1528] sm:$0xff]
        %v1374 = vld [vmem:[#allocation10 + $0x1530] sm:$0xff]
        %v1375 = vld [vmem:[#allocation10 + $0x1538] sm:$0xff]
        %v1376 = vld [vmem:[#allocation10 + $0x1540] sm:$0xff]
        %v1377 = vld [vmem:[#allocation10 + $0x1548] sm:$0xff]
        %v1378 = vld [vmem:[#allocation10 + $0x1550] sm:$0xff]
        %v1379 = vld [vmem:[#allocation10 + $0x1558] sm:$0xff]
        %v1380 = vld [vmem:[#allocation10 + $0x1560] sm:$0xff]
        %v1381 = vld [vmem:[#allocation10 + $0x1568] sm:$0xff]
        %v1382 = vld [vmem:[#allocation10 + $0x1570] sm:$0xff]
        %v1383 = vld [vmem:[#allocation10 + $0x1578] sm:$0xff]
        %v1384 = vld [vmem:[#allocation10 + $0x1580] sm:$0xff]
        %v1385 = vld [vmem:[#allocation10 + $0x1588] sm:$0xff]
        %v1386 = vld [vmem:[#allocation10 + $0x1590] sm:$0xff]
        %v1387 = vld [vmem:[#allocation10 + $0x1598] sm:$0xff]
        %v1388 = vld [vmem:[#allocation10 + $0x15a0] sm:$0xff]
        %v1389 = vld [vmem:[#allocation10 + $0x15a8] sm:$0xff]
        %v1390 = vld [vmem:[#allocation10 + $0x15b0] sm:$0xff]
        %v1391 = vld [vmem:[#allocation10 + $0x15b8] sm:$0xff]
        %v1392 = vld [vmem:[#allocation10 + $0x15c0] sm:$0xff]
        %v1393 = vld [vmem:[#allocation10 + $0x15c8] sm:$0xff]
        %v1394 = vld [vmem:[#allocation10 + $0x15d0] sm:$0xff]
        %v1395 = vld [vmem:[#allocation10 + $0x15d8] sm:$0xff]
        %v1396 = vld [vmem:[#allocation10 + $0x15e0] sm:$0xff]
        %v1397 = vld [vmem:[#allocation10 + $0x15e8] sm:$0xff]
        %v1398 = vld [vmem:[#allocation10 + $0x15f0] sm:$0xff]
        %v1399 = vld [vmem:[#allocation10 + $0x15f8] sm:$0xff]
        %v1400 = vld [vmem:[#allocation10 + $0x1600] sm:$0xff]
        %v1401 = vld [vmem:[#allocation10 + $0x1608] sm:$0xff]
        %v1402 = vld [vmem:[#allocation10 + $0x1610] sm:$0xff]
        %v1403 = vld [vmem:[#allocation10 + $0x1618] sm:$0xff]
        %v1404 = vld [vmem:[#allocation10 + $0x1620] sm:$0xff]
        %v1405 = vld [vmem:[#allocation10 + $0x1628] sm:$0xff]
        %v1406 = vld [vmem:[#allocation10 + $0x1630] sm:$0xff]
        %v1407 = vld [vmem:[#allocation10 + $0x1638] sm:$0xff]
        %v1408 = vld [vmem:[#allocation10 + $0x1640] sm:$0xff]
        %v1409 = vld [vmem:[#allocation10 + $0x1648] sm:$0xff]
        %v1410 = vld [vmem:[#allocation10 + $0x1650] sm:$0xff]
        %v1411 = vld [vmem:[#allocation10 + $0x1658] sm:$0xff]
        %v1412 = vld [vmem:[#allocation10 + $0x1660] sm:$0xff]
        %v1413 = vld [vmem:[#allocation10 + $0x1668] sm:$0xff]
        %v1414 = vld [vmem:[#allocation10 + $0x1670] sm:$0xff]
        %v1415 = vld [vmem:[#allocation10 + $0x1678] sm:$0xff]
        %v1416 = vld [vmem:[#allocation10 + $0x1680] sm:$0xff]
        %v1417 = vld [vmem:[#allocation10 + $0x1688] sm:$0xff]
        %v1418 = vld [vmem:[#allocation10 + $0x1690] sm:$0xff]
        %v1419 = vld [vmem:[#allocation10 + $0x1698] sm:$0xff]
        %v1420 = vld [vmem:[#allocation10 + $0x16a0] sm:$0xff]
        %v1421 = vld [vmem:[#allocation10 + $0x16a8] sm:$0xff]
        %v1422 = vld [vmem:[#allocation10 + $0x16b0] sm:$0xff]
        %v1423 = vld [vmem:[#allocation10 + $0x16b8] sm:$0xff]
        %v1424 = vld [vmem:[#allocation10 + $0x16c0] sm:$0xff]
        %v1425 = vld [vmem:[#allocation10 + $0x16c8] sm:$0xff]
        %v1426 = vld [vmem:[#allocation10 + $0x16d0] sm:$0xff]
        %v1427 = vld [vmem:[#allocation10 + $0x16d8] sm:$0xff]
        %v1428 = vld [vmem:[#allocation10 + $0x16e0] sm:$0xff]
        %v1429 = vld [vmem:[#allocation10 + $0x16e8] sm:$0xff]
        %v1430 = vld [vmem:[#allocation10 + $0x16f0] sm:$0xff]
        %v1431 = vld [vmem:[#allocation10 + $0x16f8] sm:$0xff]
        %v1432 = vld [vmem:[#allocation10 + $0x1700] sm:$0xff]
        %v1433 = vld [vmem:[#allocation10 + $0x1708] sm:$0xff]
        %v1434 = vld [vmem:[#allocation10 + $0x1710] sm:$0xff]
        %v1435 = vld [vmem:[#allocation10 + $0x1718] sm:$0xff]
        %v1436 = vld [vmem:[#allocation10 + $0x1720] sm:$0xff]
        %v1437 = vld [vmem:[#allocation10 + $0x1728] sm:$0xff]
        %v1438 = vld [vmem:[#allocation10 + $0x1730] sm:$0xff]
        %v1439 = vld [vmem:[#allocation10 + $0x1738] sm:$0xff]
        %v1440 = vld [vmem:[#allocation10 + $0x1740] sm:$0xff]
        %v1441 = vld [vmem:[#allocation10 + $0x1748] sm:$0xff]
        %v1442 = vld [vmem:[#allocation10 + $0x1750] sm:$0xff]
        %v1443 = vld [vmem:[#allocation10 + $0x1758] sm:$0xff]
        %v1444 = vld [vmem:[#allocation10 + $0x1760] sm:$0xff]
        %v1445 = vld [vmem:[#allocation10 + $0x1768] sm:$0xff]
        %v1446 = vld [vmem:[#allocation10 + $0x1770] sm:$0xff]
        %v1447 = vld [vmem:[#allocation10 + $0x1778] sm:$0xff]
        %v1448 = vld [vmem:[#allocation10 + $0x1780] sm:$0xff]
        %v1449 = vld [vmem:[#allocation10 + $0x1788] sm:$0xff]
        %v1450 = vld [vmem:[#allocation10 + $0x1790] sm:$0xff]
        %v1451 = vld [vmem:[#allocation10 + $0x1798] sm:$0xff]
        %v1452 = vld [vmem:[#allocation10 + $0x17a0] sm:$0xff]
        %v1453 = vld [vmem:[#allocation10 + $0x17a8] sm:$0xff]
        %v1454 = vld [vmem:[#allocation10 + $0x17b0] sm:$0xff]
        %v1455 = vld [vmem:[#allocation10 + $0x17b8] sm:$0xff]
        %v1456 = vld [vmem:[#allocation10 + $0x17c0] sm:$0xff]
        %v1457 = vld [vmem:[#allocation10 + $0x17c8] sm:$0xff]
        %v1458 = vld [vmem:[#allocation10 + $0x17d0] sm:$0xff]
        %v1459 = vld [vmem:[#allocation10 + $0x17d8] sm:$0xff]
        %v1460 = vld [vmem:[#allocation10 + $0x17e0] sm:$0xff]
        %v1461 = vld [vmem:[#allocation10 + $0x17e8] sm:$0xff]
        %v1462 = vld [vmem:[#allocation10 + $0x17f0] sm:$0xff]
        %v1463 = vld [vmem:[#allocation10 + $0x17f8] sm:$0xff]
        %v1464 = vld [vmem:[#allocation10 + $0x1800] sm:$0xff]
        %v1465 = vld [vmem:[#allocation10 + $0x1808] sm:$0xff]
        %v1466 = vld [vmem:[#allocation10 + $0x1810] sm:$0xff]
        %v1467 = vld [vmem:[#allocation10 + $0x1818] sm:$0xff]
        %v1468 = vld [vmem:[#allocation10 + $0x1820] sm:$0xff]
        %v1469 = vld [vmem:[#allocation10 + $0x1828] sm:$0xff]
        %v1470 = vld [vmem:[#allocation10 + $0x1830] sm:$0xff]
        %v1471 = vld [vmem:[#allocation10 + $0x1838] sm:$0xff]
        %v1472 = vld [vmem:[#allocation10 + $0x1840] sm:$0xff]
        %v1473 = vld [vmem:[#allocation10 + $0x1848] sm:$0xff]
        %v1474 = vld [vmem:[#allocation10 + $0x1850] sm:$0xff]
        %v1475 = vld [vmem:[#allocation10 + $0x1858] sm:$0xff]
        %v1476 = vld [vmem:[#allocation10 + $0x1860] sm:$0xff]
        %v1477 = vld [vmem:[#allocation10 + $0x1868] sm:$0xff]
        %v1478 = vld [vmem:[#allocation10 + $0x1870] sm:$0xff]
        %v1479 = vld [vmem:[#allocation10 + $0x1878] sm:$0xff]
        %v1480 = vld [vmem:[#allocation10 + $0x1880] sm:$0xff]
        %v1481 = vld [vmem:[#allocation10 + $0x1888] sm:$0xff]
        %v1482 = vld [vmem:[#allocation10 + $0x1890] sm:$0xff]
        %v1483 = vld [vmem:[#allocation10 + $0x1898] sm:$0xff]
        %v1484 = vld [vmem:[#allocation10 + $0x18a0] sm:$0xff]
        %v1485 = vld [vmem:[#allocation10 + $0x18a8] sm:$0xff]
        %v1486 = vld [vmem:[#allocation10 + $0x18b0] sm:$0xff]
        %v1487 = vld [vmem:[#allocation10 + $0x18b8] sm:$0xff]
        %v1488 = vld [vmem:[#allocation10 + $0x18c0] sm:$0xff]
        %v1489 = vld [vmem:[#allocation10 + $0x18c8] sm:$0xff]
        %v1490 = vld [vmem:[#allocation10 + $0x18d0] sm:$0xff]
        %v1491 = vld [vmem:[#allocation10 + $0x18d8] sm:$0xff]
        %v1492 = vld [vmem:[#allocation10 + $0x18e0] sm:$0xff]
        %v1493 = vld [vmem:[#allocation10 + $0x18e8] sm:$0xff]
        %v1494 = vld [vmem:[#allocation10 + $0x18f0] sm:$0xff]
        %v1495 = vld [vmem:[#allocation10 + $0x18f8] sm:$0xff]
        %v1496 = vld [vmem:[#allocation10 + $0x1900] sm:$0xff]
        %v1497 = vld [vmem:[#allocation10 + $0x1908] sm:$0xff]
        %v1498 = vld [vmem:[#allocation10 + $0x1910] sm:$0xff]
        %v1499 = vld [vmem:[#allocation10 + $0x1918] sm:$0xff]
        %v1500 = vld [vmem:[#allocation10 + $0x1920] sm:$0xff]
        %v1501 = vld [vmem:[#allocation10 + $0x1928] sm:$0xff]
        %v1502 = vld [vmem:[#allocation10 + $0x1930] sm:$0xff]
        %v1503 = vld [vmem:[#allocation10 + $0x1938] sm:$0xff]
        %v1504 = vld [vmem:[#allocation10 + $0x1940] sm:$0xff]
        %v1505 = vld [vmem:[#allocation10 + $0x1948] sm:$0xff]
        %v1506 = vld [vmem:[#allocation10 + $0x1950] sm:$0xff]
        %v1507 = vld [vmem:[#allocation10 + $0x1958] sm:$0xff]
        %v1508 = vld [vmem:[#allocation10 + $0x1960] sm:$0xff]
        %v1509 = vld [vmem:[#allocation10 + $0x1968] sm:$0xff]
        %v1510 = vld [vmem:[#allocation10 + $0x1970] sm:$0xff]
        %v1511 = vld [vmem:[#allocation10 + $0x1978] sm:$0xff]
        %v1512 = vld [vmem:[#allocation10 + $0x1980] sm:$0xff]
        %v1513 = vld [vmem:[#allocation10 + $0x1988] sm:$0xff]
        %v1514 = vld [vmem:[#allocation10 + $0x1990] sm:$0xff]
        %v1515 = vld [vmem:[#allocation10 + $0x1998] sm:$0xff]
        %v1516 = vld [vmem:[#allocation10 + $0x19a0] sm:$0xff]
        %v1517 = vld [vmem:[#allocation10 + $0x19a8] sm:$0xff]
        %v1518 = vld [vmem:[#allocation10 + $0x19b0] sm:$0xff]
        %v1519 = vld [vmem:[#allocation10 + $0x19b8] sm:$0xff]
        %v1520 = vld [vmem:[#allocation10 + $0x19c0] sm:$0xff]
        %v1521 = vld [vmem:[#allocation10 + $0x19c8] sm:$0xff]
        %v1522 = vld [vmem:[#allocation10 + $0x19d0] sm:$0xff]
        %v1523 = vld [vmem:[#allocation10 + $0x19d8] sm:$0xff]
        %v1524 = vld [vmem:[#allocation10 + $0x19e0] sm:$0xff]
        %v1525 = vld [vmem:[#allocation10 + $0x19e8] sm:$0xff]
        %v1526 = vld [vmem:[#allocation10 + $0x19f0] sm:$0xff]
        %v1527 = vld [vmem:[#allocation10 + $0x19f8] sm:$0xff]
        %v1528 = vld [vmem:[#allocation10 + $0x1a00] sm:$0xff]
        %v1529 = vld [vmem:[#allocation10 + $0x1a08] sm:$0xff]
        %v1530 = vld [vmem:[#allocation10 + $0x1a10] sm:$0xff]
        %v1531 = vld [vmem:[#allocation10 + $0x1a18] sm:$0xff]
        %v1532 = vld [vmem:[#allocation10 + $0x1a20] sm:$0xff]
        %v1533 = vld [vmem:[#allocation10 + $0x1a28] sm:$0xff]
        %v1534 = vld [vmem:[#allocation10 + $0x1a30] sm:$0xff]
        %v1535 = vld [vmem:[#allocation10 + $0x1a38] sm:$0xff]
        %v1536 = vld [vmem:[#allocation10 + $0x1a40] sm:$0xff]
        %v1537 = vld [vmem:[#allocation10 + $0x1a48] sm:$0xff]
        %v1538 = vld [vmem:[#allocation10 + $0x1a50] sm:$0xff]
        %v1539 = vld [vmem:[#allocation10 + $0x1a58] sm:$0xff]
        %v1540 = vld [vmem:[#allocation10 + $0x1a60] sm:$0xff]
        %v1541 = vld [vmem:[#allocation10 + $0x1a68] sm:$0xff]
        %v1542 = vld [vmem:[#allocation10 + $0x1a70] sm:$0xff]
        %v1543 = vld [vmem:[#allocation10 + $0x1a78] sm:$0xff]
        %v1544 = vld [vmem:[#allocation10 + $0x1a80] sm:$0xff]
        %v1545 = vld [vmem:[#allocation10 + $0x1a88] sm:$0xff]
        %v1546 = vld [vmem:[#allocation10 + $0x1a90] sm:$0xff]
        %v1547 = vld [vmem:[#allocation10 + $0x1a98] sm:$0xff]
        %v1548 = vld [vmem:[#allocation10 + $0x1aa0] sm:$0xff]
        %v1549 = vld [vmem:[#allocation10 + $0x1aa8] sm:$0xff]
        %v1550 = vld [vmem:[#allocation10 + $0x1ab0] sm:$0xff]
        %v1551 = vld [vmem:[#allocation10 + $0x1ab8] sm:$0xff]
        %v1552 = vld [vmem:[#allocation10 + $0x1ac0] sm:$0xff]
        %v1553 = vld [vmem:[#allocation10 + $0x1ac8] sm:$0xff]
        %v1554 = vld [vmem:[#allocation10 + $0x1ad0] sm:$0xff]
        %v1555 = vld [vmem:[#allocation10 + $0x1ad8] sm:$0xff]
        %v1556 = vld [vmem:[#allocation10 + $0x1ae0] sm:$0xff]
        %v1557 = vld [vmem:[#allocation10 + $0x1ae8] sm:$0xff]
        %v1558 = vld [vmem:[#allocation10 + $0x1af0] sm:$0xff]
        %v1559 = vld [vmem:[#allocation10 + $0x1af8] sm:$0xff]
        %v1560 = vld [vmem:[#allocation10 + $0x1b00] sm:$0xff]
        %v1561 = vld [vmem:[#allocation10 + $0x1b08] sm:$0xff]
        %v1562 = vld [vmem:[#allocation10 + $0x1b10] sm:$0xff]
        %v1563 = vld [vmem:[#allocation10 + $0x1b18] sm:$0xff]
        %v1564 = vld [vmem:[#allocation10 + $0x1b20] sm:$0xff]
        %v1565 = vld [vmem:[#allocation10 + $0x1b28] sm:$0xff]
        %v1566 = vld [vmem:[#allocation10 + $0x1b30] sm:$0xff]
        %v1567 = vld [vmem:[#allocation10 + $0x1b38] sm:$0xff]
        %v1568 = vld [vmem:[#allocation10 + $0x1b40] sm:$0xff]
        %v1569 = vld [vmem:[#allocation10 + $0x1b48] sm:$0xff]
        %v1570 = vld [vmem:[#allocation10 + $0x1b50] sm:$0xff]
        %v1571 = vld [vmem:[#allocation10 + $0x1b58] sm:$0xff]
        %v1572 = vld [vmem:[#allocation10 + $0x1b60] sm:$0xff]
        %v1573 = vld [vmem:[#allocation10 + $0x1b68] sm:$0xff]
        %v1574 = vld [vmem:[#allocation10 + $0x1b70] sm:$0xff]
        %v1575 = vld [vmem:[#allocation10 + $0x1b78] sm:$0xff]
        %v1576 = vld [vmem:[#allocation10 + $0x1b80] sm:$0xff]
        %v1577 = vld [vmem:[#allocation10 + $0x1b88] sm:$0xff]
        %v1578 = vld [vmem:[#allocation10 + $0x1b90] sm:$0xff]
        %v1579 = vld [vmem:[#allocation10 + $0x1b98] sm:$0xff]
        %v1580 = vld [vmem:[#allocation10 + $0x1ba0] sm:$0xff]
        %v1581 = vld [vmem:[#allocation10 + $0x1ba8] sm:$0xff]
        %v1582 = vld [vmem:[#allocation10 + $0x1bb0] sm:$0xff]
        %v1583 = vld [vmem:[#allocation10 + $0x1bb8] sm:$0xff]
        %v1584 = vld [vmem:[#allocation10 + $0x1bc0] sm:$0xff]
        %v1585 = vld [vmem:[#allocation10 + $0x1bc8] sm:$0xff]
        %v1586 = vld [vmem:[#allocation10 + $0x1bd0] sm:$0xff]
        %v1587 = vld [vmem:[#allocation10 + $0x1bd8] sm:$0xff]
        %v1588 = vld [vmem:[#allocation10 + $0x1be0] sm:$0xff]
        %v1589 = vld [vmem:[#allocation10 + $0x1be8] sm:$0xff]
        %v1590 = vld [vmem:[#allocation10 + $0x1bf0] sm:$0xff]
        %v1591 = vld [vmem:[#allocation10 + $0x1bf8] sm:$0xff]
        %v1592 = vld [vmem:[#allocation10 + $0x1c00] sm:$0xff]
        %v1593 = vld [vmem:[#allocation10 + $0x1c08] sm:$0xff]
        %v1594 = vld [vmem:[#allocation10 + $0x1c10] sm:$0xff]
        %v1595 = vld [vmem:[#allocation10 + $0x1c18] sm:$0xff]
        %v1596 = vld [vmem:[#allocation10 + $0x1c20] sm:$0xff]
        %v1597 = vld [vmem:[#allocation10 + $0x1c28] sm:$0xff]
        %v1598 = vld [vmem:[#allocation10 + $0x1c30] sm:$0xff]
        %v1599 = vld [vmem:[#allocation10 + $0x1c38] sm:$0xff]
        %v1600 = vld [vmem:[#allocation10 + $0x1c40] sm:$0xff]
        %v1601 = vld [vmem:[#allocation10 + $0x1c48] sm:$0xff]
        %v1602 = vld [vmem:[#allocation10 + $0x1c50] sm:$0xff]
        %v1603 = vld [vmem:[#allocation10 + $0x1c58] sm:$0xff]
        %v1604 = vld [vmem:[#allocation10 + $0x1c60] sm:$0xff]
        %v1605 = vld [vmem:[#allocation10 + $0x1c68] sm:$0xff]
        %v1606 = vld [vmem:[#allocation10 + $0x1c70] sm:$0xff]
        %v1607 = vld [vmem:[#allocation10 + $0x1c78] sm:$0xff]
        %v1608 = vld [vmem:[#allocation10 + $0x1c80] sm:$0xff]
        %v1609 = vld [vmem:[#allocation10 + $0x1c88] sm:$0xff]
        %v1610 = vld [vmem:[#allocation10 + $0x1c90] sm:$0xff]
        %v1611 = vld [vmem:[#allocation10 + $0x1c98] sm:$0xff]
        %v1612 = vld [vmem:[#allocation10 + $0x1ca0] sm:$0xff]
        %v1613 = vld [vmem:[#allocation10 + $0x1ca8] sm:$0xff]
        %v1614 = vld [vmem:[#allocation10 + $0x1cb0] sm:$0xff]
        %v1615 = vld [vmem:[#allocation10 + $0x1cb8] sm:$0xff]
        %v1616 = vld [vmem:[#allocation10 + $0x1cc0] sm:$0xff]
        %v1617 = vld [vmem:[#allocation10 + $0x1cc8] sm:$0xff]
        %v1618 = vld [vmem:[#allocation10 + $0x1cd0] sm:$0xff]
        %v1619 = vld [vmem:[#allocation10 + $0x1cd8] sm:$0xff]
        %v1620 = vld [vmem:[#allocation10 + $0x1ce0] sm:$0xff]
        %v1621 = vld [vmem:[#allocation10 + $0x1ce8] sm:$0xff]
        %v1622 = vld [vmem:[#allocation10 + $0x1cf0] sm:$0xff]
        %v1623 = vld [vmem:[#allocation10 + $0x1cf8] sm:$0xff]
        %v1624 = vld [vmem:[#allocation10 + $0x1d00] sm:$0xff]
        %v1625 = vld [vmem:[#allocation10 + $0x1d08] sm:$0xff]
        %v1626 = vld [vmem:[#allocation10 + $0x1d10] sm:$0xff]
        %v1627 = vld [vmem:[#allocation10 + $0x1d18] sm:$0xff]
        %v1628 = vld [vmem:[#allocation10 + $0x1d20] sm:$0xff]
        %v1629 = vld [vmem:[#allocation10 + $0x1d28] sm:$0xff]
        %v1630 = vld [vmem:[#allocation10 + $0x1d30] sm:$0xff]
        %v1631 = vld [vmem:[#allocation10 + $0x1d38] sm:$0xff]
        %v1632 = vld [vmem:[#allocation10 + $0x1d40] sm:$0xff]
        %v1633 = vld [vmem:[#allocation10 + $0x1d48] sm:$0xff]
        %v1634 = vld [vmem:[#allocation10 + $0x1d50] sm:$0xff]
        %v1635 = vld [vmem:[#allocation10 + $0x1d58] sm:$0xff]
        %v1636 = vld [vmem:[#allocation10 + $0x1d60] sm:$0xff]
        %v1637 = vld [vmem:[#allocation10 + $0x1d68] sm:$0xff]
        %v1638 = vld [vmem:[#allocation10 + $0x1d70] sm:$0xff]
        %v1639 = vld [vmem:[#allocation10 + $0x1d78] sm:$0xff]
        %v1640 = vld [vmem:[#allocation10 + $0x1d80] sm:$0xff]
        %v1641 = vld [vmem:[#allocation10 + $0x1d88] sm:$0xff]
        %v1642 = vld [vmem:[#allocation10 + $0x1d90] sm:$0xff]
        %v1643 = vld [vmem:[#allocation10 + $0x1d98] sm:$0xff]
        %v1644 = vld [vmem:[#allocation10 + $0x1da0] sm:$0xff]
        %v1645 = vld [vmem:[#allocation10 + $0x1da8] sm:$0xff]
        %v1646 = vld [vmem:[#allocation10 + $0x1db0] sm:$0xff]
        %v1647 = vld [vmem:[#allocation10 + $0x1db8] sm:$0xff]
        %v1648 = vld [vmem:[#allocation10 + $0x1dc0] sm:$0xff]
        %v1649 = vld [vmem:[#allocation10 + $0x1dc8] sm:$0xff]
        %v1650 = vld [vmem:[#allocation10 + $0x1dd0] sm:$0xff]
        %v1651 = vld [vmem:[#allocation10 + $0x1dd8] sm:$0xff]
        %v1652 = vld [vmem:[#allocation10 + $0x1de0] sm:$0xff]
        %v1653 = vld [vmem:[#allocation10 + $0x1de8] sm:$0xff]
        %v1654 = vld [vmem:[#allocation10 + $0x1df0] sm:$0xff]
        %v1655 = vld [vmem:[#allocation10 + $0x1df8] sm:$0xff]
        %v1656 = vld [vmem:[#allocation10 + $0x1e00] sm:$0xff]
        %v1657 = vld [vmem:[#allocation10 + $0x1e08] sm:$0xff]
        %v1658 = vld [vmem:[#allocation10 + $0x1e10] sm:$0xff]
        %v1659 = vld [vmem:[#allocation10 + $0x1e18] sm:$0xff]
        %v1660 = vld [vmem:[#allocation10 + $0x1e20] sm:$0xff]
        %v1661 = vld [vmem:[#allocation10 + $0x1e28] sm:$0xff]
        %v1662 = vld [vmem:[#allocation10 + $0x1e30] sm:$0xff]
        %v1663 = vld [vmem:[#allocation10 + $0x1e38] sm:$0xff]
        %v1664 = vld [vmem:[#allocation10 + $0x1e40] sm:$0xff]
        %v1665 = vld [vmem:[#allocation10 + $0x1e48] sm:$0xff]
        %v1666 = vld [vmem:[#allocation10 + $0x1e50] sm:$0xff]
        %v1667 = vld [vmem:[#allocation10 + $0x1e58] sm:$0xff]
        %v1668 = vld [vmem:[#allocation10 + $0x1e60] sm:$0xff]
        %v1669 = vld [vmem:[#allocation10 + $0x1e68] sm:$0xff]
        %v1670 = vld [vmem:[#allocation10 + $0x1e70] sm:$0xff]
        %v1671 = vld [vmem:[#allocation10 + $0x1e78] sm:$0xff]
        %v1672 = vld [vmem:[#allocation10 + $0x1e80] sm:$0xff]
        %v1673 = vld [vmem:[#allocation10 + $0x1e88] sm:$0xff]
        %v1674 = vld [vmem:[#allocation10 + $0x1e90] sm:$0xff]
        %v1675 = vld [vmem:[#allocation10 + $0x1e98] sm:$0xff]
        %v1676 = vld [vmem:[#allocation10 + $0x1ea0] sm:$0xff]
        %v1677 = vld [vmem:[#allocation10 + $0x1ea8] sm:$0xff]
        %v1678 = vld [vmem:[#allocation10 + $0x1eb0] sm:$0xff]
        %v1679 = vld [vmem:[#allocation10 + $0x1eb8] sm:$0xff]
        %v1680 = vld [vmem:[#allocation10 + $0x1ec0] sm:$0xff]
        %v1681 = vld [vmem:[#allocation10 + $0x1ec8] sm:$0xff]
        %v1682 = vld [vmem:[#allocation10 + $0x1ed0] sm:$0xff]
        %v1683 = vld [vmem:[#allocation10 + $0x1ed8] sm:$0xff]
        %v1684 = vld [vmem:[#allocation10 + $0x1ee0] sm:$0xff]
        %v1685 = vld [vmem:[#allocation10 + $0x1ee8] sm:$0xff]
        %v1686 = vld [vmem:[#allocation10 + $0x1ef0] sm:$0xff]
        %v1687 = vld [vmem:[#allocation10 + $0x1ef8] sm:$0xff]
        %v1688 = vld [vmem:[#allocation10 + $0x1f00] sm:$0xff]
        %v1689 = vld [vmem:[#allocation10 + $0x1f08] sm:$0xff]
        %v1690 = vld [vmem:[#allocation10 + $0x1f10] sm:$0xff]
        %v1691 = vld [vmem:[#allocation10 + $0x1f18] sm:$0xff]
        %v1692 = vld [vmem:[#allocation10 + $0x1f20] sm:$0xff]
        %v1693 = vld [vmem:[#allocation10 + $0x1f28] sm:$0xff]
        %v1694 = vld [vmem:[#allocation10 + $0x1f30] sm:$0xff]
        %v1695 = vld [vmem:[#allocation10 + $0x1f38] sm:$0xff]
        %v1696 = vld [vmem:[#allocation10 + $0x1f40] sm:$0xff]
        %v1697 = vld [vmem:[#allocation10 + $0x1f48] sm:$0xff]
        %v1698 = vld [vmem:[#allocation10 + $0x1f50] sm:$0xff]
        %v1699 = vld [vmem:[#allocation10 + $0x1f58] sm:$0xff]
        %v1700 = vld [vmem:[#allocation10 + $0x1f60] sm:$0xff]
        %v1701 = vld [vmem:[#allocation10 + $0x1f68] sm:$0xff]
        %v1702 = vld [vmem:[#allocation10 + $0x1f70] sm:$0xff]
        %v1703 = vld [vmem:[#allocation10 + $0x1f78] sm:$0xff]
        %v1704 = vld [vmem:[#allocation10 + $0x1f80] sm:$0xff]
        %v1705 = vld [vmem:[#allocation10 + $0x1f88] sm:$0xff]
        %v1706 = vld [vmem:[#allocation10 + $0x1f90] sm:$0xff]
        %v1707 = vld [vmem:[#allocation10 + $0x1f98] sm:$0xff]
        %v1708 = vld [vmem:[#allocation10 + $0x1fa0] sm:$0xff]
        %v1709 = vld [vmem:[#allocation10 + $0x1fa8] sm:$0xff]
        %v1710 = vld [vmem:[#allocation10 + $0x1fb0] sm:$0xff]
        %v1711 = vld [vmem:[#allocation10 + $0x1fb8] sm:$0xff]
        %v1712 = vld [vmem:[#allocation10 + $0x1fc0] sm:$0xff]
        %v1713 = vld [vmem:[#allocation10 + $0x1fc8] sm:$0xff]
        %v1714 = vld [vmem:[#allocation10 + $0x1fd0] sm:$0xff]
        %v1715 = vld [vmem:[#allocation10 + $0x1fd8] sm:$0xff]
        %v1716 = vld [vmem:[#allocation10 + $0x1fe0] sm:$0xff]
        %v1717 = vld [vmem:[#allocation10 + $0x1fe8] sm:$0xff]
        %v1718 = vld [vmem:[#allocation10 + $0x1ff0] sm:$0xff]
        %v1719 = vld [vmem:[#allocation10 + $0x1ff8] sm:$0xff]
        %v2744 = vunpack.c.l.b16 %v696
        %v2745 = vunpack.c.h.b16 %v696
        %v2746 = vunpack.c.l.b16 %v697
        %v2747 = vunpack.c.h.b16 %v697
        %v2748 = vunpack.c.l.b16 %v698
        %v2749 = vunpack.c.h.b16 %v698
        %v2750 = vunpack.c.l.b16 %v699
        %v2751 = vunpack.c.h.b16 %v699
        %v2752 = vunpack.c.l.b16 %v700
        %v2753 = vunpack.c.h.b16 %v700
        %v2754 = vunpack.c.l.b16 %v701
        %v2755 = vunpack.c.h.b16 %v701
        %v2756 = vunpack.c.l.b16 %v702
        %v2757 = vunpack.c.h.b16 %v702
        %v2758 = vunpack.c.l.b16 %v703
        %v2759 = vunpack.c.h.b16 %v703
        %v2760 = vunpack.c.l.b16 %v704
        %v2761 = vunpack.c.h.b16 %v704
        %v2762 = vunpack.c.l.b16 %v705
        %v2763 = vunpack.c.h.b16 %v705
        %v2764 = vunpack.c.l.b16 %v706
        %v2765 = vunpack.c.h.b16 %v706
        %v2766 = vunpack.c.l.b16 %v707
        %v2767 = vunpack.c.h.b16 %v707
        %v2768 = vunpack.c.l.b16 %v708
        %v2769 = vunpack.c.h.b16 %v708
        %v2770 = vunpack.c.l.b16 %v709
        %v2771 = vunpack.c.h.b16 %v709
        %v2772 = vunpack.c.l.b16 %v710
        %v2773 = vunpack.c.h.b16 %v710
        %v2774 = vunpack.c.l.b16 %v711
        %v2775 = vunpack.c.h.b16 %v711
        %v2776 = vunpack.c.l.b16 %v712
        %v2777 = vunpack.c.h.b16 %v712
        %v2778 = vunpack.c.l.b16 %v713
        %v2779 = vunpack.c.h.b16 %v713
        %v2780 = vunpack.c.l.b16 %v714
        %v2781 = vunpack.c.h.b16 %v714
        %v2782 = vunpack.c.l.b16 %v715
        %v2783 = vunpack.c.h.b16 %v715
        %v2784 = vunpack.c.l.b16 %v716
        %v2785 = vunpack.c.h.b16 %v716
        %v2786 = vunpack.c.l.b16 %v717
        %v2787 = vunpack.c.h.b16 %v717
        %v2788 = vunpack.c.l.b16 %v718
        %v2789 = vunpack.c.h.b16 %v718
        %v2790 = vunpack.c.l.b16 %v719
        %v2791 = vunpack.c.h.b16 %v719
        %v2792 = vunpack.c.l.b16 %v720
        %v2793 = vunpack.c.h.b16 %v720
        %v2794 = vunpack.c.l.b16 %v721
        %v2795 = vunpack.c.h.b16 %v721
        %v2796 = vunpack.c.l.b16 %v722
        %v2797 = vunpack.c.h.b16 %v722
        %v2798 = vunpack.c.l.b16 %v723
        %v2799 = vunpack.c.h.b16 %v723
        %v2800 = vunpack.c.l.b16 %v724
        %v2801 = vunpack.c.h.b16 %v724
        %v2802 = vunpack.c.l.b16 %v725
        %v2803 = vunpack.c.h.b16 %v725
        %v2804 = vunpack.c.l.b16 %v726
        %v2805 = vunpack.c.h.b16 %v726
        %v2806 = vunpack.c.l.b16 %v727
        %v2807 = vunpack.c.h.b16 %v727
        %v2808 = vunpack.c.l.b16 %v728
        %v2809 = vunpack.c.h.b16 %v728
        %v2810 = vunpack.c.l.b16 %v729
        %v2811 = vunpack.c.h.b16 %v729
        %v2812 = vunpack.c.l.b16 %v730
        %v2813 = vunpack.c.h.b16 %v730
        %v2814 = vunpack.c.l.b16 %v731
        %v2815 = vunpack.c.h.b16 %v731
        %v2816 = vunpack.c.l.b16 %v732
        %v2817 = vunpack.c.h.b16 %v732
        %v2818 = vunpack.c.l.b16 %v733
        %v2819 = vunpack.c.h.b16 %v733
        %v2820 = vunpack.c.l.b16 %v734
        %v2821 = vunpack.c.h.b16 %v734
        %v2822 = vunpack.c.l.b16 %v735
        %v2823 = vunpack.c.h.b16 %v735
        %v2824 = vunpack.c.l.b16 %v736
        %v2825 = vunpack.c.h.b16 %v736
        %v2826 = vunpack.c.l.b16 %v737
        %v2827 = vunpack.c.h.b16 %v737
        %v2828 = vunpack.c.l.b16 %v738
        %v2829 = vunpack.c.h.b16 %v738
        %v2830 = vunpack.c.l.b16 %v739
        %v2831 = vunpack.c.h.b16 %v739
        %v2832 = vunpack.c.l.b16 %v740
        %v2833 = vunpack.c.h.b16 %v740
        %v2834 = vunpack.c.l.b16 %v741
        %v2835 = vunpack.c.h.b16 %v741
        %v2836 = vunpack.c.l.b16 %v742
        %v2837 = vunpack.c.h.b16 %v742
        %v2838 = vunpack.c.l.b16 %v743
        %v2839 = vunpack.c.h.b16 %v743
        %v2840 = vunpack.c.l.b16 %v744
        %v2841 = vunpack.c.h.b16 %v744
        %v2842 = vunpack.c.l.b16 %v745
        %v2843 = vunpack.c.h.b16 %v745
        %v2844 = vunpack.c.l.b16 %v746
        %v2845 = vunpack.c.h.b16 %v746
        %v2846 = vunpack.c.l.b16 %v747
        %v2847 = vunpack.c.h.b16 %v747
        %v2848 = vunpack.c.l.b16 %v748
        %v2849 = vunpack.c.h.b16 %v748
        %v2850 = vunpack.c.l.b16 %v749
        %v2851 = vunpack.c.h.b16 %v749
        %v2852 = vunpack.c.l.b16 %v750
        %v2853 = vunpack.c.h.b16 %v750
        %v2854 = vunpack.c.l.b16 %v751
        %v2855 = vunpack.c.h.b16 %v751
        %v2856 = vunpack.c.l.b16 %v752
        %v2857 = vunpack.c.h.b16 %v752
        %v2858 = vunpack.c.l.b16 %v753
        %v2859 = vunpack.c.h.b16 %v753
        %v2860 = vunpack.c.l.b16 %v754
        %v2861 = vunpack.c.h.b16 %v754
        %v2862 = vunpack.c.l.b16 %v755
        %v2863 = vunpack.c.h.b16 %v755
        %v2864 = vunpack.c.l.b16 %v756
        %v2865 = vunpack.c.h.b16 %v756
        %v2866 = vunpack.c.l.b16 %v757
        %v2867 = vunpack.c.h.b16 %v757
        %v2868 = vunpack.c.l.b16 %v758
        %v2869 = vunpack.c.h.b16 %v758
        %v2870 = vunpack.c.l.b16 %v759
        %v2871 = vunpack.c.h.b16 %v759
        %v2872 = vunpack.c.l.b16 %v760
        %v2873 = vunpack.c.h.b16 %v760
        %v2874 = vunpack.c.l.b16 %v761
        %v2875 = vunpack.c.h.b16 %v761
        %v2876 = vunpack.c.l.b16 %v762
        %v2877 = vunpack.c.h.b16 %v762
        %v2878 = vunpack.c.l.b16 %v763
        %v2879 = vunpack.c.h.b16 %v763
        %v2880 = vunpack.c.l.b16 %v764
        %v2881 = vunpack.c.h.b16 %v764
        %v2882 = vunpack.c.l.b16 %v765
        %v2883 = vunpack.c.h.b16 %v765
        %v2884 = vunpack.c.l.b16 %v766
        %v2885 = vunpack.c.h.b16 %v766
        %v2886 = vunpack.c.l.b16 %v767
        %v2887 = vunpack.c.h.b16 %v767
        %v2888 = vunpack.c.l.b16 %v768
        %v2889 = vunpack.c.h.b16 %v768
        %v2890 = vunpack.c.l.b16 %v769
        %v2891 = vunpack.c.h.b16 %v769
        %v2892 = vunpack.c.l.b16 %v770
        %v2893 = vunpack.c.h.b16 %v770
        %v2894 = vunpack.c.l.b16 %v771
        %v2895 = vunpack.c.h.b16 %v771
        %v2896 = vunpack.c.l.b16 %v772
        %v2897 = vunpack.c.h.b16 %v772
        %v2898 = vunpack.c.l.b16 %v773
        %v2899 = vunpack.c.h.b16 %v773
        %v2900 = vunpack.c.l.b16 %v774
        %v2901 = vunpack.c.h.b16 %v774
        %v2902 = vunpack.c.l.b16 %v775
        %v2903 = vunpack.c.h.b16 %v775
        %v2904 = vunpack.c.l.b16 %v776
        %v2905 = vunpack.c.h.b16 %v776
        %v2906 = vunpack.c.l.b16 %v777
        %v2907 = vunpack.c.h.b16 %v777
        %v2908 = vunpack.c.l.b16 %v778
        %v2909 = vunpack.c.h.b16 %v778
        %v2910 = vunpack.c.l.b16 %v779
        %v2911 = vunpack.c.h.b16 %v779
        %v2912 = vunpack.c.l.b16 %v780
        %v2913 = vunpack.c.h.b16 %v780
        %v2914 = vunpack.c.l.b16 %v781
        %v2915 = vunpack.c.h.b16 %v781
        %v2916 = vunpack.c.l.b16 %v782
        %v2917 = vunpack.c.h.b16 %v782
        %v2918 = vunpack.c.l.b16 %v783
        %v2919 = vunpack.c.h.b16 %v783
        %v2920 = vunpack.c.l.b16 %v784
        %v2921 = vunpack.c.h.b16 %v784
        %v2922 = vunpack.c.l.b16 %v785
        %v2923 = vunpack.c.h.b16 %v785
        %v2924 = vunpack.c.l.b16 %v786
        %v2925 = vunpack.c.h.b16 %v786
        %v2926 = vunpack.c.l.b16 %v787
        %v2927 = vunpack.c.h.b16 %v787
        %v2928 = vunpack.c.l.b16 %v788
        %v2929 = vunpack.c.h.b16 %v788
        %v2930 = vunpack.c.l.b16 %v789
        %v2931 = vunpack.c.h.b16 %v789
        %v2932 = vunpack.c.l.b16 %v790
        %v2933 = vunpack.c.h.b16 %v790
        %v2934 = vunpack.c.l.b16 %v791
        %v2935 = vunpack.c.h.b16 %v791
        %v2936 = vunpack.c.l.b16 %v792
        %v2937 = vunpack.c.h.b16 %v792
        %v2938 = vunpack.c.l.b16 %v793
        %v2939 = vunpack.c.h.b16 %v793
        %v2940 = vunpack.c.l.b16 %v794
        %v2941 = vunpack.c.h.b16 %v794
        %v2942 = vunpack.c.l.b16 %v795
        %v2943 = vunpack.c.h.b16 %v795
        %v2944 = vunpack.c.l.b16 %v796
        %v2945 = vunpack.c.h.b16 %v796
        %v2946 = vunpack.c.l.b16 %v797
        %v2947 = vunpack.c.h.b16 %v797
        %v2948 = vunpack.c.l.b16 %v798
        %v2949 = vunpack.c.h.b16 %v798
        %v2950 = vunpack.c.l.b16 %v799
        %v2951 = vunpack.c.h.b16 %v799
        %v2952 = vunpack.c.l.b16 %v800
        %v2953 = vunpack.c.h.b16 %v800
        %v2954 = vunpack.c.l.b16 %v801
        %v2955 = vunpack.c.h.b16 %v801
        %v2956 = vunpack.c.l.b16 %v802
        %v2957 = vunpack.c.h.b16 %v802
        %v2958 = vunpack.c.l.b16 %v803
        %v2959 = vunpack.c.h.b16 %v803
        %v2960 = vunpack.c.l.b16 %v804
        %v2961 = vunpack.c.h.b16 %v804
        %v2962 = vunpack.c.l.b16 %v805
        %v2963 = vunpack.c.h.b16 %v805
        %v2964 = vunpack.c.l.b16 %v806
        %v2965 = vunpack.c.h.b16 %v806
        %v2966 = vunpack.c.l.b16 %v807
        %v2967 = vunpack.c.h.b16 %v807
        %v2968 = vunpack.c.l.b16 %v808
        %v2969 = vunpack.c.h.b16 %v808
        %v2970 = vunpack.c.l.b16 %v809
        %v2971 = vunpack.c.h.b16 %v809
        %v2972 = vunpack.c.l.b16 %v810
        %v2973 = vunpack.c.h.b16 %v810
        %v2974 = vunpack.c.l.b16 %v811
        %v2975 = vunpack.c.h.b16 %v811
        %v2976 = vunpack.c.l.b16 %v812
        %v2977 = vunpack.c.h.b16 %v812
        %v2978 = vunpack.c.l.b16 %v813
        %v2979 = vunpack.c.h.b16 %v813
        %v2980 = vunpack.c.l.b16 %v814
        %v2981 = vunpack.c.h.b16 %v814
        %v2982 = vunpack.c.l.b16 %v815
        %v2983 = vunpack.c.h.b16 %v815
        %v2984 = vunpack.c.l.b16 %v816
        %v2985 = vunpack.c.h.b16 %v816
        %v2986 = vunpack.c.l.b16 %v817
        %v2987 = vunpack.c.h.b16 %v817
        %v2988 = vunpack.c.l.b16 %v818
        %v2989 = vunpack.c.h.b16 %v818
        %v2990 = vunpack.c.l.b16 %v819
        %v2991 = vunpack.c.h.b16 %v819
        %v2992 = vunpack.c.l.b16 %v820
        %v2993 = vunpack.c.h.b16 %v820
        %v2994 = vunpack.c.l.b16 %v821
        %v2995 = vunpack.c.h.b16 %v821
        %v2996 = vunpack.c.l.b16 %v822
        %v2997 = vunpack.c.h.b16 %v822
        %v2998 = vunpack.c.l.b16 %v823
        %v2999 = vunpack.c.h.b16 %v823
        %v3000 = vunpack.c.l.b16 %v824
        %v3001 = vunpack.c.h.b16 %v824
        %v3002 = vunpack.c.l.b16 %v825
        %v3003 = vunpack.c.h.b16 %v825
        %v3004 = vunpack.c.l.b16 %v826
        %v3005 = vunpack.c.h.b16 %v826
        %v3006 = vunpack.c.l.b16 %v827
        %v3007 = vunpack.c.h.b16 %v827
        %v3008 = vunpack.c.l.b16 %v828
        %v3009 = vunpack.c.h.b16 %v828
        %v3010 = vunpack.c.l.b16 %v829
        %v3011 = vunpack.c.h.b16 %v829
        %v3012 = vunpack.c.l.b16 %v830
        %v3013 = vunpack.c.h.b16 %v830
        %v3014 = vunpack.c.l.b16 %v831
        %v3015 = vunpack.c.h.b16 %v831
        %v3016 = vunpack.c.l.b16 %v832
        %v3017 = vunpack.c.h.b16 %v832
        %v3018 = vunpack.c.l.b16 %v833
        %v3019 = vunpack.c.h.b16 %v833
        %v3020 = vunpack.c.l.b16 %v834
        %v3021 = vunpack.c.h.b16 %v834
        %v3022 = vunpack.c.l.b16 %v835
        %v3023 = vunpack.c.h.b16 %v835
        %v3024 = vunpack.c.l.b16 %v836
        %v3025 = vunpack.c.h.b16 %v836
        %v3026 = vunpack.c.l.b16 %v837
        %v3027 = vunpack.c.h.b16 %v837
        %v3028 = vunpack.c.l.b16 %v838
        %v3029 = vunpack.c.h.b16 %v838
        %v3030 = vunpack.c.l.b16 %v839
        %v3031 = vunpack.c.h.b16 %v839
        %v3032 = vunpack.c.l.b16 %v840
        %v3033 = vunpack.c.h.b16 %v840
        %v3034 = vunpack.c.l.b16 %v841
        %v3035 = vunpack.c.h.b16 %v841
        %v3036 = vunpack.c.l.b16 %v842
        %v3037 = vunpack.c.h.b16 %v842
        %v3038 = vunpack.c.l.b16 %v843
        %v3039 = vunpack.c.h.b16 %v843
        %v3040 = vunpack.c.l.b16 %v844
        %v3041 = vunpack.c.h.b16 %v844
        %v3042 = vunpack.c.l.b16 %v845
        %v3043 = vunpack.c.h.b16 %v845
        %v3044 = vunpack.c.l.b16 %v846
        %v3045 = vunpack.c.h.b16 %v846
        %v3046 = vunpack.c.l.b16 %v847
        %v3047 = vunpack.c.h.b16 %v847
        %v3048 = vunpack.c.l.b16 %v848
        %v3049 = vunpack.c.h.b16 %v848
        %v3050 = vunpack.c.l.b16 %v849
        %v3051 = vunpack.c.h.b16 %v849
        %v3052 = vunpack.c.l.b16 %v850
        %v3053 = vunpack.c.h.b16 %v850
        %v3054 = vunpack.c.l.b16 %v851
        %v3055 = vunpack.c.h.b16 %v851
        %v3056 = vunpack.c.l.b16 %v852
        %v3057 = vunpack.c.h.b16 %v852
        %v3058 = vunpack.c.l.b16 %v853
        %v3059 = vunpack.c.h.b16 %v853
        %v3060 = vunpack.c.l.b16 %v854
        %v3061 = vunpack.c.h.b16 %v854
        %v3062 = vunpack.c.l.b16 %v855
        %v3063 = vunpack.c.h.b16 %v855
        %v3064 = vunpack.c.l.b16 %v856
        %v3065 = vunpack.c.h.b16 %v856
        %v3066 = vunpack.c.l.b16 %v857
        %v3067 = vunpack.c.h.b16 %v857
        %v3068 = vunpack.c.l.b16 %v858
        %v3069 = vunpack.c.h.b16 %v858
        %v3070 = vunpack.c.l.b16 %v859
        %v3071 = vunpack.c.h.b16 %v859
        %v3072 = vunpack.c.l.b16 %v860
        %v3073 = vunpack.c.h.b16 %v860
        %v3074 = vunpack.c.l.b16 %v861
        %v3075 = vunpack.c.h.b16 %v861
        %v3076 = vunpack.c.l.b16 %v862
        %v3077 = vunpack.c.h.b16 %v862
        %v3078 = vunpack.c.l.b16 %v863
        %v3079 = vunpack.c.h.b16 %v863
        %v3080 = vunpack.c.l.b16 %v864
        %v3081 = vunpack.c.h.b16 %v864
        %v3082 = vunpack.c.l.b16 %v865
        %v3083 = vunpack.c.h.b16 %v865
        %v3084 = vunpack.c.l.b16 %v866
        %v3085 = vunpack.c.h.b16 %v866
        %v3086 = vunpack.c.l.b16 %v867
        %v3087 = vunpack.c.h.b16 %v867
        %v3088 = vunpack.c.l.b16 %v868
        %v3089 = vunpack.c.h.b16 %v868
        %v3090 = vunpack.c.l.b16 %v869
        %v3091 = vunpack.c.h.b16 %v869
        %v3092 = vunpack.c.l.b16 %v870
        %v3093 = vunpack.c.h.b16 %v870
        %v3094 = vunpack.c.l.b16 %v871
        %v3095 = vunpack.c.h.b16 %v871
        %v3096 = vunpack.c.l.b16 %v872
        %v3097 = vunpack.c.h.b16 %v872
        %v3098 = vunpack.c.l.b16 %v873
        %v3099 = vunpack.c.h.b16 %v873
        %v3100 = vunpack.c.l.b16 %v874
        %v3101 = vunpack.c.h.b16 %v874
        %v3102 = vunpack.c.l.b16 %v875
        %v3103 = vunpack.c.h.b16 %v875
        %v3104 = vunpack.c.l.b16 %v876
        %v3105 = vunpack.c.h.b16 %v876
        %v3106 = vunpack.c.l.b16 %v877
        %v3107 = vunpack.c.h.b16 %v877
        %v3108 = vunpack.c.l.b16 %v878
        %v3109 = vunpack.c.h.b16 %v878
        %v3110 = vunpack.c.l.b16 %v879
        %v3111 = vunpack.c.h.b16 %v879
        %v3112 = vunpack.c.l.b16 %v880
        %v3113 = vunpack.c.h.b16 %v880
        %v3114 = vunpack.c.l.b16 %v881
        %v3115 = vunpack.c.h.b16 %v881
        %v3116 = vunpack.c.l.b16 %v882
        %v3117 = vunpack.c.h.b16 %v882
        %v3118 = vunpack.c.l.b16 %v883
        %v3119 = vunpack.c.h.b16 %v883
        %v3120 = vunpack.c.l.b16 %v884
        %v3121 = vunpack.c.h.b16 %v884
        %v3122 = vunpack.c.l.b16 %v885
        %v3123 = vunpack.c.h.b16 %v885
        %v3124 = vunpack.c.l.b16 %v886
        %v3125 = vunpack.c.h.b16 %v886
        %v3126 = vunpack.c.l.b16 %v887
        %v3127 = vunpack.c.h.b16 %v887
        %v3128 = vunpack.c.l.b16 %v888
        %v3129 = vunpack.c.h.b16 %v888
        %v3130 = vunpack.c.l.b16 %v889
        %v3131 = vunpack.c.h.b16 %v889
        %v3132 = vunpack.c.l.b16 %v890
        %v3133 = vunpack.c.h.b16 %v890
        %v3134 = vunpack.c.l.b16 %v891
        %v3135 = vunpack.c.h.b16 %v891
        %v3136 = vunpack.c.l.b16 %v892
        %v3137 = vunpack.c.h.b16 %v892
        %v3138 = vunpack.c.l.b16 %v893
        %v3139 = vunpack.c.h.b16 %v893
        %v3140 = vunpack.c.l.b16 %v894
        %v3141 = vunpack.c.h.b16 %v894
        %v3142 = vunpack.c.l.b16 %v895
        %v3143 = vunpack.c.h.b16 %v895
        %v3144 = vunpack.c.l.b16 %v896
        %v3145 = vunpack.c.h.b16 %v896
        %v3146 = vunpack.c.l.b16 %v897
        %v3147 = vunpack.c.h.b16 %v897
        %v3148 = vunpack.c.l.b16 %v898
        %v3149 = vunpack.c.h.b16 %v898
        %v3150 = vunpack.c.l.b16 %v899
        %v3151 = vunpack.c.h.b16 %v899
        %v3152 = vunpack.c.l.b16 %v900
        %v3153 = vunpack.c.h.b16 %v900
        %v3154 = vunpack.c.l.b16 %v901
        %v3155 = vunpack.c.h.b16 %v901
        %v3156 = vunpack.c.l.b16 %v902
        %v3157 = vunpack.c.h.b16 %v902
        %v3158 = vunpack.c.l.b16 %v903
        %v3159 = vunpack.c.h.b16 %v903
        %v3160 = vunpack.c.l.b16 %v904
        %v3161 = vunpack.c.h.b16 %v904
        %v3162 = vunpack.c.l.b16 %v905
        %v3163 = vunpack.c.h.b16 %v905
        %v3164 = vunpack.c.l.b16 %v906
        %v3165 = vunpack.c.h.b16 %v906
        %v3166 = vunpack.c.l.b16 %v907
        %v3167 = vunpack.c.h.b16 %v907
        %v3168 = vunpack.c.l.b16 %v908
        %v3169 = vunpack.c.h.b16 %v908
        %v3170 = vunpack.c.l.b16 %v909
        %v3171 = vunpack.c.h.b16 %v909
        %v3172 = vunpack.c.l.b16 %v910
        %v3173 = vunpack.c.h.b16 %v910
        %v3174 = vunpack.c.l.b16 %v911
        %v3175 = vunpack.c.h.b16 %v911
        %v3176 = vunpack.c.l.b16 %v912
        %v3177 = vunpack.c.h.b16 %v912
        %v3178 = vunpack.c.l.b16 %v913
        %v3179 = vunpack.c.h.b16 %v913
        %v3180 = vunpack.c.l.b16 %v914
        %v3181 = vunpack.c.h.b16 %v914
        %v3182 = vunpack.c.l.b16 %v915
        %v3183 = vunpack.c.h.b16 %v915
        %v3184 = vunpack.c.l.b16 %v916
        %v3185 = vunpack.c.h.b16 %v916
        %v3186 = vunpack.c.l.b16 %v917
        %v3187 = vunpack.c.h.b16 %v917
        %v3188 = vunpack.c.l.b16 %v918
        %v3189 = vunpack.c.h.b16 %v918
        %v3190 = vunpack.c.l.b16 %v919
        %v3191 = vunpack.c.h.b16 %v919
        %v3192 = vunpack.c.l.b16 %v920
        %v3193 = vunpack.c.h.b16 %v920
        %v3194 = vunpack.c.l.b16 %v921
        %v3195 = vunpack.c.h.b16 %v921
        %v3196 = vunpack.c.l.b16 %v922
        %v3197 = vunpack.c.h.b16 %v922
        %v3198 = vunpack.c.l.b16 %v923
        %v3199 = vunpack.c.h.b16 %v923
        %v3200 = vunpack.c.l.b16 %v924
        %v3201 = vunpack.c.h.b16 %v924
        %v3202 = vunpack.c.l.b16 %v925
        %v3203 = vunpack.c.h.b16 %v925
        %v3204 = vunpack.c.l.b16 %v926
        %v3205 = vunpack.c.h.b16 %v926
        %v3206 = vunpack.c.l.b16 %v927
        %v3207 = vunpack.c.h.b16 %v927
        %v3208 = vunpack.c.l.b16 %v928
        %v3209 = vunpack.c.h.b16 %v928
        %v3210 = vunpack.c.l.b16 %v929
        %v3211 = vunpack.c.h.b16 %v929
        %v3212 = vunpack.c.l.b16 %v930
        %v3213 = vunpack.c.h.b16 %v930
        %v3214 = vunpack.c.l.b16 %v931
        %v3215 = vunpack.c.h.b16 %v931
        %v3216 = vunpack.c.l.b16 %v932
        %v3217 = vunpack.c.h.b16 %v932
        %v3218 = vunpack.c.l.b16 %v933
        %v3219 = vunpack.c.h.b16 %v933
        %v3220 = vunpack.c.l.b16 %v934
        %v3221 = vunpack.c.h.b16 %v934
        %v3222 = vunpack.c.l.b16 %v935
        %v3223 = vunpack.c.h.b16 %v935
        %v3224 = vunpack.c.l.b16 %v936
        %v3225 = vunpack.c.h.b16 %v936
        %v3226 = vunpack.c.l.b16 %v937
        %v3227 = vunpack.c.h.b16 %v937
        %v3228 = vunpack.c.l.b16 %v938
        %v3229 = vunpack.c.h.b16 %v938
        %v3230 = vunpack.c.l.b16 %v939
        %v3231 = vunpack.c.h.b16 %v939
        %v3232 = vunpack.c.l.b16 %v940
        %v3233 = vunpack.c.h.b16 %v940
        %v3234 = vunpack.c.l.b16 %v941
        %v3235 = vunpack.c.h.b16 %v941
        %v3236 = vunpack.c.l.b16 %v942
        %v3237 = vunpack.c.h.b16 %v942
        %v3238 = vunpack.c.l.b16 %v943
        %v3239 = vunpack.c.h.b16 %v943
        %v3240 = vunpack.c.l.b16 %v944
        %v3241 = vunpack.c.h.b16 %v944
        %v3242 = vunpack.c.l.b16 %v945
        %v3243 = vunpack.c.h.b16 %v945
        %v3244 = vunpack.c.l.b16 %v946
        %v3245 = vunpack.c.h.b16 %v946
        %v3246 = vunpack.c.l.b16 %v947
        %v3247 = vunpack.c.h.b16 %v947
        %v3248 = vunpack.c.l.b16 %v948
        %v3249 = vunpack.c.h.b16 %v948
        %v3250 = vunpack.c.l.b16 %v949
        %v3251 = vunpack.c.h.b16 %v949
        %v3252 = vunpack.c.l.b16 %v950
        %v3253 = vunpack.c.h.b16 %v950
        %v3254 = vunpack.c.l.b16 %v951
        %v3255 = vunpack.c.h.b16 %v951
        %v3256 = vunpack.c.l.b16 %v952
        %v3257 = vunpack.c.h.b16 %v952
        %v3258 = vunpack.c.l.b16 %v953
        %v3259 = vunpack.c.h.b16 %v953
        %v3260 = vunpack.c.l.b16 %v954
        %v3261 = vunpack.c.h.b16 %v954
        %v3262 = vunpack.c.l.b16 %v955
        %v3263 = vunpack.c.h.b16 %v955
        %v3264 = vunpack.c.l.b16 %v956
        %v3265 = vunpack.c.h.b16 %v956
        %v3266 = vunpack.c.l.b16 %v957
        %v3267 = vunpack.c.h.b16 %v957
        %v3268 = vunpack.c.l.b16 %v958
        %v3269 = vunpack.c.h.b16 %v958
        %v3270 = vunpack.c.l.b16 %v959
        %v3271 = vunpack.c.h.b16 %v959
        %v3272 = vunpack.c.l.b16 %v960
        %v3273 = vunpack.c.h.b16 %v960
        %v3274 = vunpack.c.l.b16 %v961
        %v3275 = vunpack.c.h.b16 %v961
        %v3276 = vunpack.c.l.b16 %v962
        %v3277 = vunpack.c.h.b16 %v962
        %v3278 = vunpack.c.l.b16 %v963
        %v3279 = vunpack.c.h.b16 %v963
        %v3280 = vunpack.c.l.b16 %v964
        %v3281 = vunpack.c.h.b16 %v964
        %v3282 = vunpack.c.l.b16 %v965
        %v3283 = vunpack.c.h.b16 %v965
        %v3284 = vunpack.c.l.b16 %v966
        %v3285 = vunpack.c.h.b16 %v966
        %v3286 = vunpack.c.l.b16 %v967
        %v3287 = vunpack.c.h.b16 %v967
        %v3288 = vunpack.c.l.b16 %v968
        %v3289 = vunpack.c.h.b16 %v968
        %v3290 = vunpack.c.l.b16 %v969
        %v3291 = vunpack.c.h.b16 %v969
        %v3292 = vunpack.c.l.b16 %v970
        %v3293 = vunpack.c.h.b16 %v970
        %v3294 = vunpack.c.l.b16 %v971
        %v3295 = vunpack.c.h.b16 %v971
        %v3296 = vunpack.c.l.b16 %v972
        %v3297 = vunpack.c.h.b16 %v972
        %v3298 = vunpack.c.l.b16 %v973
        %v3299 = vunpack.c.h.b16 %v973
        %v3300 = vunpack.c.l.b16 %v974
        %v3301 = vunpack.c.h.b16 %v974
        %v3302 = vunpack.c.l.b16 %v975
        %v3303 = vunpack.c.h.b16 %v975
        %v3304 = vunpack.c.l.b16 %v976
        %v3305 = vunpack.c.h.b16 %v976
        %v3306 = vunpack.c.l.b16 %v977
        %v3307 = vunpack.c.h.b16 %v977
        %v3308 = vunpack.c.l.b16 %v978
        %v3309 = vunpack.c.h.b16 %v978
        %v3310 = vunpack.c.l.b16 %v979
        %v3311 = vunpack.c.h.b16 %v979
        %v3312 = vunpack.c.l.b16 %v980
        %v3313 = vunpack.c.h.b16 %v980
        %v3314 = vunpack.c.l.b16 %v981
        %v3315 = vunpack.c.h.b16 %v981
        %v3316 = vunpack.c.l.b16 %v982
        %v3317 = vunpack.c.h.b16 %v982
        %v3318 = vunpack.c.l.b16 %v983
        %v3319 = vunpack.c.h.b16 %v983
        %v3320 = vunpack.c.l.b16 %v984
        %v3321 = vunpack.c.h.b16 %v984
        %v3322 = vunpack.c.l.b16 %v985
        %v3323 = vunpack.c.h.b16 %v985
        %v3324 = vunpack.c.l.b16 %v986
        %v3325 = vunpack.c.h.b16 %v986
        %v3326 = vunpack.c.l.b16 %v987
        %v3327 = vunpack.c.h.b16 %v987
        %v3328 = vunpack.c.l.b16 %v988
        %v3329 = vunpack.c.h.b16 %v988
        %v3330 = vunpack.c.l.b16 %v989
        %v3331 = vunpack.c.h.b16 %v989
        %v3332 = vunpack.c.l.b16 %v990
        %v3333 = vunpack.c.h.b16 %v990
        %v3334 = vunpack.c.l.b16 %v991
        %v3335 = vunpack.c.h.b16 %v991
        %v3336 = vunpack.c.l.b16 %v992
        %v3337 = vunpack.c.h.b16 %v992
        %v3338 = vunpack.c.l.b16 %v993
        %v3339 = vunpack.c.h.b16 %v993
        %v3340 = vunpack.c.l.b16 %v994
        %v3341 = vunpack.c.h.b16 %v994
        %v3342 = vunpack.c.l.b16 %v995
        %v3343 = vunpack.c.h.b16 %v995
        %v3344 = vunpack.c.l.b16 %v996
        %v3345 = vunpack.c.h.b16 %v996
        %v3346 = vunpack.c.l.b16 %v997
        %v3347 = vunpack.c.h.b16 %v997
        %v3348 = vunpack.c.l.b16 %v998
        %v3349 = vunpack.c.h.b16 %v998
        %v3350 = vunpack.c.l.b16 %v999
        %v3351 = vunpack.c.h.b16 %v999
        %v3352 = vunpack.c.l.b16 %v1000
        %v3353 = vunpack.c.h.b16 %v1000
        %v3354 = vunpack.c.l.b16 %v1001
        %v3355 = vunpack.c.h.b16 %v1001
        %v3356 = vunpack.c.l.b16 %v1002
        %v3357 = vunpack.c.h.b16 %v1002
        %v3358 = vunpack.c.l.b16 %v1003
        %v3359 = vunpack.c.h.b16 %v1003
        %v3360 = vunpack.c.l.b16 %v1004
        %v3361 = vunpack.c.h.b16 %v1004
        %v3362 = vunpack.c.l.b16 %v1005
        %v3363 = vunpack.c.h.b16 %v1005
        %v3364 = vunpack.c.l.b16 %v1006
        %v3365 = vunpack.c.h.b16 %v1006
        %v3366 = vunpack.c.l.b16 %v1007
        %v3367 = vunpack.c.h.b16 %v1007
        %v3368 = vunpack.c.l.b16 %v1008
        %v3369 = vunpack.c.h.b16 %v1008
        %v3370 = vunpack.c.l.b16 %v1009
        %v3371 = vunpack.c.h.b16 %v1009
        %v3372 = vunpack.c.l.b16 %v1010
        %v3373 = vunpack.c.h.b16 %v1010
        %v3374 = vunpack.c.l.b16 %v1011
        %v3375 = vunpack.c.h.b16 %v1011
        %v3376 = vunpack.c.l.b16 %v1012
        %v3377 = vunpack.c.h.b16 %v1012
        %v3378 = vunpack.c.l.b16 %v1013
        %v3379 = vunpack.c.h.b16 %v1013
        %v3380 = vunpack.c.l.b16 %v1014
        %v3381 = vunpack.c.h.b16 %v1014
        %v3382 = vunpack.c.l.b16 %v1015
        %v3383 = vunpack.c.h.b16 %v1015
        %v3384 = vunpack.c.l.b16 %v1016
        %v3385 = vunpack.c.h.b16 %v1016
        %v3386 = vunpack.c.l.b16 %v1017
        %v3387 = vunpack.c.h.b16 %v1017
        %v3388 = vunpack.c.l.b16 %v1018
        %v3389 = vunpack.c.h.b16 %v1018
        %v3390 = vunpack.c.l.b16 %v1019
        %v3391 = vunpack.c.h.b16 %v1019
        %v3392 = vunpack.c.l.b16 %v1020
        %v3393 = vunpack.c.h.b16 %v1020
        %v3394 = vunpack.c.l.b16 %v1021
        %v3395 = vunpack.c.h.b16 %v1021
        %v3396 = vunpack.c.l.b16 %v1022
        %v3397 = vunpack.c.h.b16 %v1022
        %v3398 = vunpack.c.l.b16 %v1023
        %v3399 = vunpack.c.h.b16 %v1023
        %v3400 = vunpack.c.l.b16 %v1024
        %v3401 = vunpack.c.h.b16 %v1024
        %v3402 = vunpack.c.l.b16 %v1025
        %v3403 = vunpack.c.h.b16 %v1025
        %v3404 = vunpack.c.l.b16 %v1026
        %v3405 = vunpack.c.h.b16 %v1026
        %v3406 = vunpack.c.l.b16 %v1027
        %v3407 = vunpack.c.h.b16 %v1027
        %v3408 = vunpack.c.l.b16 %v1028
        %v3409 = vunpack.c.h.b16 %v1028
        %v3410 = vunpack.c.l.b16 %v1029
        %v3411 = vunpack.c.h.b16 %v1029
        %v3412 = vunpack.c.l.b16 %v1030
        %v3413 = vunpack.c.h.b16 %v1030
        %v3414 = vunpack.c.l.b16 %v1031
        %v3415 = vunpack.c.h.b16 %v1031
        %v3416 = vunpack.c.l.b16 %v1032
        %v3417 = vunpack.c.h.b16 %v1032
        %v3418 = vunpack.c.l.b16 %v1033
        %v3419 = vunpack.c.h.b16 %v1033
        %v3420 = vunpack.c.l.b16 %v1034
        %v3421 = vunpack.c.h.b16 %v1034
        %v3422 = vunpack.c.l.b16 %v1035
        %v3423 = vunpack.c.h.b16 %v1035
        %v3424 = vunpack.c.l.b16 %v1036
        %v3425 = vunpack.c.h.b16 %v1036
        %v3426 = vunpack.c.l.b16 %v1037
        %v3427 = vunpack.c.h.b16 %v1037
        %v3428 = vunpack.c.l.b16 %v1038
        %v3429 = vunpack.c.h.b16 %v1038
        %v3430 = vunpack.c.l.b16 %v1039
        %v3431 = vunpack.c.h.b16 %v1039
        %v3432 = vunpack.c.l.b16 %v1040
        %v3433 = vunpack.c.h.b16 %v1040
        %v3434 = vunpack.c.l.b16 %v1041
        %v3435 = vunpack.c.h.b16 %v1041
        %v3436 = vunpack.c.l.b16 %v1042
        %v3437 = vunpack.c.h.b16 %v1042
        %v3438 = vunpack.c.l.b16 %v1043
        %v3439 = vunpack.c.h.b16 %v1043
        %v3440 = vunpack.c.l.b16 %v1044
        %v3441 = vunpack.c.h.b16 %v1044
        %v3442 = vunpack.c.l.b16 %v1045
        %v3443 = vunpack.c.h.b16 %v1045
        %v3444 = vunpack.c.l.b16 %v1046
        %v3445 = vunpack.c.h.b16 %v1046
        %v3446 = vunpack.c.l.b16 %v1047
        %v3447 = vunpack.c.h.b16 %v1047
        %v3448 = vunpack.c.l.b16 %v1048
        %v3449 = vunpack.c.h.b16 %v1048
        %v3450 = vunpack.c.l.b16 %v1049
        %v3451 = vunpack.c.h.b16 %v1049
        %v3452 = vunpack.c.l.b16 %v1050
        %v3453 = vunpack.c.h.b16 %v1050
        %v3454 = vunpack.c.l.b16 %v1051
        %v3455 = vunpack.c.h.b16 %v1051
        %v3456 = vunpack.c.l.b16 %v1052
        %v3457 = vunpack.c.h.b16 %v1052
        %v3458 = vunpack.c.l.b16 %v1053
        %v3459 = vunpack.c.h.b16 %v1053
        %v3460 = vunpack.c.l.b16 %v1054
        %v3461 = vunpack.c.h.b16 %v1054
        %v3462 = vunpack.c.l.b16 %v1055
        %v3463 = vunpack.c.h.b16 %v1055
        %v3464 = vunpack.c.l.b16 %v1056
        %v3465 = vunpack.c.h.b16 %v1056
        %v3466 = vunpack.c.l.b16 %v1057
        %v3467 = vunpack.c.h.b16 %v1057
        %v3468 = vunpack.c.l.b16 %v1058
        %v3469 = vunpack.c.h.b16 %v1058
        %v3470 = vunpack.c.l.b16 %v1059
        %v3471 = vunpack.c.h.b16 %v1059
        %v3472 = vunpack.c.l.b16 %v1060
        %v3473 = vunpack.c.h.b16 %v1060
        %v3474 = vunpack.c.l.b16 %v1061
        %v3475 = vunpack.c.h.b16 %v1061
        %v3476 = vunpack.c.l.b16 %v1062
        %v3477 = vunpack.c.h.b16 %v1062
        %v3478 = vunpack.c.l.b16 %v1063
        %v3479 = vunpack.c.h.b16 %v1063
        %v3480 = vunpack.c.l.b16 %v1064
        %v3481 = vunpack.c.h.b16 %v1064
        %v3482 = vunpack.c.l.b16 %v1065
        %v3483 = vunpack.c.h.b16 %v1065
        %v3484 = vunpack.c.l.b16 %v1066
        %v3485 = vunpack.c.h.b16 %v1066
        %v3486 = vunpack.c.l.b16 %v1067
        %v3487 = vunpack.c.h.b16 %v1067
        %v3488 = vunpack.c.l.b16 %v1068
        %v3489 = vunpack.c.h.b16 %v1068
        %v3490 = vunpack.c.l.b16 %v1069
        %v3491 = vunpack.c.h.b16 %v1069
        %v3492 = vunpack.c.l.b16 %v1070
        %v3493 = vunpack.c.h.b16 %v1070
        %v3494 = vunpack.c.l.b16 %v1071
        %v3495 = vunpack.c.h.b16 %v1071
        %v3496 = vunpack.c.l.b16 %v1072
        %v3497 = vunpack.c.h.b16 %v1072
        %v3498 = vunpack.c.l.b16 %v1073
        %v3499 = vunpack.c.h.b16 %v1073
        %v3500 = vunpack.c.l.b16 %v1074
        %v3501 = vunpack.c.h.b16 %v1074
        %v3502 = vunpack.c.l.b16 %v1075
        %v3503 = vunpack.c.h.b16 %v1075
        %v3504 = vunpack.c.l.b16 %v1076
        %v3505 = vunpack.c.h.b16 %v1076
        %v3506 = vunpack.c.l.b16 %v1077
        %v3507 = vunpack.c.h.b16 %v1077
        %v3508 = vunpack.c.l.b16 %v1078
        %v3509 = vunpack.c.h.b16 %v1078
        %v3510 = vunpack.c.l.b16 %v1079
        %v3511 = vunpack.c.h.b16 %v1079
        %v3512 = vunpack.c.l.b16 %v1080
        %v3513 = vunpack.c.h.b16 %v1080
        %v3514 = vunpack.c.l.b16 %v1081
        %v3515 = vunpack.c.h.b16 %v1081
        %v3516 = vunpack.c.l.b16 %v1082
        %v3517 = vunpack.c.h.b16 %v1082
        %v3518 = vunpack.c.l.b16 %v1083
        %v3519 = vunpack.c.h.b16 %v1083
        %v3520 = vunpack.c.l.b16 %v1084
        %v3521 = vunpack.c.h.b16 %v1084
        %v3522 = vunpack.c.l.b16 %v1085
        %v3523 = vunpack.c.h.b16 %v1085
        %v3524 = vunpack.c.l.b16 %v1086
        %v3525 = vunpack.c.h.b16 %v1086
        %v3526 = vunpack.c.l.b16 %v1087
        %v3527 = vunpack.c.h.b16 %v1087
        %v3528 = vunpack.c.l.b16 %v1088
        %v3529 = vunpack.c.h.b16 %v1088
        %v3530 = vunpack.c.l.b16 %v1089
        %v3531 = vunpack.c.h.b16 %v1089
        %v3532 = vunpack.c.l.b16 %v1090
        %v3533 = vunpack.c.h.b16 %v1090
        %v3534 = vunpack.c.l.b16 %v1091
        %v3535 = vunpack.c.h.b16 %v1091
        %v3536 = vunpack.c.l.b16 %v1092
        %v3537 = vunpack.c.h.b16 %v1092
        %v3538 = vunpack.c.l.b16 %v1093
        %v3539 = vunpack.c.h.b16 %v1093
        %v3540 = vunpack.c.l.b16 %v1094
        %v3541 = vunpack.c.h.b16 %v1094
        %v3542 = vunpack.c.l.b16 %v1095
        %v3543 = vunpack.c.h.b16 %v1095
        %v3544 = vunpack.c.l.b16 %v1096
        %v3545 = vunpack.c.h.b16 %v1096
        %v3546 = vunpack.c.l.b16 %v1097
        %v3547 = vunpack.c.h.b16 %v1097
        %v3548 = vunpack.c.l.b16 %v1098
        %v3549 = vunpack.c.h.b16 %v1098
        %v3550 = vunpack.c.l.b16 %v1099
        %v3551 = vunpack.c.h.b16 %v1099
        %v3552 = vunpack.c.l.b16 %v1100
        %v3553 = vunpack.c.h.b16 %v1100
        %v3554 = vunpack.c.l.b16 %v1101
        %v3555 = vunpack.c.h.b16 %v1101
        %v3556 = vunpack.c.l.b16 %v1102
        %v3557 = vunpack.c.h.b16 %v1102
        %v3558 = vunpack.c.l.b16 %v1103
        %v3559 = vunpack.c.h.b16 %v1103
        %v3560 = vunpack.c.l.b16 %v1104
        %v3561 = vunpack.c.h.b16 %v1104
        %v3562 = vunpack.c.l.b16 %v1105
        %v3563 = vunpack.c.h.b16 %v1105
        %v3564 = vunpack.c.l.b16 %v1106
        %v3565 = vunpack.c.h.b16 %v1106
        %v3566 = vunpack.c.l.b16 %v1107
        %v3567 = vunpack.c.h.b16 %v1107
        %v3568 = vunpack.c.l.b16 %v1108
        %v3569 = vunpack.c.h.b16 %v1108
        %v3570 = vunpack.c.l.b16 %v1109
        %v3571 = vunpack.c.h.b16 %v1109
        %v3572 = vunpack.c.l.b16 %v1110
        %v3573 = vunpack.c.h.b16 %v1110
        %v3574 = vunpack.c.l.b16 %v1111
        %v3575 = vunpack.c.h.b16 %v1111
        %v3576 = vunpack.c.l.b16 %v1112
        %v3577 = vunpack.c.h.b16 %v1112
        %v3578 = vunpack.c.l.b16 %v1113
        %v3579 = vunpack.c.h.b16 %v1113
        %v3580 = vunpack.c.l.b16 %v1114
        %v3581 = vunpack.c.h.b16 %v1114
        %v3582 = vunpack.c.l.b16 %v1115
        %v3583 = vunpack.c.h.b16 %v1115
        %v3584 = vunpack.c.l.b16 %v1116
        %v3585 = vunpack.c.h.b16 %v1116
        %v3586 = vunpack.c.l.b16 %v1117
        %v3587 = vunpack.c.h.b16 %v1117
        %v3588 = vunpack.c.l.b16 %v1118
        %v3589 = vunpack.c.h.b16 %v1118
        %v3590 = vunpack.c.l.b16 %v1119
        %v3591 = vunpack.c.h.b16 %v1119
        %v3592 = vunpack.c.l.b16 %v1120
        %v3593 = vunpack.c.h.b16 %v1120
        %v3594 = vunpack.c.l.b16 %v1121
        %v3595 = vunpack.c.h.b16 %v1121
        %v3596 = vunpack.c.l.b16 %v1122
        %v3597 = vunpack.c.h.b16 %v1122
        %v3598 = vunpack.c.l.b16 %v1123
        %v3599 = vunpack.c.h.b16 %v1123
        %v3600 = vunpack.c.l.b16 %v1124
        %v3601 = vunpack.c.h.b16 %v1124
        %v3602 = vunpack.c.l.b16 %v1125
        %v3603 = vunpack.c.h.b16 %v1125
        %v3604 = vunpack.c.l.b16 %v1126
        %v3605 = vunpack.c.h.b16 %v1126
        %v3606 = vunpack.c.l.b16 %v1127
        %v3607 = vunpack.c.h.b16 %v1127
        %v3608 = vunpack.c.l.b16 %v1128
        %v3609 = vunpack.c.h.b16 %v1128
        %v3610 = vunpack.c.l.b16 %v1129
        %v3611 = vunpack.c.h.b16 %v1129
        %v3612 = vunpack.c.l.b16 %v1130
        %v3613 = vunpack.c.h.b16 %v1130
        %v3614 = vunpack.c.l.b16 %v1131
        %v3615 = vunpack.c.h.b16 %v1131
        %v3616 = vunpack.c.l.b16 %v1132
        %v3617 = vunpack.c.h.b16 %v1132
        %v3618 = vunpack.c.l.b16 %v1133
        %v3619 = vunpack.c.h.b16 %v1133
        %v3620 = vunpack.c.l.b16 %v1134
        %v3621 = vunpack.c.h.b16 %v1134
        %v3622 = vunpack.c.l.b16 %v1135
        %v3623 = vunpack.c.h.b16 %v1135
        %v3624 = vunpack.c.l.b16 %v1136
        %v3625 = vunpack.c.h.b16 %v1136
        %v3626 = vunpack.c.l.b16 %v1137
        %v3627 = vunpack.c.h.b16 %v1137
        %v3628 = vunpack.c.l.b16 %v1138
        %v3629 = vunpack.c.h.b16 %v1138
        %v3630 = vunpack.c.l.b16 %v1139
        %v3631 = vunpack.c.h.b16 %v1139
        %v3632 = vunpack.c.l.b16 %v1140
        %v3633 = vunpack.c.h.b16 %v1140
        %v3634 = vunpack.c.l.b16 %v1141
        %v3635 = vunpack.c.h.b16 %v1141
        %v3636 = vunpack.c.l.b16 %v1142
        %v3637 = vunpack.c.h.b16 %v1142
        %v3638 = vunpack.c.l.b16 %v1143
        %v3639 = vunpack.c.h.b16 %v1143
        %v3640 = vunpack.c.l.b16 %v1144
        %v3641 = vunpack.c.h.b16 %v1144
        %v3642 = vunpack.c.l.b16 %v1145
        %v3643 = vunpack.c.h.b16 %v1145
        %v3644 = vunpack.c.l.b16 %v1146
        %v3645 = vunpack.c.h.b16 %v1146
        %v3646 = vunpack.c.l.b16 %v1147
        %v3647 = vunpack.c.h.b16 %v1147
        %v3648 = vunpack.c.l.b16 %v1148
        %v3649 = vunpack.c.h.b16 %v1148
        %v3650 = vunpack.c.l.b16 %v1149
        %v3651 = vunpack.c.h.b16 %v1149
        %v3652 = vunpack.c.l.b16 %v1150
        %v3653 = vunpack.c.h.b16 %v1150
        %v3654 = vunpack.c.l.b16 %v1151
        %v3655 = vunpack.c.h.b16 %v1151
        %v3656 = vunpack.c.l.b16 %v1152
        %v3657 = vunpack.c.h.b16 %v1152
        %v3658 = vunpack.c.l.b16 %v1153
        %v3659 = vunpack.c.h.b16 %v1153
        %v3660 = vunpack.c.l.b16 %v1154
        %v3661 = vunpack.c.h.b16 %v1154
        %v3662 = vunpack.c.l.b16 %v1155
        %v3663 = vunpack.c.h.b16 %v1155
        %v3664 = vunpack.c.l.b16 %v1156
        %v3665 = vunpack.c.h.b16 %v1156
        %v3666 = vunpack.c.l.b16 %v1157
        %v3667 = vunpack.c.h.b16 %v1157
        %v3668 = vunpack.c.l.b16 %v1158
        %v3669 = vunpack.c.h.b16 %v1158
        %v3670 = vunpack.c.l.b16 %v1159
        %v3671 = vunpack.c.h.b16 %v1159
        %v3672 = vunpack.c.l.b16 %v1160
        %v3673 = vunpack.c.h.b16 %v1160
        %v3674 = vunpack.c.l.b16 %v1161
        %v3675 = vunpack.c.h.b16 %v1161
        %v3676 = vunpack.c.l.b16 %v1162
        %v3677 = vunpack.c.h.b16 %v1162
        %v3678 = vunpack.c.l.b16 %v1163
        %v3679 = vunpack.c.h.b16 %v1163
        %v3680 = vunpack.c.l.b16 %v1164
        %v3681 = vunpack.c.h.b16 %v1164
        %v3682 = vunpack.c.l.b16 %v1165
        %v3683 = vunpack.c.h.b16 %v1165
        %v3684 = vunpack.c.l.b16 %v1166
        %v3685 = vunpack.c.h.b16 %v1166
        %v3686 = vunpack.c.l.b16 %v1167
        %v3687 = vunpack.c.h.b16 %v1167
        %v3688 = vunpack.c.l.b16 %v1168
        %v3689 = vunpack.c.h.b16 %v1168
        %v3690 = vunpack.c.l.b16 %v1169
        %v3691 = vunpack.c.h.b16 %v1169
        %v3692 = vunpack.c.l.b16 %v1170
        %v3693 = vunpack.c.h.b16 %v1170
        %v3694 = vunpack.c.l.b16 %v1171
        %v3695 = vunpack.c.h.b16 %v1171
        %v3696 = vunpack.c.l.b16 %v1172
        %v3697 = vunpack.c.h.b16 %v1172
        %v3698 = vunpack.c.l.b16 %v1173
        %v3699 = vunpack.c.h.b16 %v1173
        %v3700 = vunpack.c.l.b16 %v1174
        %v3701 = vunpack.c.h.b16 %v1174
        %v3702 = vunpack.c.l.b16 %v1175
        %v3703 = vunpack.c.h.b16 %v1175
        %v3704 = vunpack.c.l.b16 %v1176
        %v3705 = vunpack.c.h.b16 %v1176
        %v3706 = vunpack.c.l.b16 %v1177
        %v3707 = vunpack.c.h.b16 %v1177
        %v3708 = vunpack.c.l.b16 %v1178
        %v3709 = vunpack.c.h.b16 %v1178
        %v3710 = vunpack.c.l.b16 %v1179
        %v3711 = vunpack.c.h.b16 %v1179
        %v3712 = vunpack.c.l.b16 %v1180
        %v3713 = vunpack.c.h.b16 %v1180
        %v3714 = vunpack.c.l.b16 %v1181
        %v3715 = vunpack.c.h.b16 %v1181
        %v3716 = vunpack.c.l.b16 %v1182
        %v3717 = vunpack.c.h.b16 %v1182
        %v3718 = vunpack.c.l.b16 %v1183
        %v3719 = vunpack.c.h.b16 %v1183
        %v3720 = vunpack.c.l.b16 %v1184
        %v3721 = vunpack.c.h.b16 %v1184
        %v3722 = vunpack.c.l.b16 %v1185
        %v3723 = vunpack.c.h.b16 %v1185
        %v3724 = vunpack.c.l.b16 %v1186
        %v3725 = vunpack.c.h.b16 %v1186
        %v3726 = vunpack.c.l.b16 %v1187
        %v3727 = vunpack.c.h.b16 %v1187
        %v3728 = vunpack.c.l.b16 %v1188
        %v3729 = vunpack.c.h.b16 %v1188
        %v3730 = vunpack.c.l.b16 %v1189
        %v3731 = vunpack.c.h.b16 %v1189
        %v3732 = vunpack.c.l.b16 %v1190
        %v3733 = vunpack.c.h.b16 %v1190
        %v3734 = vunpack.c.l.b16 %v1191
        %v3735 = vunpack.c.h.b16 %v1191
        %v3736 = vunpack.c.l.b16 %v1192
        %v3737 = vunpack.c.h.b16 %v1192
        %v3738 = vunpack.c.l.b16 %v1193
        %v3739 = vunpack.c.h.b16 %v1193
        %v3740 = vunpack.c.l.b16 %v1194
        %v3741 = vunpack.c.h.b16 %v1194
        %v3742 = vunpack.c.l.b16 %v1195
        %v3743 = vunpack.c.h.b16 %v1195
        %v3744 = vunpack.c.l.b16 %v1196
        %v3745 = vunpack.c.h.b16 %v1196
        %v3746 = vunpack.c.l.b16 %v1197
        %v3747 = vunpack.c.h.b16 %v1197
        %v3748 = vunpack.c.l.b16 %v1198
        %v3749 = vunpack.c.h.b16 %v1198
        %v3750 = vunpack.c.l.b16 %v1199
        %v3751 = vunpack.c.h.b16 %v1199
        %v3752 = vunpack.c.l.b16 %v1200
        %v3753 = vunpack.c.h.b16 %v1200
        %v3754 = vunpack.c.l.b16 %v1201
        %v3755 = vunpack.c.h.b16 %v1201
        %v3756 = vunpack.c.l.b16 %v1202
        %v3757 = vunpack.c.h.b16 %v1202
        %v3758 = vunpack.c.l.b16 %v1203
        %v3759 = vunpack.c.h.b16 %v1203
        %v3760 = vunpack.c.l.b16 %v1204
        %v3761 = vunpack.c.h.b16 %v1204
        %v3762 = vunpack.c.l.b16 %v1205
        %v3763 = vunpack.c.h.b16 %v1205
        %v3764 = vunpack.c.l.b16 %v1206
        %v3765 = vunpack.c.h.b16 %v1206
        %v3766 = vunpack.c.l.b16 %v1207
        %v3767 = vunpack.c.h.b16 %v1207
        %v3768 = vunpack.c.l.b16 %v1208
        %v3769 = vunpack.c.h.b16 %v1208
        %v3770 = vunpack.c.l.b16 %v1209
        %v3771 = vunpack.c.h.b16 %v1209
        %v3772 = vunpack.c.l.b16 %v1210
        %v3773 = vunpack.c.h.b16 %v1210
        %v3774 = vunpack.c.l.b16 %v1211
        %v3775 = vunpack.c.h.b16 %v1211
        %v3776 = vunpack.c.l.b16 %v1212
        %v3777 = vunpack.c.h.b16 %v1212
        %v3778 = vunpack.c.l.b16 %v1213
        %v3779 = vunpack.c.h.b16 %v1213
        %v3780 = vunpack.c.l.b16 %v1214
        %v3781 = vunpack.c.h.b16 %v1214
        %v3782 = vunpack.c.l.b16 %v1215
        %v3783 = vunpack.c.h.b16 %v1215
        %v3784 = vunpack.c.l.b16 %v1216
        %v3785 = vunpack.c.h.b16 %v1216
        %v3786 = vunpack.c.l.b16 %v1217
        %v3787 = vunpack.c.h.b16 %v1217
        %v3788 = vunpack.c.l.b16 %v1218
        %v3789 = vunpack.c.h.b16 %v1218
        %v3790 = vunpack.c.l.b16 %v1219
        %v3791 = vunpack.c.h.b16 %v1219
        %v3792 = vunpack.c.l.b16 %v1220
        %v3793 = vunpack.c.h.b16 %v1220
        %v3794 = vunpack.c.l.b16 %v1221
        %v3795 = vunpack.c.h.b16 %v1221
        %v3796 = vunpack.c.l.b16 %v1222
        %v3797 = vunpack.c.h.b16 %v1222
        %v3798 = vunpack.c.l.b16 %v1223
        %v3799 = vunpack.c.h.b16 %v1223
        %v3800 = vunpack.c.l.b16 %v1224
        %v3801 = vunpack.c.h.b16 %v1224
        %v3802 = vunpack.c.l.b16 %v1225
        %v3803 = vunpack.c.h.b16 %v1225
        %v3804 = vunpack.c.l.b16 %v1226
        %v3805 = vunpack.c.h.b16 %v1226
        %v3806 = vunpack.c.l.b16 %v1227
        %v3807 = vunpack.c.h.b16 %v1227
        %v3808 = vunpack.c.l.b16 %v1228
        %v3809 = vunpack.c.h.b16 %v1228
        %v3810 = vunpack.c.l.b16 %v1229
        %v3811 = vunpack.c.h.b16 %v1229
        %v3812 = vunpack.c.l.b16 %v1230
        %v3813 = vunpack.c.h.b16 %v1230
        %v3814 = vunpack.c.l.b16 %v1231
        %v3815 = vunpack.c.h.b16 %v1231
        %v3816 = vunpack.c.l.b16 %v1232
        %v3817 = vunpack.c.h.b16 %v1232
        %v3818 = vunpack.c.l.b16 %v1233
        %v3819 = vunpack.c.h.b16 %v1233
        %v3820 = vunpack.c.l.b16 %v1234
        %v3821 = vunpack.c.h.b16 %v1234
        %v3822 = vunpack.c.l.b16 %v1235
        %v3823 = vunpack.c.h.b16 %v1235
        %v3824 = vunpack.c.l.b16 %v1236
        %v3825 = vunpack.c.h.b16 %v1236
        %v3826 = vunpack.c.l.b16 %v1237
        %v3827 = vunpack.c.h.b16 %v1237
        %v3828 = vunpack.c.l.b16 %v1238
        %v3829 = vunpack.c.h.b16 %v1238
        %v3830 = vunpack.c.l.b16 %v1239
        %v3831 = vunpack.c.h.b16 %v1239
        %v3832 = vunpack.c.l.b16 %v1240
        %v3833 = vunpack.c.h.b16 %v1240
        %v3834 = vunpack.c.l.b16 %v1241
        %v3835 = vunpack.c.h.b16 %v1241
        %v3836 = vunpack.c.l.b16 %v1242
        %v3837 = vunpack.c.h.b16 %v1242
        %v3838 = vunpack.c.l.b16 %v1243
        %v3839 = vunpack.c.h.b16 %v1243
        %v3840 = vunpack.c.l.b16 %v1244
        %v3841 = vunpack.c.h.b16 %v1244
        %v3842 = vunpack.c.l.b16 %v1245
        %v3843 = vunpack.c.h.b16 %v1245
        %v3844 = vunpack.c.l.b16 %v1246
        %v3845 = vunpack.c.h.b16 %v1246
        %v3846 = vunpack.c.l.b16 %v1247
        %v3847 = vunpack.c.h.b16 %v1247
        %v3848 = vunpack.c.l.b16 %v1248
        %v3849 = vunpack.c.h.b16 %v1248
        %v3850 = vunpack.c.l.b16 %v1249
        %v3851 = vunpack.c.h.b16 %v1249
        %v3852 = vunpack.c.l.b16 %v1250
        %v3853 = vunpack.c.h.b16 %v1250
        %v3854 = vunpack.c.l.b16 %v1251
        %v3855 = vunpack.c.h.b16 %v1251
        %v3856 = vunpack.c.l.b16 %v1252
        %v3857 = vunpack.c.h.b16 %v1252
        %v3858 = vunpack.c.l.b16 %v1253
        %v3859 = vunpack.c.h.b16 %v1253
        %v3860 = vunpack.c.l.b16 %v1254
        %v3861 = vunpack.c.h.b16 %v1254
        %v3862 = vunpack.c.l.b16 %v1255
        %v3863 = vunpack.c.h.b16 %v1255
        %v3864 = vunpack.c.l.b16 %v1256
        %v3865 = vunpack.c.h.b16 %v1256
        %v3866 = vunpack.c.l.b16 %v1257
        %v3867 = vunpack.c.h.b16 %v1257
        %v3868 = vunpack.c.l.b16 %v1258
        %v3869 = vunpack.c.h.b16 %v1258
        %v3870 = vunpack.c.l.b16 %v1259
        %v3871 = vunpack.c.h.b16 %v1259
        %v3872 = vunpack.c.l.b16 %v1260
        %v3873 = vunpack.c.h.b16 %v1260
        %v3874 = vunpack.c.l.b16 %v1261
        %v3875 = vunpack.c.h.b16 %v1261
        %v3876 = vunpack.c.l.b16 %v1262
        %v3877 = vunpack.c.h.b16 %v1262
        %v3878 = vunpack.c.l.b16 %v1263
        %v3879 = vunpack.c.h.b16 %v1263
        %v3880 = vunpack.c.l.b16 %v1264
        %v3881 = vunpack.c.h.b16 %v1264
        %v3882 = vunpack.c.l.b16 %v1265
        %v3883 = vunpack.c.h.b16 %v1265
        %v3884 = vunpack.c.l.b16 %v1266
        %v3885 = vunpack.c.h.b16 %v1266
        %v3886 = vunpack.c.l.b16 %v1267
        %v3887 = vunpack.c.h.b16 %v1267
        %v3888 = vunpack.c.l.b16 %v1268
        %v3889 = vunpack.c.h.b16 %v1268
        %v3890 = vunpack.c.l.b16 %v1269
        %v3891 = vunpack.c.h.b16 %v1269
        %v3892 = vunpack.c.l.b16 %v1270
        %v3893 = vunpack.c.h.b16 %v1270
        %v3894 = vunpack.c.l.b16 %v1271
        %v3895 = vunpack.c.h.b16 %v1271
        %v3896 = vunpack.c.l.b16 %v1272
        %v3897 = vunpack.c.h.b16 %v1272
        %v3898 = vunpack.c.l.b16 %v1273
        %v3899 = vunpack.c.h.b16 %v1273
        %v3900 = vunpack.c.l.b16 %v1274
        %v3901 = vunpack.c.h.b16 %v1274
        %v3902 = vunpack.c.l.b16 %v1275
        %v3903 = vunpack.c.h.b16 %v1275
        %v3904 = vunpack.c.l.b16 %v1276
        %v3905 = vunpack.c.h.b16 %v1276
        %v3906 = vunpack.c.l.b16 %v1277
        %v3907 = vunpack.c.h.b16 %v1277
        %v3908 = vunpack.c.l.b16 %v1278
        %v3909 = vunpack.c.h.b16 %v1278
        %v3910 = vunpack.c.l.b16 %v1279
        %v3911 = vunpack.c.h.b16 %v1279
        %v3912 = vunpack.c.l.b16 %v1280
        %v3913 = vunpack.c.h.b16 %v1280
        %v3914 = vunpack.c.l.b16 %v1281
        %v3915 = vunpack.c.h.b16 %v1281
        %v3916 = vunpack.c.l.b16 %v1282
        %v3917 = vunpack.c.h.b16 %v1282
        %v3918 = vunpack.c.l.b16 %v1283
        %v3919 = vunpack.c.h.b16 %v1283
        %v3920 = vunpack.c.l.b16 %v1284
        %v3921 = vunpack.c.h.b16 %v1284
        %v3922 = vunpack.c.l.b16 %v1285
        %v3923 = vunpack.c.h.b16 %v1285
        %v3924 = vunpack.c.l.b16 %v1286
        %v3925 = vunpack.c.h.b16 %v1286
        %v3926 = vunpack.c.l.b16 %v1287
        %v3927 = vunpack.c.h.b16 %v1287
        %v3928 = vunpack.c.l.b16 %v1288
        %v3929 = vunpack.c.h.b16 %v1288
        %v3930 = vunpack.c.l.b16 %v1289
        %v3931 = vunpack.c.h.b16 %v1289
        %v3932 = vunpack.c.l.b16 %v1290
        %v3933 = vunpack.c.h.b16 %v1290
        %v3934 = vunpack.c.l.b16 %v1291
        %v3935 = vunpack.c.h.b16 %v1291
        %v3936 = vunpack.c.l.b16 %v1292
        %v3937 = vunpack.c.h.b16 %v1292
        %v3938 = vunpack.c.l.b16 %v1293
        %v3939 = vunpack.c.h.b16 %v1293
        %v3940 = vunpack.c.l.b16 %v1294
        %v3941 = vunpack.c.h.b16 %v1294
        %v3942 = vunpack.c.l.b16 %v1295
        %v3943 = vunpack.c.h.b16 %v1295
        %v3944 = vunpack.c.l.b16 %v1296
        %v3945 = vunpack.c.h.b16 %v1296
        %v3946 = vunpack.c.l.b16 %v1297
        %v3947 = vunpack.c.h.b16 %v1297
        %v3948 = vunpack.c.l.b16 %v1298
        %v3949 = vunpack.c.h.b16 %v1298
        %v3950 = vunpack.c.l.b16 %v1299
        %v3951 = vunpack.c.h.b16 %v1299
        %v3952 = vunpack.c.l.b16 %v1300
        %v3953 = vunpack.c.h.b16 %v1300
        %v3954 = vunpack.c.l.b16 %v1301
        %v3955 = vunpack.c.h.b16 %v1301
        %v3956 = vunpack.c.l.b16 %v1302
        %v3957 = vunpack.c.h.b16 %v1302
        %v3958 = vunpack.c.l.b16 %v1303
        %v3959 = vunpack.c.h.b16 %v1303
        %v3960 = vunpack.c.l.b16 %v1304
        %v3961 = vunpack.c.h.b16 %v1304
        %v3962 = vunpack.c.l.b16 %v1305
        %v3963 = vunpack.c.h.b16 %v1305
        %v3964 = vunpack.c.l.b16 %v1306
        %v3965 = vunpack.c.h.b16 %v1306
        %v3966 = vunpack.c.l.b16 %v1307
        %v3967 = vunpack.c.h.b16 %v1307
        %v3968 = vunpack.c.l.b16 %v1308
        %v3969 = vunpack.c.h.b16 %v1308
        %v3970 = vunpack.c.l.b16 %v1309
        %v3971 = vunpack.c.h.b16 %v1309
        %v3972 = vunpack.c.l.b16 %v1310
        %v3973 = vunpack.c.h.b16 %v1310
        %v3974 = vunpack.c.l.b16 %v1311
        %v3975 = vunpack.c.h.b16 %v1311
        %v3976 = vunpack.c.l.b16 %v1312
        %v3977 = vunpack.c.h.b16 %v1312
        %v3978 = vunpack.c.l.b16 %v1313
        %v3979 = vunpack.c.h.b16 %v1313
        %v3980 = vunpack.c.l.b16 %v1314
        %v3981 = vunpack.c.h.b16 %v1314
        %v3982 = vunpack.c.l.b16 %v1315
        %v3983 = vunpack.c.h.b16 %v1315
        %v3984 = vunpack.c.l.b16 %v1316
        %v3985 = vunpack.c.h.b16 %v1316
        %v3986 = vunpack.c.l.b16 %v1317
        %v3987 = vunpack.c.h.b16 %v1317
        %v3988 = vunpack.c.l.b16 %v1318
        %v3989 = vunpack.c.h.b16 %v1318
        %v3990 = vunpack.c.l.b16 %v1319
        %v3991 = vunpack.c.h.b16 %v1319
        %v3992 = vunpack.c.l.b16 %v1320
        %v3993 = vunpack.c.h.b16 %v1320
        %v3994 = vunpack.c.l.b16 %v1321
        %v3995 = vunpack.c.h.b16 %v1321
        %v3996 = vunpack.c.l.b16 %v1322
        %v3997 = vunpack.c.h.b16 %v1322
        %v3998 = vunpack.c.l.b16 %v1323
        %v3999 = vunpack.c.h.b16 %v1323
        %v4000 = vunpack.c.l.b16 %v1324
        %v4001 = vunpack.c.h.b16 %v1324
        %v4002 = vunpack.c.l.b16 %v1325
        %v4003 = vunpack.c.h.b16 %v1325
        %v4004 = vunpack.c.l.b16 %v1326
        %v4005 = vunpack.c.h.b16 %v1326
        %v4006 = vunpack.c.l.b16 %v1327
        %v4007 = vunpack.c.h.b16 %v1327
        %v4008 = vunpack.c.l.b16 %v1328
        %v4009 = vunpack.c.h.b16 %v1328
        %v4010 = vunpack.c.l.b16 %v1329
        %v4011 = vunpack.c.h.b16 %v1329
        %v4012 = vunpack.c.l.b16 %v1330
        %v4013 = vunpack.c.h.b16 %v1330
        %v4014 = vunpack.c.l.b16 %v1331
        %v4015 = vunpack.c.h.b16 %v1331
        %v4016 = vunpack.c.l.b16 %v1332
        %v4017 = vunpack.c.h.b16 %v1332
        %v4018 = vunpack.c.l.b16 %v1333
        %v4019 = vunpack.c.h.b16 %v1333
        %v4020 = vunpack.c.l.b16 %v1334
        %v4021 = vunpack.c.h.b16 %v1334
        %v4022 = vunpack.c.l.b16 %v1335
        %v4023 = vunpack.c.h.b16 %v1335
        %v4024 = vunpack.c.l.b16 %v1336
        %v4025 = vunpack.c.h.b16 %v1336
        %v4026 = vunpack.c.l.b16 %v1337
        %v4027 = vunpack.c.h.b16 %v1337
        %v4028 = vunpack.c.l.b16 %v1338
        %v4029 = vunpack.c.h.b16 %v1338
        %v4030 = vunpack.c.l.b16 %v1339
        %v4031 = vunpack.c.h.b16 %v1339
        %v4032 = vunpack.c.l.b16 %v1340
        %v4033 = vunpack.c.h.b16 %v1340
        %v4034 = vunpack.c.l.b16 %v1341
        %v4035 = vunpack.c.h.b16 %v1341
        %v4036 = vunpack.c.l.b16 %v1342
        %v4037 = vunpack.c.h.b16 %v1342
        %v4038 = vunpack.c.l.b16 %v1343
        %v4039 = vunpack.c.h.b16 %v1343
        %v4040 = vunpack.c.l.b16 %v1344
        %v4041 = vunpack.c.h.b16 %v1344
        %v4042 = vunpack.c.l.b16 %v1345
        %v4043 = vunpack.c.h.b16 %v1345
        %v4044 = vunpack.c.l.b16 %v1346
        %v4045 = vunpack.c.h.b16 %v1346
        %v4046 = vunpack.c.l.b16 %v1347
        %v4047 = vunpack.c.h.b16 %v1347
        %v4048 = vunpack.c.l.b16 %v1348
        %v4049 = vunpack.c.h.b16 %v1348
        %v4050 = vunpack.c.l.b16 %v1349
        %v4051 = vunpack.c.h.b16 %v1349
        %v4052 = vunpack.c.l.b16 %v1350
        %v4053 = vunpack.c.h.b16 %v1350
        %v4054 = vunpack.c.l.b16 %v1351
        %v4055 = vunpack.c.h.b16 %v1351
        %v4056 = vunpack.c.l.b16 %v1352
        %v4057 = vunpack.c.h.b16 %v1352
        %v4058 = vunpack.c.l.b16 %v1353
        %v4059 = vunpack.c.h.b16 %v1353
        %v4060 = vunpack.c.l.b16 %v1354
        %v4061 = vunpack.c.h.b16 %v1354
        %v4062 = vunpack.c.l.b16 %v1355
        %v4063 = vunpack.c.h.b16 %v1355
        %v4064 = vunpack.c.l.b16 %v1356
        %v4065 = vunpack.c.h.b16 %v1356
        %v4066 = vunpack.c.l.b16 %v1357
        %v4067 = vunpack.c.h.b16 %v1357
        %v4068 = vunpack.c.l.b16 %v1358
        %v4069 = vunpack.c.h.b16 %v1358
        %v4070 = vunpack.c.l.b16 %v1359
        %v4071 = vunpack.c.h.b16 %v1359
        %v4072 = vunpack.c.l.b16 %v1360
        %v4073 = vunpack.c.h.b16 %v1360
        %v4074 = vunpack.c.l.b16 %v1361
        %v4075 = vunpack.c.h.b16 %v1361
        %v4076 = vunpack.c.l.b16 %v1362
        %v4077 = vunpack.c.h.b16 %v1362
        %v4078 = vunpack.c.l.b16 %v1363
        %v4079 = vunpack.c.h.b16 %v1363
        %v4080 = vunpack.c.l.b16 %v1364
        %v4081 = vunpack.c.h.b16 %v1364
        %v4082 = vunpack.c.l.b16 %v1365
        %v4083 = vunpack.c.h.b16 %v1365
        %v4084 = vunpack.c.l.b16 %v1366
        %v4085 = vunpack.c.h.b16 %v1366
        %v4086 = vunpack.c.l.b16 %v1367
        %v4087 = vunpack.c.h.b16 %v1367
        %v4088 = vunpack.c.l.b16 %v1368
        %v4089 = vunpack.c.h.b16 %v1368
        %v4090 = vunpack.c.l.b16 %v1369
        %v4091 = vunpack.c.h.b16 %v1369
        %v4092 = vunpack.c.l.b16 %v1370
        %v4093 = vunpack.c.h.b16 %v1370
        %v4094 = vunpack.c.l.b16 %v1371
        %v4095 = vunpack.c.h.b16 %v1371
        %v4096 = vunpack.c.l.b16 %v1372
        %v4097 = vunpack.c.h.b16 %v1372
        %v4098 = vunpack.c.l.b16 %v1373
        %v4099 = vunpack.c.h.b16 %v1373
        %v4100 = vunpack.c.l.b16 %v1374
        %v4101 = vunpack.c.h.b16 %v1374
        %v4102 = vunpack.c.l.b16 %v1375
        %v4103 = vunpack.c.h.b16 %v1375
        %v4104 = vunpack.c.l.b16 %v1376
        %v4105 = vunpack.c.h.b16 %v1376
        %v4106 = vunpack.c.l.b16 %v1377
        %v4107 = vunpack.c.h.b16 %v1377
        %v4108 = vunpack.c.l.b16 %v1378
        %v4109 = vunpack.c.h.b16 %v1378
        %v4110 = vunpack.c.l.b16 %v1379
        %v4111 = vunpack.c.h.b16 %v1379
        %v4112 = vunpack.c.l.b16 %v1380
        %v4113 = vunpack.c.h.b16 %v1380
        %v4114 = vunpack.c.l.b16 %v1381
        %v4115 = vunpack.c.h.b16 %v1381
        %v4116 = vunpack.c.l.b16 %v1382
        %v4117 = vunpack.c.h.b16 %v1382
        %v4118 = vunpack.c.l.b16 %v1383
        %v4119 = vunpack.c.h.b16 %v1383
        %v4120 = vunpack.c.l.b16 %v1384
        %v4121 = vunpack.c.h.b16 %v1384
        %v4122 = vunpack.c.l.b16 %v1385
        %v4123 = vunpack.c.h.b16 %v1385
        %v4124 = vunpack.c.l.b16 %v1386
        %v4125 = vunpack.c.h.b16 %v1386
        %v4126 = vunpack.c.l.b16 %v1387
        %v4127 = vunpack.c.h.b16 %v1387
        %v4128 = vunpack.c.l.b16 %v1388
        %v4129 = vunpack.c.h.b16 %v1388
        %v4130 = vunpack.c.l.b16 %v1389
        %v4131 = vunpack.c.h.b16 %v1389
        %v4132 = vunpack.c.l.b16 %v1390
        %v4133 = vunpack.c.h.b16 %v1390
        %v4134 = vunpack.c.l.b16 %v1391
        %v4135 = vunpack.c.h.b16 %v1391
        %v4136 = vunpack.c.l.b16 %v1392
        %v4137 = vunpack.c.h.b16 %v1392
        %v4138 = vunpack.c.l.b16 %v1393
        %v4139 = vunpack.c.h.b16 %v1393
        %v4140 = vunpack.c.l.b16 %v1394
        %v4141 = vunpack.c.h.b16 %v1394
        %v4142 = vunpack.c.l.b16 %v1395
        %v4143 = vunpack.c.h.b16 %v1395
        %v4144 = vunpack.c.l.b16 %v1396
        %v4145 = vunpack.c.h.b16 %v1396
        %v4146 = vunpack.c.l.b16 %v1397
        %v4147 = vunpack.c.h.b16 %v1397
        %v4148 = vunpack.c.l.b16 %v1398
        %v4149 = vunpack.c.h.b16 %v1398
        %v4150 = vunpack.c.l.b16 %v1399
        %v4151 = vunpack.c.h.b16 %v1399
        %v4152 = vunpack.c.l.b16 %v1400
        %v4153 = vunpack.c.h.b16 %v1400
        %v4154 = vunpack.c.l.b16 %v1401
        %v4155 = vunpack.c.h.b16 %v1401
        %v4156 = vunpack.c.l.b16 %v1402
        %v4157 = vunpack.c.h.b16 %v1402
        %v4158 = vunpack.c.l.b16 %v1403
        %v4159 = vunpack.c.h.b16 %v1403
        %v4160 = vunpack.c.l.b16 %v1404
        %v4161 = vunpack.c.h.b16 %v1404
        %v4162 = vunpack.c.l.b16 %v1405
        %v4163 = vunpack.c.h.b16 %v1405
        %v4164 = vunpack.c.l.b16 %v1406
        %v4165 = vunpack.c.h.b16 %v1406
        %v4166 = vunpack.c.l.b16 %v1407
        %v4167 = vunpack.c.h.b16 %v1407
        %v4168 = vunpack.c.l.b16 %v1408
        %v4169 = vunpack.c.h.b16 %v1408
        %v4170 = vunpack.c.l.b16 %v1409
        %v4171 = vunpack.c.h.b16 %v1409
        %v4172 = vunpack.c.l.b16 %v1410
        %v4173 = vunpack.c.h.b16 %v1410
        %v4174 = vunpack.c.l.b16 %v1411
        %v4175 = vunpack.c.h.b16 %v1411
        %v4176 = vunpack.c.l.b16 %v1412
        %v4177 = vunpack.c.h.b16 %v1412
        %v4178 = vunpack.c.l.b16 %v1413
        %v4179 = vunpack.c.h.b16 %v1413
        %v4180 = vunpack.c.l.b16 %v1414
        %v4181 = vunpack.c.h.b16 %v1414
        %v4182 = vunpack.c.l.b16 %v1415
        %v4183 = vunpack.c.h.b16 %v1415
        %v4184 = vunpack.c.l.b16 %v1416
        %v4185 = vunpack.c.h.b16 %v1416
        %v4186 = vunpack.c.l.b16 %v1417
        %v4187 = vunpack.c.h.b16 %v1417
        %v4188 = vunpack.c.l.b16 %v1418
        %v4189 = vunpack.c.h.b16 %v1418
        %v4190 = vunpack.c.l.b16 %v1419
        %v4191 = vunpack.c.h.b16 %v1419
        %v4192 = vunpack.c.l.b16 %v1420
        %v4193 = vunpack.c.h.b16 %v1420
        %v4194 = vunpack.c.l.b16 %v1421
        %v4195 = vunpack.c.h.b16 %v1421
        %v4196 = vunpack.c.l.b16 %v1422
        %v4197 = vunpack.c.h.b16 %v1422
        %v4198 = vunpack.c.l.b16 %v1423
        %v4199 = vunpack.c.h.b16 %v1423
        %v4200 = vunpack.c.l.b16 %v1424
        %v4201 = vunpack.c.h.b16 %v1424
        %v4202 = vunpack.c.l.b16 %v1425
        %v4203 = vunpack.c.h.b16 %v1425
        %v4204 = vunpack.c.l.b16 %v1426
        %v4205 = vunpack.c.h.b16 %v1426
        %v4206 = vunpack.c.l.b16 %v1427
        %v4207 = vunpack.c.h.b16 %v1427
        %v4208 = vunpack.c.l.b16 %v1428
        %v4209 = vunpack.c.h.b16 %v1428
        %v4210 = vunpack.c.l.b16 %v1429
        %v4211 = vunpack.c.h.b16 %v1429
        %v4212 = vunpack.c.l.b16 %v1430
        %v4213 = vunpack.c.h.b16 %v1430
        %v4214 = vunpack.c.l.b16 %v1431
        %v4215 = vunpack.c.h.b16 %v1431
        %v4216 = vunpack.c.l.b16 %v1432
        %v4217 = vunpack.c.h.b16 %v1432
        %v4218 = vunpack.c.l.b16 %v1433
        %v4219 = vunpack.c.h.b16 %v1433
        %v4220 = vunpack.c.l.b16 %v1434
        %v4221 = vunpack.c.h.b16 %v1434
        %v4222 = vunpack.c.l.b16 %v1435
        %v4223 = vunpack.c.h.b16 %v1435
        %v4224 = vunpack.c.l.b16 %v1436
        %v4225 = vunpack.c.h.b16 %v1436
        %v4226 = vunpack.c.l.b16 %v1437
        %v4227 = vunpack.c.h.b16 %v1437
        %v4228 = vunpack.c.l.b16 %v1438
        %v4229 = vunpack.c.h.b16 %v1438
        %v4230 = vunpack.c.l.b16 %v1439
        %v4231 = vunpack.c.h.b16 %v1439
        %v4232 = vunpack.c.l.b16 %v1440
        %v4233 = vunpack.c.h.b16 %v1440
        %v4234 = vunpack.c.l.b16 %v1441
        %v4235 = vunpack.c.h.b16 %v1441
        %v4236 = vunpack.c.l.b16 %v1442
        %v4237 = vunpack.c.h.b16 %v1442
        %v4238 = vunpack.c.l.b16 %v1443
        %v4239 = vunpack.c.h.b16 %v1443
        %v4240 = vunpack.c.l.b16 %v1444
        %v4241 = vunpack.c.h.b16 %v1444
        %v4242 = vunpack.c.l.b16 %v1445
        %v4243 = vunpack.c.h.b16 %v1445
        %v4244 = vunpack.c.l.b16 %v1446
        %v4245 = vunpack.c.h.b16 %v1446
        %v4246 = vunpack.c.l.b16 %v1447
        %v4247 = vunpack.c.h.b16 %v1447
        %v4248 = vunpack.c.l.b16 %v1448
        %v4249 = vunpack.c.h.b16 %v1448
        %v4250 = vunpack.c.l.b16 %v1449
        %v4251 = vunpack.c.h.b16 %v1449
        %v4252 = vunpack.c.l.b16 %v1450
        %v4253 = vunpack.c.h.b16 %v1450
        %v4254 = vunpack.c.l.b16 %v1451
        %v4255 = vunpack.c.h.b16 %v1451
        %v4256 = vunpack.c.l.b16 %v1452
        %v4257 = vunpack.c.h.b16 %v1452
        %v4258 = vunpack.c.l.b16 %v1453
        %v4259 = vunpack.c.h.b16 %v1453
        %v4260 = vunpack.c.l.b16 %v1454
        %v4261 = vunpack.c.h.b16 %v1454
        %v4262 = vunpack.c.l.b16 %v1455
        %v4263 = vunpack.c.h.b16 %v1455
        %v4264 = vunpack.c.l.b16 %v1456
        %v4265 = vunpack.c.h.b16 %v1456
        %v4266 = vunpack.c.l.b16 %v1457
        %v4267 = vunpack.c.h.b16 %v1457
        %v4268 = vunpack.c.l.b16 %v1458
        %v4269 = vunpack.c.h.b16 %v1458
        %v4270 = vunpack.c.l.b16 %v1459
        %v4271 = vunpack.c.h.b16 %v1459
        %v4272 = vunpack.c.l.b16 %v1460
        %v4273 = vunpack.c.h.b16 %v1460
        %v4274 = vunpack.c.l.b16 %v1461
        %v4275 = vunpack.c.h.b16 %v1461
        %v4276 = vunpack.c.l.b16 %v1462
        %v4277 = vunpack.c.h.b16 %v1462
        %v4278 = vunpack.c.l.b16 %v1463
        %v4279 = vunpack.c.h.b16 %v1463
        %v4280 = vunpack.c.l.b16 %v1464
        %v4281 = vunpack.c.h.b16 %v1464
        %v4282 = vunpack.c.l.b16 %v1465
        %v4283 = vunpack.c.h.b16 %v1465
        %v4284 = vunpack.c.l.b16 %v1466
        %v4285 = vunpack.c.h.b16 %v1466
        %v4286 = vunpack.c.l.b16 %v1467
        %v4287 = vunpack.c.h.b16 %v1467
        %v4288 = vunpack.c.l.b16 %v1468
        %v4289 = vunpack.c.h.b16 %v1468
        %v4290 = vunpack.c.l.b16 %v1469
        %v4291 = vunpack.c.h.b16 %v1469
        %v4292 = vunpack.c.l.b16 %v1470
        %v4293 = vunpack.c.h.b16 %v1470
        %v4294 = vunpack.c.l.b16 %v1471
        %v4295 = vunpack.c.h.b16 %v1471
        %v4296 = vunpack.c.l.b16 %v1472
        %v4297 = vunpack.c.h.b16 %v1472
        %v4298 = vunpack.c.l.b16 %v1473
        %v4299 = vunpack.c.h.b16 %v1473
        %v4300 = vunpack.c.l.b16 %v1474
        %v4301 = vunpack.c.h.b16 %v1474
        %v4302 = vunpack.c.l.b16 %v1475
        %v4303 = vunpack.c.h.b16 %v1475
        %v4304 = vunpack.c.l.b16 %v1476
        %v4305 = vunpack.c.h.b16 %v1476
        %v4306 = vunpack.c.l.b16 %v1477
        %v4307 = vunpack.c.h.b16 %v1477
        %v4308 = vunpack.c.l.b16 %v1478
        %v4309 = vunpack.c.h.b16 %v1478
        %v4310 = vunpack.c.l.b16 %v1479
        %v4311 = vunpack.c.h.b16 %v1479
        %v4312 = vunpack.c.l.b16 %v1480
        %v4313 = vunpack.c.h.b16 %v1480
        %v4314 = vunpack.c.l.b16 %v1481
        %v4315 = vunpack.c.h.b16 %v1481
        %v4316 = vunpack.c.l.b16 %v1482
        %v4317 = vunpack.c.h.b16 %v1482
        %v4318 = vunpack.c.l.b16 %v1483
        %v4319 = vunpack.c.h.b16 %v1483
        %v4320 = vunpack.c.l.b16 %v1484
        %v4321 = vunpack.c.h.b16 %v1484
        %v4322 = vunpack.c.l.b16 %v1485
        %v4323 = vunpack.c.h.b16 %v1485
        %v4324 = vunpack.c.l.b16 %v1486
        %v4325 = vunpack.c.h.b16 %v1486
        %v4326 = vunpack.c.l.b16 %v1487
        %v4327 = vunpack.c.h.b16 %v1487
        %v4328 = vunpack.c.l.b16 %v1488
        %v4329 = vunpack.c.h.b16 %v1488
        %v4330 = vunpack.c.l.b16 %v1489
        %v4331 = vunpack.c.h.b16 %v1489
        %v4332 = vunpack.c.l.b16 %v1490
        %v4333 = vunpack.c.h.b16 %v1490
        %v4334 = vunpack.c.l.b16 %v1491
        %v4335 = vunpack.c.h.b16 %v1491
        %v4336 = vunpack.c.l.b16 %v1492
        %v4337 = vunpack.c.h.b16 %v1492
        %v4338 = vunpack.c.l.b16 %v1493
        %v4339 = vunpack.c.h.b16 %v1493
        %v4340 = vunpack.c.l.b16 %v1494
        %v4341 = vunpack.c.h.b16 %v1494
        %v4342 = vunpack.c.l.b16 %v1495
        %v4343 = vunpack.c.h.b16 %v1495
        %v4344 = vunpack.c.l.b16 %v1496
        %v4345 = vunpack.c.h.b16 %v1496
        %v4346 = vunpack.c.l.b16 %v1497
        %v4347 = vunpack.c.h.b16 %v1497
        %v4348 = vunpack.c.l.b16 %v1498
        %v4349 = vunpack.c.h.b16 %v1498
        %v4350 = vunpack.c.l.b16 %v1499
        %v4351 = vunpack.c.h.b16 %v1499
        %v4352 = vunpack.c.l.b16 %v1500
        %v4353 = vunpack.c.h.b16 %v1500
        %v4354 = vunpack.c.l.b16 %v1501
        %v4355 = vunpack.c.h.b16 %v1501
        %v4356 = vunpack.c.l.b16 %v1502
        %v4357 = vunpack.c.h.b16 %v1502
        %v4358 = vunpack.c.l.b16 %v1503
        %v4359 = vunpack.c.h.b16 %v1503
        %v4360 = vunpack.c.l.b16 %v1504
        %v4361 = vunpack.c.h.b16 %v1504
        %v4362 = vunpack.c.l.b16 %v1505
        %v4363 = vunpack.c.h.b16 %v1505
        %v4364 = vunpack.c.l.b16 %v1506
        %v4365 = vunpack.c.h.b16 %v1506
        %v4366 = vunpack.c.l.b16 %v1507
        %v4367 = vunpack.c.h.b16 %v1507
        %v4368 = vunpack.c.l.b16 %v1508
        %v4369 = vunpack.c.h.b16 %v1508
        %v4370 = vunpack.c.l.b16 %v1509
        %v4371 = vunpack.c.h.b16 %v1509
        %v4372 = vunpack.c.l.b16 %v1510
        %v4373 = vunpack.c.h.b16 %v1510
        %v4374 = vunpack.c.l.b16 %v1511
        %v4375 = vunpack.c.h.b16 %v1511
        %v4376 = vunpack.c.l.b16 %v1512
        %v4377 = vunpack.c.h.b16 %v1512
        %v4378 = vunpack.c.l.b16 %v1513
        %v4379 = vunpack.c.h.b16 %v1513
        %v4380 = vunpack.c.l.b16 %v1514
        %v4381 = vunpack.c.h.b16 %v1514
        %v4382 = vunpack.c.l.b16 %v1515
        %v4383 = vunpack.c.h.b16 %v1515
        %v4384 = vunpack.c.l.b16 %v1516
        %v4385 = vunpack.c.h.b16 %v1516
        %v4386 = vunpack.c.l.b16 %v1517
        %v4387 = vunpack.c.h.b16 %v1517
        %v4388 = vunpack.c.l.b16 %v1518
        %v4389 = vunpack.c.h.b16 %v1518
        %v4390 = vunpack.c.l.b16 %v1519
        %v4391 = vunpack.c.h.b16 %v1519
        %v4392 = vunpack.c.l.b16 %v1520
        %v4393 = vunpack.c.h.b16 %v1520
        %v4394 = vunpack.c.l.b16 %v1521
        %v4395 = vunpack.c.h.b16 %v1521
        %v4396 = vunpack.c.l.b16 %v1522
        %v4397 = vunpack.c.h.b16 %v1522
        %v4398 = vunpack.c.l.b16 %v1523
        %v4399 = vunpack.c.h.b16 %v1523
        %v4400 = vunpack.c.l.b16 %v1524
        %v4401 = vunpack.c.h.b16 %v1524
        %v4402 = vunpack.c.l.b16 %v1525
        %v4403 = vunpack.c.h.b16 %v1525
        %v4404 = vunpack.c.l.b16 %v1526
        %v4405 = vunpack.c.h.b16 %v1526
        %v4406 = vunpack.c.l.b16 %v1527
        %v4407 = vunpack.c.h.b16 %v1527
        %v4408 = vunpack.c.l.b16 %v1528
        %v4409 = vunpack.c.h.b16 %v1528
        %v4410 = vunpack.c.l.b16 %v1529
        %v4411 = vunpack.c.h.b16 %v1529
        %v4412 = vunpack.c.l.b16 %v1530
        %v4413 = vunpack.c.h.b16 %v1530
        %v4414 = vunpack.c.l.b16 %v1531
        %v4415 = vunpack.c.h.b16 %v1531
        %v4416 = vunpack.c.l.b16 %v1532
        %v4417 = vunpack.c.h.b16 %v1532
        %v4418 = vunpack.c.l.b16 %v1533
        %v4419 = vunpack.c.h.b16 %v1533
        %v4420 = vunpack.c.l.b16 %v1534
        %v4421 = vunpack.c.h.b16 %v1534
        %v4422 = vunpack.c.l.b16 %v1535
        %v4423 = vunpack.c.h.b16 %v1535
        %v4424 = vunpack.c.l.b16 %v1536
        %v4425 = vunpack.c.h.b16 %v1536
        %v4426 = vunpack.c.l.b16 %v1537
        %v4427 = vunpack.c.h.b16 %v1537
        %v4428 = vunpack.c.l.b16 %v1538
        %v4429 = vunpack.c.h.b16 %v1538
        %v4430 = vunpack.c.l.b16 %v1539
        %v4431 = vunpack.c.h.b16 %v1539
        %v4432 = vunpack.c.l.b16 %v1540
        %v4433 = vunpack.c.h.b16 %v1540
        %v4434 = vunpack.c.l.b16 %v1541
        %v4435 = vunpack.c.h.b16 %v1541
        %v4436 = vunpack.c.l.b16 %v1542
        %v4437 = vunpack.c.h.b16 %v1542
        %v4438 = vunpack.c.l.b16 %v1543
        %v4439 = vunpack.c.h.b16 %v1543
        %v4440 = vunpack.c.l.b16 %v1544
        %v4441 = vunpack.c.h.b16 %v1544
        %v4442 = vunpack.c.l.b16 %v1545
        %v4443 = vunpack.c.h.b16 %v1545
        %v4444 = vunpack.c.l.b16 %v1546
        %v4445 = vunpack.c.h.b16 %v1546
        %v4446 = vunpack.c.l.b16 %v1547
        %v4447 = vunpack.c.h.b16 %v1547
        %v4448 = vunpack.c.l.b16 %v1548
        %v4449 = vunpack.c.h.b16 %v1548
        %v4450 = vunpack.c.l.b16 %v1549
        %v4451 = vunpack.c.h.b16 %v1549
        %v4452 = vunpack.c.l.b16 %v1550
        %v4453 = vunpack.c.h.b16 %v1550
        %v4454 = vunpack.c.l.b16 %v1551
        %v4455 = vunpack.c.h.b16 %v1551
        %v4456 = vunpack.c.l.b16 %v1552
        %v4457 = vunpack.c.h.b16 %v1552
        %v4458 = vunpack.c.l.b16 %v1553
        %v4459 = vunpack.c.h.b16 %v1553
        %v4460 = vunpack.c.l.b16 %v1554
        %v4461 = vunpack.c.h.b16 %v1554
        %v4462 = vunpack.c.l.b16 %v1555
        %v4463 = vunpack.c.h.b16 %v1555
        %v4464 = vunpack.c.l.b16 %v1556
        %v4465 = vunpack.c.h.b16 %v1556
        %v4466 = vunpack.c.l.b16 %v1557
        %v4467 = vunpack.c.h.b16 %v1557
        %v4468 = vunpack.c.l.b16 %v1558
        %v4469 = vunpack.c.h.b16 %v1558
        %v4470 = vunpack.c.l.b16 %v1559
        %v4471 = vunpack.c.h.b16 %v1559
        %v4472 = vunpack.c.l.b16 %v1560
        %v4473 = vunpack.c.h.b16 %v1560
        %v4474 = vunpack.c.l.b16 %v1561
        %v4475 = vunpack.c.h.b16 %v1561
        %v4476 = vunpack.c.l.b16 %v1562
        %v4477 = vunpack.c.h.b16 %v1562
        %v4478 = vunpack.c.l.b16 %v1563
        %v4479 = vunpack.c.h.b16 %v1563
        %v4480 = vunpack.c.l.b16 %v1564
        %v4481 = vunpack.c.h.b16 %v1564
        %v4482 = vunpack.c.l.b16 %v1565
        %v4483 = vunpack.c.h.b16 %v1565
        %v4484 = vunpack.c.l.b16 %v1566
        %v4485 = vunpack.c.h.b16 %v1566
        %v4486 = vunpack.c.l.b16 %v1567
        %v4487 = vunpack.c.h.b16 %v1567
        %v4488 = vunpack.c.l.b16 %v1568
        %v4489 = vunpack.c.h.b16 %v1568
        %v4490 = vunpack.c.l.b16 %v1569
        %v4491 = vunpack.c.h.b16 %v1569
        %v4492 = vunpack.c.l.b16 %v1570
        %v4493 = vunpack.c.h.b16 %v1570
        %v4494 = vunpack.c.l.b16 %v1571
        %v4495 = vunpack.c.h.b16 %v1571
        %v4496 = vunpack.c.l.b16 %v1572
        %v4497 = vunpack.c.h.b16 %v1572
        %v4498 = vunpack.c.l.b16 %v1573
        %v4499 = vunpack.c.h.b16 %v1573
        %v4500 = vunpack.c.l.b16 %v1574
        %v4501 = vunpack.c.h.b16 %v1574
        %v4502 = vunpack.c.l.b16 %v1575
        %v4503 = vunpack.c.h.b16 %v1575
        %v4504 = vunpack.c.l.b16 %v1576
        %v4505 = vunpack.c.h.b16 %v1576
        %v4506 = vunpack.c.l.b16 %v1577
        %v4507 = vunpack.c.h.b16 %v1577
        %v4508 = vunpack.c.l.b16 %v1578
        %v4509 = vunpack.c.h.b16 %v1578
        %v4510 = vunpack.c.l.b16 %v1579
        %v4511 = vunpack.c.h.b16 %v1579
        %v4512 = vunpack.c.l.b16 %v1580
        %v4513 = vunpack.c.h.b16 %v1580
        %v4514 = vunpack.c.l.b16 %v1581
        %v4515 = vunpack.c.h.b16 %v1581
        %v4516 = vunpack.c.l.b16 %v1582
        %v4517 = vunpack.c.h.b16 %v1582
        %v4518 = vunpack.c.l.b16 %v1583
        %v4519 = vunpack.c.h.b16 %v1583
        %v4520 = vunpack.c.l.b16 %v1584
        %v4521 = vunpack.c.h.b16 %v1584
        %v4522 = vunpack.c.l.b16 %v1585
        %v4523 = vunpack.c.h.b16 %v1585
        %v4524 = vunpack.c.l.b16 %v1586
        %v4525 = vunpack.c.h.b16 %v1586
        %v4526 = vunpack.c.l.b16 %v1587
        %v4527 = vunpack.c.h.b16 %v1587
        %v4528 = vunpack.c.l.b16 %v1588
        %v4529 = vunpack.c.h.b16 %v1588
        %v4530 = vunpack.c.l.b16 %v1589
        %v4531 = vunpack.c.h.b16 %v1589
        %v4532 = vunpack.c.l.b16 %v1590
        %v4533 = vunpack.c.h.b16 %v1590
        %v4534 = vunpack.c.l.b16 %v1591
        %v4535 = vunpack.c.h.b16 %v1591
        %v4536 = vunpack.c.l.b16 %v1592
        %v4537 = vunpack.c.h.b16 %v1592
        %v4538 = vunpack.c.l.b16 %v1593
        %v4539 = vunpack.c.h.b16 %v1593
        %v4540 = vunpack.c.l.b16 %v1594
        %v4541 = vunpack.c.h.b16 %v1594
        %v4542 = vunpack.c.l.b16 %v1595
        %v4543 = vunpack.c.h.b16 %v1595
        %v4544 = vunpack.c.l.b16 %v1596
        %v4545 = vunpack.c.h.b16 %v1596
        %v4546 = vunpack.c.l.b16 %v1597
        %v4547 = vunpack.c.h.b16 %v1597
        %v4548 = vunpack.c.l.b16 %v1598
        %v4549 = vunpack.c.h.b16 %v1598
        %v4550 = vunpack.c.l.b16 %v1599
        %v4551 = vunpack.c.h.b16 %v1599
        %v4552 = vunpack.c.l.b16 %v1600
        %v4553 = vunpack.c.h.b16 %v1600
        %v4554 = vunpack.c.l.b16 %v1601
        %v4555 = vunpack.c.h.b16 %v1601
        %v4556 = vunpack.c.l.b16 %v1602
        %v4557 = vunpack.c.h.b16 %v1602
        %v4558 = vunpack.c.l.b16 %v1603
        %v4559 = vunpack.c.h.b16 %v1603
        %v4560 = vunpack.c.l.b16 %v1604
        %v4561 = vunpack.c.h.b16 %v1604
        %v4562 = vunpack.c.l.b16 %v1605
        %v4563 = vunpack.c.h.b16 %v1605
        %v4564 = vunpack.c.l.b16 %v1606
        %v4565 = vunpack.c.h.b16 %v1606
        %v4566 = vunpack.c.l.b16 %v1607
        %v4567 = vunpack.c.h.b16 %v1607
        %v4568 = vunpack.c.l.b16 %v1608
        %v4569 = vunpack.c.h.b16 %v1608
        %v4570 = vunpack.c.l.b16 %v1609
        %v4571 = vunpack.c.h.b16 %v1609
        %v4572 = vunpack.c.l.b16 %v1610
        %v4573 = vunpack.c.h.b16 %v1610
        %v4574 = vunpack.c.l.b16 %v1611
        %v4575 = vunpack.c.h.b16 %v1611
        %v4576 = vunpack.c.l.b16 %v1612
        %v4577 = vunpack.c.h.b16 %v1612
        %v4578 = vunpack.c.l.b16 %v1613
        %v4579 = vunpack.c.h.b16 %v1613
        %v4580 = vunpack.c.l.b16 %v1614
        %v4581 = vunpack.c.h.b16 %v1614
        %v4582 = vunpack.c.l.b16 %v1615
        %v4583 = vunpack.c.h.b16 %v1615
        %v4584 = vunpack.c.l.b16 %v1616
        %v4585 = vunpack.c.h.b16 %v1616
        %v4586 = vunpack.c.l.b16 %v1617
        %v4587 = vunpack.c.h.b16 %v1617
        %v4588 = vunpack.c.l.b16 %v1618
        %v4589 = vunpack.c.h.b16 %v1618
        %v4590 = vunpack.c.l.b16 %v1619
        %v4591 = vunpack.c.h.b16 %v1619
        %v4592 = vunpack.c.l.b16 %v1620
        %v4593 = vunpack.c.h.b16 %v1620
        %v4594 = vunpack.c.l.b16 %v1621
        %v4595 = vunpack.c.h.b16 %v1621
        %v4596 = vunpack.c.l.b16 %v1622
        %v4597 = vunpack.c.h.b16 %v1622
        %v4598 = vunpack.c.l.b16 %v1623
        %v4599 = vunpack.c.h.b16 %v1623
        %v4600 = vunpack.c.l.b16 %v1624
        %v4601 = vunpack.c.h.b16 %v1624
        %v4602 = vunpack.c.l.b16 %v1625
        %v4603 = vunpack.c.h.b16 %v1625
        %v4604 = vunpack.c.l.b16 %v1626
        %v4605 = vunpack.c.h.b16 %v1626
        %v4606 = vunpack.c.l.b16 %v1627
        %v4607 = vunpack.c.h.b16 %v1627
        %v4608 = vunpack.c.l.b16 %v1628
        %v4609 = vunpack.c.h.b16 %v1628
        %v4610 = vunpack.c.l.b16 %v1629
        %v4611 = vunpack.c.h.b16 %v1629
        %v4612 = vunpack.c.l.b16 %v1630
        %v4613 = vunpack.c.h.b16 %v1630
        %v4614 = vunpack.c.l.b16 %v1631
        %v4615 = vunpack.c.h.b16 %v1631
        %v4616 = vunpack.c.l.b16 %v1632
        %v4617 = vunpack.c.h.b16 %v1632
        %v4618 = vunpack.c.l.b16 %v1633
        %v4619 = vunpack.c.h.b16 %v1633
        %v4620 = vunpack.c.l.b16 %v1634
        %v4621 = vunpack.c.h.b16 %v1634
        %v4622 = vunpack.c.l.b16 %v1635
        %v4623 = vunpack.c.h.b16 %v1635
        %v4624 = vunpack.c.l.b16 %v1636
        %v4625 = vunpack.c.h.b16 %v1636
        %v4626 = vunpack.c.l.b16 %v1637
        %v4627 = vunpack.c.h.b16 %v1637
        %v4628 = vunpack.c.l.b16 %v1638
        %v4629 = vunpack.c.h.b16 %v1638
        %v4630 = vunpack.c.l.b16 %v1639
        %v4631 = vunpack.c.h.b16 %v1639
        %v4632 = vunpack.c.l.b16 %v1640
        %v4633 = vunpack.c.h.b16 %v1640
        %v4634 = vunpack.c.l.b16 %v1641
        %v4635 = vunpack.c.h.b16 %v1641
        %v4636 = vunpack.c.l.b16 %v1642
        %v4637 = vunpack.c.h.b16 %v1642
        %v4638 = vunpack.c.l.b16 %v1643
        %v4639 = vunpack.c.h.b16 %v1643
        %v4640 = vunpack.c.l.b16 %v1644
        %v4641 = vunpack.c.h.b16 %v1644
        %v4642 = vunpack.c.l.b16 %v1645
        %v4643 = vunpack.c.h.b16 %v1645
        %v4644 = vunpack.c.l.b16 %v1646
        %v4645 = vunpack.c.h.b16 %v1646
        %v4646 = vunpack.c.l.b16 %v1647
        %v4647 = vunpack.c.h.b16 %v1647
        %v4648 = vunpack.c.l.b16 %v1648
        %v4649 = vunpack.c.h.b16 %v1648
        %v4650 = vunpack.c.l.b16 %v1649
        %v4651 = vunpack.c.h.b16 %v1649
        %v4652 = vunpack.c.l.b16 %v1650
        %v4653 = vunpack.c.h.b16 %v1650
        %v4654 = vunpack.c.l.b16 %v1651
        %v4655 = vunpack.c.h.b16 %v1651
        %v4656 = vunpack.c.l.b16 %v1652
        %v4657 = vunpack.c.h.b16 %v1652
        %v4658 = vunpack.c.l.b16 %v1653
        %v4659 = vunpack.c.h.b16 %v1653
        %v4660 = vunpack.c.l.b16 %v1654
        %v4661 = vunpack.c.h.b16 %v1654
        %v4662 = vunpack.c.l.b16 %v1655
        %v4663 = vunpack.c.h.b16 %v1655
        %v4664 = vunpack.c.l.b16 %v1656
        %v4665 = vunpack.c.h.b16 %v1656
        %v4666 = vunpack.c.l.b16 %v1657
        %v4667 = vunpack.c.h.b16 %v1657
        %v4668 = vunpack.c.l.b16 %v1658
        %v4669 = vunpack.c.h.b16 %v1658
        %v4670 = vunpack.c.l.b16 %v1659
        %v4671 = vunpack.c.h.b16 %v1659
        %v4672 = vunpack.c.l.b16 %v1660
        %v4673 = vunpack.c.h.b16 %v1660
        %v4674 = vunpack.c.l.b16 %v1661
        %v4675 = vunpack.c.h.b16 %v1661
        %v4676 = vunpack.c.l.b16 %v1662
        %v4677 = vunpack.c.h.b16 %v1662
        %v4678 = vunpack.c.l.b16 %v1663
        %v4679 = vunpack.c.h.b16 %v1663
        %v4680 = vunpack.c.l.b16 %v1664
        %v4681 = vunpack.c.h.b16 %v1664
        %v4682 = vunpack.c.l.b16 %v1665
        %v4683 = vunpack.c.h.b16 %v1665
        %v4684 = vunpack.c.l.b16 %v1666
        %v4685 = vunpack.c.h.b16 %v1666
        %v4686 = vunpack.c.l.b16 %v1667
        %v4687 = vunpack.c.h.b16 %v1667
        %v4688 = vunpack.c.l.b16 %v1668
        %v4689 = vunpack.c.h.b16 %v1668
        %v4690 = vunpack.c.l.b16 %v1669
        %v4691 = vunpack.c.h.b16 %v1669
        %v4692 = vunpack.c.l.b16 %v1670
        %v4693 = vunpack.c.h.b16 %v1670
        %v4694 = vunpack.c.l.b16 %v1671
        %v4695 = vunpack.c.h.b16 %v1671
        %v4696 = vunpack.c.l.b16 %v1672
        %v4697 = vunpack.c.h.b16 %v1672
        %v4698 = vunpack.c.l.b16 %v1673
        %v4699 = vunpack.c.h.b16 %v1673
        %v4700 = vunpack.c.l.b16 %v1674
        %v4701 = vunpack.c.h.b16 %v1674
        %v4702 = vunpack.c.l.b16 %v1675
        %v4703 = vunpack.c.h.b16 %v1675
        %v4704 = vunpack.c.l.b16 %v1676
        %v4705 = vunpack.c.h.b16 %v1676
        %v4706 = vunpack.c.l.b16 %v1677
        %v4707 = vunpack.c.h.b16 %v1677
        %v4708 = vunpack.c.l.b16 %v1678
        %v4709 = vunpack.c.h.b16 %v1678
        %v4710 = vunpack.c.l.b16 %v1679
        %v4711 = vunpack.c.h.b16 %v1679
        %v4712 = vunpack.c.l.b16 %v1680
        %v4713 = vunpack.c.h.b16 %v1680
        %v4714 = vunpack.c.l.b16 %v1681
        %v4715 = vunpack.c.h.b16 %v1681
        %v4716 = vunpack.c.l.b16 %v1682
        %v4717 = vunpack.c.h.b16 %v1682
        %v4718 = vunpack.c.l.b16 %v1683
        %v4719 = vunpack.c.h.b16 %v1683
        %v4720 = vunpack.c.l.b16 %v1684
        %v4721 = vunpack.c.h.b16 %v1684
        %v4722 = vunpack.c.l.b16 %v1685
        %v4723 = vunpack.c.h.b16 %v1685
        %v4724 = vunpack.c.l.b16 %v1686
        %v4725 = vunpack.c.h.b16 %v1686
        %v4726 = vunpack.c.l.b16 %v1687
        %v4727 = vunpack.c.h.b16 %v1687
        %v4728 = vunpack.c.l.b16 %v1688
        %v4729 = vunpack.c.h.b16 %v1688
        %v4730 = vunpack.c.l.b16 %v1689
        %v4731 = vunpack.c.h.b16 %v1689
        %v4732 = vunpack.c.l.b16 %v1690
        %v4733 = vunpack.c.h.b16 %v1690
        %v4734 = vunpack.c.l.b16 %v1691
        %v4735 = vunpack.c.h.b16 %v1691
        %v4736 = vunpack.c.l.b16 %v1692
        %v4737 = vunpack.c.h.b16 %v1692
        %v4738 = vunpack.c.l.b16 %v1693
        %v4739 = vunpack.c.h.b16 %v1693
        %v4740 = vunpack.c.l.b16 %v1694
        %v4741 = vunpack.c.h.b16 %v1694
        %v4742 = vunpack.c.l.b16 %v1695
        %v4743 = vunpack.c.h.b16 %v1695
        %v4744 = vunpack.c.l.b16 %v1696
        %v4745 = vunpack.c.h.b16 %v1696
        %v4746 = vunpack.c.l.b16 %v1697
        %v4747 = vunpack.c.h.b16 %v1697
        %v4748 = vunpack.c.l.b16 %v1698
        %v4749 = vunpack.c.h.b16 %v1698
        %v4750 = vunpack.c.l.b16 %v1699
        %v4751 = vunpack.c.h.b16 %v1699
        %v4752 = vunpack.c.l.b16 %v1700
        %v4753 = vunpack.c.h.b16 %v1700
        %v4754 = vunpack.c.l.b16 %v1701
        %v4755 = vunpack.c.h.b16 %v1701
        %v4756 = vunpack.c.l.b16 %v1702
        %v4757 = vunpack.c.h.b16 %v1702
        %v4758 = vunpack.c.l.b16 %v1703
        %v4759 = vunpack.c.h.b16 %v1703
        %v4760 = vunpack.c.l.b16 %v1704
        %v4761 = vunpack.c.h.b16 %v1704
        %v4762 = vunpack.c.l.b16 %v1705
        %v4763 = vunpack.c.h.b16 %v1705
        %v4764 = vunpack.c.l.b16 %v1706
        %v4765 = vunpack.c.h.b16 %v1706
        %v4766 = vunpack.c.l.b16 %v1707
        %v4767 = vunpack.c.h.b16 %v1707
        %v4768 = vunpack.c.l.b16 %v1708
        %v4769 = vunpack.c.h.b16 %v1708
        %v4770 = vunpack.c.l.b16 %v1709
        %v4771 = vunpack.c.h.b16 %v1709
        %v4772 = vunpack.c.l.b16 %v1710
        %v4773 = vunpack.c.h.b16 %v1710
        %v4774 = vunpack.c.l.b16 %v1711
        %v4775 = vunpack.c.h.b16 %v1711
        %v4776 = vunpack.c.l.b16 %v1712
        %v4777 = vunpack.c.h.b16 %v1712
        %v4778 = vunpack.c.l.b16 %v1713
        %v4779 = vunpack.c.h.b16 %v1713
        %v4780 = vunpack.c.l.b16 %v1714
        %v4781 = vunpack.c.h.b16 %v1714
        %v4782 = vunpack.c.l.b16 %v1715
        %v4783 = vunpack.c.h.b16 %v1715
        %v4784 = vunpack.c.l.b16 %v1716
        %v4785 = vunpack.c.h.b16 %v1716
        %v4786 = vunpack.c.l.b16 %v1717
        %v4787 = vunpack.c.h.b16 %v1717
        %v4788 = vunpack.c.l.b16 %v1718
        %v4789 = vunpack.c.h.b16 %v1718
        %v4790 = vunpack.c.l.b16 %v1719
        %v4791 = vunpack.c.h.b16 %v1719
        %v4792 = vpack.c.b16 %v2752, %v2744
        %v4793 = vpack.c.b16 %v2753, %v2745
        %v4794 = vpack.c.b16 %v2754, %v2746
        %v4795 = vpack.c.b16 %v2755, %v2747
        %v4796 = vpack.c.b16 %v2756, %v2748
        %v4797 = vpack.c.b16 %v2757, %v2749
        %v4798 = vpack.c.b16 %v2758, %v2750
        %v4799 = vpack.c.b16 %v2759, %v2751
        %v4800 = vpack.c.b16 %v2768, %v2760
        %v4801 = vpack.c.b16 %v2769, %v2761
        %v4802 = vpack.c.b16 %v2770, %v2762
        %v4803 = vpack.c.b16 %v2771, %v2763
        %v4804 = vpack.c.b16 %v2772, %v2764
        %v4805 = vpack.c.b16 %v2773, %v2765
        %v4806 = vpack.c.b16 %v2774, %v2766
        %v4807 = vpack.c.b16 %v2775, %v2767
        %v4808 = vpack.c.b16 %v2784, %v2776
        %v4809 = vpack.c.b16 %v2785, %v2777
        %v4810 = vpack.c.b16 %v2786, %v2778
        %v4811 = vpack.c.b16 %v2787, %v2779
        %v4812 = vpack.c.b16 %v2788, %v2780
        %v4813 = vpack.c.b16 %v2789, %v2781
        %v4814 = vpack.c.b16 %v2790, %v2782
        %v4815 = vpack.c.b16 %v2791, %v2783
        %v4816 = vpack.c.b16 %v2800, %v2792
        %v4817 = vpack.c.b16 %v2801, %v2793
        %v4818 = vpack.c.b16 %v2802, %v2794
        %v4819 = vpack.c.b16 %v2803, %v2795
        %v4820 = vpack.c.b16 %v2804, %v2796
        %v4821 = vpack.c.b16 %v2805, %v2797
        %v4822 = vpack.c.b16 %v2806, %v2798
        %v4823 = vpack.c.b16 %v2807, %v2799
        %v4824 = vpack.c.b16 %v2816, %v2808
        %v4825 = vpack.c.b16 %v2817, %v2809
        %v4826 = vpack.c.b16 %v2818, %v2810
        %v4827 = vpack.c.b16 %v2819, %v2811
        %v4828 = vpack.c.b16 %v2820, %v2812
        %v4829 = vpack.c.b16 %v2821, %v2813
        %v4830 = vpack.c.b16 %v2822, %v2814
        %v4831 = vpack.c.b16 %v2823, %v2815
        %v4832 = vpack.c.b16 %v2832, %v2824
        %v4833 = vpack.c.b16 %v2833, %v2825
        %v4834 = vpack.c.b16 %v2834, %v2826
        %v4835 = vpack.c.b16 %v2835, %v2827
        %v4836 = vpack.c.b16 %v2836, %v2828
        %v4837 = vpack.c.b16 %v2837, %v2829
        %v4838 = vpack.c.b16 %v2838, %v2830
        %v4839 = vpack.c.b16 %v2839, %v2831
        %v4840 = vpack.c.b16 %v2848, %v2840
        %v4841 = vpack.c.b16 %v2849, %v2841
        %v4842 = vpack.c.b16 %v2850, %v2842
        %v4843 = vpack.c.b16 %v2851, %v2843
        %v4844 = vpack.c.b16 %v2852, %v2844
        %v4845 = vpack.c.b16 %v2853, %v2845
        %v4846 = vpack.c.b16 %v2854, %v2846
        %v4847 = vpack.c.b16 %v2855, %v2847
        %v4848 = vpack.c.b16 %v2864, %v2856
        %v4849 = vpack.c.b16 %v2865, %v2857
        %v4850 = vpack.c.b16 %v2866, %v2858
        %v4851 = vpack.c.b16 %v2867, %v2859
        %v4852 = vpack.c.b16 %v2868, %v2860
        %v4853 = vpack.c.b16 %v2869, %v2861
        %v4854 = vpack.c.b16 %v2870, %v2862
        %v4855 = vpack.c.b16 %v2871, %v2863
        %v4856 = vpack.c.b16 %v2880, %v2872
        %v4857 = vpack.c.b16 %v2881, %v2873
        %v4858 = vpack.c.b16 %v2882, %v2874
        %v4859 = vpack.c.b16 %v2883, %v2875
        %v4860 = vpack.c.b16 %v2884, %v2876
        %v4861 = vpack.c.b16 %v2885, %v2877
        %v4862 = vpack.c.b16 %v2886, %v2878
        %v4863 = vpack.c.b16 %v2887, %v2879
        %v4864 = vpack.c.b16 %v2896, %v2888
        %v4865 = vpack.c.b16 %v2897, %v2889
        %v4866 = vpack.c.b16 %v2898, %v2890
        %v4867 = vpack.c.b16 %v2899, %v2891
        %v4868 = vpack.c.b16 %v2900, %v2892
        %v4869 = vpack.c.b16 %v2901, %v2893
        %v4870 = vpack.c.b16 %v2902, %v2894
        %v4871 = vpack.c.b16 %v2903, %v2895
        %v4872 = vpack.c.b16 %v2912, %v2904
        %v4873 = vpack.c.b16 %v2913, %v2905
        %v4874 = vpack.c.b16 %v2914, %v2906
        %v4875 = vpack.c.b16 %v2915, %v2907
        %v4876 = vpack.c.b16 %v2916, %v2908
        %v4877 = vpack.c.b16 %v2917, %v2909
        %v4878 = vpack.c.b16 %v2918, %v2910
        %v4879 = vpack.c.b16 %v2919, %v2911
        %v4880 = vpack.c.b16 %v2928, %v2920
        %v4881 = vpack.c.b16 %v2929, %v2921
        %v4882 = vpack.c.b16 %v2930, %v2922
        %v4883 = vpack.c.b16 %v2931, %v2923
        %v4884 = vpack.c.b16 %v2932, %v2924
        %v4885 = vpack.c.b16 %v2933, %v2925
        %v4886 = vpack.c.b16 %v2934, %v2926
        %v4887 = vpack.c.b16 %v2935, %v2927
        %v4888 = vpack.c.b16 %v2944, %v2936
        %v4889 = vpack.c.b16 %v2945, %v2937
        %v4890 = vpack.c.b16 %v2946, %v2938
        %v4891 = vpack.c.b16 %v2947, %v2939
        %v4892 = vpack.c.b16 %v2948, %v2940
        %v4893 = vpack.c.b16 %v2949, %v2941
        %v4894 = vpack.c.b16 %v2950, %v2942
        %v4895 = vpack.c.b16 %v2951, %v2943
        %v4896 = vpack.c.b16 %v2960, %v2952
        %v4897 = vpack.c.b16 %v2961, %v2953
        %v4898 = vpack.c.b16 %v2962, %v2954
        %v4899 = vpack.c.b16 %v2963, %v2955
        %v4900 = vpack.c.b16 %v2964, %v2956
        %v4901 = vpack.c.b16 %v2965, %v2957
        %v4902 = vpack.c.b16 %v2966, %v2958
        %v4903 = vpack.c.b16 %v2967, %v2959
        %v4904 = vpack.c.b16 %v2976, %v2968
        %v4905 = vpack.c.b16 %v2977, %v2969
        %v4906 = vpack.c.b16 %v2978, %v2970
        %v4907 = vpack.c.b16 %v2979, %v2971
        %v4908 = vpack.c.b16 %v2980, %v2972
        %v4909 = vpack.c.b16 %v2981, %v2973
        %v4910 = vpack.c.b16 %v2982, %v2974
        %v4911 = vpack.c.b16 %v2983, %v2975
        %v4912 = vpack.c.b16 %v2992, %v2984
        %v4913 = vpack.c.b16 %v2993, %v2985
        %v4914 = vpack.c.b16 %v2994, %v2986
        %v4915 = vpack.c.b16 %v2995, %v2987
        %v4916 = vpack.c.b16 %v2996, %v2988
        %v4917 = vpack.c.b16 %v2997, %v2989
        %v4918 = vpack.c.b16 %v2998, %v2990
        %v4919 = vpack.c.b16 %v2999, %v2991
        %v4920 = vpack.c.b16 %v3008, %v3000
        %v4921 = vpack.c.b16 %v3009, %v3001
        %v4922 = vpack.c.b16 %v3010, %v3002
        %v4923 = vpack.c.b16 %v3011, %v3003
        %v4924 = vpack.c.b16 %v3012, %v3004
        %v4925 = vpack.c.b16 %v3013, %v3005
        %v4926 = vpack.c.b16 %v3014, %v3006
        %v4927 = vpack.c.b16 %v3015, %v3007
        %v4928 = vpack.c.b16 %v3024, %v3016
        %v4929 = vpack.c.b16 %v3025, %v3017
        %v4930 = vpack.c.b16 %v3026, %v3018
        %v4931 = vpack.c.b16 %v3027, %v3019
        %v4932 = vpack.c.b16 %v3028, %v3020
        %v4933 = vpack.c.b16 %v3029, %v3021
        %v4934 = vpack.c.b16 %v3030, %v3022
        %v4935 = vpack.c.b16 %v3031, %v3023
        %v4936 = vpack.c.b16 %v3040, %v3032
        %v4937 = vpack.c.b16 %v3041, %v3033
        %v4938 = vpack.c.b16 %v3042, %v3034
        %v4939 = vpack.c.b16 %v3043, %v3035
        %v4940 = vpack.c.b16 %v3044, %v3036
        %v4941 = vpack.c.b16 %v3045, %v3037
        %v4942 = vpack.c.b16 %v3046, %v3038
        %v4943 = vpack.c.b16 %v3047, %v3039
        %v4944 = vpack.c.b16 %v3056, %v3048
        %v4945 = vpack.c.b16 %v3057, %v3049
        %v4946 = vpack.c.b16 %v3058, %v3050
        %v4947 = vpack.c.b16 %v3059, %v3051
        %v4948 = vpack.c.b16 %v3060, %v3052
        %v4949 = vpack.c.b16 %v3061, %v3053
        %v4950 = vpack.c.b16 %v3062, %v3054
        %v4951 = vpack.c.b16 %v3063, %v3055
        %v4952 = vpack.c.b16 %v3072, %v3064
        %v4953 = vpack.c.b16 %v3073, %v3065
        %v4954 = vpack.c.b16 %v3074, %v3066
        %v4955 = vpack.c.b16 %v3075, %v3067
        %v4956 = vpack.c.b16 %v3076, %v3068
        %v4957 = vpack.c.b16 %v3077, %v3069
        %v4958 = vpack.c.b16 %v3078, %v3070
        %v4959 = vpack.c.b16 %v3079, %v3071
        %v4960 = vpack.c.b16 %v3088, %v3080
        %v4961 = vpack.c.b16 %v3089, %v3081
        %v4962 = vpack.c.b16 %v3090, %v3082
        %v4963 = vpack.c.b16 %v3091, %v3083
        %v4964 = vpack.c.b16 %v3092, %v3084
        %v4965 = vpack.c.b16 %v3093, %v3085
        %v4966 = vpack.c.b16 %v3094, %v3086
        %v4967 = vpack.c.b16 %v3095, %v3087
        %v4968 = vpack.c.b16 %v3104, %v3096
        %v4969 = vpack.c.b16 %v3105, %v3097
        %v4970 = vpack.c.b16 %v3106, %v3098
        %v4971 = vpack.c.b16 %v3107, %v3099
        %v4972 = vpack.c.b16 %v3108, %v3100
        %v4973 = vpack.c.b16 %v3109, %v3101
        %v4974 = vpack.c.b16 %v3110, %v3102
        %v4975 = vpack.c.b16 %v3111, %v3103
        %v4976 = vpack.c.b16 %v3120, %v3112
        %v4977 = vpack.c.b16 %v3121, %v3113
        %v4978 = vpack.c.b16 %v3122, %v3114
        %v4979 = vpack.c.b16 %v3123, %v3115
        %v4980 = vpack.c.b16 %v3124, %v3116
        %v4981 = vpack.c.b16 %v3125, %v3117
        %v4982 = vpack.c.b16 %v3126, %v3118
        %v4983 = vpack.c.b16 %v3127, %v3119
        %v4984 = vpack.c.b16 %v3136, %v3128
        %v4985 = vpack.c.b16 %v3137, %v3129
        %v4986 = vpack.c.b16 %v3138, %v3130
        %v4987 = vpack.c.b16 %v3139, %v3131
        %v4988 = vpack.c.b16 %v3140, %v3132
        %v4989 = vpack.c.b16 %v3141, %v3133
        %v4990 = vpack.c.b16 %v3142, %v3134
        %v4991 = vpack.c.b16 %v3143, %v3135
        %v4992 = vpack.c.b16 %v3152, %v3144
        %v4993 = vpack.c.b16 %v3153, %v3145
        %v4994 = vpack.c.b16 %v3154, %v3146
        %v4995 = vpack.c.b16 %v3155, %v3147
        %v4996 = vpack.c.b16 %v3156, %v3148
        %v4997 = vpack.c.b16 %v3157, %v3149
        %v4998 = vpack.c.b16 %v3158, %v3150
        %v4999 = vpack.c.b16 %v3159, %v3151
        %v5000 = vpack.c.b16 %v3168, %v3160
        %v5001 = vpack.c.b16 %v3169, %v3161
        %v5002 = vpack.c.b16 %v3170, %v3162
        %v5003 = vpack.c.b16 %v3171, %v3163
        %v5004 = vpack.c.b16 %v3172, %v3164
        %v5005 = vpack.c.b16 %v3173, %v3165
        %v5006 = vpack.c.b16 %v3174, %v3166
        %v5007 = vpack.c.b16 %v3175, %v3167
        %v5008 = vpack.c.b16 %v3184, %v3176
        %v5009 = vpack.c.b16 %v3185, %v3177
        %v5010 = vpack.c.b16 %v3186, %v3178
        %v5011 = vpack.c.b16 %v3187, %v3179
        %v5012 = vpack.c.b16 %v3188, %v3180
        %v5013 = vpack.c.b16 %v3189, %v3181
        %v5014 = vpack.c.b16 %v3190, %v3182
        %v5015 = vpack.c.b16 %v3191, %v3183
        %v5016 = vpack.c.b16 %v3200, %v3192
        %v5017 = vpack.c.b16 %v3201, %v3193
        %v5018 = vpack.c.b16 %v3202, %v3194
        %v5019 = vpack.c.b16 %v3203, %v3195
        %v5020 = vpack.c.b16 %v3204, %v3196
        %v5021 = vpack.c.b16 %v3205, %v3197
        %v5022 = vpack.c.b16 %v3206, %v3198
        %v5023 = vpack.c.b16 %v3207, %v3199
        %v5024 = vpack.c.b16 %v3216, %v3208
        %v5025 = vpack.c.b16 %v3217, %v3209
        %v5026 = vpack.c.b16 %v3218, %v3210
        %v5027 = vpack.c.b16 %v3219, %v3211
        %v5028 = vpack.c.b16 %v3220, %v3212
        %v5029 = vpack.c.b16 %v3221, %v3213
        %v5030 = vpack.c.b16 %v3222, %v3214
        %v5031 = vpack.c.b16 %v3223, %v3215
        %v5032 = vpack.c.b16 %v3232, %v3224
        %v5033 = vpack.c.b16 %v3233, %v3225
        %v5034 = vpack.c.b16 %v3234, %v3226
        %v5035 = vpack.c.b16 %v3235, %v3227
        %v5036 = vpack.c.b16 %v3236, %v3228
        %v5037 = vpack.c.b16 %v3237, %v3229
        %v5038 = vpack.c.b16 %v3238, %v3230
        %v5039 = vpack.c.b16 %v3239, %v3231
        %v5040 = vpack.c.b16 %v3248, %v3240
        %v5041 = vpack.c.b16 %v3249, %v3241
        %v5042 = vpack.c.b16 %v3250, %v3242
        %v5043 = vpack.c.b16 %v3251, %v3243
        %v5044 = vpack.c.b16 %v3252, %v3244
        %v5045 = vpack.c.b16 %v3253, %v3245
        %v5046 = vpack.c.b16 %v3254, %v3246
        %v5047 = vpack.c.b16 %v3255, %v3247
        %v5048 = vpack.c.b16 %v3264, %v3256
        %v5049 = vpack.c.b16 %v3265, %v3257
        %v5050 = vpack.c.b16 %v3266, %v3258
        %v5051 = vpack.c.b16 %v3267, %v3259
        %v5052 = vpack.c.b16 %v3268, %v3260
        %v5053 = vpack.c.b16 %v3269, %v3261
        %v5054 = vpack.c.b16 %v3270, %v3262
        %v5055 = vpack.c.b16 %v3271, %v3263
        %v5056 = vpack.c.b16 %v3280, %v3272
        %v5057 = vpack.c.b16 %v3281, %v3273
        %v5058 = vpack.c.b16 %v3282, %v3274
        %v5059 = vpack.c.b16 %v3283, %v3275
        %v5060 = vpack.c.b16 %v3284, %v3276
        %v5061 = vpack.c.b16 %v3285, %v3277
        %v5062 = vpack.c.b16 %v3286, %v3278
        %v5063 = vpack.c.b16 %v3287, %v3279
        %v5064 = vpack.c.b16 %v3296, %v3288
        %v5065 = vpack.c.b16 %v3297, %v3289
        %v5066 = vpack.c.b16 %v3298, %v3290
        %v5067 = vpack.c.b16 %v3299, %v3291
        %v5068 = vpack.c.b16 %v3300, %v3292
        %v5069 = vpack.c.b16 %v3301, %v3293
        %v5070 = vpack.c.b16 %v3302, %v3294
        %v5071 = vpack.c.b16 %v3303, %v3295
        %v5072 = vpack.c.b16 %v3312, %v3304
        %v5073 = vpack.c.b16 %v3313, %v3305
        %v5074 = vpack.c.b16 %v3314, %v3306
        %v5075 = vpack.c.b16 %v3315, %v3307
        %v5076 = vpack.c.b16 %v3316, %v3308
        %v5077 = vpack.c.b16 %v3317, %v3309
        %v5078 = vpack.c.b16 %v3318, %v3310
        %v5079 = vpack.c.b16 %v3319, %v3311
        %v5080 = vpack.c.b16 %v3328, %v3320
        %v5081 = vpack.c.b16 %v3329, %v3321
        %v5082 = vpack.c.b16 %v3330, %v3322
        %v5083 = vpack.c.b16 %v3331, %v3323
        %v5084 = vpack.c.b16 %v3332, %v3324
        %v5085 = vpack.c.b16 %v3333, %v3325
        %v5086 = vpack.c.b16 %v3334, %v3326
        %v5087 = vpack.c.b16 %v3335, %v3327
        %v5088 = vpack.c.b16 %v3344, %v3336
        %v5089 = vpack.c.b16 %v3345, %v3337
        %v5090 = vpack.c.b16 %v3346, %v3338
        %v5091 = vpack.c.b16 %v3347, %v3339
        %v5092 = vpack.c.b16 %v3348, %v3340
        %v5093 = vpack.c.b16 %v3349, %v3341
        %v5094 = vpack.c.b16 %v3350, %v3342
        %v5095 = vpack.c.b16 %v3351, %v3343
        %v5096 = vpack.c.b16 %v3360, %v3352
        %v5097 = vpack.c.b16 %v3361, %v3353
        %v5098 = vpack.c.b16 %v3362, %v3354
        %v5099 = vpack.c.b16 %v3363, %v3355
        %v5100 = vpack.c.b16 %v3364, %v3356
        %v5101 = vpack.c.b16 %v3365, %v3357
        %v5102 = vpack.c.b16 %v3366, %v3358
        %v5103 = vpack.c.b16 %v3367, %v3359
        %v5104 = vpack.c.b16 %v3376, %v3368
        %v5105 = vpack.c.b16 %v3377, %v3369
        %v5106 = vpack.c.b16 %v3378, %v3370
        %v5107 = vpack.c.b16 %v3379, %v3371
        %v5108 = vpack.c.b16 %v3380, %v3372
        %v5109 = vpack.c.b16 %v3381, %v3373
        %v5110 = vpack.c.b16 %v3382, %v3374
        %v5111 = vpack.c.b16 %v3383, %v3375
        %v5112 = vpack.c.b16 %v3392, %v3384
        %v5113 = vpack.c.b16 %v3393, %v3385
        %v5114 = vpack.c.b16 %v3394, %v3386
        %v5115 = vpack.c.b16 %v3395, %v3387
        %v5116 = vpack.c.b16 %v3396, %v3388
        %v5117 = vpack.c.b16 %v3397, %v3389
        %v5118 = vpack.c.b16 %v3398, %v3390
        %v5119 = vpack.c.b16 %v3399, %v3391
        %v5120 = vpack.c.b16 %v3408, %v3400
        %v5121 = vpack.c.b16 %v3409, %v3401
        %v5122 = vpack.c.b16 %v3410, %v3402
        %v5123 = vpack.c.b16 %v3411, %v3403
        %v5124 = vpack.c.b16 %v3412, %v3404
        %v5125 = vpack.c.b16 %v3413, %v3405
        %v5126 = vpack.c.b16 %v3414, %v3406
        %v5127 = vpack.c.b16 %v3415, %v3407
        %v5128 = vpack.c.b16 %v3424, %v3416
        %v5129 = vpack.c.b16 %v3425, %v3417
        %v5130 = vpack.c.b16 %v3426, %v3418
        %v5131 = vpack.c.b16 %v3427, %v3419
        %v5132 = vpack.c.b16 %v3428, %v3420
        %v5133 = vpack.c.b16 %v3429, %v3421
        %v5134 = vpack.c.b16 %v3430, %v3422
        %v5135 = vpack.c.b16 %v3431, %v3423
        %v5136 = vpack.c.b16 %v3440, %v3432
        %v5137 = vpack.c.b16 %v3441, %v3433
        %v5138 = vpack.c.b16 %v3442, %v3434
        %v5139 = vpack.c.b16 %v3443, %v3435
        %v5140 = vpack.c.b16 %v3444, %v3436
        %v5141 = vpack.c.b16 %v3445, %v3437
        %v5142 = vpack.c.b16 %v3446, %v3438
        %v5143 = vpack.c.b16 %v3447, %v3439
        %v5144 = vpack.c.b16 %v3456, %v3448
        %v5145 = vpack.c.b16 %v3457, %v3449
        %v5146 = vpack.c.b16 %v3458, %v3450
        %v5147 = vpack.c.b16 %v3459, %v3451
        %v5148 = vpack.c.b16 %v3460, %v3452
        %v5149 = vpack.c.b16 %v3461, %v3453
        %v5150 = vpack.c.b16 %v3462, %v3454
        %v5151 = vpack.c.b16 %v3463, %v3455
        %v5152 = vpack.c.b16 %v3472, %v3464
        %v5153 = vpack.c.b16 %v3473, %v3465
        %v5154 = vpack.c.b16 %v3474, %v3466
        %v5155 = vpack.c.b16 %v3475, %v3467
        %v5156 = vpack.c.b16 %v3476, %v3468
        %v5157 = vpack.c.b16 %v3477, %v3469
        %v5158 = vpack.c.b16 %v3478, %v3470
        %v5159 = vpack.c.b16 %v3479, %v3471
        %v5160 = vpack.c.b16 %v3488, %v3480
        %v5161 = vpack.c.b16 %v3489, %v3481
        %v5162 = vpack.c.b16 %v3490, %v3482
        %v5163 = vpack.c.b16 %v3491, %v3483
        %v5164 = vpack.c.b16 %v3492, %v3484
        %v5165 = vpack.c.b16 %v3493, %v3485
        %v5166 = vpack.c.b16 %v3494, %v3486
        %v5167 = vpack.c.b16 %v3495, %v3487
        %v5168 = vpack.c.b16 %v3504, %v3496
        %v5169 = vpack.c.b16 %v3505, %v3497
        %v5170 = vpack.c.b16 %v3506, %v3498
        %v5171 = vpack.c.b16 %v3507, %v3499
        %v5172 = vpack.c.b16 %v3508, %v3500
        %v5173 = vpack.c.b16 %v3509, %v3501
        %v5174 = vpack.c.b16 %v3510, %v3502
        %v5175 = vpack.c.b16 %v3511, %v3503
        %v5176 = vpack.c.b16 %v3520, %v3512
        %v5177 = vpack.c.b16 %v3521, %v3513
        %v5178 = vpack.c.b16 %v3522, %v3514
        %v5179 = vpack.c.b16 %v3523, %v3515
        %v5180 = vpack.c.b16 %v3524, %v3516
        %v5181 = vpack.c.b16 %v3525, %v3517
        %v5182 = vpack.c.b16 %v3526, %v3518
        %v5183 = vpack.c.b16 %v3527, %v3519
        %v5184 = vpack.c.b16 %v3536, %v3528
        %v5185 = vpack.c.b16 %v3537, %v3529
        %v5186 = vpack.c.b16 %v3538, %v3530
        %v5187 = vpack.c.b16 %v3539, %v3531
        %v5188 = vpack.c.b16 %v3540, %v3532
        %v5189 = vpack.c.b16 %v3541, %v3533
        %v5190 = vpack.c.b16 %v3542, %v3534
        %v5191 = vpack.c.b16 %v3543, %v3535
        %v5192 = vpack.c.b16 %v3552, %v3544
        %v5193 = vpack.c.b16 %v3553, %v3545
        %v5194 = vpack.c.b16 %v3554, %v3546
        %v5195 = vpack.c.b16 %v3555, %v3547
        %v5196 = vpack.c.b16 %v3556, %v3548
        %v5197 = vpack.c.b16 %v3557, %v3549
        %v5198 = vpack.c.b16 %v3558, %v3550
        %v5199 = vpack.c.b16 %v3559, %v3551
        %v5200 = vpack.c.b16 %v3568, %v3560
        %v5201 = vpack.c.b16 %v3569, %v3561
        %v5202 = vpack.c.b16 %v3570, %v3562
        %v5203 = vpack.c.b16 %v3571, %v3563
        %v5204 = vpack.c.b16 %v3572, %v3564
        %v5205 = vpack.c.b16 %v3573, %v3565
        %v5206 = vpack.c.b16 %v3574, %v3566
        %v5207 = vpack.c.b16 %v3575, %v3567
        %v5208 = vpack.c.b16 %v3584, %v3576
        %v5209 = vpack.c.b16 %v3585, %v3577
        %v5210 = vpack.c.b16 %v3586, %v3578
        %v5211 = vpack.c.b16 %v3587, %v3579
        %v5212 = vpack.c.b16 %v3588, %v3580
        %v5213 = vpack.c.b16 %v3589, %v3581
        %v5214 = vpack.c.b16 %v3590, %v3582
        %v5215 = vpack.c.b16 %v3591, %v3583
        %v5216 = vpack.c.b16 %v3600, %v3592
        %v5217 = vpack.c.b16 %v3601, %v3593
        %v5218 = vpack.c.b16 %v3602, %v3594
        %v5219 = vpack.c.b16 %v3603, %v3595
        %v5220 = vpack.c.b16 %v3604, %v3596
        %v5221 = vpack.c.b16 %v3605, %v3597
        %v5222 = vpack.c.b16 %v3606, %v3598
        %v5223 = vpack.c.b16 %v3607, %v3599
        %v5224 = vpack.c.b16 %v3616, %v3608
        %v5225 = vpack.c.b16 %v3617, %v3609
        %v5226 = vpack.c.b16 %v3618, %v3610
        %v5227 = vpack.c.b16 %v3619, %v3611
        %v5228 = vpack.c.b16 %v3620, %v3612
        %v5229 = vpack.c.b16 %v3621, %v3613
        %v5230 = vpack.c.b16 %v3622, %v3614
        %v5231 = vpack.c.b16 %v3623, %v3615
        %v5232 = vpack.c.b16 %v3632, %v3624
        %v5233 = vpack.c.b16 %v3633, %v3625
        %v5234 = vpack.c.b16 %v3634, %v3626
        %v5235 = vpack.c.b16 %v3635, %v3627
        %v5236 = vpack.c.b16 %v3636, %v3628
        %v5237 = vpack.c.b16 %v3637, %v3629
        %v5238 = vpack.c.b16 %v3638, %v3630
        %v5239 = vpack.c.b16 %v3639, %v3631
        %v5240 = vpack.c.b16 %v3648, %v3640
        %v5241 = vpack.c.b16 %v3649, %v3641
        %v5242 = vpack.c.b16 %v3650, %v3642
        %v5243 = vpack.c.b16 %v3651, %v3643
        %v5244 = vpack.c.b16 %v3652, %v3644
        %v5245 = vpack.c.b16 %v3653, %v3645
        %v5246 = vpack.c.b16 %v3654, %v3646
        %v5247 = vpack.c.b16 %v3655, %v3647
        %v5248 = vpack.c.b16 %v3664, %v3656
        %v5249 = vpack.c.b16 %v3665, %v3657
        %v5250 = vpack.c.b16 %v3666, %v3658
        %v5251 = vpack.c.b16 %v3667, %v3659
        %v5252 = vpack.c.b16 %v3668, %v3660
        %v5253 = vpack.c.b16 %v3669, %v3661
        %v5254 = vpack.c.b16 %v3670, %v3662
        %v5255 = vpack.c.b16 %v3671, %v3663
        %v5256 = vpack.c.b16 %v3680, %v3672
        %v5257 = vpack.c.b16 %v3681, %v3673
        %v5258 = vpack.c.b16 %v3682, %v3674
        %v5259 = vpack.c.b16 %v3683, %v3675
        %v5260 = vpack.c.b16 %v3684, %v3676
        %v5261 = vpack.c.b16 %v3685, %v3677
        %v5262 = vpack.c.b16 %v3686, %v3678
        %v5263 = vpack.c.b16 %v3687, %v3679
        %v5264 = vpack.c.b16 %v3696, %v3688
        %v5265 = vpack.c.b16 %v3697, %v3689
        %v5266 = vpack.c.b16 %v3698, %v3690
        %v5267 = vpack.c.b16 %v3699, %v3691
        %v5268 = vpack.c.b16 %v3700, %v3692
        %v5269 = vpack.c.b16 %v3701, %v3693
        %v5270 = vpack.c.b16 %v3702, %v3694
        %v5271 = vpack.c.b16 %v3703, %v3695
        %v5272 = vpack.c.b16 %v3712, %v3704
        %v5273 = vpack.c.b16 %v3713, %v3705
        %v5274 = vpack.c.b16 %v3714, %v3706
        %v5275 = vpack.c.b16 %v3715, %v3707
        %v5276 = vpack.c.b16 %v3716, %v3708
        %v5277 = vpack.c.b16 %v3717, %v3709
        %v5278 = vpack.c.b16 %v3718, %v3710
        %v5279 = vpack.c.b16 %v3719, %v3711
        %v5280 = vpack.c.b16 %v3728, %v3720
        %v5281 = vpack.c.b16 %v3729, %v3721
        %v5282 = vpack.c.b16 %v3730, %v3722
        %v5283 = vpack.c.b16 %v3731, %v3723
        %v5284 = vpack.c.b16 %v3732, %v3724
        %v5285 = vpack.c.b16 %v3733, %v3725
        %v5286 = vpack.c.b16 %v3734, %v3726
        %v5287 = vpack.c.b16 %v3735, %v3727
        %v5288 = vpack.c.b16 %v3744, %v3736
        %v5289 = vpack.c.b16 %v3745, %v3737
        %v5290 = vpack.c.b16 %v3746, %v3738
        %v5291 = vpack.c.b16 %v3747, %v3739
        %v5292 = vpack.c.b16 %v3748, %v3740
        %v5293 = vpack.c.b16 %v3749, %v3741
        %v5294 = vpack.c.b16 %v3750, %v3742
        %v5295 = vpack.c.b16 %v3751, %v3743
        %v5296 = vpack.c.b16 %v3760, %v3752
        %v5297 = vpack.c.b16 %v3761, %v3753
        %v5298 = vpack.c.b16 %v3762, %v3754
        %v5299 = vpack.c.b16 %v3763, %v3755
        %v5300 = vpack.c.b16 %v3764, %v3756
        %v5301 = vpack.c.b16 %v3765, %v3757
        %v5302 = vpack.c.b16 %v3766, %v3758
        %v5303 = vpack.c.b16 %v3767, %v3759
        %v5304 = vpack.c.b16 %v3776, %v3768
        %v5305 = vpack.c.b16 %v3777, %v3769
        %v5306 = vpack.c.b16 %v3778, %v3770
        %v5307 = vpack.c.b16 %v3779, %v3771
        %v5308 = vpack.c.b16 %v3780, %v3772
        %v5309 = vpack.c.b16 %v3781, %v3773
        %v5310 = vpack.c.b16 %v3782, %v3774
        %v5311 = vpack.c.b16 %v3783, %v3775
        %v5312 = vpack.c.b16 %v3792, %v3784
        %v5313 = vpack.c.b16 %v3793, %v3785
        %v5314 = vpack.c.b16 %v3794, %v3786
        %v5315 = vpack.c.b16 %v3795, %v3787
        %v5316 = vpack.c.b16 %v3796, %v3788
        %v5317 = vpack.c.b16 %v3797, %v3789
        %v5318 = vpack.c.b16 %v3798, %v3790
        %v5319 = vpack.c.b16 %v3799, %v3791
        %v5320 = vpack.c.b16 %v3808, %v3800
        %v5321 = vpack.c.b16 %v3809, %v3801
        %v5322 = vpack.c.b16 %v3810, %v3802
        %v5323 = vpack.c.b16 %v3811, %v3803
        %v5324 = vpack.c.b16 %v3812, %v3804
        %v5325 = vpack.c.b16 %v3813, %v3805
        %v5326 = vpack.c.b16 %v3814, %v3806
        %v5327 = vpack.c.b16 %v3815, %v3807
        %v5328 = vpack.c.b16 %v3824, %v3816
        %v5329 = vpack.c.b16 %v3825, %v3817
        %v5330 = vpack.c.b16 %v3826, %v3818
        %v5331 = vpack.c.b16 %v3827, %v3819
        %v5332 = vpack.c.b16 %v3828, %v3820
        %v5333 = vpack.c.b16 %v3829, %v3821
        %v5334 = vpack.c.b16 %v3830, %v3822
        %v5335 = vpack.c.b16 %v3831, %v3823
        %v5336 = vpack.c.b16 %v3840, %v3832
        %v5337 = vpack.c.b16 %v3841, %v3833
        %v5338 = vpack.c.b16 %v3842, %v3834
        %v5339 = vpack.c.b16 %v3843, %v3835
        %v5340 = vpack.c.b16 %v3844, %v3836
        %v5341 = vpack.c.b16 %v3845, %v3837
        %v5342 = vpack.c.b16 %v3846, %v3838
        %v5343 = vpack.c.b16 %v3847, %v3839
        %v5344 = vpack.c.b16 %v3856, %v3848
        %v5345 = vpack.c.b16 %v3857, %v3849
        %v5346 = vpack.c.b16 %v3858, %v3850
        %v5347 = vpack.c.b16 %v3859, %v3851
        %v5348 = vpack.c.b16 %v3860, %v3852
        %v5349 = vpack.c.b16 %v3861, %v3853
        %v5350 = vpack.c.b16 %v3862, %v3854
        %v5351 = vpack.c.b16 %v3863, %v3855
        %v5352 = vpack.c.b16 %v3872, %v3864
        %v5353 = vpack.c.b16 %v3873, %v3865
        %v5354 = vpack.c.b16 %v3874, %v3866
        %v5355 = vpack.c.b16 %v3875, %v3867
        %v5356 = vpack.c.b16 %v3876, %v3868
        %v5357 = vpack.c.b16 %v3877, %v3869
        %v5358 = vpack.c.b16 %v3878, %v3870
        %v5359 = vpack.c.b16 %v3879, %v3871
        %v5360 = vpack.c.b16 %v3888, %v3880
        %v5361 = vpack.c.b16 %v3889, %v3881
        %v5362 = vpack.c.b16 %v3890, %v3882
        %v5363 = vpack.c.b16 %v3891, %v3883
        %v5364 = vpack.c.b16 %v3892, %v3884
        %v5365 = vpack.c.b16 %v3893, %v3885
        %v5366 = vpack.c.b16 %v3894, %v3886
        %v5367 = vpack.c.b16 %v3895, %v3887
        %v5368 = vpack.c.b16 %v3904, %v3896
        %v5369 = vpack.c.b16 %v3905, %v3897
        %v5370 = vpack.c.b16 %v3906, %v3898
        %v5371 = vpack.c.b16 %v3907, %v3899
        %v5372 = vpack.c.b16 %v3908, %v3900
        %v5373 = vpack.c.b16 %v3909, %v3901
        %v5374 = vpack.c.b16 %v3910, %v3902
        %v5375 = vpack.c.b16 %v3911, %v3903
        %v5376 = vpack.c.b16 %v3920, %v3912
        %v5377 = vpack.c.b16 %v3921, %v3913
        %v5378 = vpack.c.b16 %v3922, %v3914
        %v5379 = vpack.c.b16 %v3923, %v3915
        %v5380 = vpack.c.b16 %v3924, %v3916
        %v5381 = vpack.c.b16 %v3925, %v3917
        %v5382 = vpack.c.b16 %v3926, %v3918
        %v5383 = vpack.c.b16 %v3927, %v3919
        %v5384 = vpack.c.b16 %v3936, %v3928
        %v5385 = vpack.c.b16 %v3937, %v3929
        %v5386 = vpack.c.b16 %v3938, %v3930
        %v5387 = vpack.c.b16 %v3939, %v3931
        %v5388 = vpack.c.b16 %v3940, %v3932
        %v5389 = vpack.c.b16 %v3941, %v3933
        %v5390 = vpack.c.b16 %v3942, %v3934
        %v5391 = vpack.c.b16 %v3943, %v3935
        %v5392 = vpack.c.b16 %v3952, %v3944
        %v5393 = vpack.c.b16 %v3953, %v3945
        %v5394 = vpack.c.b16 %v3954, %v3946
        %v5395 = vpack.c.b16 %v3955, %v3947
        %v5396 = vpack.c.b16 %v3956, %v3948
        %v5397 = vpack.c.b16 %v3957, %v3949
        %v5398 = vpack.c.b16 %v3958, %v3950
        %v5399 = vpack.c.b16 %v3959, %v3951
        %v5400 = vpack.c.b16 %v3968, %v3960
        %v5401 = vpack.c.b16 %v3969, %v3961
        %v5402 = vpack.c.b16 %v3970, %v3962
        %v5403 = vpack.c.b16 %v3971, %v3963
        %v5404 = vpack.c.b16 %v3972, %v3964
        %v5405 = vpack.c.b16 %v3973, %v3965
        %v5406 = vpack.c.b16 %v3974, %v3966
        %v5407 = vpack.c.b16 %v3975, %v3967
        %v5408 = vpack.c.b16 %v3984, %v3976
        %v5409 = vpack.c.b16 %v3985, %v3977
        %v5410 = vpack.c.b16 %v3986, %v3978
        %v5411 = vpack.c.b16 %v3987, %v3979
        %v5412 = vpack.c.b16 %v3988, %v3980
        %v5413 = vpack.c.b16 %v3989, %v3981
        %v5414 = vpack.c.b16 %v3990, %v3982
        %v5415 = vpack.c.b16 %v3991, %v3983
        %v5416 = vpack.c.b16 %v4000, %v3992
        %v5417 = vpack.c.b16 %v4001, %v3993
        %v5418 = vpack.c.b16 %v4002, %v3994
        %v5419 = vpack.c.b16 %v4003, %v3995
        %v5420 = vpack.c.b16 %v4004, %v3996
        %v5421 = vpack.c.b16 %v4005, %v3997
        %v5422 = vpack.c.b16 %v4006, %v3998
        %v5423 = vpack.c.b16 %v4007, %v3999
        %v5424 = vpack.c.b16 %v4016, %v4008
        %v5425 = vpack.c.b16 %v4017, %v4009
        %v5426 = vpack.c.b16 %v4018, %v4010
        %v5427 = vpack.c.b16 %v4019, %v4011
        %v5428 = vpack.c.b16 %v4020, %v4012
        %v5429 = vpack.c.b16 %v4021, %v4013
        %v5430 = vpack.c.b16 %v4022, %v4014
        %v5431 = vpack.c.b16 %v4023, %v4015
        %v5432 = vpack.c.b16 %v4032, %v4024
        %v5433 = vpack.c.b16 %v4033, %v4025
        %v5434 = vpack.c.b16 %v4034, %v4026
        %v5435 = vpack.c.b16 %v4035, %v4027
        %v5436 = vpack.c.b16 %v4036, %v4028
        %v5437 = vpack.c.b16 %v4037, %v4029
        %v5438 = vpack.c.b16 %v4038, %v4030
        %v5439 = vpack.c.b16 %v4039, %v4031
        %v5440 = vpack.c.b16 %v4048, %v4040
        %v5441 = vpack.c.b16 %v4049, %v4041
        %v5442 = vpack.c.b16 %v4050, %v4042
        %v5443 = vpack.c.b16 %v4051, %v4043
        %v5444 = vpack.c.b16 %v4052, %v4044
        %v5445 = vpack.c.b16 %v4053, %v4045
        %v5446 = vpack.c.b16 %v4054, %v4046
        %v5447 = vpack.c.b16 %v4055, %v4047
        %v5448 = vpack.c.b16 %v4064, %v4056
        %v5449 = vpack.c.b16 %v4065, %v4057
        %v5450 = vpack.c.b16 %v4066, %v4058
        %v5451 = vpack.c.b16 %v4067, %v4059
        %v5452 = vpack.c.b16 %v4068, %v4060
        %v5453 = vpack.c.b16 %v4069, %v4061
        %v5454 = vpack.c.b16 %v4070, %v4062
        %v5455 = vpack.c.b16 %v4071, %v4063
        %v5456 = vpack.c.b16 %v4080, %v4072
        %v5457 = vpack.c.b16 %v4081, %v4073
        %v5458 = vpack.c.b16 %v4082, %v4074
        %v5459 = vpack.c.b16 %v4083, %v4075
        %v5460 = vpack.c.b16 %v4084, %v4076
        %v5461 = vpack.c.b16 %v4085, %v4077
        %v5462 = vpack.c.b16 %v4086, %v4078
        %v5463 = vpack.c.b16 %v4087, %v4079
        %v5464 = vpack.c.b16 %v4096, %v4088
        %v5465 = vpack.c.b16 %v4097, %v4089
        %v5466 = vpack.c.b16 %v4098, %v4090
        %v5467 = vpack.c.b16 %v4099, %v4091
        %v5468 = vpack.c.b16 %v4100, %v4092
        %v5469 = vpack.c.b16 %v4101, %v4093
        %v5470 = vpack.c.b16 %v4102, %v4094
        %v5471 = vpack.c.b16 %v4103, %v4095
        %v5472 = vpack.c.b16 %v4112, %v4104
        %v5473 = vpack.c.b16 %v4113, %v4105
        %v5474 = vpack.c.b16 %v4114, %v4106
        %v5475 = vpack.c.b16 %v4115, %v4107
        %v5476 = vpack.c.b16 %v4116, %v4108
        %v5477 = vpack.c.b16 %v4117, %v4109
        %v5478 = vpack.c.b16 %v4118, %v4110
        %v5479 = vpack.c.b16 %v4119, %v4111
        %v5480 = vpack.c.b16 %v4128, %v4120
        %v5481 = vpack.c.b16 %v4129, %v4121
        %v5482 = vpack.c.b16 %v4130, %v4122
        %v5483 = vpack.c.b16 %v4131, %v4123
        %v5484 = vpack.c.b16 %v4132, %v4124
        %v5485 = vpack.c.b16 %v4133, %v4125
        %v5486 = vpack.c.b16 %v4134, %v4126
        %v5487 = vpack.c.b16 %v4135, %v4127
        %v5488 = vpack.c.b16 %v4144, %v4136
        %v5489 = vpack.c.b16 %v4145, %v4137
        %v5490 = vpack.c.b16 %v4146, %v4138
        %v5491 = vpack.c.b16 %v4147, %v4139
        %v5492 = vpack.c.b16 %v4148, %v4140
        %v5493 = vpack.c.b16 %v4149, %v4141
        %v5494 = vpack.c.b16 %v4150, %v4142
        %v5495 = vpack.c.b16 %v4151, %v4143
        %v5496 = vpack.c.b16 %v4160, %v4152
        %v5497 = vpack.c.b16 %v4161, %v4153
        %v5498 = vpack.c.b16 %v4162, %v4154
        %v5499 = vpack.c.b16 %v4163, %v4155
        %v5500 = vpack.c.b16 %v4164, %v4156
        %v5501 = vpack.c.b16 %v4165, %v4157
        %v5502 = vpack.c.b16 %v4166, %v4158
        %v5503 = vpack.c.b16 %v4167, %v4159
        %v5504 = vpack.c.b16 %v4176, %v4168
        %v5505 = vpack.c.b16 %v4177, %v4169
        %v5506 = vpack.c.b16 %v4178, %v4170
        %v5507 = vpack.c.b16 %v4179, %v4171
        %v5508 = vpack.c.b16 %v4180, %v4172
        %v5509 = vpack.c.b16 %v4181, %v4173
        %v5510 = vpack.c.b16 %v4182, %v4174
        %v5511 = vpack.c.b16 %v4183, %v4175
        %v5512 = vpack.c.b16 %v4192, %v4184
        %v5513 = vpack.c.b16 %v4193, %v4185
        %v5514 = vpack.c.b16 %v4194, %v4186
        %v5515 = vpack.c.b16 %v4195, %v4187
        %v5516 = vpack.c.b16 %v4196, %v4188
        %v5517 = vpack.c.b16 %v4197, %v4189
        %v5518 = vpack.c.b16 %v4198, %v4190
        %v5519 = vpack.c.b16 %v4199, %v4191
        %v5520 = vpack.c.b16 %v4208, %v4200
        %v5521 = vpack.c.b16 %v4209, %v4201
        %v5522 = vpack.c.b16 %v4210, %v4202
        %v5523 = vpack.c.b16 %v4211, %v4203
        %v5524 = vpack.c.b16 %v4212, %v4204
        %v5525 = vpack.c.b16 %v4213, %v4205
        %v5526 = vpack.c.b16 %v4214, %v4206
        %v5527 = vpack.c.b16 %v4215, %v4207
        %v5528 = vpack.c.b16 %v4224, %v4216
        %v5529 = vpack.c.b16 %v4225, %v4217
        %v5530 = vpack.c.b16 %v4226, %v4218
        %v5531 = vpack.c.b16 %v4227, %v4219
        %v5532 = vpack.c.b16 %v4228, %v4220
        %v5533 = vpack.c.b16 %v4229, %v4221
        %v5534 = vpack.c.b16 %v4230, %v4222
        %v5535 = vpack.c.b16 %v4231, %v4223
        %v5536 = vpack.c.b16 %v4240, %v4232
        %v5537 = vpack.c.b16 %v4241, %v4233
        %v5538 = vpack.c.b16 %v4242, %v4234
        %v5539 = vpack.c.b16 %v4243, %v4235
        %v5540 = vpack.c.b16 %v4244, %v4236
        %v5541 = vpack.c.b16 %v4245, %v4237
        %v5542 = vpack.c.b16 %v4246, %v4238
        %v5543 = vpack.c.b16 %v4247, %v4239
        %v5544 = vpack.c.b16 %v4256, %v4248
        %v5545 = vpack.c.b16 %v4257, %v4249
        %v5546 = vpack.c.b16 %v4258, %v4250
        %v5547 = vpack.c.b16 %v4259, %v4251
        %v5548 = vpack.c.b16 %v4260, %v4252
        %v5549 = vpack.c.b16 %v4261, %v4253
        %v5550 = vpack.c.b16 %v4262, %v4254
        %v5551 = vpack.c.b16 %v4263, %v4255
        %v5552 = vpack.c.b16 %v4272, %v4264
        %v5553 = vpack.c.b16 %v4273, %v4265
        %v5554 = vpack.c.b16 %v4274, %v4266
        %v5555 = vpack.c.b16 %v4275, %v4267
        %v5556 = vpack.c.b16 %v4276, %v4268
        %v5557 = vpack.c.b16 %v4277, %v4269
        %v5558 = vpack.c.b16 %v4278, %v4270
        %v5559 = vpack.c.b16 %v4279, %v4271
        %v5560 = vpack.c.b16 %v4288, %v4280
        %v5561 = vpack.c.b16 %v4289, %v4281
        %v5562 = vpack.c.b16 %v4290, %v4282
        %v5563 = vpack.c.b16 %v4291, %v4283
        %v5564 = vpack.c.b16 %v4292, %v4284
        %v5565 = vpack.c.b16 %v4293, %v4285
        %v5566 = vpack.c.b16 %v4294, %v4286
        %v5567 = vpack.c.b16 %v4295, %v4287
        %v5568 = vpack.c.b16 %v4304, %v4296
        %v5569 = vpack.c.b16 %v4305, %v4297
        %v5570 = vpack.c.b16 %v4306, %v4298
        %v5571 = vpack.c.b16 %v4307, %v4299
        %v5572 = vpack.c.b16 %v4308, %v4300
        %v5573 = vpack.c.b16 %v4309, %v4301
        %v5574 = vpack.c.b16 %v4310, %v4302
        %v5575 = vpack.c.b16 %v4311, %v4303
        %v5576 = vpack.c.b16 %v4320, %v4312
        %v5577 = vpack.c.b16 %v4321, %v4313
        %v5578 = vpack.c.b16 %v4322, %v4314
        %v5579 = vpack.c.b16 %v4323, %v4315
        %v5580 = vpack.c.b16 %v4324, %v4316
        %v5581 = vpack.c.b16 %v4325, %v4317
        %v5582 = vpack.c.b16 %v4326, %v4318
        %v5583 = vpack.c.b16 %v4327, %v4319
        %v5584 = vpack.c.b16 %v4336, %v4328
        %v5585 = vpack.c.b16 %v4337, %v4329
        %v5586 = vpack.c.b16 %v4338, %v4330
        %v5587 = vpack.c.b16 %v4339, %v4331
        %v5588 = vpack.c.b16 %v4340, %v4332
        %v5589 = vpack.c.b16 %v4341, %v4333
        %v5590 = vpack.c.b16 %v4342, %v4334
        %v5591 = vpack.c.b16 %v4343, %v4335
        %v5592 = vpack.c.b16 %v4352, %v4344
        %v5593 = vpack.c.b16 %v4353, %v4345
        %v5594 = vpack.c.b16 %v4354, %v4346
        %v5595 = vpack.c.b16 %v4355, %v4347
        %v5596 = vpack.c.b16 %v4356, %v4348
        %v5597 = vpack.c.b16 %v4357, %v4349
        %v5598 = vpack.c.b16 %v4358, %v4350
        %v5599 = vpack.c.b16 %v4359, %v4351
        %v5600 = vpack.c.b16 %v4368, %v4360
        %v5601 = vpack.c.b16 %v4369, %v4361
        %v5602 = vpack.c.b16 %v4370, %v4362
        %v5603 = vpack.c.b16 %v4371, %v4363
        %v5604 = vpack.c.b16 %v4372, %v4364
        %v5605 = vpack.c.b16 %v4373, %v4365
        %v5606 = vpack.c.b16 %v4374, %v4366
        %v5607 = vpack.c.b16 %v4375, %v4367
        %v5608 = vpack.c.b16 %v4384, %v4376
        %v5609 = vpack.c.b16 %v4385, %v4377
        %v5610 = vpack.c.b16 %v4386, %v4378
        %v5611 = vpack.c.b16 %v4387, %v4379
        %v5612 = vpack.c.b16 %v4388, %v4380
        %v5613 = vpack.c.b16 %v4389, %v4381
        %v5614 = vpack.c.b16 %v4390, %v4382
        %v5615 = vpack.c.b16 %v4391, %v4383
        %v5616 = vpack.c.b16 %v4400, %v4392
        %v5617 = vpack.c.b16 %v4401, %v4393
        %v5618 = vpack.c.b16 %v4402, %v4394
        %v5619 = vpack.c.b16 %v4403, %v4395
        %v5620 = vpack.c.b16 %v4404, %v4396
        %v5621 = vpack.c.b16 %v4405, %v4397
        %v5622 = vpack.c.b16 %v4406, %v4398
        %v5623 = vpack.c.b16 %v4407, %v4399
        %v5624 = vpack.c.b16 %v4416, %v4408
        %v5625 = vpack.c.b16 %v4417, %v4409
        %v5626 = vpack.c.b16 %v4418, %v4410
        %v5627 = vpack.c.b16 %v4419, %v4411
        %v5628 = vpack.c.b16 %v4420, %v4412
        %v5629 = vpack.c.b16 %v4421, %v4413
        %v5630 = vpack.c.b16 %v4422, %v4414
        %v5631 = vpack.c.b16 %v4423, %v4415
        %v5632 = vpack.c.b16 %v4432, %v4424
        %v5633 = vpack.c.b16 %v4433, %v4425
        %v5634 = vpack.c.b16 %v4434, %v4426
        %v5635 = vpack.c.b16 %v4435, %v4427
        %v5636 = vpack.c.b16 %v4436, %v4428
        %v5637 = vpack.c.b16 %v4437, %v4429
        %v5638 = vpack.c.b16 %v4438, %v4430
        %v5639 = vpack.c.b16 %v4439, %v4431
        %v5640 = vpack.c.b16 %v4448, %v4440
        %v5641 = vpack.c.b16 %v4449, %v4441
        %v5642 = vpack.c.b16 %v4450, %v4442
        %v5643 = vpack.c.b16 %v4451, %v4443
        %v5644 = vpack.c.b16 %v4452, %v4444
        %v5645 = vpack.c.b16 %v4453, %v4445
        %v5646 = vpack.c.b16 %v4454, %v4446
        %v5647 = vpack.c.b16 %v4455, %v4447
        %v5648 = vpack.c.b16 %v4464, %v4456
        %v5649 = vpack.c.b16 %v4465, %v4457
        %v5650 = vpack.c.b16 %v4466, %v4458
        %v5651 = vpack.c.b16 %v4467, %v4459
        %v5652 = vpack.c.b16 %v4468, %v4460
        %v5653 = vpack.c.b16 %v4469, %v4461
        %v5654 = vpack.c.b16 %v4470, %v4462
        %v5655 = vpack.c.b16 %v4471, %v4463
        %v5656 = vpack.c.b16 %v4480, %v4472
        %v5657 = vpack.c.b16 %v4481, %v4473
        %v5658 = vpack.c.b16 %v4482, %v4474
        %v5659 = vpack.c.b16 %v4483, %v4475
        %v5660 = vpack.c.b16 %v4484, %v4476
        %v5661 = vpack.c.b16 %v4485, %v4477
        %v5662 = vpack.c.b16 %v4486, %v4478
        %v5663 = vpack.c.b16 %v4487, %v4479
        %v5664 = vpack.c.b16 %v4496, %v4488
        %v5665 = vpack.c.b16 %v4497, %v4489
        %v5666 = vpack.c.b16 %v4498, %v4490
        %v5667 = vpack.c.b16 %v4499, %v4491
        %v5668 = vpack.c.b16 %v4500, %v4492
        %v5669 = vpack.c.b16 %v4501, %v4493
        %v5670 = vpack.c.b16 %v4502, %v4494
        %v5671 = vpack.c.b16 %v4503, %v4495
        %v5672 = vpack.c.b16 %v4512, %v4504
        %v5673 = vpack.c.b16 %v4513, %v4505
        %v5674 = vpack.c.b16 %v4514, %v4506
        %v5675 = vpack.c.b16 %v4515, %v4507
        %v5676 = vpack.c.b16 %v4516, %v4508
        %v5677 = vpack.c.b16 %v4517, %v4509
        %v5678 = vpack.c.b16 %v4518, %v4510
        %v5679 = vpack.c.b16 %v4519, %v4511
        %v5680 = vpack.c.b16 %v4528, %v4520
        %v5681 = vpack.c.b16 %v4529, %v4521
        %v5682 = vpack.c.b16 %v4530, %v4522
        %v5683 = vpack.c.b16 %v4531, %v4523
        %v5684 = vpack.c.b16 %v4532, %v4524
        %v5685 = vpack.c.b16 %v4533, %v4525
        %v5686 = vpack.c.b16 %v4534, %v4526
        %v5687 = vpack.c.b16 %v4535, %v4527
        %v5688 = vpack.c.b16 %v4544, %v4536
        %v5689 = vpack.c.b16 %v4545, %v4537
        %v5690 = vpack.c.b16 %v4546, %v4538
        %v5691 = vpack.c.b16 %v4547, %v4539
        %v5692 = vpack.c.b16 %v4548, %v4540
        %v5693 = vpack.c.b16 %v4549, %v4541
        %v5694 = vpack.c.b16 %v4550, %v4542
        %v5695 = vpack.c.b16 %v4551, %v4543
        %v5696 = vpack.c.b16 %v4560, %v4552
        %v5697 = vpack.c.b16 %v4561, %v4553
        %v5698 = vpack.c.b16 %v4562, %v4554
        %v5699 = vpack.c.b16 %v4563, %v4555
        %v5700 = vpack.c.b16 %v4564, %v4556
        %v5701 = vpack.c.b16 %v4565, %v4557
        %v5702 = vpack.c.b16 %v4566, %v4558
        %v5703 = vpack.c.b16 %v4567, %v4559
        %v5704 = vpack.c.b16 %v4576, %v4568
        %v5705 = vpack.c.b16 %v4577, %v4569
        %v5706 = vpack.c.b16 %v4578, %v4570
        %v5707 = vpack.c.b16 %v4579, %v4571
        %v5708 = vpack.c.b16 %v4580, %v4572
        %v5709 = vpack.c.b16 %v4581, %v4573
        %v5710 = vpack.c.b16 %v4582, %v4574
        %v5711 = vpack.c.b16 %v4583, %v4575
        %v5712 = vpack.c.b16 %v4592, %v4584
        %v5713 = vpack.c.b16 %v4593, %v4585
        %v5714 = vpack.c.b16 %v4594, %v4586
        %v5715 = vpack.c.b16 %v4595, %v4587
        %v5716 = vpack.c.b16 %v4596, %v4588
        %v5717 = vpack.c.b16 %v4597, %v4589
        %v5718 = vpack.c.b16 %v4598, %v4590
        %v5719 = vpack.c.b16 %v4599, %v4591
        %v5720 = vpack.c.b16 %v4608, %v4600
        %v5721 = vpack.c.b16 %v4609, %v4601
        %v5722 = vpack.c.b16 %v4610, %v4602
        %v5723 = vpack.c.b16 %v4611, %v4603
        %v5724 = vpack.c.b16 %v4612, %v4604
        %v5725 = vpack.c.b16 %v4613, %v4605
        %v5726 = vpack.c.b16 %v4614, %v4606
        %v5727 = vpack.c.b16 %v4615, %v4607
        %v5728 = vpack.c.b16 %v4624, %v4616
        %v5729 = vpack.c.b16 %v4625, %v4617
        %v5730 = vpack.c.b16 %v4626, %v4618
        %v5731 = vpack.c.b16 %v4627, %v4619
        %v5732 = vpack.c.b16 %v4628, %v4620
        %v5733 = vpack.c.b16 %v4629, %v4621
        %v5734 = vpack.c.b16 %v4630, %v4622
        %v5735 = vpack.c.b16 %v4631, %v4623
        %v5736 = vpack.c.b16 %v4640, %v4632
        %v5737 = vpack.c.b16 %v4641, %v4633
        %v5738 = vpack.c.b16 %v4642, %v4634
        %v5739 = vpack.c.b16 %v4643, %v4635
        %v5740 = vpack.c.b16 %v4644, %v4636
        %v5741 = vpack.c.b16 %v4645, %v4637
        %v5742 = vpack.c.b16 %v4646, %v4638
        %v5743 = vpack.c.b16 %v4647, %v4639
        %v5744 = vpack.c.b16 %v4656, %v4648
        %v5745 = vpack.c.b16 %v4657, %v4649
        %v5746 = vpack.c.b16 %v4658, %v4650
        %v5747 = vpack.c.b16 %v4659, %v4651
        %v5748 = vpack.c.b16 %v4660, %v4652
        %v5749 = vpack.c.b16 %v4661, %v4653
        %v5750 = vpack.c.b16 %v4662, %v4654
        %v5751 = vpack.c.b16 %v4663, %v4655
        %v5752 = vpack.c.b16 %v4672, %v4664
        %v5753 = vpack.c.b16 %v4673, %v4665
        %v5754 = vpack.c.b16 %v4674, %v4666
        %v5755 = vpack.c.b16 %v4675, %v4667
        %v5756 = vpack.c.b16 %v4676, %v4668
        %v5757 = vpack.c.b16 %v4677, %v4669
        %v5758 = vpack.c.b16 %v4678, %v4670
        %v5759 = vpack.c.b16 %v4679, %v4671
        %v5760 = vpack.c.b16 %v4688, %v4680
        %v5761 = vpack.c.b16 %v4689, %v4681
        %v5762 = vpack.c.b16 %v4690, %v4682
        %v5763 = vpack.c.b16 %v4691, %v4683
        %v5764 = vpack.c.b16 %v4692, %v4684
        %v5765 = vpack.c.b16 %v4693, %v4685
        %v5766 = vpack.c.b16 %v4694, %v4686
        %v5767 = vpack.c.b16 %v4695, %v4687
        %v5768 = vpack.c.b16 %v4704, %v4696
        %v5769 = vpack.c.b16 %v4705, %v4697
        %v5770 = vpack.c.b16 %v4706, %v4698
        %v5771 = vpack.c.b16 %v4707, %v4699
        %v5772 = vpack.c.b16 %v4708, %v4700
        %v5773 = vpack.c.b16 %v4709, %v4701
        %v5774 = vpack.c.b16 %v4710, %v4702
        %v5775 = vpack.c.b16 %v4711, %v4703
        %v5776 = vpack.c.b16 %v4720, %v4712
        %v5777 = vpack.c.b16 %v4721, %v4713
        %v5778 = vpack.c.b16 %v4722, %v4714
        %v5779 = vpack.c.b16 %v4723, %v4715
        %v5780 = vpack.c.b16 %v4724, %v4716
        %v5781 = vpack.c.b16 %v4725, %v4717
        %v5782 = vpack.c.b16 %v4726, %v4718
        %v5783 = vpack.c.b16 %v4727, %v4719
        %v5784 = vpack.c.b16 %v4736, %v4728
        %v5785 = vpack.c.b16 %v4737, %v4729
        %v5786 = vpack.c.b16 %v4738, %v4730
        %v5787 = vpack.c.b16 %v4739, %v4731
        %v5788 = vpack.c.b16 %v4740, %v4732
        %v5789 = vpack.c.b16 %v4741, %v4733
        %v5790 = vpack.c.b16 %v4742, %v4734
        %v5791 = vpack.c.b16 %v4743, %v4735
        %v5792 = vpack.c.b16 %v4752, %v4744
        %v5793 = vpack.c.b16 %v4753, %v4745
        %v5794 = vpack.c.b16 %v4754, %v4746
        %v5795 = vpack.c.b16 %v4755, %v4747
        %v5796 = vpack.c.b16 %v4756, %v4748
        %v5797 = vpack.c.b16 %v4757, %v4749
        %v5798 = vpack.c.b16 %v4758, %v4750
        %v5799 = vpack.c.b16 %v4759, %v4751
        %v5800 = vpack.c.b16 %v4768, %v4760
        %v5801 = vpack.c.b16 %v4769, %v4761
        %v5802 = vpack.c.b16 %v4770, %v4762
        %v5803 = vpack.c.b16 %v4771, %v4763
        %v5804 = vpack.c.b16 %v4772, %v4764
        %v5805 = vpack.c.b16 %v4773, %v4765
        %v5806 = vpack.c.b16 %v4774, %v4766
        %v5807 = vpack.c.b16 %v4775, %v4767
        %v5808 = vpack.c.b16 %v4784, %v4776
        %v5809 = vpack.c.b16 %v4785, %v4777
        %v5810 = vpack.c.b16 %v4786, %v4778
        %v5811 = vpack.c.b16 %v4787, %v4779
        %v5812 = vpack.c.b16 %v4788, %v4780
        %v5813 = vpack.c.b16 %v4789, %v4781
        %v5814 = vpack.c.b16 %v4790, %v4782
        %v5815 = vpack.c.b16 %v4791, %v4783
        %6840 = vmatpush.bf16.msra.mxu0 %v4848
        %6841 = vmatpush.bf16.msra.mxu0 %v4840
        %6842 = vmatpush.bf16.msra.mxu0 %v4832
        %6843 = vmatpush.bf16.msra.mxu0 %v4824
        %6844 = vmatpush.bf16.msra.mxu0 %v4816
        %6845 = vmatpush.bf16.msra.mxu0 %v4808
        %6846 = vmatpush.bf16.msra.mxu0 %v4800
        %6847 = vmatpush.bf16.msra.mxu0 %v4792
        %6848 = vmatmul.bf16.gmra.mxu0 %v680
        %v6849 = vpop.f32.mrf.mxu0
        %v6850 = vadd.f32 0.0, %v6849
        %v6851 = vpop.f32.mrf.mxu0
        %6852 = vdwg.mxu0
        %6853 = vmatpush.bf16.msra.mxu0 %v4912
        %6854 = vmatpush.bf16.msra.mxu0 %v4904
        %6855 = vmatpush.bf16.msra.mxu0 %v4896
        %6856 = vmatpush.bf16.msra.mxu0 %v4888
        %6857 = vmatpush.bf16.msra.mxu0 %v4880
        %6858 = vmatpush.bf16.msra.mxu0 %v4872
        %6859 = vmatpush.bf16.msra.mxu0 %v4864
        %6860 = vmatpush.bf16.msra.mxu0 %v4856
        %6861 = vmatmul.bf16.gmra.mxu0 %v681
        %v6862 = vpop.f32.mrf.mxu0
        %v6863 = vadd.f32 %v6850, %v6862
        %v6864 = vpop.f32.mrf.mxu0
        %6865 = vdwg.mxu0
        %6866 = vmatpush.bf16.msra.mxu0 %v4976
        %6867 = vmatpush.bf16.msra.mxu0 %v4968
        %6868 = vmatpush.bf16.msra.mxu0 %v4960
        %6869 = vmatpush.bf16.msra.mxu0 %v4952
        %6870 = vmatpush.bf16.msra.mxu0 %v4944
        %6871 = vmatpush.bf16.msra.mxu0 %v4936
        %6872 = vmatpush.bf16.msra.mxu0 %v4928
        %6873 = vmatpush.bf16.msra.mxu0 %v4920
        %6874 = vmatmul.bf16.gmra.mxu0 %v682
        %v6875 = vpop.f32.mrf.mxu0
        %v6876 = vadd.f32 %v6863, %v6875
        %v6877 = vpop.f32.mrf.mxu0
        %6878 = vdwg.mxu0
        %6879 = vmatpush.bf16.msra.mxu0 %v5040
        %6880 = vmatpush.bf16.msra.mxu0 %v5032
        %6881 = vmatpush.bf16.msra.mxu0 %v5024
        %6882 = vmatpush.bf16.msra.mxu0 %v5016
        %6883 = vmatpush.bf16.msra.mxu0 %v5008
        %6884 = vmatpush.bf16.msra.mxu0 %v5000
        %6885 = vmatpush.bf16.msra.mxu0 %v4992
        %6886 = vmatpush.bf16.msra.mxu0 %v4984
        %6887 = vmatmul.bf16.gmra.mxu0 %v683
        %v6888 = vpop.f32.mrf.mxu0
        %v6889 = vadd.f32 %v6876, %v6888
        %v6890 = vpop.f32.mrf.mxu0
        %6891 = vdwg.mxu0
        %6892 = vmatpush.bf16.msra.mxu0 %v5104
        %6893 = vmatpush.bf16.msra.mxu0 %v5096
        %6894 = vmatpush.bf16.msra.mxu0 %v5088
        %6895 = vmatpush.bf16.msra.mxu0 %v5080
        %6896 = vmatpush.bf16.msra.mxu0 %v5072
        %6897 = vmatpush.bf16.msra.mxu0 %v5064
        %6898 = vmatpush.bf16.msra.mxu0 %v5056
        %6899 = vmatpush.bf16.msra.mxu0 %v5048
        %6900 = vmatmul.bf16.gmra.mxu0 %v684
        %v6901 = vpop.f32.mrf.mxu0
        %v6902 = vadd.f32 %v6889, %v6901
        %v6903 = vpop.f32.mrf.mxu0
        %6904 = vdwg.mxu0
        %6905 = vmatpush.bf16.msra.mxu0 %v5168
        %6906 = vmatpush.bf16.msra.mxu0 %v5160
        %6907 = vmatpush.bf16.msra.mxu0 %v5152
        %6908 = vmatpush.bf16.msra.mxu0 %v5144
        %6909 = vmatpush.bf16.msra.mxu0 %v5136
        %6910 = vmatpush.bf16.msra.mxu0 %v5128
        %6911 = vmatpush.bf16.msra.mxu0 %v5120
        %6912 = vmatpush.bf16.msra.mxu0 %v5112
        %6913 = vmatmul.bf16.gmra.mxu0 %v685
        %v6914 = vpop.f32.mrf.mxu0
        %v6915 = vadd.f32 %v6902, %v6914
        %v6916 = vpop.f32.mrf.mxu0
        %6917 = vdwg.mxu0
        %6918 = vmatpush.bf16.msra.mxu0 %v5232
        %6919 = vmatpush.bf16.msra.mxu0 %v5224
        %6920 = vmatpush.bf16.msra.mxu0 %v5216
        %6921 = vmatpush.bf16.msra.mxu0 %v5208
        %6922 = vmatpush.bf16.msra.mxu0 %v5200
        %6923 = vmatpush.bf16.msra.mxu0 %v5192
        %6924 = vmatpush.bf16.msra.mxu0 %v5184
        %6925 = vmatpush.bf16.msra.mxu0 %v5176
        %6926 = vmatmul.bf16.gmra.mxu0 %v686
        %v6927 = vpop.f32.mrf.mxu0
        %v6928 = vadd.f32 %v6915, %v6927
        %v6929 = vpop.f32.mrf.mxu0
        %6930 = vdwg.mxu0
        %6931 = vmatpush.bf16.msra.mxu0 %v5296
        %6932 = vmatpush.bf16.msra.mxu0 %v5288
        %6933 = vmatpush.bf16.msra.mxu0 %v5280
        %6934 = vmatpush.bf16.msra.mxu0 %v5272
        %6935 = vmatpush.bf16.msra.mxu0 %v5264
        %6936 = vmatpush.bf16.msra.mxu0 %v5256
        %6937 = vmatpush.bf16.msra.mxu0 %v5248
        %6938 = vmatpush.bf16.msra.mxu0 %v5240
        %6939 = vmatmul.bf16.gmra.mxu0 %v687
        %v6940 = vpop.f32.mrf.mxu0
        %v6941 = vadd.f32 %v6928, %v6940
        %v6942 = vpop.f32.mrf.mxu0
        %6943 = vdwg.mxu0
        %6944 = vmatpush.bf16.msra.mxu0 %v5360
        %6945 = vmatpush.bf16.msra.mxu0 %v5352
        %6946 = vmatpush.bf16.msra.mxu0 %v5344
        %6947 = vmatpush.bf16.msra.mxu0 %v5336
        %6948 = vmatpush.bf16.msra.mxu0 %v5328
        %6949 = vmatpush.bf16.msra.mxu0 %v5320
        %6950 = vmatpush.bf16.msra.mxu0 %v5312
        %6951 = vmatpush.bf16.msra.mxu0 %v5304
        %6952 = vmatmul.bf16.gmra.mxu0 %v688
        %v6953 = vpop.f32.mrf.mxu0
        %v6954 = vadd.f32 %v6941, %v6953
        %v6955 = vpop.f32.mrf.mxu0
        %6956 = vdwg.mxu0
        %6957 = vmatpush.bf16.msra.mxu0 %v5424
        %6958 = vmatpush.bf16.msra.mxu0 %v5416
        %6959 = vmatpush.bf16.msra.mxu0 %v5408
        %6960 = vmatpush.bf16.msra.mxu0 %v5400
        %6961 = vmatpush.bf16.msra.mxu0 %v5392
        %6962 = vmatpush.bf16.msra.mxu0 %v5384
        %6963 = vmatpush.bf16.msra.mxu0 %v5376
        %6964 = vmatpush.bf16.msra.mxu0 %v5368
        %6965 = vmatmul.bf16.gmra.mxu0 %v689
        %v6966 = vpop.f32.mrf.mxu0
        %v6967 = vadd.f32 %v6954, %v6966
        %v6968 = vpop.f32.mrf.mxu0
        %6969 = vdwg.mxu0
        %6970 = vmatpush.bf16.msra.mxu0 %v5488
        %6971 = vmatpush.bf16.msra.mxu0 %v5480
        %6972 = vmatpush.bf16.msra.mxu0 %v5472
        %6973 = vmatpush.bf16.msra.mxu0 %v5464
        %6974 = vmatpush.bf16.msra.mxu0 %v5456
        %6975 = vmatpush.bf16.msra.mxu0 %v5448
        %6976 = vmatpush.bf16.msra.mxu0 %v5440
        %6977 = vmatpush.bf16.msra.mxu0 %v5432
        %6978 = vmatmul.bf16.gmra.mxu0 %v690
        %v6979 = vpop.f32.mrf.mxu0
        %v6980 = vadd.f32 %v6967, %v6979
        %v6981 = vpop.f32.mrf.mxu0
        %6982 = vdwg.mxu0
        %6983 = vmatpush.bf16.msra.mxu0 %v5552
        %6984 = vmatpush.bf16.msra.mxu0 %v5544
        %6985 = vmatpush.bf16.msra.mxu0 %v5536
        %6986 = vmatpush.bf16.msra.mxu0 %v5528
        %6987 = vmatpush.bf16.msra.mxu0 %v5520
        %6988 = vmatpush.bf16.msra.mxu0 %v5512
        %6989 = vmatpush.bf16.msra.mxu0 %v5504
        %6990 = vmatpush.bf16.msra.mxu0 %v5496
        %6991 = vmatmul.bf16.gmra.mxu0 %v691
        %v6992 = vpop.f32.mrf.mxu0
        %v6993 = vadd.f32 %v6980, %v6992
        %v6994 = vpop.f32.mrf.mxu0
        %6995 = vdwg.mxu0
        %6996 = vmatpush.bf16.msra.mxu0 %v5616
        %6997 = vmatpush.bf16.msra.mxu0 %v5608
        %6998 = vmatpush.bf16.msra.mxu0 %v5600
        %6999 = vmatpush.bf16.msra.mxu0 %v5592
        %7000 = vmatpush.bf16.msra.mxu0 %v5584
        %7001 = vmatpush.bf16.msra.mxu0 %v5576
        %7002 = vmatpush.bf16.msra.mxu0 %v5568
        %7003 = vmatpush.bf16.msra.mxu0 %v5560
        %7004 = vmatmul.bf16.gmra.mxu0 %v692
        %v7005 = vpop.f32.mrf.mxu0
        %v7006 = vadd.f32 %v6993, %v7005
        %v7007 = vpop.f32.mrf.mxu0
        %7008 = vdwg.mxu0
        %7009 = vmatpush.bf16.msra.mxu0 %v5680
        %7010 = vmatpush.bf16.msra.mxu0 %v5672
        %7011 = vmatpush.bf16.msra.mxu0 %v5664
        %7012 = vmatpush.bf16.msra.mxu0 %v5656
        %7013 = vmatpush.bf16.msra.mxu0 %v5648
        %7014 = vmatpush.bf16.msra.mxu0 %v5640
        %7015 = vmatpush.bf16.msra.mxu0 %v5632
        %7016 = vmatpush.bf16.msra.mxu0 %v5624
        %7017 = vmatmul.bf16.gmra.mxu0 %v693
        %v7018 = vpop.f32.mrf.mxu0
        %v7019 = vadd.f32 %v7006, %v7018
        %v7020 = vpop.f32.mrf.mxu0
        %7021 = vdwg.mxu0
        %7022 = vmatpush.bf16.msra.mxu0 %v5744
        %7023 = vmatpush.bf16.msra.mxu0 %v5736
        %7024 = vmatpush.bf16.msra.mxu0 %v5728
        %7025 = vmatpush.bf16.msra.mxu0 %v5720
        %7026 = vmatpush.bf16.msra.mxu0 %v5712
        %7027 = vmatpush.bf16.msra.mxu0 %v5704
        %7028 = vmatpush.bf16.msra.mxu0 %v5696
        %7029 = vmatpush.bf16.msra.mxu0 %v5688
        %7030 = vmatmul.bf16.gmra.mxu0 %v694
        %v7031 = vpop.f32.mrf.mxu0
        %v7032 = vadd.f32 %v7019, %v7031
        %v7033 = vpop.f32.mrf.mxu0
        %7034 = vdwg.mxu0
        %7035 = vmatpush.bf16.msra.mxu0 %v5808
        %7036 = vmatpush.bf16.msra.mxu0 %v5800
        %7037 = vmatpush.bf16.msra.mxu0 %v5792
        %7038 = vmatpush.bf16.msra.mxu0 %v5784
        %7039 = vmatpush.bf16.msra.mxu0 %v5776
        %7040 = vmatpush.bf16.msra.mxu0 %v5768
        %7041 = vmatpush.bf16.msra.mxu0 %v5760
        %7042 = vmatpush.bf16.msra.mxu0 %v5752
        %7043 = vmatmul.bf16.gmra.mxu0 %v695
        %v7044 = vpop.f32.mrf.mxu0
        %v7045 = vadd.f32 %v7032, %v7044
        %v7046 = vpop.f32.mrf.mxu0
        %7047 = vdwg.mxu0
        %7048 = vmatpush.bf16.msra.mxu0 %v4849
        %7049 = vmatpush.bf16.msra.mxu0 %v4841
        %7050 = vmatpush.bf16.msra.mxu0 %v4833
        %7051 = vmatpush.bf16.msra.mxu0 %v4825
        %7052 = vmatpush.bf16.msra.mxu0 %v4817
        %7053 = vmatpush.bf16.msra.mxu0 %v4809
        %7054 = vmatpush.bf16.msra.mxu0 %v4801
        %7055 = vmatpush.bf16.msra.mxu0 %v4793
        %7056 = vmatmul.bf16.gmra.mxu0 %v680
        %v7057 = vpop.f32.mrf.mxu0
        %v7058 = vadd.f32 0.0, %v7057
        %v7059 = vpop.f32.mrf.mxu0
        %7060 = vdwg.mxu0
        %7061 = vmatpush.bf16.msra.mxu0 %v4913
        %7062 = vmatpush.bf16.msra.mxu0 %v4905
        %7063 = vmatpush.bf16.msra.mxu0 %v4897
        %7064 = vmatpush.bf16.msra.mxu0 %v4889
        %7065 = vmatpush.bf16.msra.mxu0 %v4881
        %7066 = vmatpush.bf16.msra.mxu0 %v4873
        %7067 = vmatpush.bf16.msra.mxu0 %v4865
        %7068 = vmatpush.bf16.msra.mxu0 %v4857
        %7069 = vmatmul.bf16.gmra.mxu0 %v681
        %v7070 = vpop.f32.mrf.mxu0
        %v7071 = vadd.f32 %v7058, %v7070
        %v7072 = vpop.f32.mrf.mxu0
        %7073 = vdwg.mxu0
        %7074 = vmatpush.bf16.msra.mxu0 %v4977
        %7075 = vmatpush.bf16.msra.mxu0 %v4969
        %7076 = vmatpush.bf16.msra.mxu0 %v4961
        %7077 = vmatpush.bf16.msra.mxu0 %v4953
        %7078 = vmatpush.bf16.msra.mxu0 %v4945
        %7079 = vmatpush.bf16.msra.mxu0 %v4937
        %7080 = vmatpush.bf16.msra.mxu0 %v4929
        %7081 = vmatpush.bf16.msra.mxu0 %v4921
        %7082 = vmatmul.bf16.gmra.mxu0 %v682
        %v7083 = vpop.f32.mrf.mxu0
        %v7084 = vadd.f32 %v7071, %v7083
        %v7085 = vpop.f32.mrf.mxu0
        %7086 = vdwg.mxu0
        %7087 = vmatpush.bf16.msra.mxu0 %v5041
        %7088 = vmatpush.bf16.msra.mxu0 %v5033
        %7089 = vmatpush.bf16.msra.mxu0 %v5025
        %7090 = vmatpush.bf16.msra.mxu0 %v5017
        %7091 = vmatpush.bf16.msra.mxu0 %v5009
        %7092 = vmatpush.bf16.msra.mxu0 %v5001
        %7093 = vmatpush.bf16.msra.mxu0 %v4993
        %7094 = vmatpush.bf16.msra.mxu0 %v4985
        %7095 = vmatmul.bf16.gmra.mxu0 %v683
        %v7096 = vpop.f32.mrf.mxu0
        %v7097 = vadd.f32 %v7084, %v7096
        %v7098 = vpop.f32.mrf.mxu0
        %7099 = vdwg.mxu0
        %7100 = vmatpush.bf16.msra.mxu0 %v5105
        %7101 = vmatpush.bf16.msra.mxu0 %v5097
        %7102 = vmatpush.bf16.msra.mxu0 %v5089
        %7103 = vmatpush.bf16.msra.mxu0 %v5081
        %7104 = vmatpush.bf16.msra.mxu0 %v5073
        %7105 = vmatpush.bf16.msra.mxu0 %v5065
        %7106 = vmatpush.bf16.msra.mxu0 %v5057
        %7107 = vmatpush.bf16.msra.mxu0 %v5049
        %7108 = vmatmul.bf16.gmra.mxu0 %v684
        %v7109 = vpop.f32.mrf.mxu0
        %v7110 = vadd.f32 %v7097, %v7109
        %v7111 = vpop.f32.mrf.mxu0
        %7112 = vdwg.mxu0
        %7113 = vmatpush.bf16.msra.mxu0 %v5169
        %7114 = vmatpush.bf16.msra.mxu0 %v5161
        %7115 = vmatpush.bf16.msra.mxu0 %v5153
        %7116 = vmatpush.bf16.msra.mxu0 %v5145
        %7117 = vmatpush.bf16.msra.mxu0 %v5137
        %7118 = vmatpush.bf16.msra.mxu0 %v5129
        %7119 = vmatpush.bf16.msra.mxu0 %v5121
        %7120 = vmatpush.bf16.msra.mxu0 %v5113
        %7121 = vmatmul.bf16.gmra.mxu0 %v685
        %v7122 = vpop.f32.mrf.mxu0
        %v7123 = vadd.f32 %v7110, %v7122
        %v7124 = vpop.f32.mrf.mxu0
        %7125 = vdwg.mxu0
        %7126 = vmatpush.bf16.msra.mxu0 %v5233
        %7127 = vmatpush.bf16.msra.mxu0 %v5225
        %7128 = vmatpush.bf16.msra.mxu0 %v5217
        %7129 = vmatpush.bf16.msra.mxu0 %v5209
        %7130 = vmatpush.bf16.msra.mxu0 %v5201
        %7131 = vmatpush.bf16.msra.mxu0 %v5193
        %7132 = vmatpush.bf16.msra.mxu0 %v5185
        %7133 = vmatpush.bf16.msra.mxu0 %v5177
        %7134 = vmatmul.bf16.gmra.mxu0 %v686
        %v7135 = vpop.f32.mrf.mxu0
        %v7136 = vadd.f32 %v7123, %v7135
        %v7137 = vpop.f32.mrf.mxu0
        %7138 = vdwg.mxu0
        %7139 = vmatpush.bf16.msra.mxu0 %v5297
        %7140 = vmatpush.bf16.msra.mxu0 %v5289
        %7141 = vmatpush.bf16.msra.mxu0 %v5281
        %7142 = vmatpush.bf16.msra.mxu0 %v5273
        %7143 = vmatpush.bf16.msra.mxu0 %v5265
        %7144 = vmatpush.bf16.msra.mxu0 %v5257
        %7145 = vmatpush.bf16.msra.mxu0 %v5249
        %7146 = vmatpush.bf16.msra.mxu0 %v5241
        %7147 = vmatmul.bf16.gmra.mxu0 %v687
        %v7148 = vpop.f32.mrf.mxu0
        %v7149 = vadd.f32 %v7136, %v7148
        %v7150 = vpop.f32.mrf.mxu0
        %7151 = vdwg.mxu0
        %7152 = vmatpush.bf16.msra.mxu0 %v5361
        %7153 = vmatpush.bf16.msra.mxu0 %v5353
        %7154 = vmatpush.bf16.msra.mxu0 %v5345
        %7155 = vmatpush.bf16.msra.mxu0 %v5337
        %7156 = vmatpush.bf16.msra.mxu0 %v5329
        %7157 = vmatpush.bf16.msra.mxu0 %v5321
        %7158 = vmatpush.bf16.msra.mxu0 %v5313
        %7159 = vmatpush.bf16.msra.mxu0 %v5305
        %7160 = vmatmul.bf16.gmra.mxu0 %v688
        %v7161 = vpop.f32.mrf.mxu0
        %v7162 = vadd.f32 %v7149, %v7161
        %v7163 = vpop.f32.mrf.mxu0
        %7164 = vdwg.mxu0
        %7165 = vmatpush.bf16.msra.mxu0 %v5425
        %7166 = vmatpush.bf16.msra.mxu0 %v5417
        %7167 = vmatpush.bf16.msra.mxu0 %v5409
        %7168 = vmatpush.bf16.msra.mxu0 %v5401
        %7169 = vmatpush.bf16.msra.mxu0 %v5393
        %7170 = vmatpush.bf16.msra.mxu0 %v5385
        %7171 = vmatpush.bf16.msra.mxu0 %v5377
        %7172 = vmatpush.bf16.msra.mxu0 %v5369
        %7173 = vmatmul.bf16.gmra.mxu0 %v689
        %v7174 = vpop.f32.mrf.mxu0
        %v7175 = vadd.f32 %v7162, %v7174
        %v7176 = vpop.f32.mrf.mxu0
        %7177 = vdwg.mxu0
        %7178 = vmatpush.bf16.msra.mxu0 %v5489
        %7179 = vmatpush.bf16.msra.mxu0 %v5481
        %7180 = vmatpush.bf16.msra.mxu0 %v5473
        %7181 = vmatpush.bf16.msra.mxu0 %v5465
        %7182 = vmatpush.bf16.msra.mxu0 %v5457
        %7183 = vmatpush.bf16.msra.mxu0 %v5449
        %7184 = vmatpush.bf16.msra.mxu0 %v5441
        %7185 = vmatpush.bf16.msra.mxu0 %v5433
        %7186 = vmatmul.bf16.gmra.mxu0 %v690
        %v7187 = vpop.f32.mrf.mxu0
        %v7188 = vadd.f32 %v7175, %v7187
        %v7189 = vpop.f32.mrf.mxu0
        %7190 = vdwg.mxu0
        %7191 = vmatpush.bf16.msra.mxu0 %v5553
        %7192 = vmatpush.bf16.msra.mxu0 %v5545
        %7193 = vmatpush.bf16.msra.mxu0 %v5537
        %7194 = vmatpush.bf16.msra.mxu0 %v5529
        %7195 = vmatpush.bf16.msra.mxu0 %v5521
        %7196 = vmatpush.bf16.msra.mxu0 %v5513
        %7197 = vmatpush.bf16.msra.mxu0 %v5505
        %7198 = vmatpush.bf16.msra.mxu0 %v5497
        %7199 = vmatmul.bf16.gmra.mxu0 %v691
        %v7200 = vpop.f32.mrf.mxu0
        %v7201 = vadd.f32 %v7188, %v7200
        %v7202 = vpop.f32.mrf.mxu0
        %7203 = vdwg.mxu0
        %7204 = vmatpush.bf16.msra.mxu0 %v5617
        %7205 = vmatpush.bf16.msra.mxu0 %v5609
        %7206 = vmatpush.bf16.msra.mxu0 %v5601
        %7207 = vmatpush.bf16.msra.mxu0 %v5593
        %7208 = vmatpush.bf16.msra.mxu0 %v5585
        %7209 = vmatpush.bf16.msra.mxu0 %v5577
        %7210 = vmatpush.bf16.msra.mxu0 %v5569
        %7211 = vmatpush.bf16.msra.mxu0 %v5561
        %7212 = vmatmul.bf16.gmra.mxu0 %v692
        %v7213 = vpop.f32.mrf.mxu0
        %v7214 = vadd.f32 %v7201, %v7213
        %v7215 = vpop.f32.mrf.mxu0
        %7216 = vdwg.mxu0
        %7217 = vmatpush.bf16.msra.mxu0 %v5681
        %7218 = vmatpush.bf16.msra.mxu0 %v5673
        %7219 = vmatpush.bf16.msra.mxu0 %v5665
        %7220 = vmatpush.bf16.msra.mxu0 %v5657
        %7221 = vmatpush.bf16.msra.mxu0 %v5649
        %7222 = vmatpush.bf16.msra.mxu0 %v5641
        %7223 = vmatpush.bf16.msra.mxu0 %v5633
        %7224 = vmatpush.bf16.msra.mxu0 %v5625
        %7225 = vmatmul.bf16.gmra.mxu0 %v693
        %v7226 = vpop.f32.mrf.mxu0
        %v7227 = vadd.f32 %v7214, %v7226
        %v7228 = vpop.f32.mrf.mxu0
        %7229 = vdwg.mxu0
        %7230 = vmatpush.bf16.msra.mxu0 %v5745
        %7231 = vmatpush.bf16.msra.mxu0 %v5737
        %7232 = vmatpush.bf16.msra.mxu0 %v5729
        %7233 = vmatpush.bf16.msra.mxu0 %v5721
        %7234 = vmatpush.bf16.msra.mxu0 %v5713
        %7235 = vmatpush.bf16.msra.mxu0 %v5705
        %7236 = vmatpush.bf16.msra.mxu0 %v5697
        %7237 = vmatpush.bf16.msra.mxu0 %v5689
        %7238 = vmatmul.bf16.gmra.mxu0 %v694
        %v7239 = vpop.f32.mrf.mxu0
        %v7240 = vadd.f32 %v7227, %v7239
        %v7241 = vpop.f32.mrf.mxu0
        %7242 = vdwg.mxu0
        %7243 = vmatpush.bf16.msra.mxu0 %v5809
        %7244 = vmatpush.bf16.msra.mxu0 %v5801
        %7245 = vmatpush.bf16.msra.mxu0 %v5793
        %7246 = vmatpush.bf16.msra.mxu0 %v5785
        %7247 = vmatpush.bf16.msra.mxu0 %v5777
        %7248 = vmatpush.bf16.msra.mxu0 %v5769
        %7249 = vmatpush.bf16.msra.mxu0 %v5761
        %7250 = vmatpush.bf16.msra.mxu0 %v5753
        %7251 = vmatmul.bf16.gmra.mxu0 %v695
        %v7252 = vpop.f32.mrf.mxu0
        %v7253 = vadd.f32 %v7240, %v7252
        %v7254 = vpop.f32.mrf.mxu0
        %7255 = vdwg.mxu0
        %7256 = vmatpush.bf16.msra.mxu0 %v4850
        %7257 = vmatpush.bf16.msra.mxu0 %v4842
        %7258 = vmatpush.bf16.msra.mxu0 %v4834
        %7259 = vmatpush.bf16.msra.mxu0 %v4826
        %7260 = vmatpush.bf16.msra.mxu0 %v4818
        %7261 = vmatpush.bf16.msra.mxu0 %v4810
        %7262 = vmatpush.bf16.msra.mxu0 %v4802
        %7263 = vmatpush.bf16.msra.mxu0 %v4794
        %7264 = vmatmul.bf16.gmra.mxu0 %v680
        %v7265 = vpop.f32.mrf.mxu0
        %v7266 = vadd.f32 0.0, %v7265
        %v7267 = vpop.f32.mrf.mxu0
        %7268 = vdwg.mxu0
        %7269 = vmatpush.bf16.msra.mxu0 %v4914
        %7270 = vmatpush.bf16.msra.mxu0 %v4906
        %7271 = vmatpush.bf16.msra.mxu0 %v4898
        %7272 = vmatpush.bf16.msra.mxu0 %v4890
        %7273 = vmatpush.bf16.msra.mxu0 %v4882
        %7274 = vmatpush.bf16.msra.mxu0 %v4874
        %7275 = vmatpush.bf16.msra.mxu0 %v4866
        %7276 = vmatpush.bf16.msra.mxu0 %v4858
        %7277 = vmatmul.bf16.gmra.mxu0 %v681
        %v7278 = vpop.f32.mrf.mxu0
        %v7279 = vadd.f32 %v7266, %v7278
        %v7280 = vpop.f32.mrf.mxu0
        %7281 = vdwg.mxu0
        %7282 = vmatpush.bf16.msra.mxu0 %v4978
        %7283 = vmatpush.bf16.msra.mxu0 %v4970
        %7284 = vmatpush.bf16.msra.mxu0 %v4962
        %7285 = vmatpush.bf16.msra.mxu0 %v4954
        %7286 = vmatpush.bf16.msra.mxu0 %v4946
        %7287 = vmatpush.bf16.msra.mxu0 %v4938
        %7288 = vmatpush.bf16.msra.mxu0 %v4930
        %7289 = vmatpush.bf16.msra.mxu0 %v4922
        %7290 = vmatmul.bf16.gmra.mxu0 %v682
        %v7291 = vpop.f32.mrf.mxu0
        %v7292 = vadd.f32 %v7279, %v7291
        %v7293 = vpop.f32.mrf.mxu0
        %7294 = vdwg.mxu0
        %7295 = vmatpush.bf16.msra.mxu0 %v5042
        %7296 = vmatpush.bf16.msra.mxu0 %v5034
        %7297 = vmatpush.bf16.msra.mxu0 %v5026
        %7298 = vmatpush.bf16.msra.mxu0 %v5018
        %7299 = vmatpush.bf16.msra.mxu0 %v5010
        %7300 = vmatpush.bf16.msra.mxu0 %v5002
        %7301 = vmatpush.bf16.msra.mxu0 %v4994
        %7302 = vmatpush.bf16.msra.mxu0 %v4986
        %7303 = vmatmul.bf16.gmra.mxu0 %v683
        %v7304 = vpop.f32.mrf.mxu0
        %v7305 = vadd.f32 %v7292, %v7304
        %v7306 = vpop.f32.mrf.mxu0
        %7307 = vdwg.mxu0
        %7308 = vmatpush.bf16.msra.mxu0 %v5106
        %7309 = vmatpush.bf16.msra.mxu0 %v5098
        %7310 = vmatpush.bf16.msra.mxu0 %v5090
        %7311 = vmatpush.bf16.msra.mxu0 %v5082
        %7312 = vmatpush.bf16.msra.mxu0 %v5074
        %7313 = vmatpush.bf16.msra.mxu0 %v5066
        %7314 = vmatpush.bf16.msra.mxu0 %v5058
        %7315 = vmatpush.bf16.msra.mxu0 %v5050
        %7316 = vmatmul.bf16.gmra.mxu0 %v684
        %v7317 = vpop.f32.mrf.mxu0
        %v7318 = vadd.f32 %v7305, %v7317
        %v7319 = vpop.f32.mrf.mxu0
        %7320 = vdwg.mxu0
        %7321 = vmatpush.bf16.msra.mxu0 %v5170
        %7322 = vmatpush.bf16.msra.mxu0 %v5162
        %7323 = vmatpush.bf16.msra.mxu0 %v5154
        %7324 = vmatpush.bf16.msra.mxu0 %v5146
        %7325 = vmatpush.bf16.msra.mxu0 %v5138
        %7326 = vmatpush.bf16.msra.mxu0 %v5130
        %7327 = vmatpush.bf16.msra.mxu0 %v5122
        %7328 = vmatpush.bf16.msra.mxu0 %v5114
        %7329 = vmatmul.bf16.gmra.mxu0 %v685
        %v7330 = vpop.f32.mrf.mxu0
        %v7331 = vadd.f32 %v7318, %v7330
        %v7332 = vpop.f32.mrf.mxu0
        %7333 = vdwg.mxu0
        %7334 = vmatpush.bf16.msra.mxu0 %v5234
        %7335 = vmatpush.bf16.msra.mxu0 %v5226
        %7336 = vmatpush.bf16.msra.mxu0 %v5218
        %7337 = vmatpush.bf16.msra.mxu0 %v5210
        %7338 = vmatpush.bf16.msra.mxu0 %v5202
        %7339 = vmatpush.bf16.msra.mxu0 %v5194
        %7340 = vmatpush.bf16.msra.mxu0 %v5186
        %7341 = vmatpush.bf16.msra.mxu0 %v5178
        %7342 = vmatmul.bf16.gmra.mxu0 %v686
        %v7343 = vpop.f32.mrf.mxu0
        %v7344 = vadd.f32 %v7331, %v7343
        %v7345 = vpop.f32.mrf.mxu0
        %7346 = vdwg.mxu0
        %7347 = vmatpush.bf16.msra.mxu0 %v5298
        %7348 = vmatpush.bf16.msra.mxu0 %v5290
        %7349 = vmatpush.bf16.msra.mxu0 %v5282
        %7350 = vmatpush.bf16.msra.mxu0 %v5274
        %7351 = vmatpush.bf16.msra.mxu0 %v5266
        %7352 = vmatpush.bf16.msra.mxu0 %v5258
        %7353 = vmatpush.bf16.msra.mxu0 %v5250
        %7354 = vmatpush.bf16.msra.mxu0 %v5242
        %7355 = vmatmul.bf16.gmra.mxu0 %v687
        %v7356 = vpop.f32.mrf.mxu0
        %v7357 = vadd.f32 %v7344, %v7356
        %v7358 = vpop.f32.mrf.mxu0
        %7359 = vdwg.mxu0
        %7360 = vmatpush.bf16.msra.mxu0 %v5362
        %7361 = vmatpush.bf16.msra.mxu0 %v5354
        %7362 = vmatpush.bf16.msra.mxu0 %v5346
        %7363 = vmatpush.bf16.msra.mxu0 %v5338
        %7364 = vmatpush.bf16.msra.mxu0 %v5330
        %7365 = vmatpush.bf16.msra.mxu0 %v5322
        %7366 = vmatpush.bf16.msra.mxu0 %v5314
        %7367 = vmatpush.bf16.msra.mxu0 %v5306
        %7368 = vmatmul.bf16.gmra.mxu0 %v688
        %v7369 = vpop.f32.mrf.mxu0
        %v7370 = vadd.f32 %v7357, %v7369
        %v7371 = vpop.f32.mrf.mxu0
        %7372 = vdwg.mxu0
        %7373 = vmatpush.bf16.msra.mxu0 %v5426
        %7374 = vmatpush.bf16.msra.mxu0 %v5418
        %7375 = vmatpush.bf16.msra.mxu0 %v5410
        %7376 = vmatpush.bf16.msra.mxu0 %v5402
        %7377 = vmatpush.bf16.msra.mxu0 %v5394
        %7378 = vmatpush.bf16.msra.mxu0 %v5386
        %7379 = vmatpush.bf16.msra.mxu0 %v5378
        %7380 = vmatpush.bf16.msra.mxu0 %v5370
        %7381 = vmatmul.bf16.gmra.mxu0 %v689
        %v7382 = vpop.f32.mrf.mxu0
        %v7383 = vadd.f32 %v7370, %v7382
        %v7384 = vpop.f32.mrf.mxu0
        %7385 = vdwg.mxu0
        %7386 = vmatpush.bf16.msra.mxu0 %v5490
        %7387 = vmatpush.bf16.msra.mxu0 %v5482
        %7388 = vmatpush.bf16.msra.mxu0 %v5474
        %7389 = vmatpush.bf16.msra.mxu0 %v5466
        %7390 = vmatpush.bf16.msra.mxu0 %v5458
        %7391 = vmatpush.bf16.msra.mxu0 %v5450
        %7392 = vmatpush.bf16.msra.mxu0 %v5442
        %7393 = vmatpush.bf16.msra.mxu0 %v5434
        %7394 = vmatmul.bf16.gmra.mxu0 %v690
        %v7395 = vpop.f32.mrf.mxu0
        %v7396 = vadd.f32 %v7383, %v7395
        %v7397 = vpop.f32.mrf.mxu0
        %7398 = vdwg.mxu0
        %7399 = vmatpush.bf16.msra.mxu0 %v5554
        %7400 = vmatpush.bf16.msra.mxu0 %v5546
        %7401 = vmatpush.bf16.msra.mxu0 %v5538
        %7402 = vmatpush.bf16.msra.mxu0 %v5530
        %7403 = vmatpush.bf16.msra.mxu0 %v5522
        %7404 = vmatpush.bf16.msra.mxu0 %v5514
        %7405 = vmatpush.bf16.msra.mxu0 %v5506
        %7406 = vmatpush.bf16.msra.mxu0 %v5498
        %7407 = vmatmul.bf16.gmra.mxu0 %v691
        %v7408 = vpop.f32.mrf.mxu0
        %v7409 = vadd.f32 %v7396, %v7408
        %v7410 = vpop.f32.mrf.mxu0
        %7411 = vdwg.mxu0
        %7412 = vmatpush.bf16.msra.mxu0 %v5618
        %7413 = vmatpush.bf16.msra.mxu0 %v5610
        %7414 = vmatpush.bf16.msra.mxu0 %v5602
        %7415 = vmatpush.bf16.msra.mxu0 %v5594
        %7416 = vmatpush.bf16.msra.mxu0 %v5586
        %7417 = vmatpush.bf16.msra.mxu0 %v5578
        %7418 = vmatpush.bf16.msra.mxu0 %v5570
        %7419 = vmatpush.bf16.msra.mxu0 %v5562
        %7420 = vmatmul.bf16.gmra.mxu0 %v692
        %v7421 = vpop.f32.mrf.mxu0
        %v7422 = vadd.f32 %v7409, %v7421
        %v7423 = vpop.f32.mrf.mxu0
        %7424 = vdwg.mxu0
        %7425 = vmatpush.bf16.msra.mxu0 %v5682
        %7426 = vmatpush.bf16.msra.mxu0 %v5674
        %7427 = vmatpush.bf16.msra.mxu0 %v5666
        %7428 = vmatpush.bf16.msra.mxu0 %v5658
        %7429 = vmatpush.bf16.msra.mxu0 %v5650
        %7430 = vmatpush.bf16.msra.mxu0 %v5642
        %7431 = vmatpush.bf16.msra.mxu0 %v5634
        %7432 = vmatpush.bf16.msra.mxu0 %v5626
        %7433 = vmatmul.bf16.gmra.mxu0 %v693
        %v7434 = vpop.f32.mrf.mxu0
        %v7435 = vadd.f32 %v7422, %v7434
        %v7436 = vpop.f32.mrf.mxu0
        %7437 = vdwg.mxu0
        %7438 = vmatpush.bf16.msra.mxu0 %v5746
        %7439 = vmatpush.bf16.msra.mxu0 %v5738
        %7440 = vmatpush.bf16.msra.mxu0 %v5730
        %7441 = vmatpush.bf16.msra.mxu0 %v5722
        %7442 = vmatpush.bf16.msra.mxu0 %v5714
        %7443 = vmatpush.bf16.msra.mxu0 %v5706
        %7444 = vmatpush.bf16.msra.mxu0 %v5698
        %7445 = vmatpush.bf16.msra.mxu0 %v5690
        %7446 = vmatmul.bf16.gmra.mxu0 %v694
        %v7447 = vpop.f32.mrf.mxu0
        %v7448 = vadd.f32 %v7435, %v7447
        %v7449 = vpop.f32.mrf.mxu0
        %7450 = vdwg.mxu0
        %7451 = vmatpush.bf16.msra.mxu0 %v5810
        %7452 = vmatpush.bf16.msra.mxu0 %v5802
        %7453 = vmatpush.bf16.msra.mxu0 %v5794
        %7454 = vmatpush.bf16.msra.mxu0 %v5786
        %7455 = vmatpush.bf16.msra.mxu0 %v5778
        %7456 = vmatpush.bf16.msra.mxu0 %v5770
        %7457 = vmatpush.bf16.msra.mxu0 %v5762
        %7458 = vmatpush.bf16.msra.mxu0 %v5754
        %7459 = vmatmul.bf16.gmra.mxu0 %v695
        %v7460 = vpop.f32.mrf.mxu0
        %v7461 = vadd.f32 %v7448, %v7460
        %v7462 = vpop.f32.mrf.mxu0
        %7463 = vdwg.mxu0
        %7464 = vmatpush.bf16.msra.mxu0 %v4851
        %7465 = vmatpush.bf16.msra.mxu0 %v4843
        %7466 = vmatpush.bf16.msra.mxu0 %v4835
        %7467 = vmatpush.bf16.msra.mxu0 %v4827
        %7468 = vmatpush.bf16.msra.mxu0 %v4819
        %7469 = vmatpush.bf16.msra.mxu0 %v4811
        %7470 = vmatpush.bf16.msra.mxu0 %v4803
        %7471 = vmatpush.bf16.msra.mxu0 %v4795
        %7472 = vmatmul.bf16.gmra.mxu0 %v680
        %v7473 = vpop.f32.mrf.mxu0
        %v7474 = vadd.f32 0.0, %v7473
        %v7475 = vpop.f32.mrf.mxu0
        %7476 = vdwg.mxu0
        %7477 = vmatpush.bf16.msra.mxu0 %v4915
        %7478 = vmatpush.bf16.msra.mxu0 %v4907
        %7479 = vmatpush.bf16.msra.mxu0 %v4899
        %7480 = vmatpush.bf16.msra.mxu0 %v4891
        %7481 = vmatpush.bf16.msra.mxu0 %v4883
        %7482 = vmatpush.bf16.msra.mxu0 %v4875
        %7483 = vmatpush.bf16.msra.mxu0 %v4867
        %7484 = vmatpush.bf16.msra.mxu0 %v4859
        %7485 = vmatmul.bf16.gmra.mxu0 %v681
        %v7486 = vpop.f32.mrf.mxu0
        %v7487 = vadd.f32 %v7474, %v7486
        %v7488 = vpop.f32.mrf.mxu0
        %7489 = vdwg.mxu0
        %7490 = vmatpush.bf16.msra.mxu0 %v4979
        %7491 = vmatpush.bf16.msra.mxu0 %v4971
        %7492 = vmatpush.bf16.msra.mxu0 %v4963
        %7493 = vmatpush.bf16.msra.mxu0 %v4955
        %7494 = vmatpush.bf16.msra.mxu0 %v4947
        %7495 = vmatpush.bf16.msra.mxu0 %v4939
        %7496 = vmatpush.bf16.msra.mxu0 %v4931
        %7497 = vmatpush.bf16.msra.mxu0 %v4923
        %7498 = vmatmul.bf16.gmra.mxu0 %v682
        %v7499 = vpop.f32.mrf.mxu0
        %v7500 = vadd.f32 %v7487, %v7499
        %v7501 = vpop.f32.mrf.mxu0
        %7502 = vdwg.mxu0
        %7503 = vmatpush.bf16.msra.mxu0 %v5043
        %7504 = vmatpush.bf16.msra.mxu0 %v5035
        %7505 = vmatpush.bf16.msra.mxu0 %v5027
        %7506 = vmatpush.bf16.msra.mxu0 %v5019
        %7507 = vmatpush.bf16.msra.mxu0 %v5011
        %7508 = vmatpush.bf16.msra.mxu0 %v5003
        %7509 = vmatpush.bf16.msra.mxu0 %v4995
        %7510 = vmatpush.bf16.msra.mxu0 %v4987
        %7511 = vmatmul.bf16.gmra.mxu0 %v683
        %v7512 = vpop.f32.mrf.mxu0
        %v7513 = vadd.f32 %v7500, %v7512
        %v7514 = vpop.f32.mrf.mxu0
        %7515 = vdwg.mxu0
        %7516 = vmatpush.bf16.msra.mxu0 %v5107
        %7517 = vmatpush.bf16.msra.mxu0 %v5099
        %7518 = vmatpush.bf16.msra.mxu0 %v5091
        %7519 = vmatpush.bf16.msra.mxu0 %v5083
        %7520 = vmatpush.bf16.msra.mxu0 %v5075
        %7521 = vmatpush.bf16.msra.mxu0 %v5067
        %7522 = vmatpush.bf16.msra.mxu0 %v5059
        %7523 = vmatpush.bf16.msra.mxu0 %v5051
        %7524 = vmatmul.bf16.gmra.mxu0 %v684
        %v7525 = vpop.f32.mrf.mxu0
        %v7526 = vadd.f32 %v7513, %v7525
        %v7527 = vpop.f32.mrf.mxu0
        %7528 = vdwg.mxu0
        %7529 = vmatpush.bf16.msra.mxu0 %v5171
        %7530 = vmatpush.bf16.msra.mxu0 %v5163
        %7531 = vmatpush.bf16.msra.mxu0 %v5155
        %7532 = vmatpush.bf16.msra.mxu0 %v5147
        %7533 = vmatpush.bf16.msra.mxu0 %v5139
        %7534 = vmatpush.bf16.msra.mxu0 %v5131
        %7535 = vmatpush.bf16.msra.mxu0 %v5123
        %7536 = vmatpush.bf16.msra.mxu0 %v5115
        %7537 = vmatmul.bf16.gmra.mxu0 %v685
        %v7538 = vpop.f32.mrf.mxu0
        %v7539 = vadd.f32 %v7526, %v7538
        %v7540 = vpop.f32.mrf.mxu0
        %7541 = vdwg.mxu0
        %7542 = vmatpush.bf16.msra.mxu0 %v5235
        %7543 = vmatpush.bf16.msra.mxu0 %v5227
        %7544 = vmatpush.bf16.msra.mxu0 %v5219
        %7545 = vmatpush.bf16.msra.mxu0 %v5211
        %7546 = vmatpush.bf16.msra.mxu0 %v5203
        %7547 = vmatpush.bf16.msra.mxu0 %v5195
        %7548 = vmatpush.bf16.msra.mxu0 %v5187
        %7549 = vmatpush.bf16.msra.mxu0 %v5179
        %7550 = vmatmul.bf16.gmra.mxu0 %v686
        %v7551 = vpop.f32.mrf.mxu0
        %v7552 = vadd.f32 %v7539, %v7551
        %v7553 = vpop.f32.mrf.mxu0
        %7554 = vdwg.mxu0
        %7555 = vmatpush.bf16.msra.mxu0 %v5299
        %7556 = vmatpush.bf16.msra.mxu0 %v5291
        %7557 = vmatpush.bf16.msra.mxu0 %v5283
        %7558 = vmatpush.bf16.msra.mxu0 %v5275
        %7559 = vmatpush.bf16.msra.mxu0 %v5267
        %7560 = vmatpush.bf16.msra.mxu0 %v5259
        %7561 = vmatpush.bf16.msra.mxu0 %v5251
        %7562 = vmatpush.bf16.msra.mxu0 %v5243
        %7563 = vmatmul.bf16.gmra.mxu0 %v687
        %v7564 = vpop.f32.mrf.mxu0
        %v7565 = vadd.f32 %v7552, %v7564
        %v7566 = vpop.f32.mrf.mxu0
        %7567 = vdwg.mxu0
        %7568 = vmatpush.bf16.msra.mxu0 %v5363
        %7569 = vmatpush.bf16.msra.mxu0 %v5355
        %7570 = vmatpush.bf16.msra.mxu0 %v5347
        %7571 = vmatpush.bf16.msra.mxu0 %v5339
        %7572 = vmatpush.bf16.msra.mxu0 %v5331
        %7573 = vmatpush.bf16.msra.mxu0 %v5323
        %7574 = vmatpush.bf16.msra.mxu0 %v5315
        %7575 = vmatpush.bf16.msra.mxu0 %v5307
        %7576 = vmatmul.bf16.gmra.mxu0 %v688
        %v7577 = vpop.f32.mrf.mxu0
        %v7578 = vadd.f32 %v7565, %v7577
        %v7579 = vpop.f32.mrf.mxu0
        %7580 = vdwg.mxu0
        %7581 = vmatpush.bf16.msra.mxu0 %v5427
        %7582 = vmatpush.bf16.msra.mxu0 %v5419
        %7583 = vmatpush.bf16.msra.mxu0 %v5411
        %7584 = vmatpush.bf16.msra.mxu0 %v5403
        %7585 = vmatpush.bf16.msra.mxu0 %v5395
        %7586 = vmatpush.bf16.msra.mxu0 %v5387
        %7587 = vmatpush.bf16.msra.mxu0 %v5379
        %7588 = vmatpush.bf16.msra.mxu0 %v5371
        %7589 = vmatmul.bf16.gmra.mxu0 %v689
        %v7590 = vpop.f32.mrf.mxu0
        %v7591 = vadd.f32 %v7578, %v7590
        %v7592 = vpop.f32.mrf.mxu0
        %7593 = vdwg.mxu0
        %7594 = vmatpush.bf16.msra.mxu0 %v5491
        %7595 = vmatpush.bf16.msra.mxu0 %v5483
        %7596 = vmatpush.bf16.msra.mxu0 %v5475
        %7597 = vmatpush.bf16.msra.mxu0 %v5467
        %7598 = vmatpush.bf16.msra.mxu0 %v5459
        %7599 = vmatpush.bf16.msra.mxu0 %v5451
        %7600 = vmatpush.bf16.msra.mxu0 %v5443
        %7601 = vmatpush.bf16.msra.mxu0 %v5435
        %7602 = vmatmul.bf16.gmra.mxu0 %v690
        %v7603 = vpop.f32.mrf.mxu0
        %v7604 = vadd.f32 %v7591, %v7603
        %v7605 = vpop.f32.mrf.mxu0
        %7606 = vdwg.mxu0
        %7607 = vmatpush.bf16.msra.mxu0 %v5555
        %7608 = vmatpush.bf16.msra.mxu0 %v5547
        %7609 = vmatpush.bf16.msra.mxu0 %v5539
        %7610 = vmatpush.bf16.msra.mxu0 %v5531
        %7611 = vmatpush.bf16.msra.mxu0 %v5523
        %7612 = vmatpush.bf16.msra.mxu0 %v5515
        %7613 = vmatpush.bf16.msra.mxu0 %v5507
        %7614 = vmatpush.bf16.msra.mxu0 %v5499
        %7615 = vmatmul.bf16.gmra.mxu0 %v691
        %v7616 = vpop.f32.mrf.mxu0
        %v7617 = vadd.f32 %v7604, %v7616
        %v7618 = vpop.f32.mrf.mxu0
        %7619 = vdwg.mxu0
        %7620 = vmatpush.bf16.msra.mxu0 %v5619
        %7621 = vmatpush.bf16.msra.mxu0 %v5611
        %7622 = vmatpush.bf16.msra.mxu0 %v5603
        %7623 = vmatpush.bf16.msra.mxu0 %v5595
        %7624 = vmatpush.bf16.msra.mxu0 %v5587
        %7625 = vmatpush.bf16.msra.mxu0 %v5579
        %7626 = vmatpush.bf16.msra.mxu0 %v5571
        %7627 = vmatpush.bf16.msra.mxu0 %v5563
        %7628 = vmatmul.bf16.gmra.mxu0 %v692
        %v7629 = vpop.f32.mrf.mxu0
        %v7630 = vadd.f32 %v7617, %v7629
        %v7631 = vpop.f32.mrf.mxu0
        %7632 = vdwg.mxu0
        %7633 = vmatpush.bf16.msra.mxu0 %v5683
        %7634 = vmatpush.bf16.msra.mxu0 %v5675
        %7635 = vmatpush.bf16.msra.mxu0 %v5667
        %7636 = vmatpush.bf16.msra.mxu0 %v5659
        %7637 = vmatpush.bf16.msra.mxu0 %v5651
        %7638 = vmatpush.bf16.msra.mxu0 %v5643
        %7639 = vmatpush.bf16.msra.mxu0 %v5635
        %7640 = vmatpush.bf16.msra.mxu0 %v5627
        %7641 = vmatmul.bf16.gmra.mxu0 %v693
        %v7642 = vpop.f32.mrf.mxu0
        %v7643 = vadd.f32 %v7630, %v7642
        %v7644 = vpop.f32.mrf.mxu0
        %7645 = vdwg.mxu0
        %7646 = vmatpush.bf16.msra.mxu0 %v5747
        %7647 = vmatpush.bf16.msra.mxu0 %v5739
        %7648 = vmatpush.bf16.msra.mxu0 %v5731
        %7649 = vmatpush.bf16.msra.mxu0 %v5723
        %7650 = vmatpush.bf16.msra.mxu0 %v5715
        %7651 = vmatpush.bf16.msra.mxu0 %v5707
        %7652 = vmatpush.bf16.msra.mxu0 %v5699
        %7653 = vmatpush.bf16.msra.mxu0 %v5691
        %7654 = vmatmul.bf16.gmra.mxu0 %v694
        %v7655 = vpop.f32.mrf.mxu0
        %v7656 = vadd.f32 %v7643, %v7655
        %v7657 = vpop.f32.mrf.mxu0
        %7658 = vdwg.mxu0
        %7659 = vmatpush.bf16.msra.mxu0 %v5811
        %7660 = vmatpush.bf16.msra.mxu0 %v5803
        %7661 = vmatpush.bf16.msra.mxu0 %v5795
        %7662 = vmatpush.bf16.msra.mxu0 %v5787
        %7663 = vmatpush.bf16.msra.mxu0 %v5779
        %7664 = vmatpush.bf16.msra.mxu0 %v5771
        %7665 = vmatpush.bf16.msra.mxu0 %v5763
        %7666 = vmatpush.bf16.msra.mxu0 %v5755
        %7667 = vmatmul.bf16.gmra.mxu0 %v695
        %v7668 = vpop.f32.mrf.mxu0
        %v7669 = vadd.f32 %v7656, %v7668
        %v7670 = vpop.f32.mrf.mxu0
        %7671 = vdwg.mxu0
        %7672 = vmatpush.bf16.msra.mxu0 %v4852
        %7673 = vmatpush.bf16.msra.mxu0 %v4844
        %7674 = vmatpush.bf16.msra.mxu0 %v4836
        %7675 = vmatpush.bf16.msra.mxu0 %v4828
        %7676 = vmatpush.bf16.msra.mxu0 %v4820
        %7677 = vmatpush.bf16.msra.mxu0 %v4812
        %7678 = vmatpush.bf16.msra.mxu0 %v4804
        %7679 = vmatpush.bf16.msra.mxu0 %v4796
        %7680 = vmatmul.bf16.gmra.mxu0 %v680
        %v7681 = vpop.f32.mrf.mxu0
        %v7682 = vadd.f32 0.0, %v7681
        %v7683 = vpop.f32.mrf.mxu0
        %7684 = vdwg.mxu0
        %7685 = vmatpush.bf16.msra.mxu0 %v4916
        %7686 = vmatpush.bf16.msra.mxu0 %v4908
        %7687 = vmatpush.bf16.msra.mxu0 %v4900
        %7688 = vmatpush.bf16.msra.mxu0 %v4892
        %7689 = vmatpush.bf16.msra.mxu0 %v4884
        %7690 = vmatpush.bf16.msra.mxu0 %v4876
        %7691 = vmatpush.bf16.msra.mxu0 %v4868
        %7692 = vmatpush.bf16.msra.mxu0 %v4860
        %7693 = vmatmul.bf16.gmra.mxu0 %v681
        %v7694 = vpop.f32.mrf.mxu0
        %v7695 = vadd.f32 %v7682, %v7694
        %v7696 = vpop.f32.mrf.mxu0
        %7697 = vdwg.mxu0
        %7698 = vmatpush.bf16.msra.mxu0 %v4980
        %7699 = vmatpush.bf16.msra.mxu0 %v4972
        %7700 = vmatpush.bf16.msra.mxu0 %v4964
        %7701 = vmatpush.bf16.msra.mxu0 %v4956
        %7702 = vmatpush.bf16.msra.mxu0 %v4948
        %7703 = vmatpush.bf16.msra.mxu0 %v4940
        %7704 = vmatpush.bf16.msra.mxu0 %v4932
        %7705 = vmatpush.bf16.msra.mxu0 %v4924
        %7706 = vmatmul.bf16.gmra.mxu0 %v682
        %v7707 = vpop.f32.mrf.mxu0
        %v7708 = vadd.f32 %v7695, %v7707
        %v7709 = vpop.f32.mrf.mxu0
        %7710 = vdwg.mxu0
        %7711 = vmatpush.bf16.msra.mxu0 %v5044
        %7712 = vmatpush.bf16.msra.mxu0 %v5036
        %7713 = vmatpush.bf16.msra.mxu0 %v5028
        %7714 = vmatpush.bf16.msra.mxu0 %v5020
        %7715 = vmatpush.bf16.msra.mxu0 %v5012
        %7716 = vmatpush.bf16.msra.mxu0 %v5004
        %7717 = vmatpush.bf16.msra.mxu0 %v4996
        %7718 = vmatpush.bf16.msra.mxu0 %v4988
        %7719 = vmatmul.bf16.gmra.mxu0 %v683
        %v7720 = vpop.f32.mrf.mxu0
        %v7721 = vadd.f32 %v7708, %v7720
        %v7722 = vpop.f32.mrf.mxu0
        %7723 = vdwg.mxu0
        %7724 = vmatpush.bf16.msra.mxu0 %v5108
        %7725 = vmatpush.bf16.msra.mxu0 %v5100
        %7726 = vmatpush.bf16.msra.mxu0 %v5092
        %7727 = vmatpush.bf16.msra.mxu0 %v5084
        %7728 = vmatpush.bf16.msra.mxu0 %v5076
        %7729 = vmatpush.bf16.msra.mxu0 %v5068
        %7730 = vmatpush.bf16.msra.mxu0 %v5060
        %7731 = vmatpush.bf16.msra.mxu0 %v5052
        %7732 = vmatmul.bf16.gmra.mxu0 %v684
        %v7733 = vpop.f32.mrf.mxu0
        %v7734 = vadd.f32 %v7721, %v7733
        %v7735 = vpop.f32.mrf.mxu0
        %7736 = vdwg.mxu0
        %7737 = vmatpush.bf16.msra.mxu0 %v5172
        %7738 = vmatpush.bf16.msra.mxu0 %v5164
        %7739 = vmatpush.bf16.msra.mxu0 %v5156
        %7740 = vmatpush.bf16.msra.mxu0 %v5148
        %7741 = vmatpush.bf16.msra.mxu0 %v5140
        %7742 = vmatpush.bf16.msra.mxu0 %v5132
        %7743 = vmatpush.bf16.msra.mxu0 %v5124
        %7744 = vmatpush.bf16.msra.mxu0 %v5116
        %7745 = vmatmul.bf16.gmra.mxu0 %v685
        %v7746 = vpop.f32.mrf.mxu0
        %v7747 = vadd.f32 %v7734, %v7746
        %v7748 = vpop.f32.mrf.mxu0
        %7749 = vdwg.mxu0
        %7750 = vmatpush.bf16.msra.mxu0 %v5236
        %7751 = vmatpush.bf16.msra.mxu0 %v5228
        %7752 = vmatpush.bf16.msra.mxu0 %v5220
        %7753 = vmatpush.bf16.msra.mxu0 %v5212
        %7754 = vmatpush.bf16.msra.mxu0 %v5204
        %7755 = vmatpush.bf16.msra.mxu0 %v5196
        %7756 = vmatpush.bf16.msra.mxu0 %v5188
        %7757 = vmatpush.bf16.msra.mxu0 %v5180
        %7758 = vmatmul.bf16.gmra.mxu0 %v686
        %v7759 = vpop.f32.mrf.mxu0
        %v7760 = vadd.f32 %v7747, %v7759
        %v7761 = vpop.f32.mrf.mxu0
        %7762 = vdwg.mxu0
        %7763 = vmatpush.bf16.msra.mxu0 %v5300
        %7764 = vmatpush.bf16.msra.mxu0 %v5292
        %7765 = vmatpush.bf16.msra.mxu0 %v5284
        %7766 = vmatpush.bf16.msra.mxu0 %v5276
        %7767 = vmatpush.bf16.msra.mxu0 %v5268
        %7768 = vmatpush.bf16.msra.mxu0 %v5260
        %7769 = vmatpush.bf16.msra.mxu0 %v5252
        %7770 = vmatpush.bf16.msra.mxu0 %v5244
        %7771 = vmatmul.bf16.gmra.mxu0 %v687
        %v7772 = vpop.f32.mrf.mxu0
        %v7773 = vadd.f32 %v7760, %v7772
        %v7774 = vpop.f32.mrf.mxu0
        %7775 = vdwg.mxu0
        %7776 = vmatpush.bf16.msra.mxu0 %v5364
        %7777 = vmatpush.bf16.msra.mxu0 %v5356
        %7778 = vmatpush.bf16.msra.mxu0 %v5348
        %7779 = vmatpush.bf16.msra.mxu0 %v5340
        %7780 = vmatpush.bf16.msra.mxu0 %v5332
        %7781 = vmatpush.bf16.msra.mxu0 %v5324
        %7782 = vmatpush.bf16.msra.mxu0 %v5316
        %7783 = vmatpush.bf16.msra.mxu0 %v5308
        %7784 = vmatmul.bf16.gmra.mxu0 %v688
        %v7785 = vpop.f32.mrf.mxu0
        %v7786 = vadd.f32 %v7773, %v7785
        %v7787 = vpop.f32.mrf.mxu0
        %7788 = vdwg.mxu0
        %7789 = vmatpush.bf16.msra.mxu0 %v5428
        %7790 = vmatpush.bf16.msra.mxu0 %v5420
        %7791 = vmatpush.bf16.msra.mxu0 %v5412
        %7792 = vmatpush.bf16.msra.mxu0 %v5404
        %7793 = vmatpush.bf16.msra.mxu0 %v5396
        %7794 = vmatpush.bf16.msra.mxu0 %v5388
        %7795 = vmatpush.bf16.msra.mxu0 %v5380
        %7796 = vmatpush.bf16.msra.mxu0 %v5372
        %7797 = vmatmul.bf16.gmra.mxu0 %v689
        %v7798 = vpop.f32.mrf.mxu0
        %v7799 = vadd.f32 %v7786, %v7798
        %v7800 = vpop.f32.mrf.mxu0
        %7801 = vdwg.mxu0
        %7802 = vmatpush.bf16.msra.mxu0 %v5492
        %7803 = vmatpush.bf16.msra.mxu0 %v5484
        %7804 = vmatpush.bf16.msra.mxu0 %v5476
        %7805 = vmatpush.bf16.msra.mxu0 %v5468
        %7806 = vmatpush.bf16.msra.mxu0 %v5460
        %7807 = vmatpush.bf16.msra.mxu0 %v5452
        %7808 = vmatpush.bf16.msra.mxu0 %v5444
        %7809 = vmatpush.bf16.msra.mxu0 %v5436
        %7810 = vmatmul.bf16.gmra.mxu0 %v690
        %v7811 = vpop.f32.mrf.mxu0
        %v7812 = vadd.f32 %v7799, %v7811
        %v7813 = vpop.f32.mrf.mxu0
        %7814 = vdwg.mxu0
        %7815 = vmatpush.bf16.msra.mxu0 %v5556
        %7816 = vmatpush.bf16.msra.mxu0 %v5548
        %7817 = vmatpush.bf16.msra.mxu0 %v5540
        %7818 = vmatpush.bf16.msra.mxu0 %v5532
        %7819 = vmatpush.bf16.msra.mxu0 %v5524
        %7820 = vmatpush.bf16.msra.mxu0 %v5516
        %7821 = vmatpush.bf16.msra.mxu0 %v5508
        %7822 = vmatpush.bf16.msra.mxu0 %v5500
        %7823 = vmatmul.bf16.gmra.mxu0 %v691
        %v7824 = vpop.f32.mrf.mxu0
        %v7825 = vadd.f32 %v7812, %v7824
        %v7826 = vpop.f32.mrf.mxu0
        %7827 = vdwg.mxu0
        %7828 = vmatpush.bf16.msra.mxu0 %v5620
        %7829 = vmatpush.bf16.msra.mxu0 %v5612
        %7830 = vmatpush.bf16.msra.mxu0 %v5604
        %7831 = vmatpush.bf16.msra.mxu0 %v5596
        %7832 = vmatpush.bf16.msra.mxu0 %v5588
        %7833 = vmatpush.bf16.msra.mxu0 %v5580
        %7834 = vmatpush.bf16.msra.mxu0 %v5572
        %7835 = vmatpush.bf16.msra.mxu0 %v5564
        %7836 = vmatmul.bf16.gmra.mxu0 %v692
        %v7837 = vpop.f32.mrf.mxu0
        %v7838 = vadd.f32 %v7825, %v7837
        %v7839 = vpop.f32.mrf.mxu0
        %7840 = vdwg.mxu0
        %7841 = vmatpush.bf16.msra.mxu0 %v5684
        %7842 = vmatpush.bf16.msra.mxu0 %v5676
        %7843 = vmatpush.bf16.msra.mxu0 %v5668
        %7844 = vmatpush.bf16.msra.mxu0 %v5660
        %7845 = vmatpush.bf16.msra.mxu0 %v5652
        %7846 = vmatpush.bf16.msra.mxu0 %v5644
        %7847 = vmatpush.bf16.msra.mxu0 %v5636
        %7848 = vmatpush.bf16.msra.mxu0 %v5628
        %7849 = vmatmul.bf16.gmra.mxu0 %v693
        %v7850 = vpop.f32.mrf.mxu0
        %v7851 = vadd.f32 %v7838, %v7850
        %v7852 = vpop.f32.mrf.mxu0
        %7853 = vdwg.mxu0
        %7854 = vmatpush.bf16.msra.mxu0 %v5748
        %7855 = vmatpush.bf16.msra.mxu0 %v5740
        %7856 = vmatpush.bf16.msra.mxu0 %v5732
        %7857 = vmatpush.bf16.msra.mxu0 %v5724
        %7858 = vmatpush.bf16.msra.mxu0 %v5716
        %7859 = vmatpush.bf16.msra.mxu0 %v5708
        %7860 = vmatpush.bf16.msra.mxu0 %v5700
        %7861 = vmatpush.bf16.msra.mxu0 %v5692
        %7862 = vmatmul.bf16.gmra.mxu0 %v694
        %v7863 = vpop.f32.mrf.mxu0
        %v7864 = vadd.f32 %v7851, %v7863
        %v7865 = vpop.f32.mrf.mxu0
        %7866 = vdwg.mxu0
        %7867 = vmatpush.bf16.msra.mxu0 %v5812
        %7868 = vmatpush.bf16.msra.mxu0 %v5804
        %7869 = vmatpush.bf16.msra.mxu0 %v5796
        %7870 = vmatpush.bf16.msra.mxu0 %v5788
        %7871 = vmatpush.bf16.msra.mxu0 %v5780
        %7872 = vmatpush.bf16.msra.mxu0 %v5772
        %7873 = vmatpush.bf16.msra.mxu0 %v5764
        %7874 = vmatpush.bf16.msra.mxu0 %v5756
        %7875 = vmatmul.bf16.gmra.mxu0 %v695
        %v7876 = vpop.f32.mrf.mxu0
        %v7877 = vadd.f32 %v7864, %v7876
        %v7878 = vpop.f32.mrf.mxu0
        %7879 = vdwg.mxu0
        %7880 = vmatpush.bf16.msra.mxu0 %v4853
        %7881 = vmatpush.bf16.msra.mxu0 %v4845
        %7882 = vmatpush.bf16.msra.mxu0 %v4837
        %7883 = vmatpush.bf16.msra.mxu0 %v4829
        %7884 = vmatpush.bf16.msra.mxu0 %v4821
        %7885 = vmatpush.bf16.msra.mxu0 %v4813
        %7886 = vmatpush.bf16.msra.mxu0 %v4805
        %7887 = vmatpush.bf16.msra.mxu0 %v4797
        %7888 = vmatmul.bf16.gmra.mxu0 %v680
        %v7889 = vpop.f32.mrf.mxu0
        %v7890 = vadd.f32 0.0, %v7889
        %v7891 = vpop.f32.mrf.mxu0
        %7892 = vdwg.mxu0
        %7893 = vmatpush.bf16.msra.mxu0 %v4917
        %7894 = vmatpush.bf16.msra.mxu0 %v4909
        %7895 = vmatpush.bf16.msra.mxu0 %v4901
        %7896 = vmatpush.bf16.msra.mxu0 %v4893
        %7897 = vmatpush.bf16.msra.mxu0 %v4885
        %7898 = vmatpush.bf16.msra.mxu0 %v4877
        %7899 = vmatpush.bf16.msra.mxu0 %v4869
        %7900 = vmatpush.bf16.msra.mxu0 %v4861
        %7901 = vmatmul.bf16.gmra.mxu0 %v681
        %v7902 = vpop.f32.mrf.mxu0
        %v7903 = vadd.f32 %v7890, %v7902
        %v7904 = vpop.f32.mrf.mxu0
        %7905 = vdwg.mxu0
        %7906 = vmatpush.bf16.msra.mxu0 %v4981
        %7907 = vmatpush.bf16.msra.mxu0 %v4973
        %7908 = vmatpush.bf16.msra.mxu0 %v4965
        %7909 = vmatpush.bf16.msra.mxu0 %v4957
        %7910 = vmatpush.bf16.msra.mxu0 %v4949
        %7911 = vmatpush.bf16.msra.mxu0 %v4941
        %7912 = vmatpush.bf16.msra.mxu0 %v4933
        %7913 = vmatpush.bf16.msra.mxu0 %v4925
        %7914 = vmatmul.bf16.gmra.mxu0 %v682
        %v7915 = vpop.f32.mrf.mxu0
        %v7916 = vadd.f32 %v7903, %v7915
        %v7917 = vpop.f32.mrf.mxu0
        %7918 = vdwg.mxu0
        %7919 = vmatpush.bf16.msra.mxu0 %v5045
        %7920 = vmatpush.bf16.msra.mxu0 %v5037
        %7921 = vmatpush.bf16.msra.mxu0 %v5029
        %7922 = vmatpush.bf16.msra.mxu0 %v5021
        %7923 = vmatpush.bf16.msra.mxu0 %v5013
        %7924 = vmatpush.bf16.msra.mxu0 %v5005
        %7925 = vmatpush.bf16.msra.mxu0 %v4997
        %7926 = vmatpush.bf16.msra.mxu0 %v4989
        %7927 = vmatmul.bf16.gmra.mxu0 %v683
        %v7928 = vpop.f32.mrf.mxu0
        %v7929 = vadd.f32 %v7916, %v7928
        %v7930 = vpop.f32.mrf.mxu0
        %7931 = vdwg.mxu0
        %7932 = vmatpush.bf16.msra.mxu0 %v5109
        %7933 = vmatpush.bf16.msra.mxu0 %v5101
        %7934 = vmatpush.bf16.msra.mxu0 %v5093
        %7935 = vmatpush.bf16.msra.mxu0 %v5085
        %7936 = vmatpush.bf16.msra.mxu0 %v5077
        %7937 = vmatpush.bf16.msra.mxu0 %v5069
        %7938 = vmatpush.bf16.msra.mxu0 %v5061
        %7939 = vmatpush.bf16.msra.mxu0 %v5053
        %7940 = vmatmul.bf16.gmra.mxu0 %v684
        %v7941 = vpop.f32.mrf.mxu0
        %v7942 = vadd.f32 %v7929, %v7941
        %v7943 = vpop.f32.mrf.mxu0
        %7944 = vdwg.mxu0
        %7945 = vmatpush.bf16.msra.mxu0 %v5173
        %7946 = vmatpush.bf16.msra.mxu0 %v5165
        %7947 = vmatpush.bf16.msra.mxu0 %v5157
        %7948 = vmatpush.bf16.msra.mxu0 %v5149
        %7949 = vmatpush.bf16.msra.mxu0 %v5141
        %7950 = vmatpush.bf16.msra.mxu0 %v5133
        %7951 = vmatpush.bf16.msra.mxu0 %v5125
        %7952 = vmatpush.bf16.msra.mxu0 %v5117
        %7953 = vmatmul.bf16.gmra.mxu0 %v685
        %v7954 = vpop.f32.mrf.mxu0
        %v7955 = vadd.f32 %v7942, %v7954
        %v7956 = vpop.f32.mrf.mxu0
        %7957 = vdwg.mxu0
        %7958 = vmatpush.bf16.msra.mxu0 %v5237
        %7959 = vmatpush.bf16.msra.mxu0 %v5229
        %7960 = vmatpush.bf16.msra.mxu0 %v5221
        %7961 = vmatpush.bf16.msra.mxu0 %v5213
        %7962 = vmatpush.bf16.msra.mxu0 %v5205
        %7963 = vmatpush.bf16.msra.mxu0 %v5197
        %7964 = vmatpush.bf16.msra.mxu0 %v5189
        %7965 = vmatpush.bf16.msra.mxu0 %v5181
        %7966 = vmatmul.bf16.gmra.mxu0 %v686
        %v7967 = vpop.f32.mrf.mxu0
        %v7968 = vadd.f32 %v7955, %v7967
        %v7969 = vpop.f32.mrf.mxu0
        %7970 = vdwg.mxu0
        %7971 = vmatpush.bf16.msra.mxu0 %v5301
        %7972 = vmatpush.bf16.msra.mxu0 %v5293
        %7973 = vmatpush.bf16.msra.mxu0 %v5285
        %7974 = vmatpush.bf16.msra.mxu0 %v5277
        %7975 = vmatpush.bf16.msra.mxu0 %v5269
        %7976 = vmatpush.bf16.msra.mxu0 %v5261
        %7977 = vmatpush.bf16.msra.mxu0 %v5253
        %7978 = vmatpush.bf16.msra.mxu0 %v5245
        %7979 = vmatmul.bf16.gmra.mxu0 %v687
        %v7980 = vpop.f32.mrf.mxu0
        %v7981 = vadd.f32 %v7968, %v7980
        %v7982 = vpop.f32.mrf.mxu0
        %7983 = vdwg.mxu0
        %7984 = vmatpush.bf16.msra.mxu0 %v5365
        %7985 = vmatpush.bf16.msra.mxu0 %v5357
        %7986 = vmatpush.bf16.msra.mxu0 %v5349
        %7987 = vmatpush.bf16.msra.mxu0 %v5341
        %7988 = vmatpush.bf16.msra.mxu0 %v5333
        %7989 = vmatpush.bf16.msra.mxu0 %v5325
        %7990 = vmatpush.bf16.msra.mxu0 %v5317
        %7991 = vmatpush.bf16.msra.mxu0 %v5309
        %7992 = vmatmul.bf16.gmra.mxu0 %v688
        %v7993 = vpop.f32.mrf.mxu0
        %v7994 = vadd.f32 %v7981, %v7993
        %v7995 = vpop.f32.mrf.mxu0
        %7996 = vdwg.mxu0
        %7997 = vmatpush.bf16.msra.mxu0 %v5429
        %7998 = vmatpush.bf16.msra.mxu0 %v5421
        %7999 = vmatpush.bf16.msra.mxu0 %v5413
        %8000 = vmatpush.bf16.msra.mxu0 %v5405
        %8001 = vmatpush.bf16.msra.mxu0 %v5397
        %8002 = vmatpush.bf16.msra.mxu0 %v5389
        %8003 = vmatpush.bf16.msra.mxu0 %v5381
        %8004 = vmatpush.bf16.msra.mxu0 %v5373
        %8005 = vmatmul.bf16.gmra.mxu0 %v689
        %v8006 = vpop.f32.mrf.mxu0
        %v8007 = vadd.f32 %v7994, %v8006
        %v8008 = vpop.f32.mrf.mxu0
        %8009 = vdwg.mxu0
        %8010 = vmatpush.bf16.msra.mxu0 %v5493
        %8011 = vmatpush.bf16.msra.mxu0 %v5485
        %8012 = vmatpush.bf16.msra.mxu0 %v5477
        %8013 = vmatpush.bf16.msra.mxu0 %v5469
        %8014 = vmatpush.bf16.msra.mxu0 %v5461
        %8015 = vmatpush.bf16.msra.mxu0 %v5453
        %8016 = vmatpush.bf16.msra.mxu0 %v5445
        %8017 = vmatpush.bf16.msra.mxu0 %v5437
        %8018 = vmatmul.bf16.gmra.mxu0 %v690
        %v8019 = vpop.f32.mrf.mxu0
        %v8020 = vadd.f32 %v8007, %v8019
        %v8021 = vpop.f32.mrf.mxu0
        %8022 = vdwg.mxu0
        %8023 = vmatpush.bf16.msra.mxu0 %v5557
        %8024 = vmatpush.bf16.msra.mxu0 %v5549
        %8025 = vmatpush.bf16.msra.mxu0 %v5541
        %8026 = vmatpush.bf16.msra.mxu0 %v5533
        %8027 = vmatpush.bf16.msra.mxu0 %v5525
        %8028 = vmatpush.bf16.msra.mxu0 %v5517
        %8029 = vmatpush.bf16.msra.mxu0 %v5509
        %8030 = vmatpush.bf16.msra.mxu0 %v5501
        %8031 = vmatmul.bf16.gmra.mxu0 %v691
        %v8032 = vpop.f32.mrf.mxu0
        %v8033 = vadd.f32 %v8020, %v8032
        %v8034 = vpop.f32.mrf.mxu0
        %8035 = vdwg.mxu0
        %8036 = vmatpush.bf16.msra.mxu0 %v5621
        %8037 = vmatpush.bf16.msra.mxu0 %v5613
        %8038 = vmatpush.bf16.msra.mxu0 %v5605
        %8039 = vmatpush.bf16.msra.mxu0 %v5597
        %8040 = vmatpush.bf16.msra.mxu0 %v5589
        %8041 = vmatpush.bf16.msra.mxu0 %v5581
        %8042 = vmatpush.bf16.msra.mxu0 %v5573
        %8043 = vmatpush.bf16.msra.mxu0 %v5565
        %8044 = vmatmul.bf16.gmra.mxu0 %v692
        %v8045 = vpop.f32.mrf.mxu0
        %v8046 = vadd.f32 %v8033, %v8045
        %v8047 = vpop.f32.mrf.mxu0
        %8048 = vdwg.mxu0
        %8049 = vmatpush.bf16.msra.mxu0 %v5685
        %8050 = vmatpush.bf16.msra.mxu0 %v5677
        %8051 = vmatpush.bf16.msra.mxu0 %v5669
        %8052 = vmatpush.bf16.msra.mxu0 %v5661
        %8053 = vmatpush.bf16.msra.mxu0 %v5653
        %8054 = vmatpush.bf16.msra.mxu0 %v5645
        %8055 = vmatpush.bf16.msra.mxu0 %v5637
        %8056 = vmatpush.bf16.msra.mxu0 %v5629
        %8057 = vmatmul.bf16.gmra.mxu0 %v693
        %v8058 = vpop.f32.mrf.mxu0
        %v8059 = vadd.f32 %v8046, %v8058
        %v8060 = vpop.f32.mrf.mxu0
        %8061 = vdwg.mxu0
        %8062 = vmatpush.bf16.msra.mxu0 %v5749
        %8063 = vmatpush.bf16.msra.mxu0 %v5741
        %8064 = vmatpush.bf16.msra.mxu0 %v5733
        %8065 = vmatpush.bf16.msra.mxu0 %v5725
        %8066 = vmatpush.bf16.msra.mxu0 %v5717
        %8067 = vmatpush.bf16.msra.mxu0 %v5709
        %8068 = vmatpush.bf16.msra.mxu0 %v5701
        %8069 = vmatpush.bf16.msra.mxu0 %v5693
        %8070 = vmatmul.bf16.gmra.mxu0 %v694
        %v8071 = vpop.f32.mrf.mxu0
        %v8072 = vadd.f32 %v8059, %v8071
        %v8073 = vpop.f32.mrf.mxu0
        %8074 = vdwg.mxu0
        %8075 = vmatpush.bf16.msra.mxu0 %v5813
        %8076 = vmatpush.bf16.msra.mxu0 %v5805
        %8077 = vmatpush.bf16.msra.mxu0 %v5797
        %8078 = vmatpush.bf16.msra.mxu0 %v5789
        %8079 = vmatpush.bf16.msra.mxu0 %v5781
        %8080 = vmatpush.bf16.msra.mxu0 %v5773
        %8081 = vmatpush.bf16.msra.mxu0 %v5765
        %8082 = vmatpush.bf16.msra.mxu0 %v5757
        %8083 = vmatmul.bf16.gmra.mxu0 %v695
        %v8084 = vpop.f32.mrf.mxu0
        %v8085 = vadd.f32 %v8072, %v8084
        %v8086 = vpop.f32.mrf.mxu0
        %8087 = vdwg.mxu0
        %8088 = vmatpush.bf16.msra.mxu0 %v4854
        %8089 = vmatpush.bf16.msra.mxu0 %v4846
        %8090 = vmatpush.bf16.msra.mxu0 %v4838
        %8091 = vmatpush.bf16.msra.mxu0 %v4830
        %8092 = vmatpush.bf16.msra.mxu0 %v4822
        %8093 = vmatpush.bf16.msra.mxu0 %v4814
        %8094 = vmatpush.bf16.msra.mxu0 %v4806
        %8095 = vmatpush.bf16.msra.mxu0 %v4798
        %8096 = vmatmul.bf16.gmra.mxu0 %v680
        %v8097 = vpop.f32.mrf.mxu0
        %v8098 = vadd.f32 0.0, %v8097
        %v8099 = vpop.f32.mrf.mxu0
        %8100 = vdwg.mxu0
        %8101 = vmatpush.bf16.msra.mxu0 %v4918
        %8102 = vmatpush.bf16.msra.mxu0 %v4910
        %8103 = vmatpush.bf16.msra.mxu0 %v4902
        %8104 = vmatpush.bf16.msra.mxu0 %v4894
        %8105 = vmatpush.bf16.msra.mxu0 %v4886
        %8106 = vmatpush.bf16.msra.mxu0 %v4878
        %8107 = vmatpush.bf16.msra.mxu0 %v4870
        %8108 = vmatpush.bf16.msra.mxu0 %v4862
        %8109 = vmatmul.bf16.gmra.mxu0 %v681
        %v8110 = vpop.f32.mrf.mxu0
        %v8111 = vadd.f32 %v8098, %v8110
        %v8112 = vpop.f32.mrf.mxu0
        %8113 = vdwg.mxu0
        %8114 = vmatpush.bf16.msra.mxu0 %v4982
        %8115 = vmatpush.bf16.msra.mxu0 %v4974
        %8116 = vmatpush.bf16.msra.mxu0 %v4966
        %8117 = vmatpush.bf16.msra.mxu0 %v4958
        %8118 = vmatpush.bf16.msra.mxu0 %v4950
        %8119 = vmatpush.bf16.msra.mxu0 %v4942
        %8120 = vmatpush.bf16.msra.mxu0 %v4934
        %8121 = vmatpush.bf16.msra.mxu0 %v4926
        %8122 = vmatmul.bf16.gmra.mxu0 %v682
        %v8123 = vpop.f32.mrf.mxu0
        %v8124 = vadd.f32 %v8111, %v8123
        %v8125 = vpop.f32.mrf.mxu0
        %8126 = vdwg.mxu0
        %8127 = vmatpush.bf16.msra.mxu0 %v5046
        %8128 = vmatpush.bf16.msra.mxu0 %v5038
        %8129 = vmatpush.bf16.msra.mxu0 %v5030
        %8130 = vmatpush.bf16.msra.mxu0 %v5022
        %8131 = vmatpush.bf16.msra.mxu0 %v5014
        %8132 = vmatpush.bf16.msra.mxu0 %v5006
        %8133 = vmatpush.bf16.msra.mxu0 %v4998
        %8134 = vmatpush.bf16.msra.mxu0 %v4990
        %8135 = vmatmul.bf16.gmra.mxu0 %v683
        %v8136 = vpop.f32.mrf.mxu0
        %v8137 = vadd.f32 %v8124, %v8136
        %v8138 = vpop.f32.mrf.mxu0
        %8139 = vdwg.mxu0
        %8140 = vmatpush.bf16.msra.mxu0 %v5110
        %8141 = vmatpush.bf16.msra.mxu0 %v5102
        %8142 = vmatpush.bf16.msra.mxu0 %v5094
        %8143 = vmatpush.bf16.msra.mxu0 %v5086
        %8144 = vmatpush.bf16.msra.mxu0 %v5078
        %8145 = vmatpush.bf16.msra.mxu0 %v5070
        %8146 = vmatpush.bf16.msra.mxu0 %v5062
        %8147 = vmatpush.bf16.msra.mxu0 %v5054
        %8148 = vmatmul.bf16.gmra.mxu0 %v684
        %v8149 = vpop.f32.mrf.mxu0
        %v8150 = vadd.f32 %v8137, %v8149
        %v8151 = vpop.f32.mrf.mxu0
        %8152 = vdwg.mxu0
        %8153 = vmatpush.bf16.msra.mxu0 %v5174
        %8154 = vmatpush.bf16.msra.mxu0 %v5166
        %8155 = vmatpush.bf16.msra.mxu0 %v5158
        %8156 = vmatpush.bf16.msra.mxu0 %v5150
        %8157 = vmatpush.bf16.msra.mxu0 %v5142
        %8158 = vmatpush.bf16.msra.mxu0 %v5134
        %8159 = vmatpush.bf16.msra.mxu0 %v5126
        %8160 = vmatpush.bf16.msra.mxu0 %v5118
        %8161 = vmatmul.bf16.gmra.mxu0 %v685
        %v8162 = vpop.f32.mrf.mxu0
        %v8163 = vadd.f32 %v8150, %v8162
        %v8164 = vpop.f32.mrf.mxu0
        %8165 = vdwg.mxu0
        %8166 = vmatpush.bf16.msra.mxu0 %v5238
        %8167 = vmatpush.bf16.msra.mxu0 %v5230
        %8168 = vmatpush.bf16.msra.mxu0 %v5222
        %8169 = vmatpush.bf16.msra.mxu0 %v5214
        %8170 = vmatpush.bf16.msra.mxu0 %v5206
        %8171 = vmatpush.bf16.msra.mxu0 %v5198
        %8172 = vmatpush.bf16.msra.mxu0 %v5190
        %8173 = vmatpush.bf16.msra.mxu0 %v5182
        %8174 = vmatmul.bf16.gmra.mxu0 %v686
        %v8175 = vpop.f32.mrf.mxu0
        %v8176 = vadd.f32 %v8163, %v8175
        %v8177 = vpop.f32.mrf.mxu0
        %8178 = vdwg.mxu0
        %8179 = vmatpush.bf16.msra.mxu0 %v5302
        %8180 = vmatpush.bf16.msra.mxu0 %v5294
        %8181 = vmatpush.bf16.msra.mxu0 %v5286
        %8182 = vmatpush.bf16.msra.mxu0 %v5278
        %8183 = vmatpush.bf16.msra.mxu0 %v5270
        %8184 = vmatpush.bf16.msra.mxu0 %v5262
        %8185 = vmatpush.bf16.msra.mxu0 %v5254
        %8186 = vmatpush.bf16.msra.mxu0 %v5246
        %8187 = vmatmul.bf16.gmra.mxu0 %v687
        %v8188 = vpop.f32.mrf.mxu0
        %v8189 = vadd.f32 %v8176, %v8188
        %v8190 = vpop.f32.mrf.mxu0
        %8191 = vdwg.mxu0
        %8192 = vmatpush.bf16.msra.mxu0 %v5366
        %8193 = vmatpush.bf16.msra.mxu0 %v5358
        %8194 = vmatpush.bf16.msra.mxu0 %v5350
        %8195 = vmatpush.bf16.msra.mxu0 %v5342
        %8196 = vmatpush.bf16.msra.mxu0 %v5334
        %8197 = vmatpush.bf16.msra.mxu0 %v5326
        %8198 = vmatpush.bf16.msra.mxu0 %v5318
        %8199 = vmatpush.bf16.msra.mxu0 %v5310
        %8200 = vmatmul.bf16.gmra.mxu0 %v688
        %v8201 = vpop.f32.mrf.mxu0
        %v8202 = vadd.f32 %v8189, %v8201
        %v8203 = vpop.f32.mrf.mxu0
        %8204 = vdwg.mxu0
        %8205 = vmatpush.bf16.msra.mxu0 %v5430
        %8206 = vmatpush.bf16.msra.mxu0 %v5422
        %8207 = vmatpush.bf16.msra.mxu0 %v5414
        %8208 = vmatpush.bf16.msra.mxu0 %v5406
        %8209 = vmatpush.bf16.msra.mxu0 %v5398
        %8210 = vmatpush.bf16.msra.mxu0 %v5390
        %8211 = vmatpush.bf16.msra.mxu0 %v5382
        %8212 = vmatpush.bf16.msra.mxu0 %v5374
        %8213 = vmatmul.bf16.gmra.mxu0 %v689
        %v8214 = vpop.f32.mrf.mxu0
        %v8215 = vadd.f32 %v8202, %v8214
        %v8216 = vpop.f32.mrf.mxu0
        %8217 = vdwg.mxu0
        %8218 = vmatpush.bf16.msra.mxu0 %v5494
        %8219 = vmatpush.bf16.msra.mxu0 %v5486
        %8220 = vmatpush.bf16.msra.mxu0 %v5478
        %8221 = vmatpush.bf16.msra.mxu0 %v5470
        %8222 = vmatpush.bf16.msra.mxu0 %v5462
        %8223 = vmatpush.bf16.msra.mxu0 %v5454
        %8224 = vmatpush.bf16.msra.mxu0 %v5446
        %8225 = vmatpush.bf16.msra.mxu0 %v5438
        %8226 = vmatmul.bf16.gmra.mxu0 %v690
        %v8227 = vpop.f32.mrf.mxu0
        %v8228 = vadd.f32 %v8215, %v8227
        %v8229 = vpop.f32.mrf.mxu0
        %8230 = vdwg.mxu0
        %8231 = vmatpush.bf16.msra.mxu0 %v5558
        %8232 = vmatpush.bf16.msra.mxu0 %v5550
        %8233 = vmatpush.bf16.msra.mxu0 %v5542
        %8234 = vmatpush.bf16.msra.mxu0 %v5534
        %8235 = vmatpush.bf16.msra.mxu0 %v5526
        %8236 = vmatpush.bf16.msra.mxu0 %v5518
        %8237 = vmatpush.bf16.msra.mxu0 %v5510
        %8238 = vmatpush.bf16.msra.mxu0 %v5502
        %8239 = vmatmul.bf16.gmra.mxu0 %v691
        %v8240 = vpop.f32.mrf.mxu0
        %v8241 = vadd.f32 %v8228, %v8240
        %v8242 = vpop.f32.mrf.mxu0
        %8243 = vdwg.mxu0
        %8244 = vmatpush.bf16.msra.mxu0 %v5622
        %8245 = vmatpush.bf16.msra.mxu0 %v5614
        %8246 = vmatpush.bf16.msra.mxu0 %v5606
        %8247 = vmatpush.bf16.msra.mxu0 %v5598
        %8248 = vmatpush.bf16.msra.mxu0 %v5590
        %8249 = vmatpush.bf16.msra.mxu0 %v5582
        %8250 = vmatpush.bf16.msra.mxu0 %v5574
        %8251 = vmatpush.bf16.msra.mxu0 %v5566
        %8252 = vmatmul.bf16.gmra.mxu0 %v692
        %v8253 = vpop.f32.mrf.mxu0
        %v8254 = vadd.f32 %v8241, %v8253
        %v8255 = vpop.f32.mrf.mxu0
        %8256 = vdwg.mxu0
        %8257 = vmatpush.bf16.msra.mxu0 %v5686
        %8258 = vmatpush.bf16.msra.mxu0 %v5678
        %8259 = vmatpush.bf16.msra.mxu0 %v5670
        %8260 = vmatpush.bf16.msra.mxu0 %v5662
        %8261 = vmatpush.bf16.msra.mxu0 %v5654
        %8262 = vmatpush.bf16.msra.mxu0 %v5646
        %8263 = vmatpush.bf16.msra.mxu0 %v5638
        %8264 = vmatpush.bf16.msra.mxu0 %v5630
        %8265 = vmatmul.bf16.gmra.mxu0 %v693
        %v8266 = vpop.f32.mrf.mxu0
        %v8267 = vadd.f32 %v8254, %v8266
        %v8268 = vpop.f32.mrf.mxu0
        %8269 = vdwg.mxu0
        %8270 = vmatpush.bf16.msra.mxu0 %v5750
        %8271 = vmatpush.bf16.msra.mxu0 %v5742
        %8272 = vmatpush.bf16.msra.mxu0 %v5734
        %8273 = vmatpush.bf16.msra.mxu0 %v5726
        %8274 = vmatpush.bf16.msra.mxu0 %v5718
        %8275 = vmatpush.bf16.msra.mxu0 %v5710
        %8276 = vmatpush.bf16.msra.mxu0 %v5702
        %8277 = vmatpush.bf16.msra.mxu0 %v5694
        %8278 = vmatmul.bf16.gmra.mxu0 %v694
        %v8279 = vpop.f32.mrf.mxu0
        %v8280 = vadd.f32 %v8267, %v8279
        %v8281 = vpop.f32.mrf.mxu0
        %8282 = vdwg.mxu0
        %8283 = vmatpush.bf16.msra.mxu0 %v5814
        %8284 = vmatpush.bf16.msra.mxu0 %v5806
        %8285 = vmatpush.bf16.msra.mxu0 %v5798
        %8286 = vmatpush.bf16.msra.mxu0 %v5790
        %8287 = vmatpush.bf16.msra.mxu0 %v5782
        %8288 = vmatpush.bf16.msra.mxu0 %v5774
        %8289 = vmatpush.bf16.msra.mxu0 %v5766
        %8290 = vmatpush.bf16.msra.mxu0 %v5758
        %8291 = vmatmul.bf16.gmra.mxu0 %v695
        %v8292 = vpop.f32.mrf.mxu0
        %v8293 = vadd.f32 %v8280, %v8292
        %v8294 = vpop.f32.mrf.mxu0
        %8295 = vdwg.mxu0
        %8296 = vmatpush.bf16.msra.mxu0 %v4855
        %8297 = vmatpush.bf16.msra.mxu0 %v4847
        %8298 = vmatpush.bf16.msra.mxu0 %v4839
        %8299 = vmatpush.bf16.msra.mxu0 %v4831
        %8300 = vmatpush.bf16.msra.mxu0 %v4823
        %8301 = vmatpush.bf16.msra.mxu0 %v4815
        %8302 = vmatpush.bf16.msra.mxu0 %v4807
        %8303 = vmatpush.bf16.msra.mxu0 %v4799
        %8304 = vmatmul.bf16.gmra.mxu0 %v680
        %v8305 = vpop.f32.mrf.mxu0
        %v8306 = vadd.f32 0.0, %v8305
        %v8307 = vpop.f32.mrf.mxu0
        %8308 = vdwg.mxu0
        %8309 = vmatpush.bf16.msra.mxu0 %v4919
        %8310 = vmatpush.bf16.msra.mxu0 %v4911
        %8311 = vmatpush.bf16.msra.mxu0 %v4903
        %8312 = vmatpush.bf16.msra.mxu0 %v4895
        %8313 = vmatpush.bf16.msra.mxu0 %v4887
        %8314 = vmatpush.bf16.msra.mxu0 %v4879
        %8315 = vmatpush.bf16.msra.mxu0 %v4871
        %8316 = vmatpush.bf16.msra.mxu0 %v4863
        %8317 = vmatmul.bf16.gmra.mxu0 %v681
        %v8318 = vpop.f32.mrf.mxu0
        %v8319 = vadd.f32 %v8306, %v8318
        %v8320 = vpop.f32.mrf.mxu0
        %8321 = vdwg.mxu0
        %8322 = vmatpush.bf16.msra.mxu0 %v4983
        %8323 = vmatpush.bf16.msra.mxu0 %v4975
        %8324 = vmatpush.bf16.msra.mxu0 %v4967
        %8325 = vmatpush.bf16.msra.mxu0 %v4959
        %8326 = vmatpush.bf16.msra.mxu0 %v4951
        %8327 = vmatpush.bf16.msra.mxu0 %v4943
        %8328 = vmatpush.bf16.msra.mxu0 %v4935
        %8329 = vmatpush.bf16.msra.mxu0 %v4927
        %8330 = vmatmul.bf16.gmra.mxu0 %v682
        %v8331 = vpop.f32.mrf.mxu0
        %v8332 = vadd.f32 %v8319, %v8331
        %v8333 = vpop.f32.mrf.mxu0
        %8334 = vdwg.mxu0
        %8335 = vmatpush.bf16.msra.mxu0 %v5047
        %8336 = vmatpush.bf16.msra.mxu0 %v5039
        %8337 = vmatpush.bf16.msra.mxu0 %v5031
        %8338 = vmatpush.bf16.msra.mxu0 %v5023
        %8339 = vmatpush.bf16.msra.mxu0 %v5015
        %8340 = vmatpush.bf16.msra.mxu0 %v5007
        %8341 = vmatpush.bf16.msra.mxu0 %v4999
        %8342 = vmatpush.bf16.msra.mxu0 %v4991
        %8343 = vmatmul.bf16.gmra.mxu0 %v683
        %v8344 = vpop.f32.mrf.mxu0
        %v8345 = vadd.f32 %v8332, %v8344
        %v8346 = vpop.f32.mrf.mxu0
        %8347 = vdwg.mxu0
        %8348 = vmatpush.bf16.msra.mxu0 %v5111
        %8349 = vmatpush.bf16.msra.mxu0 %v5103
        %8350 = vmatpush.bf16.msra.mxu0 %v5095
        %8351 = vmatpush.bf16.msra.mxu0 %v5087
        %8352 = vmatpush.bf16.msra.mxu0 %v5079
        %8353 = vmatpush.bf16.msra.mxu0 %v5071
        %8354 = vmatpush.bf16.msra.mxu0 %v5063
        %8355 = vmatpush.bf16.msra.mxu0 %v5055
        %8356 = vmatmul.bf16.gmra.mxu0 %v684
        %v8357 = vpop.f32.mrf.mxu0
        %v8358 = vadd.f32 %v8345, %v8357
        %v8359 = vpop.f32.mrf.mxu0
        %8360 = vdwg.mxu0
        %8361 = vmatpush.bf16.msra.mxu0 %v5175
        %8362 = vmatpush.bf16.msra.mxu0 %v5167
        %8363 = vmatpush.bf16.msra.mxu0 %v5159
        %8364 = vmatpush.bf16.msra.mxu0 %v5151
        %8365 = vmatpush.bf16.msra.mxu0 %v5143
        %8366 = vmatpush.bf16.msra.mxu0 %v5135
        %8367 = vmatpush.bf16.msra.mxu0 %v5127
        %8368 = vmatpush.bf16.msra.mxu0 %v5119
        %8369 = vmatmul.bf16.gmra.mxu0 %v685
        %v8370 = vpop.f32.mrf.mxu0
        %v8371 = vadd.f32 %v8358, %v8370
        %v8372 = vpop.f32.mrf.mxu0
        %8373 = vdwg.mxu0
        %8374 = vmatpush.bf16.msra.mxu0 %v5239
        %8375 = vmatpush.bf16.msra.mxu0 %v5231
        %8376 = vmatpush.bf16.msra.mxu0 %v5223
        %8377 = vmatpush.bf16.msra.mxu0 %v5215
        %8378 = vmatpush.bf16.msra.mxu0 %v5207
        %8379 = vmatpush.bf16.msra.mxu0 %v5199
        %8380 = vmatpush.bf16.msra.mxu0 %v5191
        %8381 = vmatpush.bf16.msra.mxu0 %v5183
        %8382 = vmatmul.bf16.gmra.mxu0 %v686
        %v8383 = vpop.f32.mrf.mxu0
        %v8384 = vadd.f32 %v8371, %v8383
        %v8385 = vpop.f32.mrf.mxu0
        %8386 = vdwg.mxu0
        %8387 = vmatpush.bf16.msra.mxu0 %v5303
        %8388 = vmatpush.bf16.msra.mxu0 %v5295
        %8389 = vmatpush.bf16.msra.mxu0 %v5287
        %8390 = vmatpush.bf16.msra.mxu0 %v5279
        %8391 = vmatpush.bf16.msra.mxu0 %v5271
        %8392 = vmatpush.bf16.msra.mxu0 %v5263
        %8393 = vmatpush.bf16.msra.mxu0 %v5255
        %8394 = vmatpush.bf16.msra.mxu0 %v5247
        %8395 = vmatmul.bf16.gmra.mxu0 %v687
        %v8396 = vpop.f32.mrf.mxu0
        %v8397 = vadd.f32 %v8384, %v8396
        %v8398 = vpop.f32.mrf.mxu0
        %8399 = vdwg.mxu0
        %8400 = vmatpush.bf16.msra.mxu0 %v5367
        %8401 = vmatpush.bf16.msra.mxu0 %v5359
        %8402 = vmatpush.bf16.msra.mxu0 %v5351
        %8403 = vmatpush.bf16.msra.mxu0 %v5343
        %8404 = vmatpush.bf16.msra.mxu0 %v5335
        %8405 = vmatpush.bf16.msra.mxu0 %v5327
        %8406 = vmatpush.bf16.msra.mxu0 %v5319
        %8407 = vmatpush.bf16.msra.mxu0 %v5311
        %8408 = vmatmul.bf16.gmra.mxu0 %v688
        %v8409 = vpop.f32.mrf.mxu0
        %v8410 = vadd.f32 %v8397, %v8409
        %v8411 = vpop.f32.mrf.mxu0
        %8412 = vdwg.mxu0
        %8413 = vmatpush.bf16.msra.mxu0 %v5431
        %8414 = vmatpush.bf16.msra.mxu0 %v5423
        %8415 = vmatpush.bf16.msra.mxu0 %v5415
        %8416 = vmatpush.bf16.msra.mxu0 %v5407
        %8417 = vmatpush.bf16.msra.mxu0 %v5399
        %8418 = vmatpush.bf16.msra.mxu0 %v5391
        %8419 = vmatpush.bf16.msra.mxu0 %v5383
        %8420 = vmatpush.bf16.msra.mxu0 %v5375
        %8421 = vmatmul.bf16.gmra.mxu0 %v689
        %v8422 = vpop.f32.mrf.mxu0
        %v8423 = vadd.f32 %v8410, %v8422
        %v8424 = vpop.f32.mrf.mxu0
        %8425 = vdwg.mxu0
        %8426 = vmatpush.bf16.msra.mxu0 %v5495
        %8427 = vmatpush.bf16.msra.mxu0 %v5487
        %8428 = vmatpush.bf16.msra.mxu0 %v5479
        %8429 = vmatpush.bf16.msra.mxu0 %v5471
        %8430 = vmatpush.bf16.msra.mxu0 %v5463
        %8431 = vmatpush.bf16.msra.mxu0 %v5455
        %8432 = vmatpush.bf16.msra.mxu0 %v5447
        %8433 = vmatpush.bf16.msra.mxu0 %v5439
        %8434 = vmatmul.bf16.gmra.mxu0 %v690
        %v8435 = vpop.f32.mrf.mxu0
        %v8436 = vadd.f32 %v8423, %v8435
        %v8437 = vpop.f32.mrf.mxu0
        %8438 = vdwg.mxu0
        %8439 = vmatpush.bf16.msra.mxu0 %v5559
        %8440 = vmatpush.bf16.msra.mxu0 %v5551
        %8441 = vmatpush.bf16.msra.mxu0 %v5543
        %8442 = vmatpush.bf16.msra.mxu0 %v5535
        %8443 = vmatpush.bf16.msra.mxu0 %v5527
        %8444 = vmatpush.bf16.msra.mxu0 %v5519
        %8445 = vmatpush.bf16.msra.mxu0 %v5511
        %8446 = vmatpush.bf16.msra.mxu0 %v5503
        %8447 = vmatmul.bf16.gmra.mxu0 %v691
        %v8448 = vpop.f32.mrf.mxu0
        %v8449 = vadd.f32 %v8436, %v8448
        %v8450 = vpop.f32.mrf.mxu0
        %8451 = vdwg.mxu0
        %8452 = vmatpush.bf16.msra.mxu0 %v5623
        %8453 = vmatpush.bf16.msra.mxu0 %v5615
        %8454 = vmatpush.bf16.msra.mxu0 %v5607
        %8455 = vmatpush.bf16.msra.mxu0 %v5599
        %8456 = vmatpush.bf16.msra.mxu0 %v5591
        %8457 = vmatpush.bf16.msra.mxu0 %v5583
        %8458 = vmatpush.bf16.msra.mxu0 %v5575
        %8459 = vmatpush.bf16.msra.mxu0 %v5567
        %8460 = vmatmul.bf16.gmra.mxu0 %v692
        %v8461 = vpop.f32.mrf.mxu0
        %v8462 = vadd.f32 %v8449, %v8461
        %v8463 = vpop.f32.mrf.mxu0
        %8464 = vdwg.mxu0
        %8465 = vmatpush.bf16.msra.mxu0 %v5687
        %8466 = vmatpush.bf16.msra.mxu0 %v5679
        %8467 = vmatpush.bf16.msra.mxu0 %v5671
        %8468 = vmatpush.bf16.msra.mxu0 %v5663
        %8469 = vmatpush.bf16.msra.mxu0 %v5655
        %8470 = vmatpush.bf16.msra.mxu0 %v5647
        %8471 = vmatpush.bf16.msra.mxu0 %v5639
        %8472 = vmatpush.bf16.msra.mxu0 %v5631
        %8473 = vmatmul.bf16.gmra.mxu0 %v693
        %v8474 = vpop.f32.mrf.mxu0
        %v8475 = vadd.f32 %v8462, %v8474
        %v8476 = vpop.f32.mrf.mxu0
        %8477 = vdwg.mxu0
        %8478 = vmatpush.bf16.msra.mxu0 %v5751
        %8479 = vmatpush.bf16.msra.mxu0 %v5743
        %8480 = vmatpush.bf16.msra.mxu0 %v5735
        %8481 = vmatpush.bf16.msra.mxu0 %v5727
        %8482 = vmatpush.bf16.msra.mxu0 %v5719
        %8483 = vmatpush.bf16.msra.mxu0 %v5711
        %8484 = vmatpush.bf16.msra.mxu0 %v5703
        %8485 = vmatpush.bf16.msra.mxu0 %v5695
        %8486 = vmatmul.bf16.gmra.mxu0 %v694
        %v8487 = vpop.f32.mrf.mxu0
        %v8488 = vadd.f32 %v8475, %v8487
        %v8489 = vpop.f32.mrf.mxu0
        %8490 = vdwg.mxu0
        %8491 = vmatpush.bf16.msra.mxu0 %v5815
        %8492 = vmatpush.bf16.msra.mxu0 %v5807
        %8493 = vmatpush.bf16.msra.mxu0 %v5799
        %8494 = vmatpush.bf16.msra.mxu0 %v5791
        %8495 = vmatpush.bf16.msra.mxu0 %v5783
        %8496 = vmatpush.bf16.msra.mxu0 %v5775
        %8497 = vmatpush.bf16.msra.mxu0 %v5767
        %8498 = vmatpush.bf16.msra.mxu0 %v5759
        %8499 = vmatmul.bf16.gmra.mxu0 %v695
        %v8500 = vpop.f32.mrf.mxu0
        %v8501 = vadd.f32 %v8488, %v8500
        %v8502 = vpop.f32.mrf.mxu0
        %8503 = vdwg.mxu0
        %v8504 = vmax.f32 %v7045, 0.0
        %v8505 = vmax.f32 %v7253, 0.0
        %v8506 = vmax.f32 %v7461, 0.0
        %v8507 = vmax.f32 %v7669, 0.0
        %v8508 = vmax.f32 %v7877, 0.0
        %v8509 = vmax.f32 %v8085, 0.0
        %v8510 = vmax.f32 %v8293, 0.0
        %v8511 = vmax.f32 %v8501, 0.0
        %v8512 = vpack.c.bf16 %v8504, %v8504
        %v8513 = vpack.c.bf16 %v8505, %v8505
        %v8514 = vpack.c.bf16 %v8506, %v8506
        %v8515 = vpack.c.bf16 %v8507, %v8507
        %v8516 = vpack.c.bf16 %v8508, %v8508
        %v8517 = vpack.c.bf16 %v8509, %v8509
        %v8518 = vpack.c.bf16 %v8510, %v8510
        %v8519 = vpack.c.bf16 %v8511, %v8511
        %v8520 = vld [vmem:[#allocation12] sm:$0xf]
        %v8521 = vld [vmem:[#allocation12 + $0x4] sm:$0xf]
        %v8522 = vld [vmem:[#allocation12 + $0x8] sm:$0xf]
        %v8523 = vld [vmem:[#allocation12 + $0xc] sm:$0xf]
        %v8524 = vld [vmem:[#allocation12 + $0x10] sm:$0xf]
        %v8525 = vld [vmem:[#allocation12 + $0x14] sm:$0xf]
        %v8526 = vld [vmem:[#allocation12 + $0x18] sm:$0xf]
        %v8527 = vld [vmem:[#allocation12 + $0x1c] sm:$0xf]
        %v8528 = vld [vmem:[#allocation12 + $0x20] sm:$0xf]
        %v8529 = vld [vmem:[#allocation12 + $0x24] sm:$0xf]
        %v8530 = vld [vmem:[#allocation12 + $0x28] sm:$0xf]
        %v8531 = vld [vmem:[#allocation12 + $0x2c] sm:$0xf]
        %v8532 = vld [vmem:[#allocation12 + $0x30] sm:$0xf]
        %v8533 = vld [vmem:[#allocation12 + $0x34] sm:$0xf]
        %v8534 = vld [vmem:[#allocation12 + $0x38] sm:$0xf]
        %v8535 = vld [vmem:[#allocation12 + $0x3c] sm:$0xf]
        %v8536 = vld [vmem:[#allocation12 + $0x40] sm:$0xf]
        %v8537 = vld [vmem:[#allocation12 + $0x44] sm:$0xf]
        %v8538 = vld [vmem:[#allocation12 + $0x48] sm:$0xf]
        %v8539 = vld [vmem:[#allocation12 + $0x4c] sm:$0xf]
        %v8540 = vld [vmem:[#allocation12 + $0x50] sm:$0xf]
        %v8541 = vld [vmem:[#allocation12 + $0x54] sm:$0xf]
        %v8542 = vld [vmem:[#allocation12 + $0x58] sm:$0xf]
        %v8543 = vld [vmem:[#allocation12 + $0x5c] sm:$0xf]
        %v8544 = vld [vmem:[#allocation12 + $0x60] sm:$0xf]
        %v8545 = vld [vmem:[#allocation12 + $0x64] sm:$0xf]
        %v8546 = vld [vmem:[#allocation12 + $0x68] sm:$0xf]
        %v8547 = vld [vmem:[#allocation12 + $0x6c] sm:$0xf]
        %v8548 = vld [vmem:[#allocation12 + $0x70] sm:$0xf]
        %v8549 = vld [vmem:[#allocation12 + $0x74] sm:$0xf]
        %v8550 = vld [vmem:[#allocation12 + $0x78] sm:$0xf]
        %v8551 = vld [vmem:[#allocation12 + $0x7c] sm:$0xf]
        %v8552 = vld [vmem:[#allocation12 + $0x80] sm:$0xf]
        %v8553 = vld [vmem:[#allocation12 + $0x84] sm:$0xf]
        %v8554 = vld [vmem:[#allocation12 + $0x88] sm:$0xf]
        %v8555 = vld [vmem:[#allocation12 + $0x8c] sm:$0xf]
        %v8556 = vld [vmem:[#allocation12 + $0x90] sm:$0xf]
        %v8557 = vld [vmem:[#allocation12 + $0x94] sm:$0xf]
        %v8558 = vld [vmem:[#allocation12 + $0x98] sm:$0xf]
        %v8559 = vld [vmem:[#allocation12 + $0x9c] sm:$0xf]
        %v8560 = vld [vmem:[#allocation12 + $0xa0] sm:$0xf]
        %v8561 = vld [vmem:[#allocation12 + $0xa4] sm:$0xf]
        %v8562 = vld [vmem:[#allocation12 + $0xa8] sm:$0xf]
        %v8563 = vld [vmem:[#allocation12 + $0xac] sm:$0xf]
        %v8564 = vld [vmem:[#allocation12 + $0xb0] sm:$0xf]
        %v8565 = vld [vmem:[#allocation12 + $0xb4] sm:$0xf]
        %v8566 = vld [vmem:[#allocation12 + $0xb8] sm:$0xf]
        %v8567 = vld [vmem:[#allocation12 + $0xbc] sm:$0xf]
        %v8568 = vld [vmem:[#allocation12 + $0xc0] sm:$0xf]
        %v8569 = vld [vmem:[#allocation12 + $0xc4] sm:$0xf]
        %v8570 = vld [vmem:[#allocation12 + $0xc8] sm:$0xf]
        %v8571 = vld [vmem:[#allocation12 + $0xcc] sm:$0xf]
        %v8572 = vld [vmem:[#allocation12 + $0xd0] sm:$0xf]
        %v8573 = vld [vmem:[#allocation12 + $0xd4] sm:$0xf]
        %v8574 = vld [vmem:[#allocation12 + $0xd8] sm:$0xf]
        %v8575 = vld [vmem:[#allocation12 + $0xdc] sm:$0xf]
        %v8576 = vld [vmem:[#allocation12 + $0xe0] sm:$0xf]
        %v8577 = vld [vmem:[#allocation12 + $0xe4] sm:$0xf]
        %v8578 = vld [vmem:[#allocation12 + $0xe8] sm:$0xf]
        %v8579 = vld [vmem:[#allocation12 + $0xec] sm:$0xf]
        %v8580 = vld [vmem:[#allocation12 + $0xf0] sm:$0xf]
        %v8581 = vld [vmem:[#allocation12 + $0xf4] sm:$0xf]
        %v8582 = vld [vmem:[#allocation12 + $0xf8] sm:$0xf]
        %v8583 = vld [vmem:[#allocation12 + $0xfc] sm:$0xf]
        %v8584 = vld [vmem:[#allocation12 + $0x100] sm:$0xf]
        %v8585 = vld [vmem:[#allocation12 + $0x104] sm:$0xf]
        %v8586 = vld [vmem:[#allocation12 + $0x108] sm:$0xf]
        %v8587 = vld [vmem:[#allocation12 + $0x10c] sm:$0xf]
        %v8588 = vld [vmem:[#allocation12 + $0x110] sm:$0xf]
        %v8589 = vld [vmem:[#allocation12 + $0x114] sm:$0xf]
        %v8590 = vld [vmem:[#allocation12 + $0x118] sm:$0xf]
        %v8591 = vld [vmem:[#allocation12 + $0x11c] sm:$0xf]
        %v8592 = vld [vmem:[#allocation12 + $0x120] sm:$0xf]
        %v8593 = vld [vmem:[#allocation12 + $0x124] sm:$0xf]
        %v8594 = vld [vmem:[#allocation12 + $0x128] sm:$0xf]
        %v8595 = vld [vmem:[#allocation12 + $0x12c] sm:$0xf]
        %v8596 = vld [vmem:[#allocation12 + $0x130] sm:$0xf]
        %v8597 = vld [vmem:[#allocation12 + $0x134] sm:$0xf]
        %v8598 = vld [vmem:[#allocation12 + $0x138] sm:$0xf]
        %v8599 = vld [vmem:[#allocation12 + $0x13c] sm:$0xf]
        %v8600 = vld [vmem:[#allocation12 + $0x140] sm:$0xf]
        %v8601 = vld [vmem:[#allocation12 + $0x144] sm:$0xf]
        %v8602 = vld [vmem:[#allocation12 + $0x148] sm:$0xf]
        %v8603 = vld [vmem:[#allocation12 + $0x14c] sm:$0xf]
        %v8604 = vld [vmem:[#allocation12 + $0x150] sm:$0xf]
        %v8605 = vld [vmem:[#allocation12 + $0x154] sm:$0xf]
        %v8606 = vld [vmem:[#allocation12 + $0x158] sm:$0xf]
        %v8607 = vld [vmem:[#allocation12 + $0x15c] sm:$0xf]
        %v8608 = vld [vmem:[#allocation12 + $0x160] sm:$0xf]
        %v8609 = vld [vmem:[#allocation12 + $0x164] sm:$0xf]
        %v8610 = vld [vmem:[#allocation12 + $0x168] sm:$0xf]
        %v8611 = vld [vmem:[#allocation12 + $0x16c] sm:$0xf]
        %v8612 = vld [vmem:[#allocation12 + $0x170] sm:$0xf]
        %v8613 = vld [vmem:[#allocation12 + $0x174] sm:$0xf]
        %v8614 = vld [vmem:[#allocation12 + $0x178] sm:$0xf]
        %v8615 = vld [vmem:[#allocation12 + $0x17c] sm:$0xf]
        %v8616 = vld [vmem:[#allocation12 + $0x180] sm:$0xf]
        %v8617 = vld [vmem:[#allocation12 + $0x184] sm:$0xf]
        %v8618 = vld [vmem:[#allocation12 + $0x188] sm:$0xf]
        %v8619 = vld [vmem:[#allocation12 + $0x18c] sm:$0xf]
        %v8620 = vld [vmem:[#allocation12 + $0x190] sm:$0xf]
        %v8621 = vld [vmem:[#allocation12 + $0x194] sm:$0xf]
        %v8622 = vld [vmem:[#allocation12 + $0x198] sm:$0xf]
        %v8623 = vld [vmem:[#allocation12 + $0x19c] sm:$0xf]
        %v8624 = vld [vmem:[#allocation12 + $0x1a0] sm:$0xf]
        %v8625 = vld [vmem:[#allocation12 + $0x1a4] sm:$0xf]
        %v8626 = vld [vmem:[#allocation12 + $0x1a8] sm:$0xf]
        %v8627 = vld [vmem:[#allocation12 + $0x1ac] sm:$0xf]
        %v8628 = vld [vmem:[#allocation12 + $0x1b0] sm:$0xf]
        %v8629 = vld [vmem:[#allocation12 + $0x1b4] sm:$0xf]
        %v8630 = vld [vmem:[#allocation12 + $0x1b8] sm:$0xf]
        %v8631 = vld [vmem:[#allocation12 + $0x1bc] sm:$0xf]
        %v8632 = vld [vmem:[#allocation12 + $0x1c0] sm:$0xf]
        %v8633 = vld [vmem:[#allocation12 + $0x1c4] sm:$0xf]
        %v8634 = vld [vmem:[#allocation12 + $0x1c8] sm:$0xf]
        %v8635 = vld [vmem:[#allocation12 + $0x1cc] sm:$0xf]
        %v8636 = vld [vmem:[#allocation12 + $0x1d0] sm:$0xf]
        %v8637 = vld [vmem:[#allocation12 + $0x1d4] sm:$0xf]
        %v8638 = vld [vmem:[#allocation12 + $0x1d8] sm:$0xf]
        %v8639 = vld [vmem:[#allocation12 + $0x1dc] sm:$0xf]
        %v8640 = vld [vmem:[#allocation12 + $0x1e0] sm:$0xf]
        %v8641 = vld [vmem:[#allocation12 + $0x1e4] sm:$0xf]
        %v8642 = vld [vmem:[#allocation12 + $0x1e8] sm:$0xf]
        %v8643 = vld [vmem:[#allocation12 + $0x1ec] sm:$0xf]
        %v8644 = vld [vmem:[#allocation12 + $0x1f0] sm:$0xf]
        %v8645 = vld [vmem:[#allocation12 + $0x1f4] sm:$0xf]
        %v8646 = vld [vmem:[#allocation12 + $0x1f8] sm:$0xf]
        %v8647 = vld [vmem:[#allocation12 + $0x1fc] sm:$0xf]
        %v8776 = vunpack.c.l.b16 %v8520
        %v8777 = vunpack.c.l.b16 %v8521
        %v8778 = vunpack.c.l.b16 %v8522
        %v8779 = vunpack.c.l.b16 %v8523
        %v8780 = vunpack.c.l.b16 %v8524
        %v8781 = vunpack.c.l.b16 %v8525
        %v8782 = vunpack.c.l.b16 %v8526
        %v8783 = vunpack.c.l.b16 %v8527
        %v8784 = vunpack.c.l.b16 %v8528
        %v8785 = vunpack.c.l.b16 %v8529
        %v8786 = vunpack.c.l.b16 %v8530
        %v8787 = vunpack.c.l.b16 %v8531
        %v8788 = vunpack.c.l.b16 %v8532
        %v8789 = vunpack.c.l.b16 %v8533
        %v8790 = vunpack.c.l.b16 %v8534
        %v8791 = vunpack.c.l.b16 %v8535
        %v8792 = vunpack.c.l.b16 %v8536
        %v8793 = vunpack.c.l.b16 %v8537
        %v8794 = vunpack.c.l.b16 %v8538
        %v8795 = vunpack.c.l.b16 %v8539
        %v8796 = vunpack.c.l.b16 %v8540
        %v8797 = vunpack.c.l.b16 %v8541
        %v8798 = vunpack.c.l.b16 %v8542
        %v8799 = vunpack.c.l.b16 %v8543
        %v8800 = vunpack.c.l.b16 %v8544
        %v8801 = vunpack.c.l.b16 %v8545
        %v8802 = vunpack.c.l.b16 %v8546
        %v8803 = vunpack.c.l.b16 %v8547
        %v8804 = vunpack.c.l.b16 %v8548
        %v8805 = vunpack.c.l.b16 %v8549
        %v8806 = vunpack.c.l.b16 %v8550
        %v8807 = vunpack.c.l.b16 %v8551
        %v8808 = vunpack.c.l.b16 %v8552
        %v8809 = vunpack.c.l.b16 %v8553
        %v8810 = vunpack.c.l.b16 %v8554
        %v8811 = vunpack.c.l.b16 %v8555
        %v8812 = vunpack.c.l.b16 %v8556
        %v8813 = vunpack.c.l.b16 %v8557
        %v8814 = vunpack.c.l.b16 %v8558
        %v8815 = vunpack.c.l.b16 %v8559
        %v8816 = vunpack.c.l.b16 %v8560
        %v8817 = vunpack.c.l.b16 %v8561
        %v8818 = vunpack.c.l.b16 %v8562
        %v8819 = vunpack.c.l.b16 %v8563
        %v8820 = vunpack.c.l.b16 %v8564
        %v8821 = vunpack.c.l.b16 %v8565
        %v8822 = vunpack.c.l.b16 %v8566
        %v8823 = vunpack.c.l.b16 %v8567
        %v8824 = vunpack.c.l.b16 %v8568
        %v8825 = vunpack.c.l.b16 %v8569
        %v8826 = vunpack.c.l.b16 %v8570
        %v8827 = vunpack.c.l.b16 %v8571
        %v8828 = vunpack.c.l.b16 %v8572
        %v8829 = vunpack.c.l.b16 %v8573
        %v8830 = vunpack.c.l.b16 %v8574
        %v8831 = vunpack.c.l.b16 %v8575
        %v8832 = vunpack.c.l.b16 %v8576
        %v8833 = vunpack.c.l.b16 %v8577
        %v8834 = vunpack.c.l.b16 %v8578
        %v8835 = vunpack.c.l.b16 %v8579
        %v8836 = vunpack.c.l.b16 %v8580
        %v8837 = vunpack.c.l.b16 %v8581
        %v8838 = vunpack.c.l.b16 %v8582
        %v8839 = vunpack.c.l.b16 %v8583
        %v8840 = vunpack.c.l.b16 %v8584
        %v8841 = vunpack.c.l.b16 %v8585
        %v8842 = vunpack.c.l.b16 %v8586
        %v8843 = vunpack.c.l.b16 %v8587
        %v8844 = vunpack.c.l.b16 %v8588
        %v8845 = vunpack.c.l.b16 %v8589
        %v8846 = vunpack.c.l.b16 %v8590
        %v8847 = vunpack.c.l.b16 %v8591
        %v8848 = vunpack.c.l.b16 %v8592
        %v8849 = vunpack.c.l.b16 %v8593
        %v8850 = vunpack.c.l.b16 %v8594
        %v8851 = vunpack.c.l.b16 %v8595
        %v8852 = vunpack.c.l.b16 %v8596
        %v8853 = vunpack.c.l.b16 %v8597
        %v8854 = vunpack.c.l.b16 %v8598
        %v8855 = vunpack.c.l.b16 %v8599
        %v8856 = vunpack.c.l.b16 %v8600
        %v8857 = vunpack.c.l.b16 %v8601
        %v8858 = vunpack.c.l.b16 %v8602
        %v8859 = vunpack.c.l.b16 %v8603
        %v8860 = vunpack.c.l.b16 %v8604
        %v8861 = vunpack.c.l.b16 %v8605
        %v8862 = vunpack.c.l.b16 %v8606
        %v8863 = vunpack.c.l.b16 %v8607
        %v8864 = vunpack.c.l.b16 %v8608
        %v8865 = vunpack.c.l.b16 %v8609
        %v8866 = vunpack.c.l.b16 %v8610
        %v8867 = vunpack.c.l.b16 %v8611
        %v8868 = vunpack.c.l.b16 %v8612
        %v8869 = vunpack.c.l.b16 %v8613
        %v8870 = vunpack.c.l.b16 %v8614
        %v8871 = vunpack.c.l.b16 %v8615
        %v8872 = vunpack.c.l.b16 %v8616
        %v8873 = vunpack.c.l.b16 %v8617
        %v8874 = vunpack.c.l.b16 %v8618
        %v8875 = vunpack.c.l.b16 %v8619
        %v8876 = vunpack.c.l.b16 %v8620
        %v8877 = vunpack.c.l.b16 %v8621
        %v8878 = vunpack.c.l.b16 %v8622
        %v8879 = vunpack.c.l.b16 %v8623
        %v8880 = vunpack.c.l.b16 %v8624
        %v8881 = vunpack.c.l.b16 %v8625
        %v8882 = vunpack.c.l.b16 %v8626
        %v8883 = vunpack.c.l.b16 %v8627
        %v8884 = vunpack.c.l.b16 %v8628
        %v8885 = vunpack.c.l.b16 %v8629
        %v8886 = vunpack.c.l.b16 %v8630
        %v8887 = vunpack.c.l.b16 %v8631
        %v8888 = vunpack.c.l.b16 %v8632
        %v8889 = vunpack.c.l.b16 %v8633
        %v8890 = vunpack.c.l.b16 %v8634
        %v8891 = vunpack.c.l.b16 %v8635
        %v8892 = vunpack.c.l.b16 %v8636
        %v8893 = vunpack.c.l.b16 %v8637
        %v8894 = vunpack.c.l.b16 %v8638
        %v8895 = vunpack.c.l.b16 %v8639
        %v8896 = vunpack.c.l.b16 %v8640
        %v8897 = vunpack.c.l.b16 %v8641
        %v8898 = vunpack.c.l.b16 %v8642
        %v8899 = vunpack.c.l.b16 %v8643
        %v8900 = vunpack.c.l.b16 %v8644
        %v8901 = vunpack.c.l.b16 %v8645
        %v8902 = vunpack.c.l.b16 %v8646
        %v8903 = vunpack.c.l.b16 %v8647
        %v8904 = vpack.c.b16 %v8777, %v8776
        %v8905 = vpack.c.b16 %v8779, %v8778
        %v8906 = vpack.c.b16 %v8781, %v8780
        %v8907 = vpack.c.b16 %v8783, %v8782
        %v8908 = vpack.c.b16 %v8785, %v8784
        %v8909 = vpack.c.b16 %v8787, %v8786
        %v8910 = vpack.c.b16 %v8789, %v8788
        %v8911 = vpack.c.b16 %v8791, %v8790
        %v8912 = vpack.c.b16 %v8793, %v8792
        %v8913 = vpack.c.b16 %v8795, %v8794
        %v8914 = vpack.c.b16 %v8797, %v8796
        %v8915 = vpack.c.b16 %v8799, %v8798
        %v8916 = vpack.c.b16 %v8801, %v8800
        %v8917 = vpack.c.b16 %v8803, %v8802
        %v8918 = vpack.c.b16 %v8805, %v8804
        %v8919 = vpack.c.b16 %v8807, %v8806
        %v8920 = vpack.c.b16 %v8809, %v8808
        %v8921 = vpack.c.b16 %v8811, %v8810
        %v8922 = vpack.c.b16 %v8813, %v8812
        %v8923 = vpack.c.b16 %v8815, %v8814
        %v8924 = vpack.c.b16 %v8817, %v8816
        %v8925 = vpack.c.b16 %v8819, %v8818
        %v8926 = vpack.c.b16 %v8821, %v8820
        %v8927 = vpack.c.b16 %v8823, %v8822
        %v8928 = vpack.c.b16 %v8825, %v8824
        %v8929 = vpack.c.b16 %v8827, %v8826
        %v8930 = vpack.c.b16 %v8829, %v8828
        %v8931 = vpack.c.b16 %v8831, %v8830
        %v8932 = vpack.c.b16 %v8833, %v8832
        %v8933 = vpack.c.b16 %v8835, %v8834
        %v8934 = vpack.c.b16 %v8837, %v8836
        %v8935 = vpack.c.b16 %v8839, %v8838
        %v8936 = vpack.c.b16 %v8841, %v8840
        %v8937 = vpack.c.b16 %v8843, %v8842
        %v8938 = vpack.c.b16 %v8845, %v8844
        %v8939 = vpack.c.b16 %v8847, %v8846
        %v8940 = vpack.c.b16 %v8849, %v8848
        %v8941 = vpack.c.b16 %v8851, %v8850
        %v8942 = vpack.c.b16 %v8853, %v8852
        %v8943 = vpack.c.b16 %v8855, %v8854
        %v8944 = vpack.c.b16 %v8857, %v8856
        %v8945 = vpack.c.b16 %v8859, %v8858
        %v8946 = vpack.c.b16 %v8861, %v8860
        %v8947 = vpack.c.b16 %v8863, %v8862
        %v8948 = vpack.c.b16 %v8865, %v8864
        %v8949 = vpack.c.b16 %v8867, %v8866
        %v8950 = vpack.c.b16 %v8869, %v8868
        %v8951 = vpack.c.b16 %v8871, %v8870
        %v8952 = vpack.c.b16 %v8873, %v8872
        %v8953 = vpack.c.b16 %v8875, %v8874
        %v8954 = vpack.c.b16 %v8877, %v8876
        %v8955 = vpack.c.b16 %v8879, %v8878
        %v8956 = vpack.c.b16 %v8881, %v8880
        %v8957 = vpack.c.b16 %v8883, %v8882
        %v8958 = vpack.c.b16 %v8885, %v8884
        %v8959 = vpack.c.b16 %v8887, %v8886
        %v8960 = vpack.c.b16 %v8889, %v8888
        %v8961 = vpack.c.b16 %v8891, %v8890
        %v8962 = vpack.c.b16 %v8893, %v8892
        %v8963 = vpack.c.b16 %v8895, %v8894
        %v8964 = vpack.c.b16 %v8897, %v8896
        %v8965 = vpack.c.b16 %v8899, %v8898
        %v8966 = vpack.c.b16 %v8901, %v8900
        %v8967 = vpack.c.b16 %v8903, %v8902
        %9032 = vmatpush.bf16.msra.mxu0 %v8911
        %9033 = vmatpush.bf16.msra.mxu0 %v8910
        %9034 = vmatpush.bf16.msra.mxu0 %v8909
        %9035 = vmatpush.bf16.msra.mxu0 %v8908
        %9036 = vmatpush.bf16.msra.mxu0 %v8907
        %9037 = vmatpush.bf16.msra.mxu0 %v8906
        %9038 = vmatpush.bf16.msra.mxu0 %v8905
        %9039 = vmatpush.bf16.msra.mxu0 %v8904
        %9040 = vmatmul.bf16.gmra.mxu0 %v8512
        %v9041 = vpop.f32.mrf.mxu0
        %v9042 = vadd.f32 0.0, %v9041
        %v9043 = vpop.f32.mrf.mxu0
        %9044 = vdwg.mxu0
        %9045 = vmatpush.bf16.msra.mxu0 %v8919
        %9046 = vmatpush.bf16.msra.mxu0 %v8918
        %9047 = vmatpush.bf16.msra.mxu0 %v8917
        %9048 = vmatpush.bf16.msra.mxu0 %v8916
        %9049 = vmatpush.bf16.msra.mxu0 %v8915
        %9050 = vmatpush.bf16.msra.mxu0 %v8914
        %9051 = vmatpush.bf16.msra.mxu0 %v8913
        %9052 = vmatpush.bf16.msra.mxu0 %v8912
        %9053 = vmatmul.bf16.gmra.mxu0 %v8513
        %v9054 = vpop.f32.mrf.mxu0
        %v9055 = vadd.f32 %v9042, %v9054
        %v9056 = vpop.f32.mrf.mxu0
        %9057 = vdwg.mxu0
        %9058 = vmatpush.bf16.msra.mxu0 %v8927
        %9059 = vmatpush.bf16.msra.mxu0 %v8926
        %9060 = vmatpush.bf16.msra.mxu0 %v8925
        %9061 = vmatpush.bf16.msra.mxu0 %v8924
        %9062 = vmatpush.bf16.msra.mxu0 %v8923
        %9063 = vmatpush.bf16.msra.mxu0 %v8922
        %9064 = vmatpush.bf16.msra.mxu0 %v8921
        %9065 = vmatpush.bf16.msra.mxu0 %v8920
        %9066 = vmatmul.bf16.gmra.mxu0 %v8514
        %v9067 = vpop.f32.mrf.mxu0
        %v9068 = vadd.f32 %v9055, %v9067
        %v9069 = vpop.f32.mrf.mxu0
        %9070 = vdwg.mxu0
        %9071 = vmatpush.bf16.msra.mxu0 %v8935
        %9072 = vmatpush.bf16.msra.mxu0 %v8934
        %9073 = vmatpush.bf16.msra.mxu0 %v8933
        %9074 = vmatpush.bf16.msra.mxu0 %v8932
        %9075 = vmatpush.bf16.msra.mxu0 %v8931
        %9076 = vmatpush.bf16.msra.mxu0 %v8930
        %9077 = vmatpush.bf16.msra.mxu0 %v8929
        %9078 = vmatpush.bf16.msra.mxu0 %v8928
        %9079 = vmatmul.bf16.gmra.mxu0 %v8515
        %v9080 = vpop.f32.mrf.mxu0
        %v9081 = vadd.f32 %v9068, %v9080
        %v9082 = vpop.f32.mrf.mxu0
        %9083 = vdwg.mxu0
        %9084 = vmatpush.bf16.msra.mxu0 %v8943
        %9085 = vmatpush.bf16.msra.mxu0 %v8942
        %9086 = vmatpush.bf16.msra.mxu0 %v8941
        %9087 = vmatpush.bf16.msra.mxu0 %v8940
        %9088 = vmatpush.bf16.msra.mxu0 %v8939
        %9089 = vmatpush.bf16.msra.mxu0 %v8938
        %9090 = vmatpush.bf16.msra.mxu0 %v8937
        %9091 = vmatpush.bf16.msra.mxu0 %v8936
        %9092 = vmatmul.bf16.gmra.mxu0 %v8516
        %v9093 = vpop.f32.mrf.mxu0
        %v9094 = vadd.f32 %v9081, %v9093
        %v9095 = vpop.f32.mrf.mxu0
        %9096 = vdwg.mxu0
        %9097 = vmatpush.bf16.msra.mxu0 %v8951
        %9098 = vmatpush.bf16.msra.mxu0 %v8950
        %9099 = vmatpush.bf16.msra.mxu0 %v8949
        %9100 = vmatpush.bf16.msra.mxu0 %v8948
        %9101 = vmatpush.bf16.msra.mxu0 %v8947
        %9102 = vmatpush.bf16.msra.mxu0 %v8946
        %9103 = vmatpush.bf16.msra.mxu0 %v8945
        %9104 = vmatpush.bf16.msra.mxu0 %v8944
        %9105 = vmatmul.bf16.gmra.mxu0 %v8517
        %v9106 = vpop.f32.mrf.mxu0
        %v9107 = vadd.f32 %v9094, %v9106
        %v9108 = vpop.f32.mrf.mxu0
        %9109 = vdwg.mxu0
        %9110 = vmatpush.bf16.msra.mxu0 %v8959
        %9111 = vmatpush.bf16.msra.mxu0 %v8958
        %9112 = vmatpush.bf16.msra.mxu0 %v8957
        %9113 = vmatpush.bf16.msra.mxu0 %v8956
        %9114 = vmatpush.bf16.msra.mxu0 %v8955
        %9115 = vmatpush.bf16.msra.mxu0 %v8954
        %9116 = vmatpush.bf16.msra.mxu0 %v8953
        %9117 = vmatpush.bf16.msra.mxu0 %v8952
        %9118 = vmatmul.bf16.gmra.mxu0 %v8518
        %v9119 = vpop.f32.mrf.mxu0
        %v9120 = vadd.f32 %v9107, %v9119
        %v9121 = vpop.f32.mrf.mxu0
        %9122 = vdwg.mxu0
        %9123 = vmatpush.bf16.msra.mxu0 %v8967
        %9124 = vmatpush.bf16.msra.mxu0 %v8966
        %9125 = vmatpush.bf16.msra.mxu0 %v8965
        %9126 = vmatpush.bf16.msra.mxu0 %v8964
        %9127 = vmatpush.bf16.msra.mxu0 %v8963
        %9128 = vmatpush.bf16.msra.mxu0 %v8962
        %9129 = vmatpush.bf16.msra.mxu0 %v8961
        %9130 = vmatpush.bf16.msra.mxu0 %v8960
        %9131 = vmatmul.bf16.gmra.mxu0 %v8519
        %v9132 = vpop.f32.mrf.mxu0
        %v9133 = vadd.f32 %v9120, %v9132
        %v9134 = vpop.f32.mrf.mxu0
        %9135 = vdwg.mxu0
        %9136 = vst [vmem:[%s324] sm:$0x1] %v9133
        %s9137 = sand.u32 %s162, 1
        %s9138 = scalar_lea.sflag [#allocation6], %s9137
        %s9139 = sand.u32 %s162, 1
        %s9140 = scalar_lea.vmem [#allocation13], %s9139
        // Predicated region
        $region65: #{inception_aux_forward.1} parent=43 // pred_check
          %p9141 = pneg %p172
        $region66: #{inception_aux_forward.1} parent=43 // pred_check_branch
          %9143 = sbr.rel (%p9141) target = $region68
        $region67: #{inception_aux_forward.1} parent=43 // pred_region
          %9145 = vsyncadd %s9138, 0
          %s9146 = scalar_lea.hbm %s6, %s23
          %s9148 = sshll.u32 %s9140, 4
          %s9149 = int_to_ptr.vmem [resolvable:$true] %s9148
          %s9150 = sshll.u32 %s9146, 4
          %s9151 = int_to_ptr.hbm [resolvable:$true] %s9150
          %9153 = dma.vmem_to_hbm [thread:$0]  %s9149, 16, %s9151, %s9138
        $region68: #{inception_aux_forward.1} parent=43 // pred_fallthru
          _
      $region44: #{inception_aux_forward.1} parent=5 // pred_fallthru
        _
      %p9154 = scmp.le.s32.totalorder 2, %s18
      // Predicated region
      $region69: #{inception_aux_forward.1} parent=5 // pred_check
        %p9155 = pneg %p9154
      $region70: #{inception_aux_forward.1} parent=5 // pred_check_branch
        %9157 = sbr.rel (%p9155) target = $region72
      $region71: #{inception_aux_forward.1} parent=5 // pred_region
        %s9158 = ssub.s32 %s18, 2
        // Predicated region
        $region73: #{inception_aux_forward.1} parent=71 // pred_check
          %p9159 = pneg %p178
        $region74: #{inception_aux_forward.1} parent=71 // pred_check_branch
          %9161 = sbr.rel (%p9159) target = $region76
        $region75: #{inception_aux_forward.1} parent=71 // pred_region
          %s9162 = sand.u32 %s163, 1
          %s9163 = scalar_lea.sflag [#allocation6], %s9162
          %s9164 = sand.u32 %s163, 1
          %s9165 = scalar_lea.vmem [#allocation13], %s9164
          %9167 = dma.done %s9163, 16
        $region76: #{inception_aux_forward.1} parent=71 // pred_fallthru
          _
      $region72: #{inception_aux_forward.1} parent=5 // pred_fallthru
        _
    $region6: #{inception_aux_forward.1} parent=1 // loop_footer
      %s22 = sadd.s32 1, %s18
    $region7: #{inception_aux_forward.1} parent=1 // loop_footer_branch
      %17 = sbr.rel target = $region3
    $region8: #{inception_aux_forward.1} parent=1 // loop_exit
      _
    %9168 = vsyncpa [#allocation5], 1
    %s9169 = scalar_lea.sflag [#allocation5], 1
    %9170 = vsyncpa %s9169, 1
    %9171 = vsyncpa [#allocation8], 1
    %9172 = vsyncpa [#allocation11], 1
    %9173 = vsyncpa [#allocation6], 1
    %s9174 = scalar_lea.sflag [#allocation6], 1
    %9175 = vsyncpa %s9174, 1

</llo_original>
